<compile_context>
chip_gen: v7x
topology: tpu7x:2x2x1
jax: 0.10.0
libtpu: 0.0.40
codegen_flags: <defaults>
</compile_context>

<pallas_src>
import jax
import jax.numpy as jnp
from jax.experimental import pallas as pl
from jax.experimental.pallas import tpu as pltpu

LANE = 128


# --------------------------------------------------------------------------------------
# banded weight builders (wrapper-side, plain XLA)
# --------------------------------------------------------------------------------------
def _conv1_banded(w):
    """Fold Conv2d(3->6,5x5,valid)+MaxPool(2,2) into 2 banded matrices over quad-row input.

    Input lanes:  r*96 + w*3 + ci          (r = row-within-quad, image row = 4*quad + r)
    Output lanes: ((q*2+qw)*2 + rho)*128 + wp*6 + co   (pool member (q,qw), row parity rho)
    """
    da = jnp.arange(2).reshape(2, 1, 1, 1, 1, 1, 1, 1, 1)
    r = jnp.arange(4).reshape(1, 4, 1, 1, 1, 1, 1, 1, 1)
    wx = jnp.arange(32).reshape(1, 1, 32, 1, 1, 1, 1, 1, 1)
    ci = jnp.arange(3).reshape(1, 1, 1, 3, 1, 1, 1, 1, 1)
    q = jnp.arange(2).reshape(1, 1, 1, 1, 2, 1, 1, 1, 1)
    qw = jnp.arange(2).reshape(1, 1, 1, 1, 1, 2, 1, 1, 1)
    rho = jnp.arange(2).reshape(1, 1, 1, 1, 1, 1, 2, 1, 1)
    wp = jnp.arange(14).reshape(1, 1, 1, 1, 1, 1, 1, 14, 1)
    co = jnp.arange(6).reshape(1, 1, 1, 1, 1, 1, 1, 1, 6)
    kh = 4 * da + r - 2 * rho - q
    kw = wx - 2 * wp - qw
    valid = (kh >= 0) & (kh < 5) & (kw >= 0) & (kw < 5)
    vals = jnp.where(valid, w[co, ci, jnp.clip(kh, 0, 4), jnp.clip(kw, 0, 4)], 0.0)
    t = vals.reshape(2, 384, 2, 2, 2, 84)
    t = jnp.pad(t, ((0, 0), (0, 0), (0, 0), (0, 0), (0, 0), (0, LANE - 84)))
    return t.reshape(2, 384, 8 * LANE).astype(jnp.bfloat16)


def _conv2_banded(w):
    """Fold Conv2d(6->16,5x5,valid)+MaxPool(2,2) into 3 banded matrices over row-pair input.

    Input lanes:  p*128 + w1*6 + ci        (p = row parity inside the pair)
    Output lanes: (q*2+qw)*128 + wp*16 + co
    """
    da = jnp.arange(3).reshape(3, 1, 1, 1, 1, 1, 1, 1)
    p = jnp.arange(2).reshape(1, 2, 1, 1, 1, 1, 1, 1)
    w1 = jnp.arange(14).reshape(1, 1, 14, 1, 1, 1, 1, 1)
    ci = jnp.arange(6).reshape(1, 1, 1, 6, 1, 1, 1, 1)
    q = jnp.arange(2).reshape(1, 1, 1, 1, 2, 1, 1, 1)
    qw = jnp.arange(2).reshape(1, 1, 1, 1, 1, 2, 1, 1)
    wp = jnp.arange(5).reshape(1, 1, 1, 1, 1, 1, 5, 1)
    co = jnp.arange(16).reshape(1, 1, 1, 1, 1, 1, 1, 16)
    kh = 2 * da + p - q
    kw = w1 - 2 * wp - qw
    valid = (kh >= 0) & (kh < 5) & (kw >= 0) & (kw < 5)
    vals = jnp.where(valid, w[co, ci, jnp.clip(kh, 0, 4), jnp.clip(kw, 0, 4)], 0.0)
    t = vals.reshape(3, 2, 84, 2, 2, 80)
    t = jnp.pad(t, ((0, 0), (0, 0), (0, LANE - 84), (0, 0), (0, 0), (0, LANE - 80)))
    return t.reshape(3, 2 * LANE, 4 * LANE).astype(jnp.bfloat16)


def _fc1_banded(w):
    """Fold torch's (C,H,W) flatten into 5 row-shifted (128,128) fc1 weight bands."""
    h2 = jnp.arange(5).reshape(5, 1, 1)
    wp = jnp.arange(5).reshape(1, 5, 1)
    co = jnp.arange(16).reshape(1, 1, 16)
    idx = co * 25 + h2 * 5 + wp                    # torch flatten index for (h2, wp, co)
    wb = w[idx.reshape(5, 80), :]                  # (5, 80, 120)
    wb = jnp.pad(wb, ((0, 0), (0, LANE - 80), (0, LANE - 120)))
    return wb.astype(jnp.bfloat16)                 # (5, 128, 128)


# --------------------------------------------------------------------------------------
# fused kernel
# --------------------------------------------------------------------------------------
def _banded_dot_acc(x, w_ref, n_shift, acc_ref):
    """acc[i, :] = sum_k (x @ w_ref[k])[i + k, :]  (tail rows keep partial sums; callers only
    consume rows for which every shifted term is in range)."""
    r = x.shape[0]
    acc_ref[...] = jnp.dot(x, w_ref[0], preferred_element_type=jnp.float32)
    for k in range(1, n_shift):
        y = jnp.dot(x, w_ref[k], preferred_element_type=jnp.float32)
        acc_ref[0:r - k, :] = acc_ref[0:r - k, :] + y[k:r, :]
    return acc_ref[...]


def _lenet_kernel(x_ref, t1_ref, bc1_ref, t2_ref, bc2_ref,
                  w1b_ref, bf1_ref, w2_ref, bf2_ref, w3_ref, bf3_ref,
                  o_ref, acc1_s, acc2_s, accf_s):
    # x_ref: (R, 384) bf16 quad-row packed NHWC input, R = bt*8 (8 quad-rows / sample)
    x = x_ref[...]

    # ---- conv1 + pool (banded quad-row matmuls, f32 accumulate in scratch) ----
    acc1 = _banded_dot_acc(x, t1_ref, 2, acc1_s)                         # (R, 1024)
    p_even = jnp.maximum(jnp.maximum(acc1[:, 0:128], acc1[:, 256:384]),
                         jnp.maximum(acc1[:, 512:640], acc1[:, 768:896]))
    p_odd = jnp.maximum(jnp.maximum(acc1[:, 128:256], acc1[:, 384:512]),
                        jnp.maximum(acc1[:, 640:768], acc1[:, 896:1024]))
    a1 = jnp.maximum(jnp.concatenate([p_even, p_odd], axis=-1) + bc1_ref[...], 0.0)
    x2 = a1.astype(jnp.bfloat16)                                         # (R, 256) row-pair packed

    # ---- conv2 + pool ----
    acc2 = _banded_dot_acc(x2, t2_ref, 3, acc2_s)                        # (R, 512)
    p2 = jnp.maximum(jnp.maximum(acc2[:, 0:128], acc2[:, 128:256]),
                     jnp.maximum(acc2[:, 256:384], acc2[:, 384:512]))
    a2 = jnp.maximum(p2 + bc2_ref[...], 0.0).astype(jnp.bfloat16)        # (R, 128)

    # ---- fc1 (flatten folded into 5 row-shifted bands) + relu ----
    h = _banded_dot_acc(a2, w1b_ref, 5, accf_s)                          # (R, 128)
    h = jnp.maximum(h + bf1_ref[...], 0.0).astype(jnp.bfloat16)

    # ---- fc2 + relu, fc3 ----
    h = jnp.maximum(jnp.dot(h, w2_ref[...], preferred_element_type=jnp.float32)
                    + bf2_ref[...], 0.0).astype(jnp.bfloat16)
    o_ref[...] = (jnp.dot(h, w3_ref[...], preferred_element_type=jnp.float32)
                  + bf3_ref[...]).astype(o_ref.dtype)


# --------------------------------------------------------------------------------------
# wrapper
# --------------------------------------------------------------------------------------
def _pick_batch_tile(batch, cap=64):
    """VMEM-budgeted batch tile; split mid-size batches so the grid has >=2 parallel steps."""
    cap = max(8, (cap // 8) * 8)
    if batch >= 2 * cap:
        return cap
    half = (batch + 1) // 2
    bt = ((half + 7) // 8) * 8
    return max(8, min(bt, cap))


def mlp_forward(x_nchw, params):
    B = x_nchw.shape[0]
    bt = _pick_batch_tile(B, cap=64)
    Bp = ((B + bt - 1) // bt) * bt
    rows = Bp * 8

    # NHWC, bf16 streaming, pad batch, quad-row pack (free contiguous reshapes in HBM).
    x = jnp.transpose(x_nchw, (0, 2, 3, 1)).astype(jnp.bfloat16)         # (B, 32, 32, 3)
    if Bp != B:
        x = jnp.pad(x, ((0, Bp - B), (0, 0), (0, 0), (0, 0)))
    x_packed = x.reshape(Bp * 8, 4 * 32 * 3)                             # (Bp*8, 384)

    # resident weights / biases
    t1 = _conv1_banded(params["w_conv1"])                                # (2, 384, 1024) bf16
    t2 = _conv2_banded(params["w_conv2"])                                # (3, 256, 512)  bf16
    w1b = _fc1_banded(params["w_fc1"])                                   # (5, 128, 128)  bf16
    w2f = jnp.pad(params["w_fc2"], ((0, 8), (0, 44))).astype(jnp.bfloat16)
    w3f = jnp.pad(params["w_head"], ((0, 44), (0, 118))).astype(jnp.bfloat16)

    tb1 = jnp.tile(params["b_conv1"], 14)                                # (84,)
    bc1 = jnp.zeros((1, 256), jnp.float32).at[0, 0:84].set(tb1).at[0, 128:212].set(tb1)
    bc2 = jnp.zeros((1, 128), jnp.float32).at[0, 0:80].set(jnp.tile(params["b_conv2"], 5))
    bf1 = jnp.zeros((1, 128), jnp.float32).at[0, 0:120].set(params["b_fc1"])
    bf2 = jnp.zeros((1, 128), jnp.float32).at[0, 0:84].set(params["b_fc2"])
    bf3 = jnp.zeros((1, 128), jnp.float32).at[0, 0:10].set(params["b_head"])

    macs_per_row = 2 * 384 * 1024 + 3 * 256 * 512 + 5 * 128 * 128 + 2 * 128 * 128
    flops = 2 * rows * macs_per_row
    weight_elems = 2 * 384 * 1024 + 3 * 256 * 512 + 5 * 128 * 128 + 2 * 128 * 128
    bytes_accessed = rows * 384 * 2 + rows * 128 * 4 + weight_elems * 2 + (256 + 5 * 128) * 4

    # TODO(synk): deepspeed.moe.layer.MoE branch (cfg.moe=True) has no clean Pallas equivalent;
    # this reproduces the cfg.moe == False path exactly.
    out = pl.pallas_call(
        _lenet_kernel,
        out_shape=jax.ShapeDtypeStruct((rows, 128), jnp.float32),
        grid=(Bp // bt,),
        in_specs=[
            pl.BlockSpec((bt * 8, 384), lambda i: (i, 0)),               # batch-block input
            pl.BlockSpec((2, 384, 1024), lambda i: (0, 0, 0)),           # resident weights
            pl.BlockSpec((1, 256), lambda i: (0, 0)),
            pl.BlockSpec((3, 256, 512), lambda i: (0, 0, 0)),
            pl.BlockSpec((1, 128), lambda i: (0, 0)),
            pl.BlockSpec((5, 128, 128), lambda i: (0, 0, 0)),
            pl.BlockSpec((1, 128), lambda i: (0, 0)),
            pl.BlockSpec((128, 128), lambda i: (0, 0)),
            pl.BlockSpec((1, 128), lambda i: (0, 0)),
            pl.BlockSpec((128, 128), lambda i: (0, 0)),
            pl.BlockSpec((1, 128), lambda i: (0, 0)),
        ],
        out_specs=pl.BlockSpec((bt * 8, 128), lambda i: (i, 0)),         # lane-dense output
        scratch_shapes=[
            pltpu.VMEM((bt * 8, 1024), jnp.float32),                     # conv1 accumulator
            pltpu.VMEM((bt * 8, 512), jnp.float32),                      # conv2 accumulator
            pltpu.VMEM((bt * 8, 128), jnp.float32),                      # fc1 accumulator
        ],
        compiler_params=pltpu.CompilerParams(
            dimension_semantics=("parallel",),
            vmem_limit_bytes=48 * 1024 * 1024),
        cost_estimate=pl.CostEstimate(flops=flops, transcendentals=0,
                                      bytes_accessed=bytes_accessed),
    )(x_packed, t1, bc1, t2, bc2, w1b, bf1, w2f, bf2, w3f, bf3)

    # valid logits live at row 8*b, lanes 0..9
    return out.reshape(Bp, 8, 128)[:B, 0, :10]


# --------------------------------------------------------------------------------------
# plain-JAX reference (numerics check) and params
# --------------------------------------------------------------------------------------
def mlp_reference(x_nchw, params):
    def conv_relu_pool_ref(x, wt, b):
        y = jax.lax.conv_general_dilated(
            x, jnp.transpose(wt, (2, 3, 1, 0)), window_strides=(1, 1), padding="VALID",
            dimension_numbers=("NHWC", "HWIO", "NHWC"))
        y = jnp.maximum(y + b, 0.0)
        return jax.lax.reduce_window(y, -jnp.inf, jax.lax.max,
                                     (1, 2, 2, 1), (1, 2, 2, 1), "VALID")

    x = jnp.transpose(x_nchw, (0, 2, 3, 1))
    x = conv_relu_pool_ref(x, params["w_conv1"], params["b_conv1"])
    x = conv_relu_pool_ref(x, params["w_conv2"], params["b_conv2"])
    B = x.shape[0]
    feats = jnp.transpose(x, (0, 3, 1, 2)).reshape(B, 400)               # torch (C,H,W) flatten
    h = jnp.maximum(feats @ params["w_fc1"] + params["b_fc1"], 0.0)
    h = jnp.maximum(h @ params["w_fc2"] + params["b_fc2"], 0.0)
    return h @ params["w_head"] + params["b_head"]


def init_params(key):
    ks = jax.random.split(key, 10)

    def dense(k, shape, fan_in):
        return jax.random.normal(k, shape, jnp.float32) / jnp.sqrt(float(fan_in))

    return {
        "w_conv1": dense(ks[0], (6, 3, 5, 5), 5 * 5 * 3),
        "b_conv1": dense(ks[1], (6,), 5 * 5 * 3),
        "w_conv2": dense(ks[2], (16, 6, 5, 5), 5 * 5 * 6),
        "b_conv2": dense(ks[3], (16,), 5 * 5 * 6),
        "w_fc1": dense(ks[4], (400, 120), 400),
        "b_fc1": dense(ks[5], (120,), 400),
        "w_fc2": dense(ks[6], (120, 84), 120),
        "b_fc2": dense(ks[7], (84,), 120),
        "w_head": dense(ks[8], (84, 10), 84),
        "b_head": dense(ks[9], (10,), 84),
    }


if __name__ == "__main__":
    key = jax.random.PRNGKey(0)
    pkey, xkey = jax.random.split(key)
    params = init_params(pkey)
    # CIFAR-10-style NCHW input (32x32 is required by the 16*5*5 = 400 flatten in the module)
    x = jax.random.normal(xkey, (2, 3, 32, 32), jnp.float32)

    y = jax.block_until_ready(jax.jit(mlp_forward)(x, params))
    assert y.shape == (2, 10) and y.dtype == jnp.float32

    y_ref = jax.block_until_ready(jax.jit(mlp_reference)(x, params))
    err = float(jnp.max(jnp.abs(y - y_ref)))
    assert err < 0.1, f"mismatch vs plain-JAX reference: max abs err {err}"

    print("KERNEL_OK")
</pallas_src>

<mosaic_0001>
module attributes {stable_mosaic.version = 11 : i64} {
  func.func @_lenet_kernel(%arg0: i32, %arg1: memref<64x384xbf16, #tpu.memory_space<vmem>>, %arg2: memref<2x384x1024xbf16, #tpu.memory_space<vmem>>, %arg3: memref<1x256xf32, #tpu.memory_space<vmem>>, %arg4: memref<3x256x512xbf16, #tpu.memory_space<vmem>>, %arg5: memref<1x128xf32, #tpu.memory_space<vmem>>, %arg6: memref<5x128x128xbf16, #tpu.memory_space<vmem>>, %arg7: memref<1x128xf32, #tpu.memory_space<vmem>>, %arg8: memref<128x128xbf16, #tpu.memory_space<vmem>>, %arg9: memref<1x128xf32, #tpu.memory_space<vmem>>, %arg10: memref<128x128xbf16, #tpu.memory_space<vmem>>, %arg11: memref<1x128xf32, #tpu.memory_space<vmem>>, %arg12: memref<64x128xf32, #tpu.memory_space<vmem>>, %arg13: memref<64x1024xf32, #tpu.memory_space<vmem>>, %arg14: memref<64x512xf32, #tpu.memory_space<vmem>>, %arg15: memref<64x128xf32, #tpu.memory_space<vmem>>) attributes {dimension_semantics = [#tpu.dimension_semantics<parallel>], iteration_bounds = array<i64: 1>, scalar_prefetch = 0 : i64, scratch_operands = 3 : i64, tpu.core_type = #tpu.core_type<tc>, window_params = [{transform_indices = @transform_0, window_bounds = array<i64: 64, 384>}, {pipeline_mode = #tpu.pipeline_mode<synchronous>, transform_indices = @transform_1, window_bounds = array<i64: 2, 384, 1024>}, {pipeline_mode = #tpu.pipeline_mode<synchronous>, transform_indices = @transform_2, window_bounds = array<i64: 1, 256>}, {pipeline_mode = #tpu.pipeline_mode<synchronous>, transform_indices = @transform_3, window_bounds = array<i64: 3, 256, 512>}, {pipeline_mode = #tpu.pipeline_mode<synchronous>, transform_indices = @transform_4, window_bounds = array<i64: 1, 128>}, {pipeline_mode = #tpu.pipeline_mode<synchronous>, transform_indices = @transform_5, window_bounds = array<i64: 5, 128, 128>}, {pipeline_mode = #tpu.pipeline_mode<synchronous>, transform_indices = @transform_6, window_bounds = array<i64: 1, 128>}, {pipeline_mode = #tpu.pipeline_mode<synchronous>, transform_indices = @transform_7, window_bounds = array<i64: 128, 128>}, {pipeline_mode = #tpu.pipeline_mode<synchronous>, transform_indices = @transform_8, window_bounds = array<i64: 1, 128>}, {pipeline_mode = #tpu.pipeline_mode<synchronous>, transform_indices = @transform_9, window_bounds = array<i64: 128, 128>}, {pipeline_mode = #tpu.pipeline_mode<synchronous>, transform_indices = @transform_10, window_bounds = array<i64: 1, 128>}, {transform_indices = @transform_11, window_bounds = array<i64: 64, 128>}]} {
    %c0 = arith.constant 0 : index
    %c0_0 = arith.constant 0 : index
    %0 = vector.load %arg1[%c0, %c0_0] : memref<64x384xbf16, #tpu.memory_space<vmem>>, vector<64x384xbf16>
    %c0_1 = arith.constant 0 : index
    %c0_2 = arith.constant 0 : index
    %c0_3 = arith.constant 0 : index
    %1 = vector.load %arg2[%c0_1, %c0_2, %c0_3] : memref<2x384x1024xbf16, #tpu.memory_space<vmem>>, vector<1x384x1024xbf16>
    %2 = vector.shape_cast %1 : vector<1x384x1024xbf16> to vector<384x1024xbf16>
    %cst = arith.constant dense<0.000000e+00> : vector<64x1024xf32>
    %3 = tpu.matmul %0, %2, %cst {dimension_numbers = #tpu.dot_dimension_numbers<[1], [0], [0], [1], [0, 0, 1, 1], [], []>} : vector<64x384xbf16>, vector<384x1024xbf16>, vector<64x1024xf32> -> vector<64x1024xf32>
    %c0_4 = arith.constant 0 : index
    %c0_5 = arith.constant 0 : index
    %4 = vector.load %arg13[%c0_4, %c0_5] : memref<64x1024xf32, #tpu.memory_space<vmem>>, vector<64x1024xf32>
    tpu.vector_store %arg13[%c0_4, %c0_5], %3 {strides = array<i32>} : memref<64x1024xf32, #tpu.memory_space<vmem>>, vector<64x1024xf32>,
    %c1 = arith.constant 1 : index
    %c0_6 = arith.constant 0 : index
    %c0_7 = arith.constant 0 : index
    %5 = vector.load %arg2[%c1, %c0_6, %c0_7] : memref<2x384x1024xbf16, #tpu.memory_space<vmem>>, vector<1x384x1024xbf16>
    %6 = vector.shape_cast %5 : vector<1x384x1024xbf16> to vector<384x1024xbf16>
    %cst_8 = arith.constant dense<0.000000e+00> : vector<64x1024xf32>
    %7 = tpu.matmul %0, %6, %cst_8 {dimension_numbers = #tpu.dot_dimension_numbers<[1], [0], [0], [1], [0, 0, 1, 1], [], []>} : vector<64x384xbf16>, vector<384x1024xbf16>, vector<64x1024xf32> -> vector<64x1024xf32>
    %c0_9 = arith.constant 0 : index
    %c0_10 = arith.constant 0 : index
    %8 = vector.load %arg13[%c0_9, %c0_10] : memref<64x1024xf32, #tpu.memory_space<vmem>>, vector<63x1024xf32>
    %9 = vector.extract_strided_slice %7 {offsets = [1, 0], sizes = [63, 1024], strides = [1, 1]} : vector<64x1024xf32> to vector<63x1024xf32>
    %10 = arith.addf %8, %9 : vector<63x1024xf32>
    %c0_11 = arith.constant 0 : index
    %c0_12 = arith.constant 0 : index
    %11 = vector.load %arg13[%c0_11, %c0_12] : memref<64x1024xf32, #tpu.memory_space<vmem>>, vector<63x1024xf32>
    tpu.vector_store %arg13[%c0_11, %c0_12], %10 {strides = array<i32>} : memref<64x1024xf32, #tpu.memory_space<vmem>>, vector<63x1024xf32>,
    %c0_13 = arith.constant 0 : index
    %c0_14 = arith.constant 0 : index
    %12 = vector.load %arg13[%c0_13, %c0_14] : memref<64x1024xf32, #tpu.memory_space<vmem>>, vector<64x1024xf32>
    %13 = vector.extract_strided_slice %12 {offsets = [0, 0], sizes = [64, 128], strides = [1, 1]} : vector<64x1024xf32> to vector<64x128xf32>
    %14 = vector.extract_strided_slice %12 {offsets = [0, 256], sizes = [64, 128], strides = [1, 1]} : vector<64x1024xf32> to vector<64x128xf32>
    %15 = arith.maximumf %13, %14 : vector<64x128xf32>
    %16 = vector.extract_strided_slice %12 {offsets = [0, 512], sizes = [64, 128], strides = [1, 1]} : vector<64x1024xf32> to vector<64x128xf32>
    %17 = vector.extract_strided_slice %12 {offsets = [0, 768], sizes = [64, 128], strides = [1, 1]} : vector<64x1024xf32> to vector<64x128xf32>
    %18 = arith.maximumf %16, %17 : vector<64x128xf32>
    %19 = arith.maximumf %15, %18 : vector<64x128xf32>
    %20 = vector.extract_strided_slice %12 {offsets = [0, 128], sizes = [64, 128], strides = [1, 1]} : vector<64x1024xf32> to vector<64x128xf32>
    %21 = vector.extract_strided_slice %12 {offsets = [0, 384], sizes = [64, 128], strides = [1, 1]} : vector<64x1024xf32> to vector<64x128xf32>
    %22 = arith.maximumf %20, %21 : vector<64x128xf32>
    %23 = vector.extract_strided_slice %12 {offsets = [0, 640], sizes = [64, 128], strides = [1, 1]} : vector<64x1024xf32> to vector<64x128xf32>
    %24 = vector.extract_strided_slice %12 {offsets = [0, 896], sizes = [64, 128], strides = [1, 1]} : vector<64x1024xf32> to vector<64x128xf32>
    %25 = arith.maximumf %23, %24 : vector<64x128xf32>
    %26 = arith.maximumf %22, %25 : vector<64x128xf32>
    %27 = tpu.concatenate %19, %26 in 1 : vector<64x128xf32>, vector<64x128xf32> -> vector<64x256xf32>
    %c0_15 = arith.constant 0 : index
    %c0_16 = arith.constant 0 : index
    %28 = vector.load %arg3[%c0_15, %c0_16] : memref<1x256xf32, #tpu.memory_space<vmem>>, vector<1x256xf32>
    %29 = vector.broadcast %28 : vector<1x256xf32> to vector<64x256xf32>
    %30 = arith.addf %27, %29 : vector<64x256xf32>
    %cst_17 = arith.constant 0.000000e+00 : f32
    %31 = vector.broadcast %cst_17 : f32 to vector<64x256xf32>
    %32 = arith.maximumf %30, %31 : vector<64x256xf32>
    %33 = arith.truncf %32 : vector<64x256xf32> to vector<64x256xbf16>
    %c0_18 = arith.constant 0 : index
    %c0_19 = arith.constant 0 : index
    %c0_20 = arith.constant 0 : index
    %34 = vector.load %arg4[%c0_18, %c0_19, %c0_20] : memref<3x256x512xbf16, #tpu.memory_space<vmem>>, vector<1x256x512xbf16>
    %35 = vector.shape_cast %34 : vector<1x256x512xbf16> to vector<256x512xbf16>
    %cst_21 = arith.constant dense<0.000000e+00> : vector<64x512xf32>
    %36 = tpu.matmul %33, %35, %cst_21 {dimension_numbers = #tpu.dot_dimension_numbers<[1], [0], [0], [1], [0, 0, 1, 1], [], []>} : vector<64x256xbf16>, vector<256x512xbf16>, vector<64x512xf32> -> vector<64x512xf32>
    %c0_22 = arith.constant 0 : index
    %c0_23 = arith.constant 0 : index
    %37 = vector.load %arg14[%c0_22, %c0_23] : memref<64x512xf32, #tpu.memory_space<vmem>>, vector<64x512xf32>
    tpu.vector_store %arg14[%c0_22, %c0_23], %36 {strides = array<i32>} : memref<64x512xf32, #tpu.memory_space<vmem>>, vector<64x512xf32>,
    %c1_24 = arith.constant 1 : index
    %c0_25 = arith.constant 0 : index
    %c0_26 = arith.constant 0 : index
    %38 = vector.load %arg4[%c1_24, %c0_25, %c0_26] : memref<3x256x512xbf16, #tpu.memory_space<vmem>>, vector<1x256x512xbf16>
    %39 = vector.shape_cast %38 : vector<1x256x512xbf16> to vector<256x512xbf16>
    %cst_27 = arith.constant dense<0.000000e+00> : vector<64x512xf32>
    %40 = tpu.matmul %33, %39, %cst_27 {dimension_numbers = #tpu.dot_dimension_numbers<[1], [0], [0], [1], [0, 0, 1, 1], [], []>} : vector<64x256xbf16>, vector<256x512xbf16>, vector<64x512xf32> -> vector<64x512xf32>
    %c0_28 = arith.constant 0 : index
    %c0_29 = arith.constant 0 : index
    %41 = vector.load %arg14[%c0_28, %c0_29] : memref<64x512xf32, #tpu.memory_space<vmem>>, vector<63x512xf32>
    %42 = vector.extract_strided_slice %40 {offsets = [1, 0], sizes = [63, 512], strides = [1, 1]} : vector<64x512xf32> to vector<63x512xf32>
    %43 = arith.addf %41, %42 : vector<63x512xf32>
    %c0_30 = arith.constant 0 : index
    %c0_31 = arith.constant 0 : index
    %44 = vector.load %arg14[%c0_30, %c0_31] : memref<64x512xf32, #tpu.memory_space<vmem>>, vector<63x512xf32>
    tpu.vector_store %arg14[%c0_30, %c0_31], %43 {strides = array<i32>} : memref<64x512xf32, #tpu.memory_space<vmem>>, vector<63x512xf32>,
    %c2 = arith.constant 2 : index
    %c0_32 = arith.constant 0 : index
    %c0_33 = arith.constant 0 : index
    %45 = vector.load %arg4[%c2, %c0_32, %c0_33] : memref<3x256x512xbf16, #tpu.memory_space<vmem>>, vector<1x256x512xbf16>
    %46 = vector.shape_cast %45 : vector<1x256x512xbf16> to vector<256x512xbf16>
    %cst_34 = arith.constant dense<0.000000e+00> : vector<64x512xf32>
    %47 = tpu.matmul %33, %46, %cst_34 {dimension_numbers = #tpu.dot_dimension_numbers<[1], [0], [0], [1], [0, 0, 1, 1], [], []>} : vector<64x256xbf16>, vector<256x512xbf16>, vector<64x512xf32> -> vector<64x512xf32>
    %c0_35 = arith.constant 0 : index
    %c0_36 = arith.constant 0 : index
    %48 = vector.load %arg14[%c0_35, %c0_36] : memref<64x512xf32, #tpu.memory_space<vmem>>, vector<62x512xf32>
    %49 = vector.extract_strided_slice %47 {offsets = [2, 0], sizes = [62, 512], strides = [1, 1]} : vector<64x512xf32> to vector<62x512xf32>
    %50 = arith.addf %48, %49 : vector<62x512xf32>
    %c0_37 = arith.constant 0 : index
    %c0_38 = arith.constant 0 : index
    %51 = vector.load %arg14[%c0_37, %c0_38] : memref<64x512xf32, #tpu.memory_space<vmem>>, vector<62x512xf32>
    tpu.vector_store %arg14[%c0_37, %c0_38], %50 {strides = array<i32>} : memref<64x512xf32, #tpu.memory_space<vmem>>, vector<62x512xf32>,
    %c0_39 = arith.constant 0 : index
    %c0_40 = arith.constant 0 : index
    %52 = vector.load %arg14[%c0_39, %c0_40] : memref<64x512xf32, #tpu.memory_space<vmem>>, vector<64x512xf32>
    %53 = vector.extract_strided_slice %52 {offsets = [0, 0], sizes = [64, 128], strides = [1, 1]} : vector<64x512xf32> to vector<64x128xf32>
    %54 = vector.extract_strided_slice %52 {offsets = [0, 128], sizes = [64, 128], strides = [1, 1]} : vector<64x512xf32> to vector<64x128xf32>
    %55 = arith.maximumf %53, %54 : vector<64x128xf32>
    %56 = vector.extract_strided_slice %52 {offsets = [0, 256], sizes = [64, 128], strides = [1, 1]} : vector<64x512xf32> to vector<64x128xf32>
    %57 = vector.extract_strided_slice %52 {offsets = [0, 384], sizes = [64, 128], strides = [1, 1]} : vector<64x512xf32> to vector<64x128xf32>
    %58 = arith.maximumf %56, %57 : vector<64x128xf32>
    %59 = arith.maximumf %55, %58 : vector<64x128xf32>
    %c0_41 = arith.constant 0 : index
    %c0_42 = arith.constant 0 : index
    %60 = vector.load %arg5[%c0_41, %c0_42] : memref<1x128xf32, #tpu.memory_space<vmem>>, vector<1x128xf32>
    %61 = vector.broadcast %60 : vector<1x128xf32> to vector<64x128xf32>
    %62 = arith.addf %59, %61 : vector<64x128xf32>
    %cst_43 = arith.constant 0.000000e+00 : f32
    %63 = vector.broadcast %cst_43 : f32 to vector<64x128xf32>
    %64 = arith.maximumf %62, %63 : vector<64x128xf32>
    %65 = arith.truncf %64 : vector<64x128xf32> to vector<64x128xbf16>
    %c0_44 = arith.constant 0 : index
    %c0_45 = arith.constant 0 : index
    %c0_46 = arith.constant 0 : index
    %66 = vector.load %arg6[%c0_44, %c0_45, %c0_46] : memref<5x128x128xbf16, #tpu.memory_space<vmem>>, vector<1x128x128xbf16>
    %67 = vector.shape_cast %66 : vector<1x128x128xbf16> to vector<128x128xbf16>
    %cst_47 = arith.constant dense<0.000000e+00> : vector<64x128xf32>
    %68 = tpu.matmul %65, %67, %cst_47 {dimension_numbers = #tpu.dot_dimension_numbers<[1], [0], [0], [1], [0, 0, 1, 1], [], []>} : vector<64x128xbf16>, vector<128x128xbf16>, vector<64x128xf32> -> vector<64x128xf32>
    %c0_48 = arith.constant 0 : index
    %c0_49 = arith.constant 0 : index
    %69 = vector.load %arg15[%c0_48, %c0_49] : memref<64x128xf32, #tpu.memory_space<vmem>>, vector<64x128xf32>
    tpu.vector_store %arg15[%c0_48, %c0_49], %68 {strides = array<i32>} : memref<64x128xf32, #tpu.memory_space<vmem>>, vector<64x128xf32>,
    %c1_50 = arith.constant 1 : index
    %c0_51 = arith.constant 0 : index
    %c0_52 = arith.constant 0 : index
    %70 = vector.load %arg6[%c1_50, %c0_51, %c0_52] : memref<5x128x128xbf16, #tpu.memory_space<vmem>>, vector<1x128x128xbf16>
    %71 = vector.shape_cast %70 : vector<1x128x128xbf16> to vector<128x128xbf16>
    %cst_53 = arith.constant dense<0.000000e+00> : vector<64x128xf32>
    %72 = tpu.matmul %65, %71, %cst_53 {dimension_numbers = #tpu.dot_dimension_numbers<[1], [0], [0], [1], [0, 0, 1, 1], [], []>} : vector<64x128xbf16>, vector<128x128xbf16>, vector<64x128xf32> -> vector<64x128xf32>
    %c0_54 = arith.constant 0 : index
    %c0_55 = arith.constant 0 : index
    %73 = vector.load %arg15[%c0_54, %c0_55] : memref<64x128xf32, #tpu.memory_space<vmem>>, vector<63x128xf32>
    %74 = vector.extract_strided_slice %72 {offsets = [1, 0], sizes = [63, 128], strides = [1, 1]} : vector<64x128xf32> to vector<63x128xf32>
    %75 = arith.addf %73, %74 : vector<63x128xf32>
    %c0_56 = arith.constant 0 : index
    %c0_57 = arith.constant 0 : index
    %76 = vector.load %arg15[%c0_56, %c0_57] : memref<64x128xf32, #tpu.memory_space<vmem>>, vector<63x128xf32>
    tpu.vector_store %arg15[%c0_56, %c0_57], %75 {strides = array<i32>} : memref<64x128xf32, #tpu.memory_space<vmem>>, vector<63x128xf32>,
    %c2_58 = arith.constant 2 : index
    %c0_59 = arith.constant 0 : index
    %c0_60 = arith.constant 0 : index
    %77 = vector.load %arg6[%c2_58, %c0_59, %c0_60] : memref<5x128x128xbf16, #tpu.memory_space<vmem>>, vector<1x128x128xbf16>
    %78 = vector.shape_cast %77 : vector<1x128x128xbf16> to vector<128x128xbf16>
    %cst_61 = arith.constant dense<0.000000e+00> : vector<64x128xf32>
    %79 = tpu.matmul %65, %78, %cst_61 {dimension_numbers = #tpu.dot_dimension_numbers<[1], [0], [0], [1], [0, 0, 1, 1], [], []>} : vector<64x128xbf16>, vector<128x128xbf16>, vector<64x128xf32> -> vector<64x128xf32>
    %c0_62 = arith.constant 0 : index
    %c0_63 = arith.constant 0 : index
    %80 = vector.load %arg15[%c0_62, %c0_63] : memref<64x128xf32, #tpu.memory_space<vmem>>, vector<62x128xf32>
    %81 = vector.extract_strided_slice %79 {offsets = [2, 0], sizes = [62, 128], strides = [1, 1]} : vector<64x128xf32> to vector<62x128xf32>
    %82 = arith.addf %80, %81 : vector<62x128xf32>
    %c0_64 = arith.constant 0 : index
    %c0_65 = arith.constant 0 : index
    %83 = vector.load %arg15[%c0_64, %c0_65] : memref<64x128xf32, #tpu.memory_space<vmem>>, vector<62x128xf32>
    tpu.vector_store %arg15[%c0_64, %c0_65], %82 {strides = array<i32>} : memref<64x128xf32, #tpu.memory_space<vmem>>, vector<62x128xf32>,
    %c3 = arith.constant 3 : index
    %c0_66 = arith.constant 0 : index
    %c0_67 = arith.constant 0 : index
    %84 = vector.load %arg6[%c3, %c0_66, %c0_67] : memref<5x128x128xbf16, #tpu.memory_space<vmem>>, vector<1x128x128xbf16>
    %85 = vector.shape_cast %84 : vector<1x128x128xbf16> to vector<128x128xbf16>
    %cst_68 = arith.constant dense<0.000000e+00> : vector<64x128xf32>
    %86 = tpu.matmul %65, %85, %cst_68 {dimension_numbers = #tpu.dot_dimension_numbers<[1], [0], [0], [1], [0, 0, 1, 1], [], []>} : vector<64x128xbf16>, vector<128x128xbf16>, vector<64x128xf32> -> vector<64x128xf32>
    %c0_69 = arith.constant 0 : index
    %c0_70 = arith.constant 0 : index
    %87 = vector.load %arg15[%c0_69, %c0_70] : memref<64x128xf32, #tpu.memory_space<vmem>>, vector<61x128xf32>
    %88 = vector.extract_strided_slice %86 {offsets = [3, 0], sizes = [61, 128], strides = [1, 1]} : vector<64x128xf32> to vector<61x128xf32>
    %89 = arith.addf %87, %88 : vector<61x128xf32>
    %c0_71 = arith.constant 0 : index
    %c0_72 = arith.constant 0 : index
    %90 = vector.load %arg15[%c0_71, %c0_72] : memref<64x128xf32, #tpu.memory_space<vmem>>, vector<61x128xf32>
    tpu.vector_store %arg15[%c0_71, %c0_72], %89 {strides = array<i32>} : memref<64x128xf32, #tpu.memory_space<vmem>>, vector<61x128xf32>,
    %c4 = arith.constant 4 : index
    %c0_73 = arith.constant 0 : index
    %c0_74 = arith.constant 0 : index
    %91 = vector.load %arg6[%c4, %c0_73, %c0_74] : memref<5x128x128xbf16, #tpu.memory_space<vmem>>, vector<1x128x128xbf16>
    %92 = vector.shape_cast %91 : vector<1x128x128xbf16> to vector<128x128xbf16>
    %cst_75 = arith.constant dense<0.000000e+00> : vector<64x128xf32>
    %93 = tpu.matmul %65, %92, %cst_75 {dimension_numbers = #tpu.dot_dimension_numbers<[1], [0], [0], [1], [0, 0, 1, 1], [], []>} : vector<64x128xbf16>, vector<128x128xbf16>, vector<64x128xf32> -> vector<64x128xf32>
    %c0_76 = arith.constant 0 : index
    %c0_77 = arith.constant 0 : index
    %94 = vector.load %arg15[%c0_76, %c0_77] : memref<64x128xf32, #tpu.memory_space<vmem>>, vector<60x128xf32>
    %95 = vector.extract_strided_slice %93 {offsets = [4, 0], sizes = [60, 128], strides = [1, 1]} : vector<64x128xf32> to vector<60x128xf32>
    %96 = arith.addf %94, %95 : vector<60x128xf32>
    %c0_78 = arith.constant 0 : index
    %c0_79 = arith.constant 0 : index
    %97 = vector.load %arg15[%c0_78, %c0_79] : memref<64x128xf32, #tpu.memory_space<vmem>>, vector<60x128xf32>
    tpu.vector_store %arg15[%c0_78, %c0_79], %96 {strides = array<i32>} : memref<64x128xf32, #tpu.memory_space<vmem>>, vector<60x128xf32>,
    %c0_80 = arith.constant 0 : index
    %c0_81 = arith.constant 0 : index
    %98 = vector.load %arg15[%c0_80, %c0_81] : memref<64x128xf32, #tpu.memory_space<vmem>>, vector<64x128xf32>
    %c0_82 = arith.constant 0 : index
    %c0_83 = arith.constant 0 : index
    %99 = vector.load %arg7[%c0_82, %c0_83] : memref<1x128xf32, #tpu.memory_space<vmem>>, vector<1x128xf32>
    %100 = vector.broadcast %99 : vector<1x128xf32> to vector<64x128xf32>
    %101 = arith.addf %98, %100 : vector<64x128xf32>
    %cst_84 = arith.constant 0.000000e+00 : f32
    %102 = vector.broadcast %cst_84 : f32 to vector<64x128xf32>
    %103 = arith.maximumf %101, %102 : vector<64x128xf32>
    %104 = arith.truncf %103 : vector<64x128xf32> to vector<64x128xbf16>
    %c0_85 = arith.constant 0 : index
    %c0_86 = arith.constant 0 : index
    %105 = vector.load %arg8[%c0_85, %c0_86] : memref<128x128xbf16, #tpu.memory_space<vmem>>, vector<128x128xbf16>
    %cst_87 = arith.constant dense<0.000000e+00> : vector<64x128xf32>
    %106 = tpu.matmul %104, %105, %cst_87 {dimension_numbers = #tpu.dot_dimension_numbers<[1], [0], [0], [1], [0, 0, 1, 1], [], []>} : vector<64x128xbf16>, vector<128x128xbf16>, vector<64x128xf32> -> vector<64x128xf32>
    %c0_88 = arith.constant 0 : index
    %c0_89 = arith.constant 0 : index
    %107 = vector.load %arg9[%c0_88, %c0_89] : memref<1x128xf32, #tpu.memory_space<vmem>>, vector<1x128xf32>
    %108 = vector.broadcast %107 : vector<1x128xf32> to vector<64x128xf32>
    %109 = arith.addf %106, %108 : vector<64x128xf32>
    %cst_90 = arith.constant 0.000000e+00 : f32
    %110 = vector.broadcast %cst_90 : f32 to vector<64x128xf32>
    %111 = arith.maximumf %109, %110 : vector<64x128xf32>
    %112 = arith.truncf %111 : vector<64x128xf32> to vector<64x128xbf16>
    %c0_91 = arith.constant 0 : index
    %c0_92 = arith.constant 0 : index
    %113 = vector.load %arg10[%c0_91, %c0_92] : memref<128x128xbf16, #tpu.memory_space<vmem>>, vector<128x128xbf16>
    %cst_93 = arith.constant dense<0.000000e+00> : vector<64x128xf32>
    %114 = tpu.matmul %112, %113, %cst_93 {dimension_numbers = #tpu.dot_dimension_numbers<[1], [0], [0], [1], [0, 0, 1, 1], [], []>} : vector<64x128xbf16>, vector<128x128xbf16>, vector<64x128xf32> -> vector<64x128xf32>
    %c0_94 = arith.constant 0 : index
    %c0_95 = arith.constant 0 : index
    %115 = vector.load %arg11[%c0_94, %c0_95] : memref<1x128xf32, #tpu.memory_space<vmem>>, vector<1x128xf32>
    %116 = vector.broadcast %115 : vector<1x128xf32> to vector<64x128xf32>
    %117 = arith.addf %114, %116 : vector<64x128xf32>
    %c0_96 = arith.constant 0 : index
    %c0_97 = arith.constant 0 : index
    %118 = vector.load %arg12[%c0_96, %c0_97] : memref<64x128xf32, #tpu.memory_space<vmem>>, vector<64x128xf32>
    tpu.vector_store %arg12[%c0_96, %c0_97], %117 {strides = array<i32>} : memref<64x128xf32, #tpu.memory_space<vmem>>, vector<64x128xf32>,
    return
  }
  func.func @transform_0(%arg0: i32) -> (i32, i32) {
    %c0_i32 = arith.constant 0 : i32
    %c0_i32_0 = arith.constant 0 : i32
    return %arg0, %c0_i32 : i32, i32
  }
  func.func @transform_1(%arg0: i32) -> (i32, i32, i32) {
    %c0_i32 = arith.constant 0 : i32
    %c0_i32_0 = arith.constant 0 : i32
    %c0_i32_1 = arith.constant 0 : i32
    %c0_i32_2 = arith.constant 0 : i32
    return %c0_i32, %c0_i32_0, %c0_i32_1 : i32, i32, i32
  }
  func.func @transform_2(%arg0: i32) -> (i32, i32) {
    %c0_i32 = arith.constant 0 : i32
    %c0_i32_0 = arith.constant 0 : i32
    %c0_i32_1 = arith.constant 0 : i32
    return %c0_i32, %c0_i32_0 : i32, i32
  }
  func.func @transform_3(%arg0: i32) -> (i32, i32, i32) {
    %c0_i32 = arith.constant 0 : i32
    %c0_i32_0 = arith.constant 0 : i32
    %c0_i32_1 = arith.constant 0 : i32
    %c0_i32_2 = arith.constant 0 : i32
    return %c0_i32, %c0_i32_0, %c0_i32_1 : i32, i32, i32
  }
  func.func @transform_4(%arg0: i32) -> (i32, i32) {
    %c0_i32 = arith.constant 0 : i32
    %c0_i32_0 = arith.constant 0 : i32
    %c0_i32_1 = arith.constant 0 : i32
    return %c0_i32, %c0_i32_0 : i32, i32
  }
  func.func @transform_5(%arg0: i32) -> (i32, i32, i32) {
    %c0_i32 = arith.constant 0 : i32
    %c0_i32_0 = arith.constant 0 : i32
    %c0_i32_1 = arith.constant 0 : i32
    %c0_i32_2 = arith.constant 0 : i32
    return %c0_i32, %c0_i32_0, %c0_i32_1 : i32, i32, i32
  }
  func.func @transform_6(%arg0: i32) -> (i32, i32) {
    %c0_i32 = arith.constant 0 : i32
    %c0_i32_0 = arith.constant 0 : i32
    %c0_i32_1 = arith.constant 0 : i32
    return %c0_i32, %c0_i32_0 : i32, i32
  }
  func.func @transform_7(%arg0: i32) -> (i32, i32) {
    %c0_i32 = arith.constant 0 : i32
    %c0_i32_0 = arith.constant 0 : i32
    %c0_i32_1 = arith.constant 0 : i32
    return %c0_i32, %c0_i32_0 : i32, i32
  }
  func.func @transform_8(%arg0: i32) -> (i32, i32) {
    %c0_i32 = arith.constant 0 : i32
    %c0_i32_0 = arith.constant 0 : i32
    %c0_i32_1 = arith.constant 0 : i32
    return %c0_i32, %c0_i32_0 : i32, i32
  }
  func.func @transform_9(%arg0: i32) -> (i32, i32) {
    %c0_i32 = arith.constant 0 : i32
    %c0_i32_0 = arith.constant 0 : i32
    %c0_i32_1 = arith.constant 0 : i32
    return %c0_i32, %c0_i32_0 : i32, i32
  }
  func.func @transform_10(%arg0: i32) -> (i32, i32) {
    %c0_i32 = arith.constant 0 : i32
    %c0_i32_0 = arith.constant 0 : i32
    %c0_i32_1 = arith.constant 0 : i32
    return %c0_i32, %c0_i32_0 : i32, i32
  }
  func.func @transform_11(%arg0: i32) -> (i32, i32) {
    %c0_i32 = arith.constant 0 : i32
    %c0_i32_0 = arith.constant 0 : i32
    return %arg0, %c0_i32 : i32, i32
  }
}

</mosaic_0001>

<llo_original>
// kernel: tile.13
$region0: #{tile.13}
  #allocation0 [shape = 's32[1]{0}', space=sflag, size = 0x4, scoped, tag = 'scoped memory for tile.13']
  %s0 = inlined_call_operand.vmem [shape: f32[6], index: 0, kind: input, shape index: {}]
  %s1 = inlined_call_operand.vmem [shape: f32[14,6], index: 1, kind: output, shape index: {}]
  // Predicated region
  $region2: #{tile.13} parent=0 // pred_check
    _
  $region3: #{tile.13} parent=0 // pred_check_branch
    %3 = sbr.rel (0) target = $region5
  $region4: #{tile.13} parent=0 // pred_region
    _
  $region5: #{tile.13} parent=0 // pred_fallthru
    _
  %v4 = vld [vmem:[%s0] ss:$0 sm:$0xff]
  %5 = vst [vmem:[%s1] sm:$0xff] %v4
  %s6 = scalar_lea.vmem %s1, 8
  %7 = vst [vmem:[%s6] sm:$0xff] %v4

// kernel: mlp_forward.1
$region0: #{mlp_forward.1}
  #allocation0 [shape = 'u32[]', space=smem, size = 0x4, offset = 0x4, fixed_abs, tag = 'smem constant byte address 0x4 - core index']
  #allocation1 [shape = 'u32[144,128]{1,0:T(1,128)}', space=vmem, size = 0x12000, scoped, tag = 'internal scratch']
  #allocation2 [shape = 'f32[64,1024]{1,0:T(8,128)}', space=vmem, size = 0x40000, scoped, tag = 'scratch operand']
  #allocation3 [shape = 'f32[64,512]{1,0:T(8,128)}', space=vmem, size = 0x20000, scoped, tag = 'scratch operand']
  #allocation4 [shape = 'f32[64,128]{1,0:T(8,128)}', space=vmem, size = 0x8000, scoped, tag = 'scratch operand']
  %s0 = inlined_call_operand.vmem [shape: bf16[64,384], index: 0, kind: input, shape index: {}]
  %s1 = inlined_call_operand.vmem [shape: bf16[2,384,1024], index: 1, kind: input, shape index: {}]
  %s2 = inlined_call_operand.vmem [shape: f32[1,256], index: 2, kind: input, shape index: {}]
  %s3 = inlined_call_operand.vmem [shape: bf16[3,256,512], index: 3, kind: input, shape index: {}]
  %s4 = inlined_call_operand.vmem [shape: f32[1,128], index: 4, kind: input, shape index: {}]
  %s5 = inlined_call_operand.vmem [shape: bf16[5,128,128], index: 5, kind: input, shape index: {}]
  %s6 = inlined_call_operand.vmem [shape: f32[1,128], index: 6, kind: input, shape index: {}]
  %s7 = inlined_call_operand.vmem [shape: bf16[128,128], index: 7, kind: input, shape index: {}]
  %s8 = inlined_call_operand.vmem [shape: f32[1,128], index: 8, kind: input, shape index: {}]
  %s9 = inlined_call_operand.vmem [shape: bf16[128,128], index: 9, kind: input, shape index: {}]
  %s10 = inlined_call_operand.vmem [shape: f32[1,128], index: 10, kind: input, shape index: {}]
  %s11 = inlined_call_operand.vmem [shape: f32[64,128], index: 11, kind: output, shape index: {}]
  %s12 = sld [smem:[#allocation0]]
  $region54: #{mlp_forward.1} parent=0
    _
  %s14 = ssub.s32 1, %s12
  %s15 = scalar_select 0, %s14, %s12
  // Predicated region
  $region2: #{mlp_forward.1} parent=0 // pred_check
    _
  $region3: #{mlp_forward.1} parent=0 // pred_check_branch
    %17 = sbr.rel (0) target = $region5
  $region4: #{mlp_forward.1} parent=0 // pred_region
    _
  $region5: #{mlp_forward.1} parent=0 // pred_fallthru
    _
  // Predicated region
  $region6: #{mlp_forward.1} parent=0 // pred_check
    _
  $region7: #{mlp_forward.1} parent=0 // pred_check_branch
    %19 = sbr.rel (0) target = $region9
  $region8: #{mlp_forward.1} parent=0 // pred_region
    _
  $region9: #{mlp_forward.1} parent=0 // pred_fallthru
    _
  // Predicated region
  $region10: #{mlp_forward.1} parent=0 // pred_check
    _
  $region11: #{mlp_forward.1} parent=0 // pred_check_branch
    %21 = sbr.rel (0) target = $region13
  $region12: #{mlp_forward.1} parent=0 // pred_region
    _
  $region13: #{mlp_forward.1} parent=0 // pred_fallthru
    _
  // Predicated region
  $region14: #{mlp_forward.1} parent=0 // pred_check
    _
  $region15: #{mlp_forward.1} parent=0 // pred_check_branch
    %23 = sbr.rel (0) target = $region17
  $region16: #{mlp_forward.1} parent=0 // pred_region
    _
  $region17: #{mlp_forward.1} parent=0 // pred_fallthru
    _
  // Predicated region
  $region18: #{mlp_forward.1} parent=0 // pred_check
    _
  $region19: #{mlp_forward.1} parent=0 // pred_check_branch
    %25 = sbr.rel (0) target = $region21
  $region20: #{mlp_forward.1} parent=0 // pred_region
    _
  $region21: #{mlp_forward.1} parent=0 // pred_fallthru
    _
  // Predicated region
  $region22: #{mlp_forward.1} parent=0 // pred_check
    _
  $region23: #{mlp_forward.1} parent=0 // pred_check_branch
    %27 = sbr.rel (0) target = $region25
  $region24: #{mlp_forward.1} parent=0 // pred_region
    _
  $region25: #{mlp_forward.1} parent=0 // pred_fallthru
    _
  // Predicated region
  $region26: #{mlp_forward.1} parent=0 // pred_check
    _
  $region27: #{mlp_forward.1} parent=0 // pred_check_branch
    %29 = sbr.rel (0) target = $region29
  $region28: #{mlp_forward.1} parent=0 // pred_region
    _
  $region29: #{mlp_forward.1} parent=0 // pred_fallthru
    _
  // Predicated region
  $region30: #{mlp_forward.1} parent=0 // pred_check
    _
  $region31: #{mlp_forward.1} parent=0 // pred_check_branch
    %31 = sbr.rel (0) target = $region33
  $region32: #{mlp_forward.1} parent=0 // pred_region
    _
  $region33: #{mlp_forward.1} parent=0 // pred_fallthru
    _
  // Predicated region
  $region34: #{mlp_forward.1} parent=0 // pred_check
    _
  $region35: #{mlp_forward.1} parent=0 // pred_check_branch
    %33 = sbr.rel (0) target = $region37
  $region36: #{mlp_forward.1} parent=0 // pred_region
    _
  $region37: #{mlp_forward.1} parent=0 // pred_fallthru
    _
  // Predicated region
  $region38: #{mlp_forward.1} parent=0 // pred_check
    _
  $region39: #{mlp_forward.1} parent=0 // pred_check_branch
    %35 = sbr.rel (0) target = $region41
  $region40: #{mlp_forward.1} parent=0 // pred_region
    _
  $region41: #{mlp_forward.1} parent=0 // pred_fallthru
    _
  // Predicated region
  $region42: #{mlp_forward.1} parent=0 // pred_check
    _
  $region43: #{mlp_forward.1} parent=0 // pred_check_branch
    %37 = sbr.rel (0) target = $region45
  $region44: #{mlp_forward.1} parent=0 // pred_region
    _
  $region45: #{mlp_forward.1} parent=0 // pred_fallthru
    _
  %v39 = vld [vmem:[%s0] sm:$0xff]
  %v40 = vld [vmem:[%s0 + $0x8] sm:$0xf]
  %v41 = vld [vmem:[%s0 + $0xc] sm:$0xff]
  %v42 = vld [vmem:[%s0 + $0x14] sm:$0xf]
  %v43 = vld [vmem:[%s0 + $0x18] sm:$0xff]
  %v44 = vld [vmem:[%s0 + $0x20] sm:$0xf]
  %v45 = vld [vmem:[%s0 + $0x24] sm:$0xff]
  %v46 = vld [vmem:[%s0 + $0x2c] sm:$0xf]
  %v47 = vld [vmem:[%s0 + $0x30] sm:$0xff]
  %v48 = vld [vmem:[%s0 + $0x38] sm:$0xf]
  %v49 = vld [vmem:[%s0 + $0x3c] sm:$0xff]
  %v50 = vld [vmem:[%s0 + $0x44] sm:$0xf]
  %v51 = vld [vmem:[%s0 + $0x48] sm:$0xff]
  %v52 = vld [vmem:[%s0 + $0x50] sm:$0xf]
  %v53 = vld [vmem:[%s0 + $0x54] sm:$0xff]
  %v54 = vld [vmem:[%s0 + $0x5c] sm:$0xf]
  %v55 = vld [vmem:[%s1] sm:$0xff]
  %v56 = vld [vmem:[%s1 + $0x8] sm:$0xff]
  %v57 = vld [vmem:[%s1 + $0x10] sm:$0xff]
  %v58 = vld [vmem:[%s1 + $0x18] sm:$0xff]
  %v59 = vld [vmem:[%s1 + $0x20] sm:$0xff]
  %v60 = vld [vmem:[%s1 + $0x28] sm:$0xff]
  %v61 = vld [vmem:[%s1 + $0x30] sm:$0xff]
  %v62 = vld [vmem:[%s1 + $0x38] sm:$0xff]
  %v63 = vld [vmem:[%s1 + $0x40] sm:$0xff]
  %v64 = vld [vmem:[%s1 + $0x48] sm:$0xff]
  %v65 = vld [vmem:[%s1 + $0x50] sm:$0xff]
  %v66 = vld [vmem:[%s1 + $0x58] sm:$0xff]
  %v67 = vld [vmem:[%s1 + $0x60] sm:$0xff]
  %v68 = vld [vmem:[%s1 + $0x68] sm:$0xff]
  %v69 = vld [vmem:[%s1 + $0x70] sm:$0xff]
  %v70 = vld [vmem:[%s1 + $0x78] sm:$0xff]
  %v71 = vld [vmem:[%s1 + $0x80] sm:$0xff]
  %v72 = vld [vmem:[%s1 + $0x88] sm:$0xff]
  %v73 = vld [vmem:[%s1 + $0x90] sm:$0xff]
  %v74 = vld [vmem:[%s1 + $0x98] sm:$0xff]
  %v75 = vld [vmem:[%s1 + $0xa0] sm:$0xff]
  %v76 = vld [vmem:[%s1 + $0xa8] sm:$0xff]
  %v77 = vld [vmem:[%s1 + $0xb0] sm:$0xff]
  %v78 = vld [vmem:[%s1 + $0xb8] sm:$0xff]
  %v79 = vld [vmem:[%s1 + $0xc0] sm:$0xff]
  %v80 = vld [vmem:[%s1 + $0xc8] sm:$0xff]
  %v81 = vld [vmem:[%s1 + $0xd0] sm:$0xff]
  %v82 = vld [vmem:[%s1 + $0xd8] sm:$0xff]
  %v83 = vld [vmem:[%s1 + $0xe0] sm:$0xff]
  %v84 = vld [vmem:[%s1 + $0xe8] sm:$0xff]
  %v85 = vld [vmem:[%s1 + $0xf0] sm:$0xff]
  %v86 = vld [vmem:[%s1 + $0xf8] sm:$0xff]
  %v87 = vld [vmem:[%s1 + $0x100] sm:$0xff]
  %v88 = vld [vmem:[%s1 + $0x108] sm:$0xff]
  %v89 = vld [vmem:[%s1 + $0x110] sm:$0xff]
  %v90 = vld [vmem:[%s1 + $0x118] sm:$0xff]
  %v91 = vld [vmem:[%s1 + $0x120] sm:$0xff]
  %v92 = vld [vmem:[%s1 + $0x128] sm:$0xff]
  %v93 = vld [vmem:[%s1 + $0x130] sm:$0xff]
  %v94 = vld [vmem:[%s1 + $0x138] sm:$0xff]
  %v95 = vld [vmem:[%s1 + $0x140] sm:$0xff]
  %v96 = vld [vmem:[%s1 + $0x148] sm:$0xff]
  %v97 = vld [vmem:[%s1 + $0x150] sm:$0xff]
  %v98 = vld [vmem:[%s1 + $0x158] sm:$0xff]
  %v99 = vld [vmem:[%s1 + $0x160] sm:$0xff]
  %v100 = vld [vmem:[%s1 + $0x168] sm:$0xff]
  %v101 = vld [vmem:[%s1 + $0x170] sm:$0xff]
  %v102 = vld [vmem:[%s1 + $0x178] sm:$0xff]
  %v103 = vld [vmem:[%s1 + $0x180] sm:$0xff]
  %v104 = vld [vmem:[%s1 + $0x188] sm:$0xff]
  %v105 = vld [vmem:[%s1 + $0x190] sm:$0xff]
  %v106 = vld [vmem:[%s1 + $0x198] sm:$0xff]
  %v107 = vld [vmem:[%s1 + $0x1a0] sm:$0xff]
  %v108 = vld [vmem:[%s1 + $0x1a8] sm:$0xff]
  %v109 = vld [vmem:[%s1 + $0x1b0] sm:$0xff]
  %v110 = vld [vmem:[%s1 + $0x1b8] sm:$0xff]
  %v111 = vld [vmem:[%s1 + $0x1c0] sm:$0xff]
  %v112 = vld [vmem:[%s1 + $0x1c8] sm:$0xff]
  %v113 = vld [vmem:[%s1 + $0x1d0] sm:$0xff]
  %v114 = vld [vmem:[%s1 + $0x1d8] sm:$0xff]
  %v115 = vld [vmem:[%s1 + $0x1e0] sm:$0xff]
  %v116 = vld [vmem:[%s1 + $0x1e8] sm:$0xff]
  %v117 = vld [vmem:[%s1 + $0x1f0] sm:$0xff]
  %v118 = vld [vmem:[%s1 + $0x1f8] sm:$0xff]
  %v119 = vld [vmem:[%s1 + $0x200] sm:$0xff]
  %v120 = vld [vmem:[%s1 + $0x208] sm:$0xff]
  %v121 = vld [vmem:[%s1 + $0x210] sm:$0xff]
  %v122 = vld [vmem:[%s1 + $0x218] sm:$0xff]
  %v123 = vld [vmem:[%s1 + $0x220] sm:$0xff]
  %v124 = vld [vmem:[%s1 + $0x228] sm:$0xff]
  %v125 = vld [vmem:[%s1 + $0x230] sm:$0xff]
  %v126 = vld [vmem:[%s1 + $0x238] sm:$0xff]
  %v127 = vld [vmem:[%s1 + $0x240] sm:$0xff]
  %v128 = vld [vmem:[%s1 + $0x248] sm:$0xff]
  %v129 = vld [vmem:[%s1 + $0x250] sm:$0xff]
  %v130 = vld [vmem:[%s1 + $0x258] sm:$0xff]
  %v131 = vld [vmem:[%s1 + $0x260] sm:$0xff]
  %v132 = vld [vmem:[%s1 + $0x268] sm:$0xff]
  %v133 = vld [vmem:[%s1 + $0x270] sm:$0xff]
  %v134 = vld [vmem:[%s1 + $0x278] sm:$0xff]
  %v135 = vld [vmem:[%s1 + $0x280] sm:$0xff]
  %v136 = vld [vmem:[%s1 + $0x288] sm:$0xff]
  %v137 = vld [vmem:[%s1 + $0x290] sm:$0xff]
  %v138 = vld [vmem:[%s1 + $0x298] sm:$0xff]
  %v139 = vld [vmem:[%s1 + $0x2a0] sm:$0xff]
  %v140 = vld [vmem:[%s1 + $0x2a8] sm:$0xff]
  %v141 = vld [vmem:[%s1 + $0x2b0] sm:$0xff]
  %v142 = vld [vmem:[%s1 + $0x2b8] sm:$0xff]
  %v143 = vld [vmem:[%s1 + $0x2c0] sm:$0xff]
  %v144 = vld [vmem:[%s1 + $0x2c8] sm:$0xff]
  %v145 = vld [vmem:[%s1 + $0x2d0] sm:$0xff]
  %v146 = vld [vmem:[%s1 + $0x2d8] sm:$0xff]
  %v147 = vld [vmem:[%s1 + $0x2e0] sm:$0xff]
  %v148 = vld [vmem:[%s1 + $0x2e8] sm:$0xff]
  %v149 = vld [vmem:[%s1 + $0x2f0] sm:$0xff]
  %v150 = vld [vmem:[%s1 + $0x2f8] sm:$0xff]
  %v151 = vld [vmem:[%s1 + $0x300] sm:$0xff]
  %v152 = vld [vmem:[%s1 + $0x308] sm:$0xff]
  %v153 = vld [vmem:[%s1 + $0x310] sm:$0xff]
  %v154 = vld [vmem:[%s1 + $0x318] sm:$0xff]
  %v155 = vld [vmem:[%s1 + $0x320] sm:$0xff]
  %v156 = vld [vmem:[%s1 + $0x328] sm:$0xff]
  %v157 = vld [vmem:[%s1 + $0x330] sm:$0xff]
  %v158 = vld [vmem:[%s1 + $0x338] sm:$0xff]
  %v159 = vld [vmem:[%s1 + $0x340] sm:$0xff]
  %v160 = vld [vmem:[%s1 + $0x348] sm:$0xff]
  %v161 = vld [vmem:[%s1 + $0x350] sm:$0xff]
  %v162 = vld [vmem:[%s1 + $0x358] sm:$0xff]
  %v163 = vld [vmem:[%s1 + $0x360] sm:$0xff]
  %v164 = vld [vmem:[%s1 + $0x368] sm:$0xff]
  %v165 = vld [vmem:[%s1 + $0x370] sm:$0xff]
  %v166 = vld [vmem:[%s1 + $0x378] sm:$0xff]
  %v167 = vld [vmem:[%s1 + $0x380] sm:$0xff]
  %v168 = vld [vmem:[%s1 + $0x388] sm:$0xff]
  %v169 = vld [vmem:[%s1 + $0x390] sm:$0xff]
  %v170 = vld [vmem:[%s1 + $0x398] sm:$0xff]
  %v171 = vld [vmem:[%s1 + $0x3a0] sm:$0xff]
  %v172 = vld [vmem:[%s1 + $0x3a8] sm:$0xff]
  %v173 = vld [vmem:[%s1 + $0x3b0] sm:$0xff]
  %v174 = vld [vmem:[%s1 + $0x3b8] sm:$0xff]
  %v175 = vld [vmem:[%s1 + $0x3c0] sm:$0xff]
  %v176 = vld [vmem:[%s1 + $0x3c8] sm:$0xff]
  %v177 = vld [vmem:[%s1 + $0x3d0] sm:$0xff]
  %v178 = vld [vmem:[%s1 + $0x3d8] sm:$0xff]
  %v179 = vld [vmem:[%s1 + $0x3e0] sm:$0xff]
  %v180 = vld [vmem:[%s1 + $0x3e8] sm:$0xff]
  %v181 = vld [vmem:[%s1 + $0x3f0] sm:$0xff]
  %v182 = vld [vmem:[%s1 + $0x3f8] sm:$0xff]
  %v183 = vld [vmem:[%s1 + $0x400] sm:$0xff]
  %v184 = vld [vmem:[%s1 + $0x408] sm:$0xff]
  %v185 = vld [vmem:[%s1 + $0x410] sm:$0xff]
  %v186 = vld [vmem:[%s1 + $0x418] sm:$0xff]
  %v187 = vld [vmem:[%s1 + $0x420] sm:$0xff]
  %v188 = vld [vmem:[%s1 + $0x428] sm:$0xff]
  %v189 = vld [vmem:[%s1 + $0x430] sm:$0xff]
  %v190 = vld [vmem:[%s1 + $0x438] sm:$0xff]
  %v191 = vld [vmem:[%s1 + $0x440] sm:$0xff]
  %v192 = vld [vmem:[%s1 + $0x448] sm:$0xff]
  %v193 = vld [vmem:[%s1 + $0x450] sm:$0xff]
  %v194 = vld [vmem:[%s1 + $0x458] sm:$0xff]
  %v195 = vld [vmem:[%s1 + $0x460] sm:$0xff]
  %v196 = vld [vmem:[%s1 + $0x468] sm:$0xff]
  %v197 = vld [vmem:[%s1 + $0x470] sm:$0xff]
  %v198 = vld [vmem:[%s1 + $0x478] sm:$0xff]
  %v199 = vld [vmem:[%s1 + $0x480] sm:$0xff]
  %v200 = vld [vmem:[%s1 + $0x488] sm:$0xff]
  %v201 = vld [vmem:[%s1 + $0x490] sm:$0xff]
  %v202 = vld [vmem:[%s1 + $0x498] sm:$0xff]
  %v203 = vld [vmem:[%s1 + $0x4a0] sm:$0xff]
  %v204 = vld [vmem:[%s1 + $0x4a8] sm:$0xff]
  %v205 = vld [vmem:[%s1 + $0x4b0] sm:$0xff]
  %v206 = vld [vmem:[%s1 + $0x4b8] sm:$0xff]
  %v207 = vld [vmem:[%s1 + $0x4c0] sm:$0xff]
  %v208 = vld [vmem:[%s1 + $0x4c8] sm:$0xff]
  %v209 = vld [vmem:[%s1 + $0x4d0] sm:$0xff]
  %v210 = vld [vmem:[%s1 + $0x4d8] sm:$0xff]
  %v211 = vld [vmem:[%s1 + $0x4e0] sm:$0xff]
  %v212 = vld [vmem:[%s1 + $0x4e8] sm:$0xff]
  %v213 = vld [vmem:[%s1 + $0x4f0] sm:$0xff]
  %v214 = vld [vmem:[%s1 + $0x4f8] sm:$0xff]
  %v215 = vld [vmem:[%s1 + $0x500] sm:$0xff]
  %v216 = vld [vmem:[%s1 + $0x508] sm:$0xff]
  %v217 = vld [vmem:[%s1 + $0x510] sm:$0xff]
  %v218 = vld [vmem:[%s1 + $0x518] sm:$0xff]
  %v219 = vld [vmem:[%s1 + $0x520] sm:$0xff]
  %v220 = vld [vmem:[%s1 + $0x528] sm:$0xff]
  %v221 = vld [vmem:[%s1 + $0x530] sm:$0xff]
  %v222 = vld [vmem:[%s1 + $0x538] sm:$0xff]
  %v223 = vld [vmem:[%s1 + $0x540] sm:$0xff]
  %v224 = vld [vmem:[%s1 + $0x548] sm:$0xff]
  %v225 = vld [vmem:[%s1 + $0x550] sm:$0xff]
  %v226 = vld [vmem:[%s1 + $0x558] sm:$0xff]
  %v227 = vld [vmem:[%s1 + $0x560] sm:$0xff]
  %v228 = vld [vmem:[%s1 + $0x568] sm:$0xff]
  %v229 = vld [vmem:[%s1 + $0x570] sm:$0xff]
  %v230 = vld [vmem:[%s1 + $0x578] sm:$0xff]
  %v231 = vld [vmem:[%s1 + $0x580] sm:$0xff]
  %v232 = vld [vmem:[%s1 + $0x588] sm:$0xff]
  %v233 = vld [vmem:[%s1 + $0x590] sm:$0xff]
  %v234 = vld [vmem:[%s1 + $0x598] sm:$0xff]
  %v235 = vld [vmem:[%s1 + $0x5a0] sm:$0xff]
  %v236 = vld [vmem:[%s1 + $0x5a8] sm:$0xff]
  %v237 = vld [vmem:[%s1 + $0x5b0] sm:$0xff]
  %v238 = vld [vmem:[%s1 + $0x5b8] sm:$0xff]
  %v239 = vld [vmem:[%s1 + $0x5c0] sm:$0xff]
  %v240 = vld [vmem:[%s1 + $0x5c8] sm:$0xff]
  %v241 = vld [vmem:[%s1 + $0x5d0] sm:$0xff]
  %v242 = vld [vmem:[%s1 + $0x5d8] sm:$0xff]
  %v243 = vld [vmem:[%s1 + $0x5e0] sm:$0xff]
  %v244 = vld [vmem:[%s1 + $0x5e8] sm:$0xff]
  %v245 = vld [vmem:[%s1 + $0x5f0] sm:$0xff]
  %v246 = vld [vmem:[%s1 + $0x5f8] sm:$0xff]
  %v263 = vunpack.c.l.b16 %v39
  %v264 = vunpack.c.h.b16 %v39
  %v265 = vunpack.c.l.b16 %v40
  %v266 = vunpack.c.l.b16 %v41
  %v267 = vunpack.c.h.b16 %v41
  %v268 = vunpack.c.l.b16 %v42
  %v269 = vunpack.c.l.b16 %v43
  %v270 = vunpack.c.h.b16 %v43
  %v271 = vunpack.c.l.b16 %v44
  %v272 = vunpack.c.l.b16 %v45
  %v273 = vunpack.c.h.b16 %v45
  %v274 = vunpack.c.l.b16 %v46
  %v275 = vunpack.c.l.b16 %v47
  %v276 = vunpack.c.h.b16 %v47
  %v277 = vunpack.c.l.b16 %v48
  %v278 = vunpack.c.l.b16 %v49
  %v279 = vunpack.c.h.b16 %v49
  %v280 = vunpack.c.l.b16 %v50
  %v281 = vunpack.c.l.b16 %v51
  %v282 = vunpack.c.h.b16 %v51
  %v283 = vunpack.c.l.b16 %v52
  %v284 = vunpack.c.l.b16 %v53
  %v285 = vunpack.c.h.b16 %v53
  %v286 = vunpack.c.l.b16 %v54
  %v287 = vpack.c.b16 %v266, %v263
  %v288 = vpack.c.b16 %v267, %v264
  %v289 = vpack.c.b16 %v268, %v265
  %v290 = vpack.c.b16 %v272, %v269
  %v291 = vpack.c.b16 %v273, %v270
  %v292 = vpack.c.b16 %v274, %v271
  %v293 = vpack.c.b16 %v278, %v275
  %v294 = vpack.c.b16 %v279, %v276
  %v295 = vpack.c.b16 %v280, %v277
  %v296 = vpack.c.b16 %v284, %v281
  %v297 = vpack.c.b16 %v285, %v282
  %v298 = vpack.c.b16 %v286, %v283
  %v503 = vunpack.c.l.b16 %v55
  %v504 = vunpack.c.h.b16 %v55
  %v505 = vunpack.c.l.b16 %v56
  %v506 = vunpack.c.h.b16 %v56
  %v507 = vunpack.c.l.b16 %v57
  %v508 = vunpack.c.h.b16 %v57
  %v509 = vunpack.c.l.b16 %v58
  %v510 = vunpack.c.h.b16 %v58
  %v511 = vunpack.c.l.b16 %v59
  %v512 = vunpack.c.h.b16 %v59
  %v513 = vunpack.c.l.b16 %v60
  %v514 = vunpack.c.h.b16 %v60
  %v515 = vunpack.c.l.b16 %v61
  %v516 = vunpack.c.h.b16 %v61
  %v517 = vunpack.c.l.b16 %v62
  %v518 = vunpack.c.h.b16 %v62
  %v519 = vunpack.c.l.b16 %v63
  %v520 = vunpack.c.h.b16 %v63
  %v521 = vunpack.c.l.b16 %v64
  %v522 = vunpack.c.h.b16 %v64
  %v523 = vunpack.c.l.b16 %v65
  %v524 = vunpack.c.h.b16 %v65
  %v525 = vunpack.c.l.b16 %v66
  %v526 = vunpack.c.h.b16 %v66
  %v527 = vunpack.c.l.b16 %v67
  %v528 = vunpack.c.h.b16 %v67
  %v529 = vunpack.c.l.b16 %v68
  %v530 = vunpack.c.h.b16 %v68
  %v531 = vunpack.c.l.b16 %v69
  %v532 = vunpack.c.h.b16 %v69
  %v533 = vunpack.c.l.b16 %v70
  %v534 = vunpack.c.h.b16 %v70
  %v535 = vunpack.c.l.b16 %v71
  %v536 = vunpack.c.h.b16 %v71
  %v537 = vunpack.c.l.b16 %v72
  %v538 = vunpack.c.h.b16 %v72
  %v539 = vunpack.c.l.b16 %v73
  %v540 = vunpack.c.h.b16 %v73
  %v541 = vunpack.c.l.b16 %v74
  %v542 = vunpack.c.h.b16 %v74
  %v543 = vunpack.c.l.b16 %v75
  %v544 = vunpack.c.h.b16 %v75
  %v545 = vunpack.c.l.b16 %v76
  %v546 = vunpack.c.h.b16 %v76
  %v547 = vunpack.c.l.b16 %v77
  %v548 = vunpack.c.h.b16 %v77
  %v549 = vunpack.c.l.b16 %v78
  %v550 = vunpack.c.h.b16 %v78
  %v551 = vunpack.c.l.b16 %v79
  %v552 = vunpack.c.h.b16 %v79
  %v553 = vunpack.c.l.b16 %v80
  %v554 = vunpack.c.h.b16 %v80
  %v555 = vunpack.c.l.b16 %v81
  %v556 = vunpack.c.h.b16 %v81
  %v557 = vunpack.c.l.b16 %v82
  %v558 = vunpack.c.h.b16 %v82
  %v559 = vunpack.c.l.b16 %v83
  %v560 = vunpack.c.h.b16 %v83
  %v561 = vunpack.c.l.b16 %v84
  %v562 = vunpack.c.h.b16 %v84
  %v563 = vunpack.c.l.b16 %v85
  %v564 = vunpack.c.h.b16 %v85
  %v565 = vunpack.c.l.b16 %v86
  %v566 = vunpack.c.h.b16 %v86
  %v567 = vunpack.c.l.b16 %v87
  %v568 = vunpack.c.h.b16 %v87
  %v569 = vunpack.c.l.b16 %v88
  %v570 = vunpack.c.h.b16 %v88
  %v571 = vunpack.c.l.b16 %v89
  %v572 = vunpack.c.h.b16 %v89
  %v573 = vunpack.c.l.b16 %v90
  %v574 = vunpack.c.h.b16 %v90
  %v575 = vunpack.c.l.b16 %v91
  %v576 = vunpack.c.h.b16 %v91
  %v577 = vunpack.c.l.b16 %v92
  %v578 = vunpack.c.h.b16 %v92
  %v579 = vunpack.c.l.b16 %v93
  %v580 = vunpack.c.h.b16 %v93
  %v581 = vunpack.c.l.b16 %v94
  %v582 = vunpack.c.h.b16 %v94
  %v583 = vunpack.c.l.b16 %v95
  %v584 = vunpack.c.h.b16 %v95
  %v585 = vunpack.c.l.b16 %v96
  %v586 = vunpack.c.h.b16 %v96
  %v587 = vunpack.c.l.b16 %v97
  %v588 = vunpack.c.h.b16 %v97
  %v589 = vunpack.c.l.b16 %v98
  %v590 = vunpack.c.h.b16 %v98
  %v591 = vunpack.c.l.b16 %v99
  %v592 = vunpack.c.h.b16 %v99
  %v593 = vunpack.c.l.b16 %v100
  %v594 = vunpack.c.h.b16 %v100
  %v595 = vunpack.c.l.b16 %v101
  %v596 = vunpack.c.h.b16 %v101
  %v597 = vunpack.c.l.b16 %v102
  %v598 = vunpack.c.h.b16 %v102
  %v599 = vunpack.c.l.b16 %v103
  %v600 = vunpack.c.h.b16 %v103
  %v601 = vunpack.c.l.b16 %v104
  %v602 = vunpack.c.h.b16 %v104
  %v603 = vunpack.c.l.b16 %v105
  %v604 = vunpack.c.h.b16 %v105
  %v605 = vunpack.c.l.b16 %v106
  %v606 = vunpack.c.h.b16 %v106
  %v607 = vunpack.c.l.b16 %v107
  %v608 = vunpack.c.h.b16 %v107
  %v609 = vunpack.c.l.b16 %v108
  %v610 = vunpack.c.h.b16 %v108
  %v611 = vunpack.c.l.b16 %v109
  %v612 = vunpack.c.h.b16 %v109
  %v613 = vunpack.c.l.b16 %v110
  %v614 = vunpack.c.h.b16 %v110
  %v615 = vunpack.c.l.b16 %v111
  %v616 = vunpack.c.h.b16 %v111
  %v617 = vunpack.c.l.b16 %v112
  %v618 = vunpack.c.h.b16 %v112
  %v619 = vunpack.c.l.b16 %v113
  %v620 = vunpack.c.h.b16 %v113
  %v621 = vunpack.c.l.b16 %v114
  %v622 = vunpack.c.h.b16 %v114
  %v623 = vunpack.c.l.b16 %v115
  %v624 = vunpack.c.h.b16 %v115
  %v625 = vunpack.c.l.b16 %v116
  %v626 = vunpack.c.h.b16 %v116
  %v627 = vunpack.c.l.b16 %v117
  %v628 = vunpack.c.h.b16 %v117
  %v629 = vunpack.c.l.b16 %v118
  %v630 = vunpack.c.h.b16 %v118
  %v631 = vunpack.c.l.b16 %v119
  %v632 = vunpack.c.h.b16 %v119
  %v633 = vunpack.c.l.b16 %v120
  %v634 = vunpack.c.h.b16 %v120
  %v635 = vunpack.c.l.b16 %v121
  %v636 = vunpack.c.h.b16 %v121
  %v637 = vunpack.c.l.b16 %v122
  %v638 = vunpack.c.h.b16 %v122
  %v639 = vunpack.c.l.b16 %v123
  %v640 = vunpack.c.h.b16 %v123
  %v641 = vunpack.c.l.b16 %v124
  %v642 = vunpack.c.h.b16 %v124
  %v643 = vunpack.c.l.b16 %v125
  %v644 = vunpack.c.h.b16 %v125
  %v645 = vunpack.c.l.b16 %v126
  %v646 = vunpack.c.h.b16 %v126
  %v647 = vunpack.c.l.b16 %v127
  %v648 = vunpack.c.h.b16 %v127
  %v649 = vunpack.c.l.b16 %v128
  %v650 = vunpack.c.h.b16 %v128
  %v651 = vunpack.c.l.b16 %v129
  %v652 = vunpack.c.h.b16 %v129
  %v653 = vunpack.c.l.b16 %v130
  %v654 = vunpack.c.h.b16 %v130
  %v655 = vunpack.c.l.b16 %v131
  %v656 = vunpack.c.h.b16 %v131
  %v657 = vunpack.c.l.b16 %v132
  %v658 = vunpack.c.h.b16 %v132
  %v659 = vunpack.c.l.b16 %v133
  %v660 = vunpack.c.h.b16 %v133
  %v661 = vunpack.c.l.b16 %v134
  %v662 = vunpack.c.h.b16 %v134
  %v663 = vunpack.c.l.b16 %v135
  %v664 = vunpack.c.h.b16 %v135
  %v665 = vunpack.c.l.b16 %v136
  %v666 = vunpack.c.h.b16 %v136
  %v667 = vunpack.c.l.b16 %v137
  %v668 = vunpack.c.h.b16 %v137
  %v669 = vunpack.c.l.b16 %v138
  %v670 = vunpack.c.h.b16 %v138
  %v671 = vunpack.c.l.b16 %v139
  %v672 = vunpack.c.h.b16 %v139
  %v673 = vunpack.c.l.b16 %v140
  %v674 = vunpack.c.h.b16 %v140
  %v675 = vunpack.c.l.b16 %v141
  %v676 = vunpack.c.h.b16 %v141
  %v677 = vunpack.c.l.b16 %v142
  %v678 = vunpack.c.h.b16 %v142
  %v679 = vunpack.c.l.b16 %v143
  %v680 = vunpack.c.h.b16 %v143
  %v681 = vunpack.c.l.b16 %v144
  %v682 = vunpack.c.h.b16 %v144
  %v683 = vunpack.c.l.b16 %v145
  %v684 = vunpack.c.h.b16 %v145
  %v685 = vunpack.c.l.b16 %v146
  %v686 = vunpack.c.h.b16 %v146
  %v687 = vunpack.c.l.b16 %v147
  %v688 = vunpack.c.h.b16 %v147
  %v689 = vunpack.c.l.b16 %v148
  %v690 = vunpack.c.h.b16 %v148
  %v691 = vunpack.c.l.b16 %v149
  %v692 = vunpack.c.h.b16 %v149
  %v693 = vunpack.c.l.b16 %v150
  %v694 = vunpack.c.h.b16 %v150
  %v695 = vunpack.c.l.b16 %v151
  %v696 = vunpack.c.h.b16 %v151
  %v697 = vunpack.c.l.b16 %v152
  %v698 = vunpack.c.h.b16 %v152
  %v699 = vunpack.c.l.b16 %v153
  %v700 = vunpack.c.h.b16 %v153
  %v701 = vunpack.c.l.b16 %v154
  %v702 = vunpack.c.h.b16 %v154
  %v703 = vunpack.c.l.b16 %v155
  %v704 = vunpack.c.h.b16 %v155
  %v705 = vunpack.c.l.b16 %v156
  %v706 = vunpack.c.h.b16 %v156
  %v707 = vunpack.c.l.b16 %v157
  %v708 = vunpack.c.h.b16 %v157
  %v709 = vunpack.c.l.b16 %v158
  %v710 = vunpack.c.h.b16 %v158
  %v711 = vunpack.c.l.b16 %v159
  %v712 = vunpack.c.h.b16 %v159
  %v713 = vunpack.c.l.b16 %v160
  %v714 = vunpack.c.h.b16 %v160
  %v715 = vunpack.c.l.b16 %v161
  %v716 = vunpack.c.h.b16 %v161
  %v717 = vunpack.c.l.b16 %v162
  %v718 = vunpack.c.h.b16 %v162
  %v719 = vunpack.c.l.b16 %v163
  %v720 = vunpack.c.h.b16 %v163
  %v721 = vunpack.c.l.b16 %v164
  %v722 = vunpack.c.h.b16 %v164
  %v723 = vunpack.c.l.b16 %v165
  %v724 = vunpack.c.h.b16 %v165
  %v725 = vunpack.c.l.b16 %v166
  %v726 = vunpack.c.h.b16 %v166
  %v727 = vunpack.c.l.b16 %v167
  %v728 = vunpack.c.h.b16 %v167
  %v729 = vunpack.c.l.b16 %v168
  %v730 = vunpack.c.h.b16 %v168
  %v731 = vunpack.c.l.b16 %v169
  %v732 = vunpack.c.h.b16 %v169
  %v733 = vunpack.c.l.b16 %v170
  %v734 = vunpack.c.h.b16 %v170
  %v735 = vunpack.c.l.b16 %v171
  %v736 = vunpack.c.h.b16 %v171
  %v737 = vunpack.c.l.b16 %v172
  %v738 = vunpack.c.h.b16 %v172
  %v739 = vunpack.c.l.b16 %v173
  %v740 = vunpack.c.h.b16 %v173
  %v741 = vunpack.c.l.b16 %v174
  %v742 = vunpack.c.h.b16 %v174
  %v743 = vunpack.c.l.b16 %v175
  %v744 = vunpack.c.h.b16 %v175
  %v745 = vunpack.c.l.b16 %v176
  %v746 = vunpack.c.h.b16 %v176
  %v747 = vunpack.c.l.b16 %v177
  %v748 = vunpack.c.h.b16 %v177
  %v749 = vunpack.c.l.b16 %v178
  %v750 = vunpack.c.h.b16 %v178
  %v751 = vunpack.c.l.b16 %v179
  %v752 = vunpack.c.h.b16 %v179
  %v753 = vunpack.c.l.b16 %v180
  %v754 = vunpack.c.h.b16 %v180
  %v755 = vunpack.c.l.b16 %v181
  %v756 = vunpack.c.h.b16 %v181
  %v757 = vunpack.c.l.b16 %v182
  %v758 = vunpack.c.h.b16 %v182
  %v759 = vunpack.c.l.b16 %v183
  %v760 = vunpack.c.h.b16 %v183
  %v761 = vunpack.c.l.b16 %v184
  %v762 = vunpack.c.h.b16 %v184
  %v763 = vunpack.c.l.b16 %v185
  %v764 = vunpack.c.h.b16 %v185
  %v765 = vunpack.c.l.b16 %v186
  %v766 = vunpack.c.h.b16 %v186
  %v767 = vunpack.c.l.b16 %v187
  %v768 = vunpack.c.h.b16 %v187
  %v769 = vunpack.c.l.b16 %v188
  %v770 = vunpack.c.h.b16 %v188
  %v771 = vunpack.c.l.b16 %v189
  %v772 = vunpack.c.h.b16 %v189
  %v773 = vunpack.c.l.b16 %v190
  %v774 = vunpack.c.h.b16 %v190
  %v775 = vunpack.c.l.b16 %v191
  %v776 = vunpack.c.h.b16 %v191
  %v777 = vunpack.c.l.b16 %v192
  %v778 = vunpack.c.h.b16 %v192
  %v779 = vunpack.c.l.b16 %v193
  %v780 = vunpack.c.h.b16 %v193
  %v781 = vunpack.c.l.b16 %v194
  %v782 = vunpack.c.h.b16 %v194
  %v783 = vunpack.c.l.b16 %v195
  %v784 = vunpack.c.h.b16 %v195
  %v785 = vunpack.c.l.b16 %v196
  %v786 = vunpack.c.h.b16 %v196
  %v787 = vunpack.c.l.b16 %v197
  %v788 = vunpack.c.h.b16 %v197
  %v789 = vunpack.c.l.b16 %v198
  %v790 = vunpack.c.h.b16 %v198
  %v791 = vunpack.c.l.b16 %v199
  %v792 = vunpack.c.h.b16 %v199
  %v793 = vunpack.c.l.b16 %v200
  %v794 = vunpack.c.h.b16 %v200
  %v795 = vunpack.c.l.b16 %v201
  %v796 = vunpack.c.h.b16 %v201
  %v797 = vunpack.c.l.b16 %v202
  %v798 = vunpack.c.h.b16 %v202
  %v799 = vunpack.c.l.b16 %v203
  %v800 = vunpack.c.h.b16 %v203
  %v801 = vunpack.c.l.b16 %v204
  %v802 = vunpack.c.h.b16 %v204
  %v803 = vunpack.c.l.b16 %v205
  %v804 = vunpack.c.h.b16 %v205
  %v805 = vunpack.c.l.b16 %v206
  %v806 = vunpack.c.h.b16 %v206
  %v807 = vunpack.c.l.b16 %v207
  %v808 = vunpack.c.h.b16 %v207
  %v809 = vunpack.c.l.b16 %v208
  %v810 = vunpack.c.h.b16 %v208
  %v811 = vunpack.c.l.b16 %v209
  %v812 = vunpack.c.h.b16 %v209
  %v813 = vunpack.c.l.b16 %v210
  %v814 = vunpack.c.h.b16 %v210
  %v815 = vunpack.c.l.b16 %v211
  %v816 = vunpack.c.h.b16 %v211
  %v817 = vunpack.c.l.b16 %v212
  %v818 = vunpack.c.h.b16 %v212
  %v819 = vunpack.c.l.b16 %v213
  %v820 = vunpack.c.h.b16 %v213
  %v821 = vunpack.c.l.b16 %v214
  %v822 = vunpack.c.h.b16 %v214
  %v823 = vunpack.c.l.b16 %v215
  %v824 = vunpack.c.h.b16 %v215
  %v825 = vunpack.c.l.b16 %v216
  %v826 = vunpack.c.h.b16 %v216
  %v827 = vunpack.c.l.b16 %v217
  %v828 = vunpack.c.h.b16 %v217
  %v829 = vunpack.c.l.b16 %v218
  %v830 = vunpack.c.h.b16 %v218
  %v831 = vunpack.c.l.b16 %v219
  %v832 = vunpack.c.h.b16 %v219
  %v833 = vunpack.c.l.b16 %v220
  %v834 = vunpack.c.h.b16 %v220
  %v835 = vunpack.c.l.b16 %v221
  %v836 = vunpack.c.h.b16 %v221
  %v837 = vunpack.c.l.b16 %v222
  %v838 = vunpack.c.h.b16 %v222
  %v839 = vunpack.c.l.b16 %v223
  %v840 = vunpack.c.h.b16 %v223
  %v841 = vunpack.c.l.b16 %v224
  %v842 = vunpack.c.h.b16 %v224
  %v843 = vunpack.c.l.b16 %v225
  %v844 = vunpack.c.h.b16 %v225
  %v845 = vunpack.c.l.b16 %v226
  %v846 = vunpack.c.h.b16 %v226
  %v847 = vunpack.c.l.b16 %v227
  %v848 = vunpack.c.h.b16 %v227
  %v849 = vunpack.c.l.b16 %v228
  %v850 = vunpack.c.h.b16 %v228
  %v851 = vunpack.c.l.b16 %v229
  %v852 = vunpack.c.h.b16 %v229
  %v853 = vunpack.c.l.b16 %v230
  %v854 = vunpack.c.h.b16 %v230
  %v855 = vunpack.c.l.b16 %v231
  %v856 = vunpack.c.h.b16 %v231
  %v857 = vunpack.c.l.b16 %v232
  %v858 = vunpack.c.h.b16 %v232
  %v859 = vunpack.c.l.b16 %v233
  %v860 = vunpack.c.h.b16 %v233
  %v861 = vunpack.c.l.b16 %v234
  %v862 = vunpack.c.h.b16 %v234
  %v863 = vunpack.c.l.b16 %v235
  %v864 = vunpack.c.h.b16 %v235
  %v865 = vunpack.c.l.b16 %v236
  %v866 = vunpack.c.h.b16 %v236
  %v867 = vunpack.c.l.b16 %v237
  %v868 = vunpack.c.h.b16 %v237
  %v869 = vunpack.c.l.b16 %v238
  %v870 = vunpack.c.h.b16 %v238
  %v871 = vunpack.c.l.b16 %v239
  %v872 = vunpack.c.h.b16 %v239
  %v873 = vunpack.c.l.b16 %v240
  %v874 = vunpack.c.h.b16 %v240
  %v875 = vunpack.c.l.b16 %v241
  %v876 = vunpack.c.h.b16 %v241
  %v877 = vunpack.c.l.b16 %v242
  %v878 = vunpack.c.h.b16 %v242
  %v879 = vunpack.c.l.b16 %v243
  %v880 = vunpack.c.h.b16 %v243
  %v881 = vunpack.c.l.b16 %v244
  %v882 = vunpack.c.h.b16 %v244
  %v883 = vunpack.c.l.b16 %v245
  %v884 = vunpack.c.h.b16 %v245
  %v885 = vunpack.c.l.b16 %v246
  %v886 = vunpack.c.h.b16 %v246
  %v887 = vpack.c.b16 %v511, %v503
  %v888 = vpack.c.b16 %v512, %v504
  %v889 = vpack.c.b16 %v513, %v505
  %v890 = vpack.c.b16 %v514, %v506
  %v891 = vpack.c.b16 %v515, %v507
  %v892 = vpack.c.b16 %v516, %v508
  %v893 = vpack.c.b16 %v517, %v509
  %v894 = vpack.c.b16 %v518, %v510
  %v895 = vpack.c.b16 %v527, %v519
  %v896 = vpack.c.b16 %v528, %v520
  %v897 = vpack.c.b16 %v529, %v521
  %v898 = vpack.c.b16 %v530, %v522
  %v899 = vpack.c.b16 %v531, %v523
  %v900 = vpack.c.b16 %v532, %v524
  %v901 = vpack.c.b16 %v533, %v525
  %v902 = vpack.c.b16 %v534, %v526
  %v903 = vpack.c.b16 %v543, %v535
  %v904 = vpack.c.b16 %v544, %v536
  %v905 = vpack.c.b16 %v545, %v537
  %v906 = vpack.c.b16 %v546, %v538
  %v907 = vpack.c.b16 %v547, %v539
  %v908 = vpack.c.b16 %v548, %v540
  %v909 = vpack.c.b16 %v549, %v541
  %v910 = vpack.c.b16 %v550, %v542
  %v911 = vpack.c.b16 %v559, %v551
  %v912 = vpack.c.b16 %v560, %v552
  %v913 = vpack.c.b16 %v561, %v553
  %v914 = vpack.c.b16 %v562, %v554
  %v915 = vpack.c.b16 %v563, %v555
  %v916 = vpack.c.b16 %v564, %v556
  %v917 = vpack.c.b16 %v565, %v557
  %v918 = vpack.c.b16 %v566, %v558
  %v919 = vpack.c.b16 %v575, %v567
  %v920 = vpack.c.b16 %v576, %v568
  %v921 = vpack.c.b16 %v577, %v569
  %v922 = vpack.c.b16 %v578, %v570
  %v923 = vpack.c.b16 %v579, %v571
  %v924 = vpack.c.b16 %v580, %v572
  %v925 = vpack.c.b16 %v581, %v573
  %v926 = vpack.c.b16 %v582, %v574
  %v927 = vpack.c.b16 %v591, %v583
  %v928 = vpack.c.b16 %v592, %v584
  %v929 = vpack.c.b16 %v593, %v585
  %v930 = vpack.c.b16 %v594, %v586
  %v931 = vpack.c.b16 %v595, %v587
  %v932 = vpack.c.b16 %v596, %v588
  %v933 = vpack.c.b16 %v597, %v589
  %v934 = vpack.c.b16 %v598, %v590
  %v935 = vpack.c.b16 %v607, %v599
  %v936 = vpack.c.b16 %v608, %v600
  %v937 = vpack.c.b16 %v609, %v601
  %v938 = vpack.c.b16 %v610, %v602
  %v939 = vpack.c.b16 %v611, %v603
  %v940 = vpack.c.b16 %v612, %v604
  %v941 = vpack.c.b16 %v613, %v605
  %v942 = vpack.c.b16 %v614, %v606
  %v943 = vpack.c.b16 %v623, %v615
  %v944 = vpack.c.b16 %v624, %v616
  %v945 = vpack.c.b16 %v625, %v617
  %v946 = vpack.c.b16 %v626, %v618
  %v947 = vpack.c.b16 %v627, %v619
  %v948 = vpack.c.b16 %v628, %v620
  %v949 = vpack.c.b16 %v629, %v621
  %v950 = vpack.c.b16 %v630, %v622
  %v951 = vpack.c.b16 %v639, %v631
  %v952 = vpack.c.b16 %v640, %v632
  %v953 = vpack.c.b16 %v641, %v633
  %v954 = vpack.c.b16 %v642, %v634
  %v955 = vpack.c.b16 %v643, %v635
  %v956 = vpack.c.b16 %v644, %v636
  %v957 = vpack.c.b16 %v645, %v637
  %v958 = vpack.c.b16 %v646, %v638
  %v959 = vpack.c.b16 %v655, %v647
  %v960 = vpack.c.b16 %v656, %v648
  %v961 = vpack.c.b16 %v657, %v649
  %v962 = vpack.c.b16 %v658, %v650
  %v963 = vpack.c.b16 %v659, %v651
  %v964 = vpack.c.b16 %v660, %v652
  %v965 = vpack.c.b16 %v661, %v653
  %v966 = vpack.c.b16 %v662, %v654
  %v967 = vpack.c.b16 %v671, %v663
  %v968 = vpack.c.b16 %v672, %v664
  %v969 = vpack.c.b16 %v673, %v665
  %v970 = vpack.c.b16 %v674, %v666
  %v971 = vpack.c.b16 %v675, %v667
  %v972 = vpack.c.b16 %v676, %v668
  %v973 = vpack.c.b16 %v677, %v669
  %v974 = vpack.c.b16 %v678, %v670
  %v975 = vpack.c.b16 %v687, %v679
  %v976 = vpack.c.b16 %v688, %v680
  %v977 = vpack.c.b16 %v689, %v681
  %v978 = vpack.c.b16 %v690, %v682
  %v979 = vpack.c.b16 %v691, %v683
  %v980 = vpack.c.b16 %v692, %v684
  %v981 = vpack.c.b16 %v693, %v685
  %v982 = vpack.c.b16 %v694, %v686
  %v983 = vpack.c.b16 %v703, %v695
  %v984 = vpack.c.b16 %v704, %v696
  %v985 = vpack.c.b16 %v705, %v697
  %v986 = vpack.c.b16 %v706, %v698
  %v987 = vpack.c.b16 %v707, %v699
  %v988 = vpack.c.b16 %v708, %v700
  %v989 = vpack.c.b16 %v709, %v701
  %v990 = vpack.c.b16 %v710, %v702
  %v991 = vpack.c.b16 %v719, %v711
  %v992 = vpack.c.b16 %v720, %v712
  %v993 = vpack.c.b16 %v721, %v713
  %v994 = vpack.c.b16 %v722, %v714
  %v995 = vpack.c.b16 %v723, %v715
  %v996 = vpack.c.b16 %v724, %v716
  %v997 = vpack.c.b16 %v725, %v717
  %v998 = vpack.c.b16 %v726, %v718
  %v999 = vpack.c.b16 %v735, %v727
  %v1000 = vpack.c.b16 %v736, %v728
  %v1001 = vpack.c.b16 %v737, %v729
  %v1002 = vpack.c.b16 %v738, %v730
  %v1003 = vpack.c.b16 %v739, %v731
  %v1004 = vpack.c.b16 %v740, %v732
  %v1005 = vpack.c.b16 %v741, %v733
  %v1006 = vpack.c.b16 %v742, %v734
  %v1007 = vpack.c.b16 %v751, %v743
  %v1008 = vpack.c.b16 %v752, %v744
  %v1009 = vpack.c.b16 %v753, %v745
  %v1010 = vpack.c.b16 %v754, %v746
  %v1011 = vpack.c.b16 %v755, %v747
  %v1012 = vpack.c.b16 %v756, %v748
  %v1013 = vpack.c.b16 %v757, %v749
  %v1014 = vpack.c.b16 %v758, %v750
  %v1015 = vpack.c.b16 %v767, %v759
  %v1016 = vpack.c.b16 %v768, %v760
  %v1017 = vpack.c.b16 %v769, %v761
  %v1018 = vpack.c.b16 %v770, %v762
  %v1019 = vpack.c.b16 %v771, %v763
  %v1020 = vpack.c.b16 %v772, %v764
  %v1021 = vpack.c.b16 %v773, %v765
  %v1022 = vpack.c.b16 %v774, %v766
  %v1023 = vpack.c.b16 %v783, %v775
  %v1024 = vpack.c.b16 %v784, %v776
  %v1025 = vpack.c.b16 %v785, %v777
  %v1026 = vpack.c.b16 %v786, %v778
  %v1027 = vpack.c.b16 %v787, %v779
  %v1028 = vpack.c.b16 %v788, %v780
  %v1029 = vpack.c.b16 %v789, %v781
  %v1030 = vpack.c.b16 %v790, %v782
  %v1031 = vpack.c.b16 %v799, %v791
  %v1032 = vpack.c.b16 %v800, %v792
  %v1033 = vpack.c.b16 %v801, %v793
  %v1034 = vpack.c.b16 %v802, %v794
  %v1035 = vpack.c.b16 %v803, %v795
  %v1036 = vpack.c.b16 %v804, %v796
  %v1037 = vpack.c.b16 %v805, %v797
  %v1038 = vpack.c.b16 %v806, %v798
  %v1039 = vpack.c.b16 %v815, %v807
  %v1040 = vpack.c.b16 %v816, %v808
  %v1041 = vpack.c.b16 %v817, %v809
  %v1042 = vpack.c.b16 %v818, %v810
  %v1043 = vpack.c.b16 %v819, %v811
  %v1044 = vpack.c.b16 %v820, %v812
  %v1045 = vpack.c.b16 %v821, %v813
  %v1046 = vpack.c.b16 %v822, %v814
  %v1047 = vpack.c.b16 %v831, %v823
  %v1048 = vpack.c.b16 %v832, %v824
  %v1049 = vpack.c.b16 %v833, %v825
  %v1050 = vpack.c.b16 %v834, %v826
  %v1051 = vpack.c.b16 %v835, %v827
  %v1052 = vpack.c.b16 %v836, %v828
  %v1053 = vpack.c.b16 %v837, %v829
  %v1054 = vpack.c.b16 %v838, %v830
  %v1055 = vpack.c.b16 %v847, %v839
  %v1056 = vpack.c.b16 %v848, %v840
  %v1057 = vpack.c.b16 %v849, %v841
  %v1058 = vpack.c.b16 %v850, %v842
  %v1059 = vpack.c.b16 %v851, %v843
  %v1060 = vpack.c.b16 %v852, %v844
  %v1061 = vpack.c.b16 %v853, %v845
  %v1062 = vpack.c.b16 %v854, %v846
  %v1063 = vpack.c.b16 %v863, %v855
  %v1064 = vpack.c.b16 %v864, %v856
  %v1065 = vpack.c.b16 %v865, %v857
  %v1066 = vpack.c.b16 %v866, %v858
  %v1067 = vpack.c.b16 %v867, %v859
  %v1068 = vpack.c.b16 %v868, %v860
  %v1069 = vpack.c.b16 %v869, %v861
  %v1070 = vpack.c.b16 %v870, %v862
  %v1071 = vpack.c.b16 %v879, %v871
  %v1072 = vpack.c.b16 %v880, %v872
  %v1073 = vpack.c.b16 %v881, %v873
  %v1074 = vpack.c.b16 %v882, %v874
  %v1075 = vpack.c.b16 %v883, %v875
  %v1076 = vpack.c.b16 %v884, %v876
  %v1077 = vpack.c.b16 %v885, %v877
  %v1078 = vpack.c.b16 %v886, %v878
  %1271 = vmatprep.subr.bf16.mxu0 %v888
  %1272 = vmatpush1.bf16.msra.mxu0 %v887
  %1273 = vmatprep.subr.bf16.mxu0 %v896
  %1274 = vmatpush1.bf16.msra.mxu0 %v895
  %1275 = vmatprep.subr.bf16.mxu0 %v904
  %1276 = vmatpush1.bf16.msra.mxu0 %v903
  %1277 = vmatprep.subr.bf16.mxu0 %v912
  %1278 = vmatpush1.bf16.msra.mxu0 %v911
  %1279 = vmatprep.subr.bf16.mxu0 %v920
  %1280 = vmatpush1.bf16.msra.mxu0 %v919
  %1281 = vmatprep.subr.bf16.mxu0 %v928
  %1282 = vmatpush1.bf16.msra.mxu0 %v927
  %1283 = vmatprep.subr.bf16.mxu0 %v936
  %1284 = vmatpush1.bf16.msra.mxu0 %v935
  %1285 = vmatprep.subr.bf16.mxu0 %v944
  %1286 = vmatpush1.bf16.msra.mxu0 %v943
  %1287 = vmatprep.subr.bf16.mxu0 %v952
  %1288 = vmatpush1.bf16.msra.mxu0 %v951
  %1289 = vmatprep.subr.bf16.mxu0 %v960
  %1290 = vmatpush1.bf16.msra.mxu0 %v959
  %1291 = vmatprep.subr.bf16.mxu0 %v968
  %1292 = vmatpush1.bf16.msra.mxu0 %v967
  %1293 = vmatprep.subr.bf16.mxu0 %v976
  %1294 = vmatpush1.bf16.msra.mxu0 %v975
  %1295 = vmatprep.subr.bf16.mxu0 %v984
  %1296 = vmatpush1.bf16.msra.mxu0 %v983
  %1297 = vmatprep.subr.bf16.mxu0 %v992
  %1298 = vmatpush1.bf16.msra.mxu0 %v991
  %1299 = vmatprep.subr.bf16.mxu0 %v1000
  %1300 = vmatpush1.bf16.msra.mxu0 %v999
  %1301 = vmatprep.subr.bf16.mxu0 %v1008
  %1302 = vmatpush1.bf16.msra.mxu0 %v1007
  %1303 = vmatprep.mubr.bf16.mxu0 %v288
  %1304 = vmatmul.mubr.bf16.gmra.mrb[0].mxu0 %v287
  %v1305 = vpop.f32.mrb[0].mxu0
  %v1306 = vadd.f32 0.0, %v1305
  %v1307 = vpop.f32.mrb[0].mxu0
  %v1308 = vadd.f32 0.0, %v1307
  %v1309 = vpop.f32.mrb[0].mxu0
  %v1310 = vadd.f32 0.0, %v1309
  %v1311 = vpop.f32.mrb[0].mxu0
  %v1312 = vadd.f32 0.0, %v1311
  %1313 = vmatprep.mubr.bf16.mxu0 %v291
  %1314 = vmatmul.mubr.bf16.gmra.mrb[0].mxu0 %v290
  %v1315 = vpop.f32.mrb[0].mxu0
  %v1316 = vadd.f32 0.0, %v1315
  %v1317 = vpop.f32.mrb[0].mxu0
  %v1318 = vadd.f32 0.0, %v1317
  %v1319 = vpop.f32.mrb[0].mxu0
  %v1320 = vadd.f32 0.0, %v1319
  %v1321 = vpop.f32.mrb[0].mxu0
  %v1322 = vadd.f32 0.0, %v1321
  %1323 = vmatprep.mubr.bf16.mxu0 %v294
  %1324 = vmatmul.mubr.bf16.gmra.mrb[0].mxu0 %v293
  %v1325 = vpop.f32.mrb[0].mxu0
  %v1326 = vadd.f32 0.0, %v1325
  %v1327 = vpop.f32.mrb[0].mxu0
  %v1328 = vadd.f32 0.0, %v1327
  %v1329 = vpop.f32.mrb[0].mxu0
  %v1330 = vadd.f32 0.0, %v1329
  %v1331 = vpop.f32.mrb[0].mxu0
  %v1332 = vadd.f32 0.0, %v1331
  %1333 = vmatprep.mubr.bf16.mxu0 %v297
  %1334 = vmatmul.mubr.bf16.gmra.mrb[0].mxu0 %v296
  %v1335 = vpop.f32.mrb[0].mxu0
  %v1336 = vadd.f32 0.0, %v1335
  %v1337 = vpop.f32.mrb[0].mxu0
  %v1338 = vadd.f32 0.0, %v1337
  %v1339 = vpop.f32.mrb[0].mxu0
  %v1340 = vadd.f32 0.0, %v1339
  %v1341 = vpop.f32.mrb[0].mxu0
  %v1342 = vadd.f32 0.0, %v1341
  %1343 = vdwg.mxu0
  %1344 = vmatprep.subr.bf16.mxu0 %v1016
  %1345 = vmatpush1.bf16.msra.mxu0 %v1015
  %1346 = vmatprep.subr.bf16.mxu0 %v1024
  %1347 = vmatpush1.bf16.msra.mxu0 %v1023
  %1348 = vmatprep.subr.bf16.mxu0 %v1032
  %1349 = vmatpush1.bf16.msra.mxu0 %v1031
  %1350 = vmatprep.subr.bf16.mxu0 %v1040
  %1351 = vmatpush1.bf16.msra.mxu0 %v1039
  %1352 = vmatprep.subr.bf16.mxu0 %v1048
  %1353 = vmatpush1.bf16.msra.mxu0 %v1047
  %1354 = vmatprep.subr.bf16.mxu0 %v1056
  %1355 = vmatpush1.bf16.msra.mxu0 %v1055
  %1356 = vmatprep.subr.bf16.mxu0 %v1064
  %1357 = vmatpush1.bf16.msra.mxu0 %v1063
  %1358 = vmatprep.subr.bf16.mxu0 %v1072
  %1359 = vmatpush1.bf16.msra.mxu0 %v1071
  %1360 = vmatprep.subr.bf16.mxu0 0
  %1361 = vmatpush1.bf16.msra.mxu0 0
  %1362 = vmatprep.subr.bf16.mxu0 0
  %1363 = vmatpush1.bf16.msra.mxu0 0
  %1364 = vmatprep.subr.bf16.mxu0 0
  %1365 = vmatpush1.bf16.msra.mxu0 0
  %1366 = vmatprep.subr.bf16.mxu0 0
  %1367 = vmatpush1.bf16.msra.mxu0 0
  %1368 = vmatprep.subr.bf16.mxu0 0
  %1369 = vmatpush1.bf16.msra.mxu0 0
  %1370 = vmatprep.subr.bf16.mxu0 0
  %1371 = vmatpush1.bf16.msra.mxu0 0
  %1372 = vmatprep.subr.bf16.mxu0 0
  %1373 = vmatpush1.bf16.msra.mxu0 0
  %1374 = vmatprep.subr.bf16.mxu0 0
  %1375 = vmatpush1.bf16.msra.mxu0 0
  %1376 = vmatprep.mubr.bf16.mxu0 0
  %1377 = vmatmul.mubr.bf16.gmra.mrb[0].mxu0 %v289
  %v1378 = vpop.f32.mrb[0].mxu0
  %v1379 = vadd.f32 %v1306, %v1378
  %v1380 = vpop.f32.mrb[0].mxu0
  %v1381 = vadd.f32 %v1308, %v1380
  %v1382 = vpop.f32.mrb[0].mxu0
  %v1383 = vadd.f32 %v1310, %v1382
  %v1384 = vpop.f32.mrb[0].mxu0
  %v1385 = vadd.f32 %v1312, %v1384
  %1386 = vmatprep.mubr.bf16.mxu0 0
  %1387 = vmatmul.mubr.bf16.gmra.mrb[0].mxu0 %v292
  %v1388 = vpop.f32.mrb[0].mxu0
  %v1389 = vadd.f32 %v1316, %v1388
  %v1390 = vpop.f32.mrb[0].mxu0
  %v1391 = vadd.f32 %v1318, %v1390
  %v1392 = vpop.f32.mrb[0].mxu0
  %v1393 = vadd.f32 %v1320, %v1392
  %v1394 = vpop.f32.mrb[0].mxu0
  %v1395 = vadd.f32 %v1322, %v1394
  %1396 = vmatprep.mubr.bf16.mxu0 0
  %1397 = vmatmul.mubr.bf16.gmra.mrb[0].mxu0 %v295
  %v1398 = vpop.f32.mrb[0].mxu0
  %v1399 = vadd.f32 %v1326, %v1398
  %v1400 = vpop.f32.mrb[0].mxu0
  %v1401 = vadd.f32 %v1328, %v1400
  %v1402 = vpop.f32.mrb[0].mxu0
  %v1403 = vadd.f32 %v1330, %v1402
  %v1404 = vpop.f32.mrb[0].mxu0
  %v1405 = vadd.f32 %v1332, %v1404
  %1406 = vmatprep.mubr.bf16.mxu0 0
  %1407 = vmatmul.mubr.bf16.gmra.mrb[0].mxu0 %v298
  %v1408 = vpop.f32.mrb[0].mxu0
  %v1409 = vadd.f32 %v1336, %v1408
  %v1410 = vpop.f32.mrb[0].mxu0
  %v1411 = vadd.f32 %v1338, %v1410
  %v1412 = vpop.f32.mrb[0].mxu0
  %v1413 = vadd.f32 %v1340, %v1412
  %v1414 = vpop.f32.mrb[0].mxu0
  %v1415 = vadd.f32 %v1342, %v1414
  %1416 = vdwg.mxu0
  %1417 = vmatprep.subr.bf16.mxu0 %v890
  %1418 = vmatpush1.bf16.msra.mxu0 %v889
  %1419 = vmatprep.subr.bf16.mxu0 %v898
  %1420 = vmatpush1.bf16.msra.mxu0 %v897
  %1421 = vmatprep.subr.bf16.mxu0 %v906
  %1422 = vmatpush1.bf16.msra.mxu0 %v905
  %1423 = vmatprep.subr.bf16.mxu0 %v914
  %1424 = vmatpush1.bf16.msra.mxu0 %v913
  %1425 = vmatprep.subr.bf16.mxu0 %v922
  %1426 = vmatpush1.bf16.msra.mxu0 %v921
  %1427 = vmatprep.subr.bf16.mxu0 %v930
  %1428 = vmatpush1.bf16.msra.mxu0 %v929
  %1429 = vmatprep.subr.bf16.mxu0 %v938
  %1430 = vmatpush1.bf16.msra.mxu0 %v937
  %1431 = vmatprep.subr.bf16.mxu0 %v946
  %1432 = vmatpush1.bf16.msra.mxu0 %v945
  %1433 = vmatprep.subr.bf16.mxu0 %v954
  %1434 = vmatpush1.bf16.msra.mxu0 %v953
  %1435 = vmatprep.subr.bf16.mxu0 %v962
  %1436 = vmatpush1.bf16.msra.mxu0 %v961
  %1437 = vmatprep.subr.bf16.mxu0 %v970
  %1438 = vmatpush1.bf16.msra.mxu0 %v969
  %1439 = vmatprep.subr.bf16.mxu0 %v978
  %1440 = vmatpush1.bf16.msra.mxu0 %v977
  %1441 = vmatprep.subr.bf16.mxu0 %v986
  %1442 = vmatpush1.bf16.msra.mxu0 %v985
  %1443 = vmatprep.subr.bf16.mxu0 %v994
  %1444 = vmatpush1.bf16.msra.mxu0 %v993
  %1445 = vmatprep.subr.bf16.mxu0 %v1002
  %1446 = vmatpush1.bf16.msra.mxu0 %v1001
  %1447 = vmatprep.subr.bf16.mxu0 %v1010
  %1448 = vmatpush1.bf16.msra.mxu0 %v1009
  %1449 = vmatprep.mubr.bf16.mxu0 %v288
  %1450 = vmatmul.mubr.bf16.gmra.mrb[0].mxu0 %v287
  %v1451 = vpop.f32.mrb[0].mxu0
  %v1452 = vadd.f32 0.0, %v1451
  %v1453 = vpop.f32.mrb[0].mxu0
  %v1454 = vadd.f32 0.0, %v1453
  %v1455 = vpop.f32.mrb[0].mxu0
  %v1456 = vadd.f32 0.0, %v1455
  %v1457 = vpop.f32.mrb[0].mxu0
  %v1458 = vadd.f32 0.0, %v1457
  %1459 = vmatprep.mubr.bf16.mxu0 %v291
  %1460 = vmatmul.mubr.bf16.gmra.mrb[0].mxu0 %v290
  %v1461 = vpop.f32.mrb[0].mxu0
  %v1462 = vadd.f32 0.0, %v1461
  %v1463 = vpop.f32.mrb[0].mxu0
  %v1464 = vadd.f32 0.0, %v1463
  %v1465 = vpop.f32.mrb[0].mxu0
  %v1466 = vadd.f32 0.0, %v1465
  %v1467 = vpop.f32.mrb[0].mxu0
  %v1468 = vadd.f32 0.0, %v1467
  %1469 = vmatprep.mubr.bf16.mxu0 %v294
  %1470 = vmatmul.mubr.bf16.gmra.mrb[0].mxu0 %v293
  %v1471 = vpop.f32.mrb[0].mxu0
  %v1472 = vadd.f32 0.0, %v1471
  %v1473 = vpop.f32.mrb[0].mxu0
  %v1474 = vadd.f32 0.0, %v1473
  %v1475 = vpop.f32.mrb[0].mxu0
  %v1476 = vadd.f32 0.0, %v1475
  %v1477 = vpop.f32.mrb[0].mxu0
  %v1478 = vadd.f32 0.0, %v1477
  %1479 = vmatprep.mubr.bf16.mxu0 %v297
  %1480 = vmatmul.mubr.bf16.gmra.mrb[0].mxu0 %v296
  %v1481 = vpop.f32.mrb[0].mxu0
  %v1482 = vadd.f32 0.0, %v1481
  %v1483 = vpop.f32.mrb[0].mxu0
  %v1484 = vadd.f32 0.0, %v1483
  %v1485 = vpop.f32.mrb[0].mxu0
  %v1486 = vadd.f32 0.0, %v1485
  %v1487 = vpop.f32.mrb[0].mxu0
  %v1488 = vadd.f32 0.0, %v1487
  %1489 = vdwg.mxu0
  %1490 = vmatprep.subr.bf16.mxu0 %v1018
  %1491 = vmatpush1.bf16.msra.mxu0 %v1017
  %1492 = vmatprep.subr.bf16.mxu0 %v1026
  %1493 = vmatpush1.bf16.msra.mxu0 %v1025
  %1494 = vmatprep.subr.bf16.mxu0 %v1034
  %1495 = vmatpush1.bf16.msra.mxu0 %v1033
  %1496 = vmatprep.subr.bf16.mxu0 %v1042
  %1497 = vmatpush1.bf16.msra.mxu0 %v1041
  %1498 = vmatprep.subr.bf16.mxu0 %v1050
  %1499 = vmatpush1.bf16.msra.mxu0 %v1049
  %1500 = vmatprep.subr.bf16.mxu0 %v1058
  %1501 = vmatpush1.bf16.msra.mxu0 %v1057
  %1502 = vmatprep.subr.bf16.mxu0 %v1066
  %1503 = vmatpush1.bf16.msra.mxu0 %v1065
  %1504 = vmatprep.subr.bf16.mxu0 %v1074
  %1505 = vmatpush1.bf16.msra.mxu0 %v1073
  %1506 = vmatprep.subr.bf16.mxu0 0
  %1507 = vmatpush1.bf16.msra.mxu0 0
  %1508 = vmatprep.subr.bf16.mxu0 0
  %1509 = vmatpush1.bf16.msra.mxu0 0
  %1510 = vmatprep.subr.bf16.mxu0 0
  %1511 = vmatpush1.bf16.msra.mxu0 0
  %1512 = vmatprep.subr.bf16.mxu0 0
  %1513 = vmatpush1.bf16.msra.mxu0 0
  %1514 = vmatprep.subr.bf16.mxu0 0
  %1515 = vmatpush1.bf16.msra.mxu0 0
  %1516 = vmatprep.subr.bf16.mxu0 0
  %1517 = vmatpush1.bf16.msra.mxu0 0
  %1518 = vmatprep.subr.bf16.mxu0 0
  %1519 = vmatpush1.bf16.msra.mxu0 0
  %1520 = vmatprep.subr.bf16.mxu0 0
  %1521 = vmatpush1.bf16.msra.mxu0 0
  %1522 = vmatprep.mubr.bf16.mxu0 0
  %1523 = vmatmul.mubr.bf16.gmra.mrb[0].mxu0 %v289
  %v1524 = vpop.f32.mrb[0].mxu0
  %v1525 = vadd.f32 %v1452, %v1524
  %v1526 = vpop.f32.mrb[0].mxu0
  %v1527 = vadd.f32 %v1454, %v1526
  %v1528 = vpop.f32.mrb[0].mxu0
  %v1529 = vadd.f32 %v1456, %v1528
  %v1530 = vpop.f32.mrb[0].mxu0
  %v1531 = vadd.f32 %v1458, %v1530
  %1532 = vmatprep.mubr.bf16.mxu0 0
  %1533 = vmatmul.mubr.bf16.gmra.mrb[0].mxu0 %v292
  %v1534 = vpop.f32.mrb[0].mxu0
  %v1535 = vadd.f32 %v1462, %v1534
  %v1536 = vpop.f32.mrb[0].mxu0
  %v1537 = vadd.f32 %v1464, %v1536
  %v1538 = vpop.f32.mrb[0].mxu0
  %v1539 = vadd.f32 %v1466, %v1538
  %v1540 = vpop.f32.mrb[0].mxu0
  %v1541 = vadd.f32 %v1468, %v1540
  %1542 = vmatprep.mubr.bf16.mxu0 0
  %1543 = vmatmul.mubr.bf16.gmra.mrb[0].mxu0 %v295
  %v1544 = vpop.f32.mrb[0].mxu0
  %v1545 = vadd.f32 %v1472, %v1544
  %v1546 = vpop.f32.mrb[0].mxu0
  %v1547 = vadd.f32 %v1474, %v1546
  %v1548 = vpop.f32.mrb[0].mxu0
  %v1549 = vadd.f32 %v1476, %v1548
  %v1550 = vpop.f32.mrb[0].mxu0
  %v1551 = vadd.f32 %v1478, %v1550
  %1552 = vmatprep.mubr.bf16.mxu0 0
  %1553 = vmatmul.mubr.bf16.gmra.mrb[0].mxu0 %v298
  %v1554 = vpop.f32.mrb[0].mxu0
  %v1555 = vadd.f32 %v1482, %v1554
  %v1556 = vpop.f32.mrb[0].mxu0
  %v1557 = vadd.f32 %v1484, %v1556
  %v1558 = vpop.f32.mrb[0].mxu0
  %v1559 = vadd.f32 %v1486, %v1558
  %v1560 = vpop.f32.mrb[0].mxu0
  %v1561 = vadd.f32 %v1488, %v1560
  %1562 = vdwg.mxu0
  %1563 = vmatprep.subr.bf16.mxu0 %v892
  %1564 = vmatpush1.bf16.msra.mxu0 %v891
  %1565 = vmatprep.subr.bf16.mxu0 %v900
  %1566 = vmatpush1.bf16.msra.mxu0 %v899
  %1567 = vmatprep.subr.bf16.mxu0 %v908
  %1568 = vmatpush1.bf16.msra.mxu0 %v907
  %1569 = vmatprep.subr.bf16.mxu0 %v916
  %1570 = vmatpush1.bf16.msra.mxu0 %v915
  %1571 = vmatprep.subr.bf16.mxu0 %v924
  %1572 = vmatpush1.bf16.msra.mxu0 %v923
  %1573 = vmatprep.subr.bf16.mxu0 %v932
  %1574 = vmatpush1.bf16.msra.mxu0 %v931
  %1575 = vmatprep.subr.bf16.mxu0 %v940
  %1576 = vmatpush1.bf16.msra.mxu0 %v939
  %1577 = vmatprep.subr.bf16.mxu0 %v948
  %1578 = vmatpush1.bf16.msra.mxu0 %v947
  %1579 = vmatprep.subr.bf16.mxu0 %v956
  %1580 = vmatpush1.bf16.msra.mxu0 %v955
  %1581 = vmatprep.subr.bf16.mxu0 %v964
  %1582 = vmatpush1.bf16.msra.mxu0 %v963
  %1583 = vmatprep.subr.bf16.mxu0 %v972
  %1584 = vmatpush1.bf16.msra.mxu0 %v971
  %1585 = vmatprep.subr.bf16.mxu0 %v980
  %1586 = vmatpush1.bf16.msra.mxu0 %v979
  %1587 = vmatprep.subr.bf16.mxu0 %v988
  %1588 = vmatpush1.bf16.msra.mxu0 %v987
  %1589 = vmatprep.subr.bf16.mxu0 %v996
  %1590 = vmatpush1.bf16.msra.mxu0 %v995
  %1591 = vmatprep.subr.bf16.mxu0 %v1004
  %1592 = vmatpush1.bf16.msra.mxu0 %v1003
  %1593 = vmatprep.subr.bf16.mxu0 %v1012
  %1594 = vmatpush1.bf16.msra.mxu0 %v1011
  %1595 = vmatprep.mubr.bf16.mxu0 %v288
  %1596 = vmatmul.mubr.bf16.gmra.mrb[0].mxu0 %v287
  %v1597 = vpop.f32.mrb[0].mxu0
  %v1598 = vadd.f32 0.0, %v1597
  %v1599 = vpop.f32.mrb[0].mxu0
  %v1600 = vadd.f32 0.0, %v1599
  %v1601 = vpop.f32.mrb[0].mxu0
  %v1602 = vadd.f32 0.0, %v1601
  %v1603 = vpop.f32.mrb[0].mxu0
  %v1604 = vadd.f32 0.0, %v1603
  %1605 = vmatprep.mubr.bf16.mxu0 %v291
  %1606 = vmatmul.mubr.bf16.gmra.mrb[0].mxu0 %v290
  %v1607 = vpop.f32.mrb[0].mxu0
  %v1608 = vadd.f32 0.0, %v1607
  %v1609 = vpop.f32.mrb[0].mxu0
  %v1610 = vadd.f32 0.0, %v1609
  %v1611 = vpop.f32.mrb[0].mxu0
  %v1612 = vadd.f32 0.0, %v1611
  %v1613 = vpop.f32.mrb[0].mxu0
  %v1614 = vadd.f32 0.0, %v1613
  %1615 = vmatprep.mubr.bf16.mxu0 %v294
  %1616 = vmatmul.mubr.bf16.gmra.mrb[0].mxu0 %v293
  %v1617 = vpop.f32.mrb[0].mxu0
  %v1618 = vadd.f32 0.0, %v1617
  %v1619 = vpop.f32.mrb[0].mxu0
  %v1620 = vadd.f32 0.0, %v1619
  %v1621 = vpop.f32.mrb[0].mxu0
  %v1622 = vadd.f32 0.0, %v1621
  %v1623 = vpop.f32.mrb[0].mxu0
  %v1624 = vadd.f32 0.0, %v1623
  %1625 = vmatprep.mubr.bf16.mxu0 %v297
  %1626 = vmatmul.mubr.bf16.gmra.mrb[0].mxu0 %v296
  %v1627 = vpop.f32.mrb[0].mxu0
  %v1628 = vadd.f32 0.0, %v1627
  %v1629 = vpop.f32.mrb[0].mxu0
  %v1630 = vadd.f32 0.0, %v1629
  %v1631 = vpop.f32.mrb[0].mxu0
  %v1632 = vadd.f32 0.0, %v1631
  %v1633 = vpop.f32.mrb[0].mxu0
  %v1634 = vadd.f32 0.0, %v1633
  %1635 = vdwg.mxu0
  %1636 = vmatprep.subr.bf16.mxu0 %v1020
  %1637 = vmatpush1.bf16.msra.mxu0 %v1019
  %1638 = vmatprep.subr.bf16.mxu0 %v1028
  %1639 = vmatpush1.bf16.msra.mxu0 %v1027
  %1640 = vmatprep.subr.bf16.mxu0 %v1036
  %1641 = vmatpush1.bf16.msra.mxu0 %v1035
  %1642 = vmatprep.subr.bf16.mxu0 %v1044
  %1643 = vmatpush1.bf16.msra.mxu0 %v1043
  %1644 = vmatprep.subr.bf16.mxu0 %v1052
  %1645 = vmatpush1.bf16.msra.mxu0 %v1051
  %1646 = vmatprep.subr.bf16.mxu0 %v1060
  %1647 = vmatpush1.bf16.msra.mxu0 %v1059
  %1648 = vmatprep.subr.bf16.mxu0 %v1068
  %1649 = vmatpush1.bf16.msra.mxu0 %v1067
  %1650 = vmatprep.subr.bf16.mxu0 %v1076
  %1651 = vmatpush1.bf16.msra.mxu0 %v1075
  %1652 = vmatprep.subr.bf16.mxu0 0
  %1653 = vmatpush1.bf16.msra.mxu0 0
  %1654 = vmatprep.subr.bf16.mxu0 0
  %1655 = vmatpush1.bf16.msra.mxu0 0
  %1656 = vmatprep.subr.bf16.mxu0 0
  %1657 = vmatpush1.bf16.msra.mxu0 0
  %1658 = vmatprep.subr.bf16.mxu0 0
  %1659 = vmatpush1.bf16.msra.mxu0 0
  %1660 = vmatprep.subr.bf16.mxu0 0
  %1661 = vmatpush1.bf16.msra.mxu0 0
  %1662 = vmatprep.subr.bf16.mxu0 0
  %1663 = vmatpush1.bf16.msra.mxu0 0
  %1664 = vmatprep.subr.bf16.mxu0 0
  %1665 = vmatpush1.bf16.msra.mxu0 0
  %1666 = vmatprep.subr.bf16.mxu0 0
  %1667 = vmatpush1.bf16.msra.mxu0 0
  %1668 = vmatprep.mubr.bf16.mxu0 0
  %1669 = vmatmul.mubr.bf16.gmra.mrb[0].mxu0 %v289
  %v1670 = vpop.f32.mrb[0].mxu0
  %v1671 = vadd.f32 %v1598, %v1670
  %v1672 = vpop.f32.mrb[0].mxu0
  %v1673 = vadd.f32 %v1600, %v1672
  %v1674 = vpop.f32.mrb[0].mxu0
  %v1675 = vadd.f32 %v1602, %v1674
  %v1676 = vpop.f32.mrb[0].mxu0
  %v1677 = vadd.f32 %v1604, %v1676
  %1678 = vmatprep.mubr.bf16.mxu0 0
  %1679 = vmatmul.mubr.bf16.gmra.mrb[0].mxu0 %v292
  %v1680 = vpop.f32.mrb[0].mxu0
  %v1681 = vadd.f32 %v1608, %v1680
  %v1682 = vpop.f32.mrb[0].mxu0
  %v1683 = vadd.f32 %v1610, %v1682
  %v1684 = vpop.f32.mrb[0].mxu0
  %v1685 = vadd.f32 %v1612, %v1684
  %v1686 = vpop.f32.mrb[0].mxu0
  %v1687 = vadd.f32 %v1614, %v1686
  %1688 = vmatprep.mubr.bf16.mxu0 0
  %1689 = vmatmul.mubr.bf16.gmra.mrb[0].mxu0 %v295
  %v1690 = vpop.f32.mrb[0].mxu0
  %v1691 = vadd.f32 %v1618, %v1690
  %v1692 = vpop.f32.mrb[0].mxu0
  %v1693 = vadd.f32 %v1620, %v1692
  %v1694 = vpop.f32.mrb[0].mxu0
  %v1695 = vadd.f32 %v1622, %v1694
  %v1696 = vpop.f32.mrb[0].mxu0
  %v1697 = vadd.f32 %v1624, %v1696
  %1698 = vmatprep.mubr.bf16.mxu0 0
  %1699 = vmatmul.mubr.bf16.gmra.mrb[0].mxu0 %v298
  %v1700 = vpop.f32.mrb[0].mxu0
  %v1701 = vadd.f32 %v1628, %v1700
  %v1702 = vpop.f32.mrb[0].mxu0
  %v1703 = vadd.f32 %v1630, %v1702
  %v1704 = vpop.f32.mrb[0].mxu0
  %v1705 = vadd.f32 %v1632, %v1704
  %v1706 = vpop.f32.mrb[0].mxu0
  %v1707 = vadd.f32 %v1634, %v1706
  %1708 = vdwg.mxu0
  %1709 = vmatprep.subr.bf16.mxu0 %v894
  %1710 = vmatpush1.bf16.msra.mxu0 %v893
  %1711 = vmatprep.subr.bf16.mxu0 %v902
  %1712 = vmatpush1.bf16.msra.mxu0 %v901
  %1713 = vmatprep.subr.bf16.mxu0 %v910
  %1714 = vmatpush1.bf16.msra.mxu0 %v909
  %1715 = vmatprep.subr.bf16.mxu0 %v918
  %1716 = vmatpush1.bf16.msra.mxu0 %v917
  %1717 = vmatprep.subr.bf16.mxu0 %v926
  %1718 = vmatpush1.bf16.msra.mxu0 %v925
  %1719 = vmatprep.subr.bf16.mxu0 %v934
  %1720 = vmatpush1.bf16.msra.mxu0 %v933
  %1721 = vmatprep.subr.bf16.mxu0 %v942
  %1722 = vmatpush1.bf16.msra.mxu0 %v941
  %1723 = vmatprep.subr.bf16.mxu0 %v950
  %1724 = vmatpush1.bf16.msra.mxu0 %v949
  %1725 = vmatprep.subr.bf16.mxu0 %v958
  %1726 = vmatpush1.bf16.msra.mxu0 %v957
  %1727 = vmatprep.subr.bf16.mxu0 %v966
  %1728 = vmatpush1.bf16.msra.mxu0 %v965
  %1729 = vmatprep.subr.bf16.mxu0 %v974
  %1730 = vmatpush1.bf16.msra.mxu0 %v973
  %1731 = vmatprep.subr.bf16.mxu0 %v982
  %1732 = vmatpush1.bf16.msra.mxu0 %v981
  %1733 = vmatprep.subr.bf16.mxu0 %v990
  %1734 = vmatpush1.bf16.msra.mxu0 %v989
  %1735 = vmatprep.subr.bf16.mxu0 %v998
  %1736 = vmatpush1.bf16.msra.mxu0 %v997
  %1737 = vmatprep.subr.bf16.mxu0 %v1006
  %1738 = vmatpush1.bf16.msra.mxu0 %v1005
  %1739 = vmatprep.subr.bf16.mxu0 %v1014
  %1740 = vmatpush1.bf16.msra.mxu0 %v1013
  %1741 = vmatprep.mubr.bf16.mxu0 %v288
  %1742 = vmatmul.mubr.bf16.gmra.mrb[0].mxu0 %v287
  %v1743 = vpop.f32.mrb[0].mxu0
  %v1744 = vadd.f32 0.0, %v1743
  %v1745 = vpop.f32.mrb[0].mxu0
  %v1746 = vadd.f32 0.0, %v1745
  %v1747 = vpop.f32.mrb[0].mxu0
  %v1748 = vadd.f32 0.0, %v1747
  %v1749 = vpop.f32.mrb[0].mxu0
  %v1750 = vadd.f32 0.0, %v1749
  %1751 = vmatprep.mubr.bf16.mxu0 %v291
  %1752 = vmatmul.mubr.bf16.gmra.mrb[0].mxu0 %v290
  %v1753 = vpop.f32.mrb[0].mxu0
  %v1754 = vadd.f32 0.0, %v1753
  %v1755 = vpop.f32.mrb[0].mxu0
  %v1756 = vadd.f32 0.0, %v1755
  %v1757 = vpop.f32.mrb[0].mxu0
  %v1758 = vadd.f32 0.0, %v1757
  %v1759 = vpop.f32.mrb[0].mxu0
  %v1760 = vadd.f32 0.0, %v1759
  %1761 = vmatprep.mubr.bf16.mxu0 %v294
  %1762 = vmatmul.mubr.bf16.gmra.mrb[0].mxu0 %v293
  %v1763 = vpop.f32.mrb[0].mxu0
  %v1764 = vadd.f32 0.0, %v1763
  %v1765 = vpop.f32.mrb[0].mxu0
  %v1766 = vadd.f32 0.0, %v1765
  %v1767 = vpop.f32.mrb[0].mxu0
  %v1768 = vadd.f32 0.0, %v1767
  %v1769 = vpop.f32.mrb[0].mxu0
  %v1770 = vadd.f32 0.0, %v1769
  %1771 = vmatprep.mubr.bf16.mxu0 %v297
  %1772 = vmatmul.mubr.bf16.gmra.mrb[0].mxu0 %v296
  %v1773 = vpop.f32.mrb[0].mxu0
  %v1774 = vadd.f32 0.0, %v1773
  %v1775 = vpop.f32.mrb[0].mxu0
  %v1776 = vadd.f32 0.0, %v1775
  %v1777 = vpop.f32.mrb[0].mxu0
  %v1778 = vadd.f32 0.0, %v1777
  %v1779 = vpop.f32.mrb[0].mxu0
  %v1780 = vadd.f32 0.0, %v1779
  %1781 = vdwg.mxu0
  %1782 = vmatprep.subr.bf16.mxu0 %v1022
  %1783 = vmatpush1.bf16.msra.mxu0 %v1021
  %1784 = vmatprep.subr.bf16.mxu0 %v1030
  %1785 = vmatpush1.bf16.msra.mxu0 %v1029
  %1786 = vmatprep.subr.bf16.mxu0 %v1038
  %1787 = vmatpush1.bf16.msra.mxu0 %v1037
  %1788 = vmatprep.subr.bf16.mxu0 %v1046
  %1789 = vmatpush1.bf16.msra.mxu0 %v1045
  %1790 = vmatprep.subr.bf16.mxu0 %v1054
  %1791 = vmatpush1.bf16.msra.mxu0 %v1053
  %1792 = vmatprep.subr.bf16.mxu0 %v1062
  %1793 = vmatpush1.bf16.msra.mxu0 %v1061
  %1794 = vmatprep.subr.bf16.mxu0 %v1070
  %1795 = vmatpush1.bf16.msra.mxu0 %v1069
  %1796 = vmatprep.subr.bf16.mxu0 %v1078
  %1797 = vmatpush1.bf16.msra.mxu0 %v1077
  %1798 = vmatprep.subr.bf16.mxu0 0
  %1799 = vmatpush1.bf16.msra.mxu0 0
  %1800 = vmatprep.subr.bf16.mxu0 0
  %1801 = vmatpush1.bf16.msra.mxu0 0
  %1802 = vmatprep.subr.bf16.mxu0 0
  %1803 = vmatpush1.bf16.msra.mxu0 0
  %1804 = vmatprep.subr.bf16.mxu0 0
  %1805 = vmatpush1.bf16.msra.mxu0 0
  %1806 = vmatprep.subr.bf16.mxu0 0
  %1807 = vmatpush1.bf16.msra.mxu0 0
  %1808 = vmatprep.subr.bf16.mxu0 0
  %1809 = vmatpush1.bf16.msra.mxu0 0
  %1810 = vmatprep.subr.bf16.mxu0 0
  %1811 = vmatpush1.bf16.msra.mxu0 0
  %1812 = vmatprep.subr.bf16.mxu0 0
  %1813 = vmatpush1.bf16.msra.mxu0 0
  %1814 = vmatprep.mubr.bf16.mxu0 0
  %1815 = vmatmul.mubr.bf16.gmra.mrb[0].mxu0 %v289
  %v1816 = vpop.f32.mrb[0].mxu0
  %v1817 = vadd.f32 %v1744, %v1816
  %v1818 = vpop.f32.mrb[0].mxu0
  %v1819 = vadd.f32 %v1746, %v1818
  %v1820 = vpop.f32.mrb[0].mxu0
  %v1821 = vadd.f32 %v1748, %v1820
  %v1822 = vpop.f32.mrb[0].mxu0
  %v1823 = vadd.f32 %v1750, %v1822
  %1824 = vmatprep.mubr.bf16.mxu0 0
  %1825 = vmatmul.mubr.bf16.gmra.mrb[0].mxu0 %v292
  %v1826 = vpop.f32.mrb[0].mxu0
  %v1827 = vadd.f32 %v1754, %v1826
  %v1828 = vpop.f32.mrb[0].mxu0
  %v1829 = vadd.f32 %v1756, %v1828
  %v1830 = vpop.f32.mrb[0].mxu0
  %v1831 = vadd.f32 %v1758, %v1830
  %v1832 = vpop.f32.mrb[0].mxu0
  %v1833 = vadd.f32 %v1760, %v1832
  %1834 = vmatprep.mubr.bf16.mxu0 0
  %1835 = vmatmul.mubr.bf16.gmra.mrb[0].mxu0 %v295
  %v1836 = vpop.f32.mrb[0].mxu0
  %v1837 = vadd.f32 %v1764, %v1836
  %v1838 = vpop.f32.mrb[0].mxu0
  %v1839 = vadd.f32 %v1766, %v1838
  %v1840 = vpop.f32.mrb[0].mxu0
  %v1841 = vadd.f32 %v1768, %v1840
  %v1842 = vpop.f32.mrb[0].mxu0
  %v1843 = vadd.f32 %v1770, %v1842
  %1844 = vmatprep.mubr.bf16.mxu0 0
  %1845 = vmatmul.mubr.bf16.gmra.mrb[0].mxu0 %v298
  %v1846 = vpop.f32.mrb[0].mxu0
  %v1847 = vadd.f32 %v1774, %v1846
  %v1848 = vpop.f32.mrb[0].mxu0
  %v1849 = vadd.f32 %v1776, %v1848
  %v1850 = vpop.f32.mrb[0].mxu0
  %v1851 = vadd.f32 %v1778, %v1850
  %v1852 = vpop.f32.mrb[0].mxu0
  %v1853 = vadd.f32 %v1780, %v1852
  %1854 = vdwg.mxu0
  %1855 = vst [vmem:[#allocation2] sm:$0xff] %v1379
  %1856 = vst [vmem:[#allocation2 + $0x8] sm:$0xff] %v1381
  %1857 = vst [vmem:[#allocation2 + $0x10] sm:$0xff] %v1525
  %1858 = vst [vmem:[#allocation2 + $0x18] sm:$0xff] %v1527
  %1859 = vst [vmem:[#allocation2 + $0x20] sm:$0xff] %v1671
  %1860 = vst [vmem:[#allocation2 + $0x28] sm:$0xff] %v1673
  %1861 = vst [vmem:[#allocation2 + $0x30] sm:$0xff] %v1817
  %1862 = vst [vmem:[#allocation2 + $0x38] sm:$0xff] %v1819
  %1863 = vst [vmem:[#allocation2 + $0x40] sm:$0xff] %v1383
  %1864 = vst [vmem:[#allocation2 + $0x48] sm:$0xff] %v1385
  %1865 = vst [vmem:[#allocation2 + $0x50] sm:$0xff] %v1529
  %1866 = vst [vmem:[#allocation2 + $0x58] sm:$0xff] %v1531
  %1867 = vst [vmem:[#allocation2 + $0x60] sm:$0xff] %v1675
  %1868 = vst [vmem:[#allocation2 + $0x68] sm:$0xff] %v1677
  %1869 = vst [vmem:[#allocation2 + $0x70] sm:$0xff] %v1821
  %1870 = vst [vmem:[#allocation2 + $0x78] sm:$0xff] %v1823
  %1871 = vst [vmem:[#allocation2 + $0x80] sm:$0xff] %v1389
  %1872 = vst [vmem:[#allocation2 + $0x88] sm:$0xff] %v1391
  %1873 = vst [vmem:[#allocation2 + $0x90] sm:$0xff] %v1535
  %1874 = vst [vmem:[#allocation2 + $0x98] sm:$0xff] %v1537
  %1875 = vst [vmem:[#allocation2 + $0xa0] sm:$0xff] %v1681
  %1876 = vst [vmem:[#allocation2 + $0xa8] sm:$0xff] %v1683
  %1877 = vst [vmem:[#allocation2 + $0xb0] sm:$0xff] %v1827
  %1878 = vst [vmem:[#allocation2 + $0xb8] sm:$0xff] %v1829
  %1879 = vst [vmem:[#allocation2 + $0xc0] sm:$0xff] %v1393
  %1880 = vst [vmem:[#allocation2 + $0xc8] sm:$0xff] %v1395
  %1881 = vst [vmem:[#allocation2 + $0xd0] sm:$0xff] %v1539
  %1882 = vst [vmem:[#allocation2 + $0xd8] sm:$0xff] %v1541
  %1883 = vst [vmem:[#allocation2 + $0xe0] sm:$0xff] %v1685
  %1884 = vst [vmem:[#allocation2 + $0xe8] sm:$0xff] %v1687
  %1885 = vst [vmem:[#allocation2 + $0xf0] sm:$0xff] %v1831
  %1886 = vst [vmem:[#allocation2 + $0xf8] sm:$0xff] %v1833
  %1887 = vst [vmem:[#allocation2 + $0x100] sm:$0xff] %v1399
  %1888 = vst [vmem:[#allocation2 + $0x108] sm:$0xff] %v1401
  %1889 = vst [vmem:[#allocation2 + $0x110] sm:$0xff] %v1545
  %1890 = vst [vmem:[#allocation2 + $0x118] sm:$0xff] %v1547
  %1891 = vst [vmem:[#allocation2 + $0x120] sm:$0xff] %v1691
  %1892 = vst [vmem:[#allocation2 + $0x128] sm:$0xff] %v1693
  %1893 = vst [vmem:[#allocation2 + $0x130] sm:$0xff] %v1837
  %1894 = vst [vmem:[#allocation2 + $0x138] sm:$0xff] %v1839
  %1895 = vst [vmem:[#allocation2 + $0x140] sm:$0xff] %v1403
  %1896 = vst [vmem:[#allocation2 + $0x148] sm:$0xff] %v1405
  %1897 = vst [vmem:[#allocation2 + $0x150] sm:$0xff] %v1549
  %1898 = vst [vmem:[#allocation2 + $0x158] sm:$0xff] %v1551
  %1899 = vst [vmem:[#allocation2 + $0x160] sm:$0xff] %v1695
  %1900 = vst [vmem:[#allocation2 + $0x168] sm:$0xff] %v1697
  %1901 = vst [vmem:[#allocation2 + $0x170] sm:$0xff] %v1841
  %1902 = vst [vmem:[#allocation2 + $0x178] sm:$0xff] %v1843
  %1903 = vst [vmem:[#allocation2 + $0x180] sm:$0xff] %v1409
  %1904 = vst [vmem:[#allocation2 + $0x188] sm:$0xff] %v1411
  %1905 = vst [vmem:[#allocation2 + $0x190] sm:$0xff] %v1555
  %1906 = vst [vmem:[#allocation2 + $0x198] sm:$0xff] %v1557
  %1907 = vst [vmem:[#allocation2 + $0x1a0] sm:$0xff] %v1701
  %1908 = vst [vmem:[#allocation2 + $0x1a8] sm:$0xff] %v1703
  %1909 = vst [vmem:[#allocation2 + $0x1b0] sm:$0xff] %v1847
  %1910 = vst [vmem:[#allocation2 + $0x1b8] sm:$0xff] %v1849
  %1911 = vst [vmem:[#allocation2 + $0x1c0] sm:$0xff] %v1413
  %1912 = vst [vmem:[#allocation2 + $0x1c8] sm:$0xff] %v1415
  %1913 = vst [vmem:[#allocation2 + $0x1d0] sm:$0xff] %v1559
  %1914 = vst [vmem:[#allocation2 + $0x1d8] sm:$0xff] %v1561
  %1915 = vst [vmem:[#allocation2 + $0x1e0] sm:$0xff] %v1705
  %1916 = vst [vmem:[#allocation2 + $0x1e8] sm:$0xff] %v1707
  %1917 = vst [vmem:[#allocation2 + $0x1f0] sm:$0xff] %v1851
  %1918 = vst [vmem:[#allocation2 + $0x1f8] sm:$0xff] %v1853
  %s1919 = scalar_lea.vmem %s1, 1536
  %v1920 = vld [vmem:[%s1919] sm:$0xff]
  %v1921 = vld [vmem:[%s1919 + $0x8] sm:$0xff]
  %v1922 = vld [vmem:[%s1919 + $0x10] sm:$0xff]
  %v1923 = vld [vmem:[%s1919 + $0x18] sm:$0xff]
  %v1924 = vld [vmem:[%s1919 + $0x20] sm:$0xff]
  %v1925 = vld [vmem:[%s1919 + $0x28] sm:$0xff]
  %v1926 = vld [vmem:[%s1919 + $0x30] sm:$0xff]
  %v1927 = vld [vmem:[%s1919 + $0x38] sm:$0xff]
  %v1928 = vld [vmem:[%s1919 + $0x40] sm:$0xff]
  %v1929 = vld [vmem:[%s1919 + $0x48] sm:$0xff]
  %v1930 = vld [vmem:[%s1919 + $0x50] sm:$0xff]
  %v1931 = vld [vmem:[%s1919 + $0x58] sm:$0xff]
  %v1932 = vld [vmem:[%s1919 + $0x60] sm:$0xff]
  %v1933 = vld [vmem:[%s1919 + $0x68] sm:$0xff]
  %v1934 = vld [vmem:[%s1919 + $0x70] sm:$0xff]
  %v1935 = vld [vmem:[%s1919 + $0x78] sm:$0xff]
  %v1936 = vld [vmem:[%s1919 + $0x80] sm:$0xff]
  %v1937 = vld [vmem:[%s1919 + $0x88] sm:$0xff]
  %v1938 = vld [vmem:[%s1919 + $0x90] sm:$0xff]
  %v1939 = vld [vmem:[%s1919 + $0x98] sm:$0xff]
  %v1940 = vld [vmem:[%s1919 + $0xa0] sm:$0xff]
  %v1941 = vld [vmem:[%s1919 + $0xa8] sm:$0xff]
  %v1942 = vld [vmem:[%s1919 + $0xb0] sm:$0xff]
  %v1943 = vld [vmem:[%s1919 + $0xb8] sm:$0xff]
  %v1944 = vld [vmem:[%s1919 + $0xc0] sm:$0xff]
  %v1945 = vld [vmem:[%s1919 + $0xc8] sm:$0xff]
  %v1946 = vld [vmem:[%s1919 + $0xd0] sm:$0xff]
  %v1947 = vld [vmem:[%s1919 + $0xd8] sm:$0xff]
  %v1948 = vld [vmem:[%s1919 + $0xe0] sm:$0xff]
  %v1949 = vld [vmem:[%s1919 + $0xe8] sm:$0xff]
  %v1950 = vld [vmem:[%s1919 + $0xf0] sm:$0xff]
  %v1951 = vld [vmem:[%s1919 + $0xf8] sm:$0xff]
  %v1952 = vld [vmem:[%s1919 + $0x100] sm:$0xff]
  %v1953 = vld [vmem:[%s1919 + $0x108] sm:$0xff]
  %v1954 = vld [vmem:[%s1919 + $0x110] sm:$0xff]
  %v1955 = vld [vmem:[%s1919 + $0x118] sm:$0xff]
  %v1956 = vld [vmem:[%s1919 + $0x120] sm:$0xff]
  %v1957 = vld [vmem:[%s1919 + $0x128] sm:$0xff]
  %v1958 = vld [vmem:[%s1919 + $0x130] sm:$0xff]
  %v1959 = vld [vmem:[%s1919 + $0x138] sm:$0xff]
  %v1960 = vld [vmem:[%s1919 + $0x140] sm:$0xff]
  %v1961 = vld [vmem:[%s1919 + $0x148] sm:$0xff]
  %v1962 = vld [vmem:[%s1919 + $0x150] sm:$0xff]
  %v1963 = vld [vmem:[%s1919 + $0x158] sm:$0xff]
  %v1964 = vld [vmem:[%s1919 + $0x160] sm:$0xff]
  %v1965 = vld [vmem:[%s1919 + $0x168] sm:$0xff]
  %v1966 = vld [vmem:[%s1919 + $0x170] sm:$0xff]
  %v1967 = vld [vmem:[%s1919 + $0x178] sm:$0xff]
  %v1968 = vld [vmem:[%s1919 + $0x180] sm:$0xff]
  %v1969 = vld [vmem:[%s1919 + $0x188] sm:$0xff]
  %v1970 = vld [vmem:[%s1919 + $0x190] sm:$0xff]
  %v1971 = vld [vmem:[%s1919 + $0x198] sm:$0xff]
  %v1972 = vld [vmem:[%s1919 + $0x1a0] sm:$0xff]
  %v1973 = vld [vmem:[%s1919 + $0x1a8] sm:$0xff]
  %v1974 = vld [vmem:[%s1919 + $0x1b0] sm:$0xff]
  %v1975 = vld [vmem:[%s1919 + $0x1b8] sm:$0xff]
  %v1976 = vld [vmem:[%s1919 + $0x1c0] sm:$0xff]
  %v1977 = vld [vmem:[%s1919 + $0x1c8] sm:$0xff]
  %v1978 = vld [vmem:[%s1919 + $0x1d0] sm:$0xff]
  %v1979 = vld [vmem:[%s1919 + $0x1d8] sm:$0xff]
  %v1980 = vld [vmem:[%s1919 + $0x1e0] sm:$0xff]
  %v1981 = vld [vmem:[%s1919 + $0x1e8] sm:$0xff]
  %v1982 = vld [vmem:[%s1919 + $0x1f0] sm:$0xff]
  %v1983 = vld [vmem:[%s1919 + $0x1f8] sm:$0xff]
  %v1984 = vld [vmem:[%s1919 + $0x200] sm:$0xff]
  %v1985 = vld [vmem:[%s1919 + $0x208] sm:$0xff]
  %v1986 = vld [vmem:[%s1919 + $0x210] sm:$0xff]
  %v1987 = vld [vmem:[%s1919 + $0x218] sm:$0xff]
  %v1988 = vld [vmem:[%s1919 + $0x220] sm:$0xff]
  %v1989 = vld [vmem:[%s1919 + $0x228] sm:$0xff]
  %v1990 = vld [vmem:[%s1919 + $0x230] sm:$0xff]
  %v1991 = vld [vmem:[%s1919 + $0x238] sm:$0xff]
  %v1992 = vld [vmem:[%s1919 + $0x240] sm:$0xff]
  %v1993 = vld [vmem:[%s1919 + $0x248] sm:$0xff]
  %v1994 = vld [vmem:[%s1919 + $0x250] sm:$0xff]
  %v1995 = vld [vmem:[%s1919 + $0x258] sm:$0xff]
  %v1996 = vld [vmem:[%s1919 + $0x260] sm:$0xff]
  %v1997 = vld [vmem:[%s1919 + $0x268] sm:$0xff]
  %v1998 = vld [vmem:[%s1919 + $0x270] sm:$0xff]
  %v1999 = vld [vmem:[%s1919 + $0x278] sm:$0xff]
  %v2000 = vld [vmem:[%s1919 + $0x280] sm:$0xff]
  %v2001 = vld [vmem:[%s1919 + $0x288] sm:$0xff]
  %v2002 = vld [vmem:[%s1919 + $0x290] sm:$0xff]
  %v2003 = vld [vmem:[%s1919 + $0x298] sm:$0xff]
  %v2004 = vld [vmem:[%s1919 + $0x2a0] sm:$0xff]
  %v2005 = vld [vmem:[%s1919 + $0x2a8] sm:$0xff]
  %v2006 = vld [vmem:[%s1919 + $0x2b0] sm:$0xff]
  %v2007 = vld [vmem:[%s1919 + $0x2b8] sm:$0xff]
  %v2008 = vld [vmem:[%s1919 + $0x2c0] sm:$0xff]
  %v2009 = vld [vmem:[%s1919 + $0x2c8] sm:$0xff]
  %v2010 = vld [vmem:[%s1919 + $0x2d0] sm:$0xff]
  %v2011 = vld [vmem:[%s1919 + $0x2d8] sm:$0xff]
  %v2012 = vld [vmem:[%s1919 + $0x2e0] sm:$0xff]
  %v2013 = vld [vmem:[%s1919 + $0x2e8] sm:$0xff]
  %v2014 = vld [vmem:[%s1919 + $0x2f0] sm:$0xff]
  %v2015 = vld [vmem:[%s1919 + $0x2f8] sm:$0xff]
  %v2016 = vld [vmem:[%s1919 + $0x300] sm:$0xff]
  %v2017 = vld [vmem:[%s1919 + $0x308] sm:$0xff]
  %v2018 = vld [vmem:[%s1919 + $0x310] sm:$0xff]
  %v2019 = vld [vmem:[%s1919 + $0x318] sm:$0xff]
  %v2020 = vld [vmem:[%s1919 + $0x320] sm:$0xff]
  %v2021 = vld [vmem:[%s1919 + $0x328] sm:$0xff]
  %v2022 = vld [vmem:[%s1919 + $0x330] sm:$0xff]
  %v2023 = vld [vmem:[%s1919 + $0x338] sm:$0xff]
  %v2024 = vld [vmem:[%s1919 + $0x340] sm:$0xff]
  %v2025 = vld [vmem:[%s1919 + $0x348] sm:$0xff]
  %v2026 = vld [vmem:[%s1919 + $0x350] sm:$0xff]
  %v2027 = vld [vmem:[%s1919 + $0x358] sm:$0xff]
  %v2028 = vld [vmem:[%s1919 + $0x360] sm:$0xff]
  %v2029 = vld [vmem:[%s1919 + $0x368] sm:$0xff]
  %v2030 = vld [vmem:[%s1919 + $0x370] sm:$0xff]
  %v2031 = vld [vmem:[%s1919 + $0x378] sm:$0xff]
  %v2032 = vld [vmem:[%s1919 + $0x380] sm:$0xff]
  %v2033 = vld [vmem:[%s1919 + $0x388] sm:$0xff]
  %v2034 = vld [vmem:[%s1919 + $0x390] sm:$0xff]
  %v2035 = vld [vmem:[%s1919 + $0x398] sm:$0xff]
  %v2036 = vld [vmem:[%s1919 + $0x3a0] sm:$0xff]
  %v2037 = vld [vmem:[%s1919 + $0x3a8] sm:$0xff]
  %v2038 = vld [vmem:[%s1919 + $0x3b0] sm:$0xff]
  %v2039 = vld [vmem:[%s1919 + $0x3b8] sm:$0xff]
  %v2040 = vld [vmem:[%s1919 + $0x3c0] sm:$0xff]
  %v2041 = vld [vmem:[%s1919 + $0x3c8] sm:$0xff]
  %v2042 = vld [vmem:[%s1919 + $0x3d0] sm:$0xff]
  %v2043 = vld [vmem:[%s1919 + $0x3d8] sm:$0xff]
  %v2044 = vld [vmem:[%s1919 + $0x3e0] sm:$0xff]
  %v2045 = vld [vmem:[%s1919 + $0x3e8] sm:$0xff]
  %v2046 = vld [vmem:[%s1919 + $0x3f0] sm:$0xff]
  %v2047 = vld [vmem:[%s1919 + $0x3f8] sm:$0xff]
  %v2048 = vld [vmem:[%s1919 + $0x400] sm:$0xff]
  %v2049 = vld [vmem:[%s1919 + $0x408] sm:$0xff]
  %v2050 = vld [vmem:[%s1919 + $0x410] sm:$0xff]
  %v2051 = vld [vmem:[%s1919 + $0x418] sm:$0xff]
  %v2052 = vld [vmem:[%s1919 + $0x420] sm:$0xff]
  %v2053 = vld [vmem:[%s1919 + $0x428] sm:$0xff]
  %v2054 = vld [vmem:[%s1919 + $0x430] sm:$0xff]
  %v2055 = vld [vmem:[%s1919 + $0x438] sm:$0xff]
  %v2056 = vld [vmem:[%s1919 + $0x440] sm:$0xff]
  %v2057 = vld [vmem:[%s1919 + $0x448] sm:$0xff]
  %v2058 = vld [vmem:[%s1919 + $0x450] sm:$0xff]
  %v2059 = vld [vmem:[%s1919 + $0x458] sm:$0xff]
  %v2060 = vld [vmem:[%s1919 + $0x460] sm:$0xff]
  %v2061 = vld [vmem:[%s1919 + $0x468] sm:$0xff]
  %v2062 = vld [vmem:[%s1919 + $0x470] sm:$0xff]
  %v2063 = vld [vmem:[%s1919 + $0x478] sm:$0xff]
  %v2064 = vld [vmem:[%s1919 + $0x480] sm:$0xff]
  %v2065 = vld [vmem:[%s1919 + $0x488] sm:$0xff]
  %v2066 = vld [vmem:[%s1919 + $0x490] sm:$0xff]
  %v2067 = vld [vmem:[%s1919 + $0x498] sm:$0xff]
  %v2068 = vld [vmem:[%s1919 + $0x4a0] sm:$0xff]
  %v2069 = vld [vmem:[%s1919 + $0x4a8] sm:$0xff]
  %v2070 = vld [vmem:[%s1919 + $0x4b0] sm:$0xff]
  %v2071 = vld [vmem:[%s1919 + $0x4b8] sm:$0xff]
  %v2072 = vld [vmem:[%s1919 + $0x4c0] sm:$0xff]
  %v2073 = vld [vmem:[%s1919 + $0x4c8] sm:$0xff]
  %v2074 = vld [vmem:[%s1919 + $0x4d0] sm:$0xff]
  %v2075 = vld [vmem:[%s1919 + $0x4d8] sm:$0xff]
  %v2076 = vld [vmem:[%s1919 + $0x4e0] sm:$0xff]
  %v2077 = vld [vmem:[%s1919 + $0x4e8] sm:$0xff]
  %v2078 = vld [vmem:[%s1919 + $0x4f0] sm:$0xff]
  %v2079 = vld [vmem:[%s1919 + $0x4f8] sm:$0xff]
  %v2080 = vld [vmem:[%s1919 + $0x500] sm:$0xff]
  %v2081 = vld [vmem:[%s1919 + $0x508] sm:$0xff]
  %v2082 = vld [vmem:[%s1919 + $0x510] sm:$0xff]
  %v2083 = vld [vmem:[%s1919 + $0x518] sm:$0xff]
  %v2084 = vld [vmem:[%s1919 + $0x520] sm:$0xff]
  %v2085 = vld [vmem:[%s1919 + $0x528] sm:$0xff]
  %v2086 = vld [vmem:[%s1919 + $0x530] sm:$0xff]
  %v2087 = vld [vmem:[%s1919 + $0x538] sm:$0xff]
  %v2088 = vld [vmem:[%s1919 + $0x540] sm:$0xff]
  %v2089 = vld [vmem:[%s1919 + $0x548] sm:$0xff]
  %v2090 = vld [vmem:[%s1919 + $0x550] sm:$0xff]
  %v2091 = vld [vmem:[%s1919 + $0x558] sm:$0xff]
  %v2092 = vld [vmem:[%s1919 + $0x560] sm:$0xff]
  %v2093 = vld [vmem:[%s1919 + $0x568] sm:$0xff]
  %v2094 = vld [vmem:[%s1919 + $0x570] sm:$0xff]
  %v2095 = vld [vmem:[%s1919 + $0x578] sm:$0xff]
  %v2096 = vld [vmem:[%s1919 + $0x580] sm:$0xff]
  %v2097 = vld [vmem:[%s1919 + $0x588] sm:$0xff]
  %v2098 = vld [vmem:[%s1919 + $0x590] sm:$0xff]
  %v2099 = vld [vmem:[%s1919 + $0x598] sm:$0xff]
  %v2100 = vld [vmem:[%s1919 + $0x5a0] sm:$0xff]
  %v2101 = vld [vmem:[%s1919 + $0x5a8] sm:$0xff]
  %v2102 = vld [vmem:[%s1919 + $0x5b0] sm:$0xff]
  %v2103 = vld [vmem:[%s1919 + $0x5b8] sm:$0xff]
  %v2104 = vld [vmem:[%s1919 + $0x5c0] sm:$0xff]
  %v2105 = vld [vmem:[%s1919 + $0x5c8] sm:$0xff]
  %v2106 = vld [vmem:[%s1919 + $0x5d0] sm:$0xff]
  %v2107 = vld [vmem:[%s1919 + $0x5d8] sm:$0xff]
  %v2108 = vld [vmem:[%s1919 + $0x5e0] sm:$0xff]
  %v2109 = vld [vmem:[%s1919 + $0x5e8] sm:$0xff]
  %v2110 = vld [vmem:[%s1919 + $0x5f0] sm:$0xff]
  %v2111 = vld [vmem:[%s1919 + $0x5f8] sm:$0xff]
  %v2304 = vunpack.c.l.b16 %v1920
  %v2305 = vunpack.c.h.b16 %v1920
  %v2306 = vunpack.c.l.b16 %v1921
  %v2307 = vunpack.c.h.b16 %v1921
  %v2308 = vunpack.c.l.b16 %v1922
  %v2309 = vunpack.c.h.b16 %v1922
  %v2310 = vunpack.c.l.b16 %v1923
  %v2311 = vunpack.c.h.b16 %v1923
  %v2312 = vunpack.c.l.b16 %v1924
  %v2313 = vunpack.c.h.b16 %v1924
  %v2314 = vunpack.c.l.b16 %v1925
  %v2315 = vunpack.c.h.b16 %v1925
  %v2316 = vunpack.c.l.b16 %v1926
  %v2317 = vunpack.c.h.b16 %v1926
  %v2318 = vunpack.c.l.b16 %v1927
  %v2319 = vunpack.c.h.b16 %v1927
  %v2320 = vunpack.c.l.b16 %v1928
  %v2321 = vunpack.c.h.b16 %v1928
  %v2322 = vunpack.c.l.b16 %v1929
  %v2323 = vunpack.c.h.b16 %v1929
  %v2324 = vunpack.c.l.b16 %v1930
  %v2325 = vunpack.c.h.b16 %v1930
  %v2326 = vunpack.c.l.b16 %v1931
  %v2327 = vunpack.c.h.b16 %v1931
  %v2328 = vunpack.c.l.b16 %v1932
  %v2329 = vunpack.c.h.b16 %v1932
  %v2330 = vunpack.c.l.b16 %v1933
  %v2331 = vunpack.c.h.b16 %v1933
  %v2332 = vunpack.c.l.b16 %v1934
  %v2333 = vunpack.c.h.b16 %v1934
  %v2334 = vunpack.c.l.b16 %v1935
  %v2335 = vunpack.c.h.b16 %v1935
  %v2336 = vunpack.c.l.b16 %v1936
  %v2337 = vunpack.c.h.b16 %v1936
  %v2338 = vunpack.c.l.b16 %v1937
  %v2339 = vunpack.c.h.b16 %v1937
  %v2340 = vunpack.c.l.b16 %v1938
  %v2341 = vunpack.c.h.b16 %v1938
  %v2342 = vunpack.c.l.b16 %v1939
  %v2343 = vunpack.c.h.b16 %v1939
  %v2344 = vunpack.c.l.b16 %v1940
  %v2345 = vunpack.c.h.b16 %v1940
  %v2346 = vunpack.c.l.b16 %v1941
  %v2347 = vunpack.c.h.b16 %v1941
  %v2348 = vunpack.c.l.b16 %v1942
  %v2349 = vunpack.c.h.b16 %v1942
  %v2350 = vunpack.c.l.b16 %v1943
  %v2351 = vunpack.c.h.b16 %v1943
  %v2352 = vunpack.c.l.b16 %v1944
  %v2353 = vunpack.c.h.b16 %v1944
  %v2354 = vunpack.c.l.b16 %v1945
  %v2355 = vunpack.c.h.b16 %v1945
  %v2356 = vunpack.c.l.b16 %v1946
  %v2357 = vunpack.c.h.b16 %v1946
  %v2358 = vunpack.c.l.b16 %v1947
  %v2359 = vunpack.c.h.b16 %v1947
  %v2360 = vunpack.c.l.b16 %v1948
  %v2361 = vunpack.c.h.b16 %v1948
  %v2362 = vunpack.c.l.b16 %v1949
  %v2363 = vunpack.c.h.b16 %v1949
  %v2364 = vunpack.c.l.b16 %v1950
  %v2365 = vunpack.c.h.b16 %v1950
  %v2366 = vunpack.c.l.b16 %v1951
  %v2367 = vunpack.c.h.b16 %v1951
  %v2368 = vunpack.c.l.b16 %v1952
  %v2369 = vunpack.c.h.b16 %v1952
  %v2370 = vunpack.c.l.b16 %v1953
  %v2371 = vunpack.c.h.b16 %v1953
  %v2372 = vunpack.c.l.b16 %v1954
  %v2373 = vunpack.c.h.b16 %v1954
  %v2374 = vunpack.c.l.b16 %v1955
  %v2375 = vunpack.c.h.b16 %v1955
  %v2376 = vunpack.c.l.b16 %v1956
  %v2377 = vunpack.c.h.b16 %v1956
  %v2378 = vunpack.c.l.b16 %v1957
  %v2379 = vunpack.c.h.b16 %v1957
  %v2380 = vunpack.c.l.b16 %v1958
  %v2381 = vunpack.c.h.b16 %v1958
  %v2382 = vunpack.c.l.b16 %v1959
  %v2383 = vunpack.c.h.b16 %v1959
  %v2384 = vunpack.c.l.b16 %v1960
  %v2385 = vunpack.c.h.b16 %v1960
  %v2386 = vunpack.c.l.b16 %v1961
  %v2387 = vunpack.c.h.b16 %v1961
  %v2388 = vunpack.c.l.b16 %v1962
  %v2389 = vunpack.c.h.b16 %v1962
  %v2390 = vunpack.c.l.b16 %v1963
  %v2391 = vunpack.c.h.b16 %v1963
  %v2392 = vunpack.c.l.b16 %v1964
  %v2393 = vunpack.c.h.b16 %v1964
  %v2394 = vunpack.c.l.b16 %v1965
  %v2395 = vunpack.c.h.b16 %v1965
  %v2396 = vunpack.c.l.b16 %v1966
  %v2397 = vunpack.c.h.b16 %v1966
  %v2398 = vunpack.c.l.b16 %v1967
  %v2399 = vunpack.c.h.b16 %v1967
  %v2400 = vunpack.c.l.b16 %v1968
  %v2401 = vunpack.c.h.b16 %v1968
  %v2402 = vunpack.c.l.b16 %v1969
  %v2403 = vunpack.c.h.b16 %v1969
  %v2404 = vunpack.c.l.b16 %v1970
  %v2405 = vunpack.c.h.b16 %v1970
  %v2406 = vunpack.c.l.b16 %v1971
  %v2407 = vunpack.c.h.b16 %v1971
  %v2408 = vunpack.c.l.b16 %v1972
  %v2409 = vunpack.c.h.b16 %v1972
  %v2410 = vunpack.c.l.b16 %v1973
  %v2411 = vunpack.c.h.b16 %v1973
  %v2412 = vunpack.c.l.b16 %v1974
  %v2413 = vunpack.c.h.b16 %v1974
  %v2414 = vunpack.c.l.b16 %v1975
  %v2415 = vunpack.c.h.b16 %v1975
  %v2416 = vunpack.c.l.b16 %v1976
  %v2417 = vunpack.c.h.b16 %v1976
  %v2418 = vunpack.c.l.b16 %v1977
  %v2419 = vunpack.c.h.b16 %v1977
  %v2420 = vunpack.c.l.b16 %v1978
  %v2421 = vunpack.c.h.b16 %v1978
  %v2422 = vunpack.c.l.b16 %v1979
  %v2423 = vunpack.c.h.b16 %v1979
  %v2424 = vunpack.c.l.b16 %v1980
  %v2425 = vunpack.c.h.b16 %v1980
  %v2426 = vunpack.c.l.b16 %v1981
  %v2427 = vunpack.c.h.b16 %v1981
  %v2428 = vunpack.c.l.b16 %v1982
  %v2429 = vunpack.c.h.b16 %v1982
  %v2430 = vunpack.c.l.b16 %v1983
  %v2431 = vunpack.c.h.b16 %v1983
  %v2432 = vunpack.c.l.b16 %v1984
  %v2433 = vunpack.c.h.b16 %v1984
  %v2434 = vunpack.c.l.b16 %v1985
  %v2435 = vunpack.c.h.b16 %v1985
  %v2436 = vunpack.c.l.b16 %v1986
  %v2437 = vunpack.c.h.b16 %v1986
  %v2438 = vunpack.c.l.b16 %v1987
  %v2439 = vunpack.c.h.b16 %v1987
  %v2440 = vunpack.c.l.b16 %v1988
  %v2441 = vunpack.c.h.b16 %v1988
  %v2442 = vunpack.c.l.b16 %v1989
  %v2443 = vunpack.c.h.b16 %v1989
  %v2444 = vunpack.c.l.b16 %v1990
  %v2445 = vunpack.c.h.b16 %v1990
  %v2446 = vunpack.c.l.b16 %v1991
  %v2447 = vunpack.c.h.b16 %v1991
  %v2448 = vunpack.c.l.b16 %v1992
  %v2449 = vunpack.c.h.b16 %v1992
  %v2450 = vunpack.c.l.b16 %v1993
  %v2451 = vunpack.c.h.b16 %v1993
  %v2452 = vunpack.c.l.b16 %v1994
  %v2453 = vunpack.c.h.b16 %v1994
  %v2454 = vunpack.c.l.b16 %v1995
  %v2455 = vunpack.c.h.b16 %v1995
  %v2456 = vunpack.c.l.b16 %v1996
  %v2457 = vunpack.c.h.b16 %v1996
  %v2458 = vunpack.c.l.b16 %v1997
  %v2459 = vunpack.c.h.b16 %v1997
  %v2460 = vunpack.c.l.b16 %v1998
  %v2461 = vunpack.c.h.b16 %v1998
  %v2462 = vunpack.c.l.b16 %v1999
  %v2463 = vunpack.c.h.b16 %v1999
  %v2464 = vunpack.c.l.b16 %v2000
  %v2465 = vunpack.c.h.b16 %v2000
  %v2466 = vunpack.c.l.b16 %v2001
  %v2467 = vunpack.c.h.b16 %v2001
  %v2468 = vunpack.c.l.b16 %v2002
  %v2469 = vunpack.c.h.b16 %v2002
  %v2470 = vunpack.c.l.b16 %v2003
  %v2471 = vunpack.c.h.b16 %v2003
  %v2472 = vunpack.c.l.b16 %v2004
  %v2473 = vunpack.c.h.b16 %v2004
  %v2474 = vunpack.c.l.b16 %v2005
  %v2475 = vunpack.c.h.b16 %v2005
  %v2476 = vunpack.c.l.b16 %v2006
  %v2477 = vunpack.c.h.b16 %v2006
  %v2478 = vunpack.c.l.b16 %v2007
  %v2479 = vunpack.c.h.b16 %v2007
  %v2480 = vunpack.c.l.b16 %v2008
  %v2481 = vunpack.c.h.b16 %v2008
  %v2482 = vunpack.c.l.b16 %v2009
  %v2483 = vunpack.c.h.b16 %v2009
  %v2484 = vunpack.c.l.b16 %v2010
  %v2485 = vunpack.c.h.b16 %v2010
  %v2486 = vunpack.c.l.b16 %v2011
  %v2487 = vunpack.c.h.b16 %v2011
  %v2488 = vunpack.c.l.b16 %v2012
  %v2489 = vunpack.c.h.b16 %v2012
  %v2490 = vunpack.c.l.b16 %v2013
  %v2491 = vunpack.c.h.b16 %v2013
  %v2492 = vunpack.c.l.b16 %v2014
  %v2493 = vunpack.c.h.b16 %v2014
  %v2494 = vunpack.c.l.b16 %v2015
  %v2495 = vunpack.c.h.b16 %v2015
  %v2496 = vunpack.c.l.b16 %v2016
  %v2497 = vunpack.c.h.b16 %v2016
  %v2498 = vunpack.c.l.b16 %v2017
  %v2499 = vunpack.c.h.b16 %v2017
  %v2500 = vunpack.c.l.b16 %v2018
  %v2501 = vunpack.c.h.b16 %v2018
  %v2502 = vunpack.c.l.b16 %v2019
  %v2503 = vunpack.c.h.b16 %v2019
  %v2504 = vunpack.c.l.b16 %v2020
  %v2505 = vunpack.c.h.b16 %v2020
  %v2506 = vunpack.c.l.b16 %v2021
  %v2507 = vunpack.c.h.b16 %v2021
  %v2508 = vunpack.c.l.b16 %v2022
  %v2509 = vunpack.c.h.b16 %v2022
  %v2510 = vunpack.c.l.b16 %v2023
  %v2511 = vunpack.c.h.b16 %v2023
  %v2512 = vunpack.c.l.b16 %v2024
  %v2513 = vunpack.c.h.b16 %v2024
  %v2514 = vunpack.c.l.b16 %v2025
  %v2515 = vunpack.c.h.b16 %v2025
  %v2516 = vunpack.c.l.b16 %v2026
  %v2517 = vunpack.c.h.b16 %v2026
  %v2518 = vunpack.c.l.b16 %v2027
  %v2519 = vunpack.c.h.b16 %v2027
  %v2520 = vunpack.c.l.b16 %v2028
  %v2521 = vunpack.c.h.b16 %v2028
  %v2522 = vunpack.c.l.b16 %v2029
  %v2523 = vunpack.c.h.b16 %v2029
  %v2524 = vunpack.c.l.b16 %v2030
  %v2525 = vunpack.c.h.b16 %v2030
  %v2526 = vunpack.c.l.b16 %v2031
  %v2527 = vunpack.c.h.b16 %v2031
  %v2528 = vunpack.c.l.b16 %v2032
  %v2529 = vunpack.c.h.b16 %v2032
  %v2530 = vunpack.c.l.b16 %v2033
  %v2531 = vunpack.c.h.b16 %v2033
  %v2532 = vunpack.c.l.b16 %v2034
  %v2533 = vunpack.c.h.b16 %v2034
  %v2534 = vunpack.c.l.b16 %v2035
  %v2535 = vunpack.c.h.b16 %v2035
  %v2536 = vunpack.c.l.b16 %v2036
  %v2537 = vunpack.c.h.b16 %v2036
  %v2538 = vunpack.c.l.b16 %v2037
  %v2539 = vunpack.c.h.b16 %v2037
  %v2540 = vunpack.c.l.b16 %v2038
  %v2541 = vunpack.c.h.b16 %v2038
  %v2542 = vunpack.c.l.b16 %v2039
  %v2543 = vunpack.c.h.b16 %v2039
  %v2544 = vunpack.c.l.b16 %v2040
  %v2545 = vunpack.c.h.b16 %v2040
  %v2546 = vunpack.c.l.b16 %v2041
  %v2547 = vunpack.c.h.b16 %v2041
  %v2548 = vunpack.c.l.b16 %v2042
  %v2549 = vunpack.c.h.b16 %v2042
  %v2550 = vunpack.c.l.b16 %v2043
  %v2551 = vunpack.c.h.b16 %v2043
  %v2552 = vunpack.c.l.b16 %v2044
  %v2553 = vunpack.c.h.b16 %v2044
  %v2554 = vunpack.c.l.b16 %v2045
  %v2555 = vunpack.c.h.b16 %v2045
  %v2556 = vunpack.c.l.b16 %v2046
  %v2557 = vunpack.c.h.b16 %v2046
  %v2558 = vunpack.c.l.b16 %v2047
  %v2559 = vunpack.c.h.b16 %v2047
  %v2560 = vunpack.c.l.b16 %v2048
  %v2561 = vunpack.c.h.b16 %v2048
  %v2562 = vunpack.c.l.b16 %v2049
  %v2563 = vunpack.c.h.b16 %v2049
  %v2564 = vunpack.c.l.b16 %v2050
  %v2565 = vunpack.c.h.b16 %v2050
  %v2566 = vunpack.c.l.b16 %v2051
  %v2567 = vunpack.c.h.b16 %v2051
  %v2568 = vunpack.c.l.b16 %v2052
  %v2569 = vunpack.c.h.b16 %v2052
  %v2570 = vunpack.c.l.b16 %v2053
  %v2571 = vunpack.c.h.b16 %v2053
  %v2572 = vunpack.c.l.b16 %v2054
  %v2573 = vunpack.c.h.b16 %v2054
  %v2574 = vunpack.c.l.b16 %v2055
  %v2575 = vunpack.c.h.b16 %v2055
  %v2576 = vunpack.c.l.b16 %v2056
  %v2577 = vunpack.c.h.b16 %v2056
  %v2578 = vunpack.c.l.b16 %v2057
  %v2579 = vunpack.c.h.b16 %v2057
  %v2580 = vunpack.c.l.b16 %v2058
  %v2581 = vunpack.c.h.b16 %v2058
  %v2582 = vunpack.c.l.b16 %v2059
  %v2583 = vunpack.c.h.b16 %v2059
  %v2584 = vunpack.c.l.b16 %v2060
  %v2585 = vunpack.c.h.b16 %v2060
  %v2586 = vunpack.c.l.b16 %v2061
  %v2587 = vunpack.c.h.b16 %v2061
  %v2588 = vunpack.c.l.b16 %v2062
  %v2589 = vunpack.c.h.b16 %v2062
  %v2590 = vunpack.c.l.b16 %v2063
  %v2591 = vunpack.c.h.b16 %v2063
  %v2592 = vunpack.c.l.b16 %v2064
  %v2593 = vunpack.c.h.b16 %v2064
  %v2594 = vunpack.c.l.b16 %v2065
  %v2595 = vunpack.c.h.b16 %v2065
  %v2596 = vunpack.c.l.b16 %v2066
  %v2597 = vunpack.c.h.b16 %v2066
  %v2598 = vunpack.c.l.b16 %v2067
  %v2599 = vunpack.c.h.b16 %v2067
  %v2600 = vunpack.c.l.b16 %v2068
  %v2601 = vunpack.c.h.b16 %v2068
  %v2602 = vunpack.c.l.b16 %v2069
  %v2603 = vunpack.c.h.b16 %v2069
  %v2604 = vunpack.c.l.b16 %v2070
  %v2605 = vunpack.c.h.b16 %v2070
  %v2606 = vunpack.c.l.b16 %v2071
  %v2607 = vunpack.c.h.b16 %v2071
  %v2608 = vunpack.c.l.b16 %v2072
  %v2609 = vunpack.c.h.b16 %v2072
  %v2610 = vunpack.c.l.b16 %v2073
  %v2611 = vunpack.c.h.b16 %v2073
  %v2612 = vunpack.c.l.b16 %v2074
  %v2613 = vunpack.c.h.b16 %v2074
  %v2614 = vunpack.c.l.b16 %v2075
  %v2615 = vunpack.c.h.b16 %v2075
  %v2616 = vunpack.c.l.b16 %v2076
  %v2617 = vunpack.c.h.b16 %v2076
  %v2618 = vunpack.c.l.b16 %v2077
  %v2619 = vunpack.c.h.b16 %v2077
  %v2620 = vunpack.c.l.b16 %v2078
  %v2621 = vunpack.c.h.b16 %v2078
  %v2622 = vunpack.c.l.b16 %v2079
  %v2623 = vunpack.c.h.b16 %v2079
  %v2624 = vunpack.c.l.b16 %v2080
  %v2625 = vunpack.c.h.b16 %v2080
  %v2626 = vunpack.c.l.b16 %v2081
  %v2627 = vunpack.c.h.b16 %v2081
  %v2628 = vunpack.c.l.b16 %v2082
  %v2629 = vunpack.c.h.b16 %v2082
  %v2630 = vunpack.c.l.b16 %v2083
  %v2631 = vunpack.c.h.b16 %v2083
  %v2632 = vunpack.c.l.b16 %v2084
  %v2633 = vunpack.c.h.b16 %v2084
  %v2634 = vunpack.c.l.b16 %v2085
  %v2635 = vunpack.c.h.b16 %v2085
  %v2636 = vunpack.c.l.b16 %v2086
  %v2637 = vunpack.c.h.b16 %v2086
  %v2638 = vunpack.c.l.b16 %v2087
  %v2639 = vunpack.c.h.b16 %v2087
  %v2640 = vunpack.c.l.b16 %v2088
  %v2641 = vunpack.c.h.b16 %v2088
  %v2642 = vunpack.c.l.b16 %v2089
  %v2643 = vunpack.c.h.b16 %v2089
  %v2644 = vunpack.c.l.b16 %v2090
  %v2645 = vunpack.c.h.b16 %v2090
  %v2646 = vunpack.c.l.b16 %v2091
  %v2647 = vunpack.c.h.b16 %v2091
  %v2648 = vunpack.c.l.b16 %v2092
  %v2649 = vunpack.c.h.b16 %v2092
  %v2650 = vunpack.c.l.b16 %v2093
  %v2651 = vunpack.c.h.b16 %v2093
  %v2652 = vunpack.c.l.b16 %v2094
  %v2653 = vunpack.c.h.b16 %v2094
  %v2654 = vunpack.c.l.b16 %v2095
  %v2655 = vunpack.c.h.b16 %v2095
  %v2656 = vunpack.c.l.b16 %v2096
  %v2657 = vunpack.c.h.b16 %v2096
  %v2658 = vunpack.c.l.b16 %v2097
  %v2659 = vunpack.c.h.b16 %v2097
  %v2660 = vunpack.c.l.b16 %v2098
  %v2661 = vunpack.c.h.b16 %v2098
  %v2662 = vunpack.c.l.b16 %v2099
  %v2663 = vunpack.c.h.b16 %v2099
  %v2664 = vunpack.c.l.b16 %v2100
  %v2665 = vunpack.c.h.b16 %v2100
  %v2666 = vunpack.c.l.b16 %v2101
  %v2667 = vunpack.c.h.b16 %v2101
  %v2668 = vunpack.c.l.b16 %v2102
  %v2669 = vunpack.c.h.b16 %v2102
  %v2670 = vunpack.c.l.b16 %v2103
  %v2671 = vunpack.c.h.b16 %v2103
  %v2672 = vunpack.c.l.b16 %v2104
  %v2673 = vunpack.c.h.b16 %v2104
  %v2674 = vunpack.c.l.b16 %v2105
  %v2675 = vunpack.c.h.b16 %v2105
  %v2676 = vunpack.c.l.b16 %v2106
  %v2677 = vunpack.c.h.b16 %v2106
  %v2678 = vunpack.c.l.b16 %v2107
  %v2679 = vunpack.c.h.b16 %v2107
  %v2680 = vunpack.c.l.b16 %v2108
  %v2681 = vunpack.c.h.b16 %v2108
  %v2682 = vunpack.c.l.b16 %v2109
  %v2683 = vunpack.c.h.b16 %v2109
  %v2684 = vunpack.c.l.b16 %v2110
  %v2685 = vunpack.c.h.b16 %v2110
  %v2686 = vunpack.c.l.b16 %v2111
  %v2687 = vunpack.c.h.b16 %v2111
  %v2688 = vpack.c.b16 %v2312, %v2304
  %v2689 = vpack.c.b16 %v2313, %v2305
  %v2690 = vpack.c.b16 %v2314, %v2306
  %v2691 = vpack.c.b16 %v2315, %v2307
  %v2692 = vpack.c.b16 %v2316, %v2308
  %v2693 = vpack.c.b16 %v2317, %v2309
  %v2694 = vpack.c.b16 %v2318, %v2310
  %v2695 = vpack.c.b16 %v2319, %v2311
  %v2696 = vpack.c.b16 %v2328, %v2320
  %v2697 = vpack.c.b16 %v2329, %v2321
  %v2698 = vpack.c.b16 %v2330, %v2322
  %v2699 = vpack.c.b16 %v2331, %v2323
  %v2700 = vpack.c.b16 %v2332, %v2324
  %v2701 = vpack.c.b16 %v2333, %v2325
  %v2702 = vpack.c.b16 %v2334, %v2326
  %v2703 = vpack.c.b16 %v2335, %v2327
  %v2704 = vpack.c.b16 %v2344, %v2336
  %v2705 = vpack.c.b16 %v2345, %v2337
  %v2706 = vpack.c.b16 %v2346, %v2338
  %v2707 = vpack.c.b16 %v2347, %v2339
  %v2708 = vpack.c.b16 %v2348, %v2340
  %v2709 = vpack.c.b16 %v2349, %v2341
  %v2710 = vpack.c.b16 %v2350, %v2342
  %v2711 = vpack.c.b16 %v2351, %v2343
  %v2712 = vpack.c.b16 %v2360, %v2352
  %v2713 = vpack.c.b16 %v2361, %v2353
  %v2714 = vpack.c.b16 %v2362, %v2354
  %v2715 = vpack.c.b16 %v2363, %v2355
  %v2716 = vpack.c.b16 %v2364, %v2356
  %v2717 = vpack.c.b16 %v2365, %v2357
  %v2718 = vpack.c.b16 %v2366, %v2358
  %v2719 = vpack.c.b16 %v2367, %v2359
  %v2720 = vpack.c.b16 %v2376, %v2368
  %v2721 = vpack.c.b16 %v2377, %v2369
  %v2722 = vpack.c.b16 %v2378, %v2370
  %v2723 = vpack.c.b16 %v2379, %v2371
  %v2724 = vpack.c.b16 %v2380, %v2372
  %v2725 = vpack.c.b16 %v2381, %v2373
  %v2726 = vpack.c.b16 %v2382, %v2374
  %v2727 = vpack.c.b16 %v2383, %v2375
  %v2728 = vpack.c.b16 %v2392, %v2384
  %v2729 = vpack.c.b16 %v2393, %v2385
  %v2730 = vpack.c.b16 %v2394, %v2386
  %v2731 = vpack.c.b16 %v2395, %v2387
  %v2732 = vpack.c.b16 %v2396, %v2388
  %v2733 = vpack.c.b16 %v2397, %v2389
  %v2734 = vpack.c.b16 %v2398, %v2390
  %v2735 = vpack.c.b16 %v2399, %v2391
  %v2736 = vpack.c.b16 %v2408, %v2400
  %v2737 = vpack.c.b16 %v2409, %v2401
  %v2738 = vpack.c.b16 %v2410, %v2402
  %v2739 = vpack.c.b16 %v2411, %v2403
  %v2740 = vpack.c.b16 %v2412, %v2404
  %v2741 = vpack.c.b16 %v2413, %v2405
  %v2742 = vpack.c.b16 %v2414, %v2406
  %v2743 = vpack.c.b16 %v2415, %v2407
  %v2744 = vpack.c.b16 %v2424, %v2416
  %v2745 = vpack.c.b16 %v2425, %v2417
  %v2746 = vpack.c.b16 %v2426, %v2418
  %v2747 = vpack.c.b16 %v2427, %v2419
  %v2748 = vpack.c.b16 %v2428, %v2420
  %v2749 = vpack.c.b16 %v2429, %v2421
  %v2750 = vpack.c.b16 %v2430, %v2422
  %v2751 = vpack.c.b16 %v2431, %v2423
  %v2752 = vpack.c.b16 %v2440, %v2432
  %v2753 = vpack.c.b16 %v2441, %v2433
  %v2754 = vpack.c.b16 %v2442, %v2434
  %v2755 = vpack.c.b16 %v2443, %v2435
  %v2756 = vpack.c.b16 %v2444, %v2436
  %v2757 = vpack.c.b16 %v2445, %v2437
  %v2758 = vpack.c.b16 %v2446, %v2438
  %v2759 = vpack.c.b16 %v2447, %v2439
  %v2760 = vpack.c.b16 %v2456, %v2448
  %v2761 = vpack.c.b16 %v2457, %v2449
  %v2762 = vpack.c.b16 %v2458, %v2450
  %v2763 = vpack.c.b16 %v2459, %v2451
  %v2764 = vpack.c.b16 %v2460, %v2452
  %v2765 = vpack.c.b16 %v2461, %v2453
  %v2766 = vpack.c.b16 %v2462, %v2454
  %v2767 = vpack.c.b16 %v2463, %v2455
  %v2768 = vpack.c.b16 %v2472, %v2464
  %v2769 = vpack.c.b16 %v2473, %v2465
  %v2770 = vpack.c.b16 %v2474, %v2466
  %v2771 = vpack.c.b16 %v2475, %v2467
  %v2772 = vpack.c.b16 %v2476, %v2468
  %v2773 = vpack.c.b16 %v2477, %v2469
  %v2774 = vpack.c.b16 %v2478, %v2470
  %v2775 = vpack.c.b16 %v2479, %v2471
  %v2776 = vpack.c.b16 %v2488, %v2480
  %v2777 = vpack.c.b16 %v2489, %v2481
  %v2778 = vpack.c.b16 %v2490, %v2482
  %v2779 = vpack.c.b16 %v2491, %v2483
  %v2780 = vpack.c.b16 %v2492, %v2484
  %v2781 = vpack.c.b16 %v2493, %v2485
  %v2782 = vpack.c.b16 %v2494, %v2486
  %v2783 = vpack.c.b16 %v2495, %v2487
  %v2784 = vpack.c.b16 %v2504, %v2496
  %v2785 = vpack.c.b16 %v2505, %v2497
  %v2786 = vpack.c.b16 %v2506, %v2498
  %v2787 = vpack.c.b16 %v2507, %v2499
  %v2788 = vpack.c.b16 %v2508, %v2500
  %v2789 = vpack.c.b16 %v2509, %v2501
  %v2790 = vpack.c.b16 %v2510, %v2502
  %v2791 = vpack.c.b16 %v2511, %v2503
  %v2792 = vpack.c.b16 %v2520, %v2512
  %v2793 = vpack.c.b16 %v2521, %v2513
  %v2794 = vpack.c.b16 %v2522, %v2514
  %v2795 = vpack.c.b16 %v2523, %v2515
  %v2796 = vpack.c.b16 %v2524, %v2516
  %v2797 = vpack.c.b16 %v2525, %v2517
  %v2798 = vpack.c.b16 %v2526, %v2518
  %v2799 = vpack.c.b16 %v2527, %v2519
  %v2800 = vpack.c.b16 %v2536, %v2528
  %v2801 = vpack.c.b16 %v2537, %v2529
  %v2802 = vpack.c.b16 %v2538, %v2530
  %v2803 = vpack.c.b16 %v2539, %v2531
  %v2804 = vpack.c.b16 %v2540, %v2532
  %v2805 = vpack.c.b16 %v2541, %v2533
  %v2806 = vpack.c.b16 %v2542, %v2534
  %v2807 = vpack.c.b16 %v2543, %v2535
  %v2808 = vpack.c.b16 %v2552, %v2544
  %v2809 = vpack.c.b16 %v2553, %v2545
  %v2810 = vpack.c.b16 %v2554, %v2546
  %v2811 = vpack.c.b16 %v2555, %v2547
  %v2812 = vpack.c.b16 %v2556, %v2548
  %v2813 = vpack.c.b16 %v2557, %v2549
  %v2814 = vpack.c.b16 %v2558, %v2550
  %v2815 = vpack.c.b16 %v2559, %v2551
  %v2816 = vpack.c.b16 %v2568, %v2560
  %v2817 = vpack.c.b16 %v2569, %v2561
  %v2818 = vpack.c.b16 %v2570, %v2562
  %v2819 = vpack.c.b16 %v2571, %v2563
  %v2820 = vpack.c.b16 %v2572, %v2564
  %v2821 = vpack.c.b16 %v2573, %v2565
  %v2822 = vpack.c.b16 %v2574, %v2566
  %v2823 = vpack.c.b16 %v2575, %v2567
  %v2824 = vpack.c.b16 %v2584, %v2576
  %v2825 = vpack.c.b16 %v2585, %v2577
  %v2826 = vpack.c.b16 %v2586, %v2578
  %v2827 = vpack.c.b16 %v2587, %v2579
  %v2828 = vpack.c.b16 %v2588, %v2580
  %v2829 = vpack.c.b16 %v2589, %v2581
  %v2830 = vpack.c.b16 %v2590, %v2582
  %v2831 = vpack.c.b16 %v2591, %v2583
  %v2832 = vpack.c.b16 %v2600, %v2592
  %v2833 = vpack.c.b16 %v2601, %v2593
  %v2834 = vpack.c.b16 %v2602, %v2594
  %v2835 = vpack.c.b16 %v2603, %v2595
  %v2836 = vpack.c.b16 %v2604, %v2596
  %v2837 = vpack.c.b16 %v2605, %v2597
  %v2838 = vpack.c.b16 %v2606, %v2598
  %v2839 = vpack.c.b16 %v2607, %v2599
  %v2840 = vpack.c.b16 %v2616, %v2608
  %v2841 = vpack.c.b16 %v2617, %v2609
  %v2842 = vpack.c.b16 %v2618, %v2610
  %v2843 = vpack.c.b16 %v2619, %v2611
  %v2844 = vpack.c.b16 %v2620, %v2612
  %v2845 = vpack.c.b16 %v2621, %v2613
  %v2846 = vpack.c.b16 %v2622, %v2614
  %v2847 = vpack.c.b16 %v2623, %v2615
  %v2848 = vpack.c.b16 %v2632, %v2624
  %v2849 = vpack.c.b16 %v2633, %v2625
  %v2850 = vpack.c.b16 %v2634, %v2626
  %v2851 = vpack.c.b16 %v2635, %v2627
  %v2852 = vpack.c.b16 %v2636, %v2628
  %v2853 = vpack.c.b16 %v2637, %v2629
  %v2854 = vpack.c.b16 %v2638, %v2630
  %v2855 = vpack.c.b16 %v2639, %v2631
  %v2856 = vpack.c.b16 %v2648, %v2640
  %v2857 = vpack.c.b16 %v2649, %v2641
  %v2858 = vpack.c.b16 %v2650, %v2642
  %v2859 = vpack.c.b16 %v2651, %v2643
  %v2860 = vpack.c.b16 %v2652, %v2644
  %v2861 = vpack.c.b16 %v2653, %v2645
  %v2862 = vpack.c.b16 %v2654, %v2646
  %v2863 = vpack.c.b16 %v2655, %v2647
  %v2864 = vpack.c.b16 %v2664, %v2656
  %v2865 = vpack.c.b16 %v2665, %v2657
  %v2866 = vpack.c.b16 %v2666, %v2658
  %v2867 = vpack.c.b16 %v2667, %v2659
  %v2868 = vpack.c.b16 %v2668, %v2660
  %v2869 = vpack.c.b16 %v2669, %v2661
  %v2870 = vpack.c.b16 %v2670, %v2662
  %v2871 = vpack.c.b16 %v2671, %v2663
  %v2872 = vpack.c.b16 %v2680, %v2672
  %v2873 = vpack.c.b16 %v2681, %v2673
  %v2874 = vpack.c.b16 %v2682, %v2674
  %v2875 = vpack.c.b16 %v2683, %v2675
  %v2876 = vpack.c.b16 %v2684, %v2676
  %v2877 = vpack.c.b16 %v2685, %v2677
  %v2878 = vpack.c.b16 %v2686, %v2678
  %v2879 = vpack.c.b16 %v2687, %v2679
  %3072 = vmatprep.subr.bf16.mxu0 %v2689
  %3073 = vmatpush1.bf16.msra.mxu0 %v2688
  %3074 = vmatprep.subr.bf16.mxu0 %v2697
  %3075 = vmatpush1.bf16.msra.mxu0 %v2696
  %3076 = vmatprep.subr.bf16.mxu0 %v2705
  %3077 = vmatpush1.bf16.msra.mxu0 %v2704
  %3078 = vmatprep.subr.bf16.mxu0 %v2713
  %3079 = vmatpush1.bf16.msra.mxu0 %v2712
  %3080 = vmatprep.subr.bf16.mxu0 %v2721
  %3081 = vmatpush1.bf16.msra.mxu0 %v2720
  %3082 = vmatprep.subr.bf16.mxu0 %v2729
  %3083 = vmatpush1.bf16.msra.mxu0 %v2728
  %3084 = vmatprep.subr.bf16.mxu0 %v2737
  %3085 = vmatpush1.bf16.msra.mxu0 %v2736
  %3086 = vmatprep.subr.bf16.mxu0 %v2745
  %3087 = vmatpush1.bf16.msra.mxu0 %v2744
  %3088 = vmatprep.subr.bf16.mxu0 %v2753
  %3089 = vmatpush1.bf16.msra.mxu0 %v2752
  %3090 = vmatprep.subr.bf16.mxu0 %v2761
  %3091 = vmatpush1.bf16.msra.mxu0 %v2760
  %3092 = vmatprep.subr.bf16.mxu0 %v2769
  %3093 = vmatpush1.bf16.msra.mxu0 %v2768
  %3094 = vmatprep.subr.bf16.mxu0 %v2777
  %3095 = vmatpush1.bf16.msra.mxu0 %v2776
  %3096 = vmatprep.subr.bf16.mxu0 %v2785
  %3097 = vmatpush1.bf16.msra.mxu0 %v2784
  %3098 = vmatprep.subr.bf16.mxu0 %v2793
  %3099 = vmatpush1.bf16.msra.mxu0 %v2792
  %3100 = vmatprep.subr.bf16.mxu0 %v2801
  %3101 = vmatpush1.bf16.msra.mxu0 %v2800
  %3102 = vmatprep.subr.bf16.mxu0 %v2809
  %3103 = vmatpush1.bf16.msra.mxu0 %v2808
  %3104 = vmatprep.mubr.bf16.mxu0 %v288
  %3105 = vmatmul.mubr.bf16.gmra.mrb[0].mxu0 %v287
  %v3106 = vpop.f32.mrb[0].mxu0
  %v3107 = vadd.f32 0.0, %v3106
  %v3108 = vpop.f32.mrb[0].mxu0
  %v3109 = vadd.f32 0.0, %v3108
  %v3110 = vpop.f32.mrb[0].mxu0
  %v3111 = vadd.f32 0.0, %v3110
  %v3112 = vpop.f32.mrb[0].mxu0
  %v3113 = vadd.f32 0.0, %v3112
  %3114 = vmatprep.mubr.bf16.mxu0 %v291
  %3115 = vmatmul.mubr.bf16.gmra.mrb[0].mxu0 %v290
  %v3116 = vpop.f32.mrb[0].mxu0
  %v3117 = vadd.f32 0.0, %v3116
  %v3118 = vpop.f32.mrb[0].mxu0
  %v3119 = vadd.f32 0.0, %v3118
  %v3120 = vpop.f32.mrb[0].mxu0
  %v3121 = vadd.f32 0.0, %v3120
  %v3122 = vpop.f32.mrb[0].mxu0
  %v3123 = vadd.f32 0.0, %v3122
  %3124 = vmatprep.mubr.bf16.mxu0 %v294
  %3125 = vmatmul.mubr.bf16.gmra.mrb[0].mxu0 %v293
  %v3126 = vpop.f32.mrb[0].mxu0
  %v3127 = vadd.f32 0.0, %v3126
  %v3128 = vpop.f32.mrb[0].mxu0
  %v3129 = vadd.f32 0.0, %v3128
  %v3130 = vpop.f32.mrb[0].mxu0
  %v3131 = vadd.f32 0.0, %v3130
  %v3132 = vpop.f32.mrb[0].mxu0
  %v3133 = vadd.f32 0.0, %v3132
  %3134 = vmatprep.mubr.bf16.mxu0 %v297
  %3135 = vmatmul.mubr.bf16.gmra.mrb[0].mxu0 %v296
  %v3136 = vpop.f32.mrb[0].mxu0
  %v3137 = vadd.f32 0.0, %v3136
  %v3138 = vpop.f32.mrb[0].mxu0
  %v3139 = vadd.f32 0.0, %v3138
  %v3140 = vpop.f32.mrb[0].mxu0
  %v3141 = vadd.f32 0.0, %v3140
  %v3142 = vpop.f32.mrb[0].mxu0
  %v3143 = vadd.f32 0.0, %v3142
  %3144 = vdwg.mxu0
  %3145 = vmatprep.subr.bf16.mxu0 %v2817
  %3146 = vmatpush1.bf16.msra.mxu0 %v2816
  %3147 = vmatprep.subr.bf16.mxu0 %v2825
  %3148 = vmatpush1.bf16.msra.mxu0 %v2824
  %3149 = vmatprep.subr.bf16.mxu0 %v2833
  %3150 = vmatpush1.bf16.msra.mxu0 %v2832
  %3151 = vmatprep.subr.bf16.mxu0 %v2841
  %3152 = vmatpush1.bf16.msra.mxu0 %v2840
  %3153 = vmatprep.subr.bf16.mxu0 %v2849
  %3154 = vmatpush1.bf16.msra.mxu0 %v2848
  %3155 = vmatprep.subr.bf16.mxu0 %v2857
  %3156 = vmatpush1.bf16.msra.mxu0 %v2856
  %3157 = vmatprep.subr.bf16.mxu0 %v2865
  %3158 = vmatpush1.bf16.msra.mxu0 %v2864
  %3159 = vmatprep.subr.bf16.mxu0 %v2873
  %3160 = vmatpush1.bf16.msra.mxu0 %v2872
  %3161 = vmatprep.subr.bf16.mxu0 0
  %3162 = vmatpush1.bf16.msra.mxu0 0
  %3163 = vmatprep.subr.bf16.mxu0 0
  %3164 = vmatpush1.bf16.msra.mxu0 0
  %3165 = vmatprep.subr.bf16.mxu0 0
  %3166 = vmatpush1.bf16.msra.mxu0 0
  %3167 = vmatprep.subr.bf16.mxu0 0
  %3168 = vmatpush1.bf16.msra.mxu0 0
  %3169 = vmatprep.subr.bf16.mxu0 0
  %3170 = vmatpush1.bf16.msra.mxu0 0
  %3171 = vmatprep.subr.bf16.mxu0 0
  %3172 = vmatpush1.bf16.msra.mxu0 0
  %3173 = vmatprep.subr.bf16.mxu0 0
  %3174 = vmatpush1.bf16.msra.mxu0 0
  %3175 = vmatprep.subr.bf16.mxu0 0
  %3176 = vmatpush1.bf16.msra.mxu0 0
  %3177 = vmatprep.mubr.bf16.mxu0 0
  %3178 = vmatmul.mubr.bf16.gmra.mrb[0].mxu0 %v289
  %v3179 = vpop.f32.mrb[0].mxu0
  %v3180 = vadd.f32 %v3107, %v3179
  %v3181 = vpop.f32.mrb[0].mxu0
  %v3182 = vadd.f32 %v3109, %v3181
  %v3183 = vpop.f32.mrb[0].mxu0
  %v3184 = vadd.f32 %v3111, %v3183
  %v3185 = vpop.f32.mrb[0].mxu0
  %v3186 = vadd.f32 %v3113, %v3185
  %3187 = vmatprep.mubr.bf16.mxu0 0
  %3188 = vmatmul.mubr.bf16.gmra.mrb[0].mxu0 %v292
  %v3189 = vpop.f32.mrb[0].mxu0
  %v3190 = vadd.f32 %v3117, %v3189
  %v3191 = vpop.f32.mrb[0].mxu0
  %v3192 = vadd.f32 %v3119, %v3191
  %v3193 = vpop.f32.mrb[0].mxu0
  %v3194 = vadd.f32 %v3121, %v3193
  %v3195 = vpop.f32.mrb[0].mxu0
  %v3196 = vadd.f32 %v3123, %v3195
  %3197 = vmatprep.mubr.bf16.mxu0 0
  %3198 = vmatmul.mubr.bf16.gmra.mrb[0].mxu0 %v295
  %v3199 = vpop.f32.mrb[0].mxu0
  %v3200 = vadd.f32 %v3127, %v3199
  %v3201 = vpop.f32.mrb[0].mxu0
  %v3202 = vadd.f32 %v3129, %v3201
  %v3203 = vpop.f32.mrb[0].mxu0
  %v3204 = vadd.f32 %v3131, %v3203
  %v3205 = vpop.f32.mrb[0].mxu0
  %v3206 = vadd.f32 %v3133, %v3205
  %3207 = vmatprep.mubr.bf16.mxu0 0
  %3208 = vmatmul.mubr.bf16.gmra.mrb[0].mxu0 %v298
  %v3209 = vpop.f32.mrb[0].mxu0
  %v3210 = vadd.f32 %v3137, %v3209
  %v3211 = vpop.f32.mrb[0].mxu0
  %v3212 = vadd.f32 %v3139, %v3211
  %v3213 = vpop.f32.mrb[0].mxu0
  %v3214 = vadd.f32 %v3141, %v3213
  %v3215 = vpop.f32.mrb[0].mxu0
  %v3216 = vadd.f32 %v3143, %v3215
  %3217 = vdwg.mxu0
  %3218 = vmatprep.subr.bf16.mxu0 %v2691
  %3219 = vmatpush1.bf16.msra.mxu0 %v2690
  %3220 = vmatprep.subr.bf16.mxu0 %v2699
  %3221 = vmatpush1.bf16.msra.mxu0 %v2698
  %3222 = vmatprep.subr.bf16.mxu0 %v2707
  %3223 = vmatpush1.bf16.msra.mxu0 %v2706
  %3224 = vmatprep.subr.bf16.mxu0 %v2715
  %3225 = vmatpush1.bf16.msra.mxu0 %v2714
  %3226 = vmatprep.subr.bf16.mxu0 %v2723
  %3227 = vmatpush1.bf16.msra.mxu0 %v2722
  %3228 = vmatprep.subr.bf16.mxu0 %v2731
  %3229 = vmatpush1.bf16.msra.mxu0 %v2730
  %3230 = vmatprep.subr.bf16.mxu0 %v2739
  %3231 = vmatpush1.bf16.msra.mxu0 %v2738
  %3232 = vmatprep.subr.bf16.mxu0 %v2747
  %3233 = vmatpush1.bf16.msra.mxu0 %v2746
  %3234 = vmatprep.subr.bf16.mxu0 %v2755
  %3235 = vmatpush1.bf16.msra.mxu0 %v2754
  %3236 = vmatprep.subr.bf16.mxu0 %v2763
  %3237 = vmatpush1.bf16.msra.mxu0 %v2762
  %3238 = vmatprep.subr.bf16.mxu0 %v2771
  %3239 = vmatpush1.bf16.msra.mxu0 %v2770
  %3240 = vmatprep.subr.bf16.mxu0 %v2779
  %3241 = vmatpush1.bf16.msra.mxu0 %v2778
  %3242 = vmatprep.subr.bf16.mxu0 %v2787
  %3243 = vmatpush1.bf16.msra.mxu0 %v2786
  %3244 = vmatprep.subr.bf16.mxu0 %v2795
  %3245 = vmatpush1.bf16.msra.mxu0 %v2794
  %3246 = vmatprep.subr.bf16.mxu0 %v2803
  %3247 = vmatpush1.bf16.msra.mxu0 %v2802
  %3248 = vmatprep.subr.bf16.mxu0 %v2811
  %3249 = vmatpush1.bf16.msra.mxu0 %v2810
  %3250 = vmatprep.mubr.bf16.mxu0 %v288
  %3251 = vmatmul.mubr.bf16.gmra.mrb[0].mxu0 %v287
  %v3252 = vpop.f32.mrb[0].mxu0
  %v3253 = vadd.f32 0.0, %v3252
  %v3254 = vpop.f32.mrb[0].mxu0
  %v3255 = vadd.f32 0.0, %v3254
  %v3256 = vpop.f32.mrb[0].mxu0
  %v3257 = vadd.f32 0.0, %v3256
  %v3258 = vpop.f32.mrb[0].mxu0
  %v3259 = vadd.f32 0.0, %v3258
  %3260 = vmatprep.mubr.bf16.mxu0 %v291
  %3261 = vmatmul.mubr.bf16.gmra.mrb[0].mxu0 %v290
  %v3262 = vpop.f32.mrb[0].mxu0
  %v3263 = vadd.f32 0.0, %v3262
  %v3264 = vpop.f32.mrb[0].mxu0
  %v3265 = vadd.f32 0.0, %v3264
  %v3266 = vpop.f32.mrb[0].mxu0
  %v3267 = vadd.f32 0.0, %v3266
  %v3268 = vpop.f32.mrb[0].mxu0
  %v3269 = vadd.f32 0.0, %v3268
  %3270 = vmatprep.mubr.bf16.mxu0 %v294
  %3271 = vmatmul.mubr.bf16.gmra.mrb[0].mxu0 %v293
  %v3272 = vpop.f32.mrb[0].mxu0
  %v3273 = vadd.f32 0.0, %v3272
  %v3274 = vpop.f32.mrb[0].mxu0
  %v3275 = vadd.f32 0.0, %v3274
  %v3276 = vpop.f32.mrb[0].mxu0
  %v3277 = vadd.f32 0.0, %v3276
  %v3278 = vpop.f32.mrb[0].mxu0
  %v3279 = vadd.f32 0.0, %v3278
  %3280 = vmatprep.mubr.bf16.mxu0 %v297
  %3281 = vmatmul.mubr.bf16.gmra.mrb[0].mxu0 %v296
  %v3282 = vpop.f32.mrb[0].mxu0
  %v3283 = vadd.f32 0.0, %v3282
  %v3284 = vpop.f32.mrb[0].mxu0
  %v3285 = vadd.f32 0.0, %v3284
  %v3286 = vpop.f32.mrb[0].mxu0
  %v3287 = vadd.f32 0.0, %v3286
  %v3288 = vpop.f32.mrb[0].mxu0
  %v3289 = vadd.f32 0.0, %v3288
  %3290 = vdwg.mxu0
  %3291 = vmatprep.subr.bf16.mxu0 %v2819
  %3292 = vmatpush1.bf16.msra.mxu0 %v2818
  %3293 = vmatprep.subr.bf16.mxu0 %v2827
  %3294 = vmatpush1.bf16.msra.mxu0 %v2826
  %3295 = vmatprep.subr.bf16.mxu0 %v2835
  %3296 = vmatpush1.bf16.msra.mxu0 %v2834
  %3297 = vmatprep.subr.bf16.mxu0 %v2843
  %3298 = vmatpush1.bf16.msra.mxu0 %v2842
  %3299 = vmatprep.subr.bf16.mxu0 %v2851
  %3300 = vmatpush1.bf16.msra.mxu0 %v2850
  %3301 = vmatprep.subr.bf16.mxu0 %v2859
  %3302 = vmatpush1.bf16.msra.mxu0 %v2858
  %3303 = vmatprep.subr.bf16.mxu0 %v2867
  %3304 = vmatpush1.bf16.msra.mxu0 %v2866
  %3305 = vmatprep.subr.bf16.mxu0 %v2875
  %3306 = vmatpush1.bf16.msra.mxu0 %v2874
  %3307 = vmatprep.subr.bf16.mxu0 0
  %3308 = vmatpush1.bf16.msra.mxu0 0
  %3309 = vmatprep.subr.bf16.mxu0 0
  %3310 = vmatpush1.bf16.msra.mxu0 0
  %3311 = vmatprep.subr.bf16.mxu0 0
  %3312 = vmatpush1.bf16.msra.mxu0 0
  %3313 = vmatprep.subr.bf16.mxu0 0
  %3314 = vmatpush1.bf16.msra.mxu0 0
  %3315 = vmatprep.subr.bf16.mxu0 0
  %3316 = vmatpush1.bf16.msra.mxu0 0
  %3317 = vmatprep.subr.bf16.mxu0 0
  %3318 = vmatpush1.bf16.msra.mxu0 0
  %3319 = vmatprep.subr.bf16.mxu0 0
  %3320 = vmatpush1.bf16.msra.mxu0 0
  %3321 = vmatprep.subr.bf16.mxu0 0
  %3322 = vmatpush1.bf16.msra.mxu0 0
  %3323 = vmatprep.mubr.bf16.mxu0 0
  %3324 = vmatmul.mubr.bf16.gmra.mrb[0].mxu0 %v289
  %v3325 = vpop.f32.mrb[0].mxu0
  %v3326 = vadd.f32 %v3253, %v3325
  %v3327 = vpop.f32.mrb[0].mxu0
  %v3328 = vadd.f32 %v3255, %v3327
  %v3329 = vpop.f32.mrb[0].mxu0
  %v3330 = vadd.f32 %v3257, %v3329
  %v3331 = vpop.f32.mrb[0].mxu0
  %v3332 = vadd.f32 %v3259, %v3331
  %3333 = vmatprep.mubr.bf16.mxu0 0
  %3334 = vmatmul.mubr.bf16.gmra.mrb[0].mxu0 %v292
  %v3335 = vpop.f32.mrb[0].mxu0
  %v3336 = vadd.f32 %v3263, %v3335
  %v3337 = vpop.f32.mrb[0].mxu0
  %v3338 = vadd.f32 %v3265, %v3337
  %v3339 = vpop.f32.mrb[0].mxu0
  %v3340 = vadd.f32 %v3267, %v3339
  %v3341 = vpop.f32.mrb[0].mxu0
  %v3342 = vadd.f32 %v3269, %v3341
  %3343 = vmatprep.mubr.bf16.mxu0 0
  %3344 = vmatmul.mubr.bf16.gmra.mrb[0].mxu0 %v295
  %v3345 = vpop.f32.mrb[0].mxu0
  %v3346 = vadd.f32 %v3273, %v3345
  %v3347 = vpop.f32.mrb[0].mxu0
  %v3348 = vadd.f32 %v3275, %v3347
  %v3349 = vpop.f32.mrb[0].mxu0
  %v3350 = vadd.f32 %v3277, %v3349
  %v3351 = vpop.f32.mrb[0].mxu0
  %v3352 = vadd.f32 %v3279, %v3351
  %3353 = vmatprep.mubr.bf16.mxu0 0
  %3354 = vmatmul.mubr.bf16.gmra.mrb[0].mxu0 %v298
  %v3355 = vpop.f32.mrb[0].mxu0
  %v3356 = vadd.f32 %v3283, %v3355
  %v3357 = vpop.f32.mrb[0].mxu0
  %v3358 = vadd.f32 %v3285, %v3357
  %v3359 = vpop.f32.mrb[0].mxu0
  %v3360 = vadd.f32 %v3287, %v3359
  %v3361 = vpop.f32.mrb[0].mxu0
  %v3362 = vadd.f32 %v3289, %v3361
  %3363 = vdwg.mxu0
  %3364 = vmatprep.subr.bf16.mxu0 %v2693
  %3365 = vmatpush1.bf16.msra.mxu0 %v2692
  %3366 = vmatprep.subr.bf16.mxu0 %v2701
  %3367 = vmatpush1.bf16.msra.mxu0 %v2700
  %3368 = vmatprep.subr.bf16.mxu0 %v2709
  %3369 = vmatpush1.bf16.msra.mxu0 %v2708
  %3370 = vmatprep.subr.bf16.mxu0 %v2717
  %3371 = vmatpush1.bf16.msra.mxu0 %v2716
  %3372 = vmatprep.subr.bf16.mxu0 %v2725
  %3373 = vmatpush1.bf16.msra.mxu0 %v2724
  %3374 = vmatprep.subr.bf16.mxu0 %v2733
  %3375 = vmatpush1.bf16.msra.mxu0 %v2732
  %3376 = vmatprep.subr.bf16.mxu0 %v2741
  %3377 = vmatpush1.bf16.msra.mxu0 %v2740
  %3378 = vmatprep.subr.bf16.mxu0 %v2749
  %3379 = vmatpush1.bf16.msra.mxu0 %v2748
  %3380 = vmatprep.subr.bf16.mxu0 %v2757
  %3381 = vmatpush1.bf16.msra.mxu0 %v2756
  %3382 = vmatprep.subr.bf16.mxu0 %v2765
  %3383 = vmatpush1.bf16.msra.mxu0 %v2764
  %3384 = vmatprep.subr.bf16.mxu0 %v2773
  %3385 = vmatpush1.bf16.msra.mxu0 %v2772
  %3386 = vmatprep.subr.bf16.mxu0 %v2781
  %3387 = vmatpush1.bf16.msra.mxu0 %v2780
  %3388 = vmatprep.subr.bf16.mxu0 %v2789
  %3389 = vmatpush1.bf16.msra.mxu0 %v2788
  %3390 = vmatprep.subr.bf16.mxu0 %v2797
  %3391 = vmatpush1.bf16.msra.mxu0 %v2796
  %3392 = vmatprep.subr.bf16.mxu0 %v2805
  %3393 = vmatpush1.bf16.msra.mxu0 %v2804
  %3394 = vmatprep.subr.bf16.mxu0 %v2813
  %3395 = vmatpush1.bf16.msra.mxu0 %v2812
  %3396 = vmatprep.mubr.bf16.mxu0 %v288
  %3397 = vmatmul.mubr.bf16.gmra.mrb[0].mxu0 %v287
  %v3398 = vpop.f32.mrb[0].mxu0
  %v3399 = vadd.f32 0.0, %v3398
  %v3400 = vpop.f32.mrb[0].mxu0
  %v3401 = vadd.f32 0.0, %v3400
  %v3402 = vpop.f32.mrb[0].mxu0
  %v3403 = vadd.f32 0.0, %v3402
  %v3404 = vpop.f32.mrb[0].mxu0
  %v3405 = vadd.f32 0.0, %v3404
  %3406 = vmatprep.mubr.bf16.mxu0 %v291
  %3407 = vmatmul.mubr.bf16.gmra.mrb[0].mxu0 %v290
  %v3408 = vpop.f32.mrb[0].mxu0
  %v3409 = vadd.f32 0.0, %v3408
  %v3410 = vpop.f32.mrb[0].mxu0
  %v3411 = vadd.f32 0.0, %v3410
  %v3412 = vpop.f32.mrb[0].mxu0
  %v3413 = vadd.f32 0.0, %v3412
  %v3414 = vpop.f32.mrb[0].mxu0
  %v3415 = vadd.f32 0.0, %v3414
  %3416 = vmatprep.mubr.bf16.mxu0 %v294
  %3417 = vmatmul.mubr.bf16.gmra.mrb[0].mxu0 %v293
  %v3418 = vpop.f32.mrb[0].mxu0
  %v3419 = vadd.f32 0.0, %v3418
  %v3420 = vpop.f32.mrb[0].mxu0
  %v3421 = vadd.f32 0.0, %v3420
  %v3422 = vpop.f32.mrb[0].mxu0
  %v3423 = vadd.f32 0.0, %v3422
  %v3424 = vpop.f32.mrb[0].mxu0
  %v3425 = vadd.f32 0.0, %v3424
  %3426 = vmatprep.mubr.bf16.mxu0 %v297
  %3427 = vmatmul.mubr.bf16.gmra.mrb[0].mxu0 %v296
  %v3428 = vpop.f32.mrb[0].mxu0
  %v3429 = vadd.f32 0.0, %v3428
  %v3430 = vpop.f32.mrb[0].mxu0
  %v3431 = vadd.f32 0.0, %v3430
  %v3432 = vpop.f32.mrb[0].mxu0
  %v3433 = vadd.f32 0.0, %v3432
  %v3434 = vpop.f32.mrb[0].mxu0
  %v3435 = vadd.f32 0.0, %v3434
  %3436 = vdwg.mxu0
  %3437 = vmatprep.subr.bf16.mxu0 %v2821
  %3438 = vmatpush1.bf16.msra.mxu0 %v2820
  %3439 = vmatprep.subr.bf16.mxu0 %v2829
  %3440 = vmatpush1.bf16.msra.mxu0 %v2828
  %3441 = vmatprep.subr.bf16.mxu0 %v2837
  %3442 = vmatpush1.bf16.msra.mxu0 %v2836
  %3443 = vmatprep.subr.bf16.mxu0 %v2845
  %3444 = vmatpush1.bf16.msra.mxu0 %v2844
  %3445 = vmatprep.subr.bf16.mxu0 %v2853
  %3446 = vmatpush1.bf16.msra.mxu0 %v2852
  %3447 = vmatprep.subr.bf16.mxu0 %v2861
  %3448 = vmatpush1.bf16.msra.mxu0 %v2860
  %3449 = vmatprep.subr.bf16.mxu0 %v2869
  %3450 = vmatpush1.bf16.msra.mxu0 %v2868
  %3451 = vmatprep.subr.bf16.mxu0 %v2877
  %3452 = vmatpush1.bf16.msra.mxu0 %v2876
  %3453 = vmatprep.subr.bf16.mxu0 0
  %3454 = vmatpush1.bf16.msra.mxu0 0
  %3455 = vmatprep.subr.bf16.mxu0 0
  %3456 = vmatpush1.bf16.msra.mxu0 0
  %3457 = vmatprep.subr.bf16.mxu0 0
  %3458 = vmatpush1.bf16.msra.mxu0 0
  %3459 = vmatprep.subr.bf16.mxu0 0
  %3460 = vmatpush1.bf16.msra.mxu0 0
  %3461 = vmatprep.subr.bf16.mxu0 0
  %3462 = vmatpush1.bf16.msra.mxu0 0
  %3463 = vmatprep.subr.bf16.mxu0 0
  %3464 = vmatpush1.bf16.msra.mxu0 0
  %3465 = vmatprep.subr.bf16.mxu0 0
  %3466 = vmatpush1.bf16.msra.mxu0 0
  %3467 = vmatprep.subr.bf16.mxu0 0
  %3468 = vmatpush1.bf16.msra.mxu0 0
  %3469 = vmatprep.mubr.bf16.mxu0 0
  %3470 = vmatmul.mubr.bf16.gmra.mrb[0].mxu0 %v289
  %v3471 = vpop.f32.mrb[0].mxu0
  %v3472 = vadd.f32 %v3399, %v3471
  %v3473 = vpop.f32.mrb[0].mxu0
  %v3474 = vadd.f32 %v3401, %v3473
  %v3475 = vpop.f32.mrb[0].mxu0
  %v3476 = vadd.f32 %v3403, %v3475
  %v3477 = vpop.f32.mrb[0].mxu0
  %v3478 = vadd.f32 %v3405, %v3477
  %3479 = vmatprep.mubr.bf16.mxu0 0
  %3480 = vmatmul.mubr.bf16.gmra.mrb[0].mxu0 %v292
  %v3481 = vpop.f32.mrb[0].mxu0
  %v3482 = vadd.f32 %v3409, %v3481
  %v3483 = vpop.f32.mrb[0].mxu0
  %v3484 = vadd.f32 %v3411, %v3483
  %v3485 = vpop.f32.mrb[0].mxu0
  %v3486 = vadd.f32 %v3413, %v3485
  %v3487 = vpop.f32.mrb[0].mxu0
  %v3488 = vadd.f32 %v3415, %v3487
  %3489 = vmatprep.mubr.bf16.mxu0 0
  %3490 = vmatmul.mubr.bf16.gmra.mrb[0].mxu0 %v295
  %v3491 = vpop.f32.mrb[0].mxu0
  %v3492 = vadd.f32 %v3419, %v3491
  %v3493 = vpop.f32.mrb[0].mxu0
  %v3494 = vadd.f32 %v3421, %v3493
  %v3495 = vpop.f32.mrb[0].mxu0
  %v3496 = vadd.f32 %v3423, %v3495
  %v3497 = vpop.f32.mrb[0].mxu0
  %v3498 = vadd.f32 %v3425, %v3497
  %3499 = vmatprep.mubr.bf16.mxu0 0
  %3500 = vmatmul.mubr.bf16.gmra.mrb[0].mxu0 %v298
  %v3501 = vpop.f32.mrb[0].mxu0
  %v3502 = vadd.f32 %v3429, %v3501
  %v3503 = vpop.f32.mrb[0].mxu0
  %v3504 = vadd.f32 %v3431, %v3503
  %v3505 = vpop.f32.mrb[0].mxu0
  %v3506 = vadd.f32 %v3433, %v3505
  %v3507 = vpop.f32.mrb[0].mxu0
  %v3508 = vadd.f32 %v3435, %v3507
  %3509 = vdwg.mxu0
  %3510 = vmatprep.subr.bf16.mxu0 %v2695
  %3511 = vmatpush1.bf16.msra.mxu0 %v2694
  %3512 = vmatprep.subr.bf16.mxu0 %v2703
  %3513 = vmatpush1.bf16.msra.mxu0 %v2702
  %3514 = vmatprep.subr.bf16.mxu0 %v2711
  %3515 = vmatpush1.bf16.msra.mxu0 %v2710
  %3516 = vmatprep.subr.bf16.mxu0 %v2719
  %3517 = vmatpush1.bf16.msra.mxu0 %v2718
  %3518 = vmatprep.subr.bf16.mxu0 %v2727
  %3519 = vmatpush1.bf16.msra.mxu0 %v2726
  %3520 = vmatprep.subr.bf16.mxu0 %v2735
  %3521 = vmatpush1.bf16.msra.mxu0 %v2734
  %3522 = vmatprep.subr.bf16.mxu0 %v2743
  %3523 = vmatpush1.bf16.msra.mxu0 %v2742
  %3524 = vmatprep.subr.bf16.mxu0 %v2751
  %3525 = vmatpush1.bf16.msra.mxu0 %v2750
  %3526 = vmatprep.subr.bf16.mxu0 %v2759
  %3527 = vmatpush1.bf16.msra.mxu0 %v2758
  %3528 = vmatprep.subr.bf16.mxu0 %v2767
  %3529 = vmatpush1.bf16.msra.mxu0 %v2766
  %3530 = vmatprep.subr.bf16.mxu0 %v2775
  %3531 = vmatpush1.bf16.msra.mxu0 %v2774
  %3532 = vmatprep.subr.bf16.mxu0 %v2783
  %3533 = vmatpush1.bf16.msra.mxu0 %v2782
  %3534 = vmatprep.subr.bf16.mxu0 %v2791
  %3535 = vmatpush1.bf16.msra.mxu0 %v2790
  %3536 = vmatprep.subr.bf16.mxu0 %v2799
  %3537 = vmatpush1.bf16.msra.mxu0 %v2798
  %3538 = vmatprep.subr.bf16.mxu0 %v2807
  %3539 = vmatpush1.bf16.msra.mxu0 %v2806
  %3540 = vmatprep.subr.bf16.mxu0 %v2815
  %3541 = vmatpush1.bf16.msra.mxu0 %v2814
  %3542 = vmatprep.mubr.bf16.mxu0 %v288
  %3543 = vmatmul.mubr.bf16.gmra.mrb[0].mxu0 %v287
  %v3544 = vpop.f32.mrb[0].mxu0
  %v3545 = vadd.f32 0.0, %v3544
  %v3546 = vpop.f32.mrb[0].mxu0
  %v3547 = vadd.f32 0.0, %v3546
  %v3548 = vpop.f32.mrb[0].mxu0
  %v3549 = vadd.f32 0.0, %v3548
  %v3550 = vpop.f32.mrb[0].mxu0
  %v3551 = vadd.f32 0.0, %v3550
  %3552 = vmatprep.mubr.bf16.mxu0 %v291
  %3553 = vmatmul.mubr.bf16.gmra.mrb[0].mxu0 %v290
  %v3554 = vpop.f32.mrb[0].mxu0
  %v3555 = vadd.f32 0.0, %v3554
  %v3556 = vpop.f32.mrb[0].mxu0
  %v3557 = vadd.f32 0.0, %v3556
  %v3558 = vpop.f32.mrb[0].mxu0
  %v3559 = vadd.f32 0.0, %v3558
  %v3560 = vpop.f32.mrb[0].mxu0
  %v3561 = vadd.f32 0.0, %v3560
  %3562 = vmatprep.mubr.bf16.mxu0 %v294
  %3563 = vmatmul.mubr.bf16.gmra.mrb[0].mxu0 %v293
  %v3564 = vpop.f32.mrb[0].mxu0
  %v3565 = vadd.f32 0.0, %v3564
  %v3566 = vpop.f32.mrb[0].mxu0
  %v3567 = vadd.f32 0.0, %v3566
  %v3568 = vpop.f32.mrb[0].mxu0
  %v3569 = vadd.f32 0.0, %v3568
  %v3570 = vpop.f32.mrb[0].mxu0
  %v3571 = vadd.f32 0.0, %v3570
  %3572 = vmatprep.mubr.bf16.mxu0 %v297
  %3573 = vmatmul.mubr.bf16.gmra.mrb[0].mxu0 %v296
  %v3574 = vpop.f32.mrb[0].mxu0
  %v3575 = vadd.f32 0.0, %v3574
  %v3576 = vpop.f32.mrb[0].mxu0
  %v3577 = vadd.f32 0.0, %v3576
  %v3578 = vpop.f32.mrb[0].mxu0
  %v3579 = vadd.f32 0.0, %v3578
  %v3580 = vpop.f32.mrb[0].mxu0
  %v3581 = vadd.f32 0.0, %v3580
  %3582 = vdwg.mxu0
  %3583 = vmatprep.subr.bf16.mxu0 %v2823
  %3584 = vmatpush1.bf16.msra.mxu0 %v2822
  %3585 = vmatprep.subr.bf16.mxu0 %v2831
  %3586 = vmatpush1.bf16.msra.mxu0 %v2830
  %3587 = vmatprep.subr.bf16.mxu0 %v2839
  %3588 = vmatpush1.bf16.msra.mxu0 %v2838
  %3589 = vmatprep.subr.bf16.mxu0 %v2847
  %3590 = vmatpush1.bf16.msra.mxu0 %v2846
  %3591 = vmatprep.subr.bf16.mxu0 %v2855
  %3592 = vmatpush1.bf16.msra.mxu0 %v2854
  %3593 = vmatprep.subr.bf16.mxu0 %v2863
  %3594 = vmatpush1.bf16.msra.mxu0 %v2862
  %3595 = vmatprep.subr.bf16.mxu0 %v2871
  %3596 = vmatpush1.bf16.msra.mxu0 %v2870
  %3597 = vmatprep.subr.bf16.mxu0 %v2879
  %3598 = vmatpush1.bf16.msra.mxu0 %v2878
  %3599 = vmatprep.subr.bf16.mxu0 0
  %3600 = vmatpush1.bf16.msra.mxu0 0
  %3601 = vmatprep.subr.bf16.mxu0 0
  %3602 = vmatpush1.bf16.msra.mxu0 0
  %3603 = vmatprep.subr.bf16.mxu0 0
  %3604 = vmatpush1.bf16.msra.mxu0 0
  %3605 = vmatprep.subr.bf16.mxu0 0
  %3606 = vmatpush1.bf16.msra.mxu0 0
  %3607 = vmatprep.subr.bf16.mxu0 0
  %3608 = vmatpush1.bf16.msra.mxu0 0
  %3609 = vmatprep.subr.bf16.mxu0 0
  %3610 = vmatpush1.bf16.msra.mxu0 0
  %3611 = vmatprep.subr.bf16.mxu0 0
  %3612 = vmatpush1.bf16.msra.mxu0 0
  %3613 = vmatprep.subr.bf16.mxu0 0
  %3614 = vmatpush1.bf16.msra.mxu0 0
  %3615 = vmatprep.mubr.bf16.mxu0 0
  %3616 = vmatmul.mubr.bf16.gmra.mrb[0].mxu0 %v289
  %v3617 = vpop.f32.mrb[0].mxu0
  %v3618 = vadd.f32 %v3545, %v3617
  %v3619 = vpop.f32.mrb[0].mxu0
  %v3620 = vadd.f32 %v3547, %v3619
  %v3621 = vpop.f32.mrb[0].mxu0
  %v3622 = vadd.f32 %v3549, %v3621
  %v3623 = vpop.f32.mrb[0].mxu0
  %v3624 = vadd.f32 %v3551, %v3623
  %3625 = vmatprep.mubr.bf16.mxu0 0
  %3626 = vmatmul.mubr.bf16.gmra.mrb[0].mxu0 %v292
  %v3627 = vpop.f32.mrb[0].mxu0
  %v3628 = vadd.f32 %v3555, %v3627
  %v3629 = vpop.f32.mrb[0].mxu0
  %v3630 = vadd.f32 %v3557, %v3629
  %v3631 = vpop.f32.mrb[0].mxu0
  %v3632 = vadd.f32 %v3559, %v3631
  %v3633 = vpop.f32.mrb[0].mxu0
  %v3634 = vadd.f32 %v3561, %v3633
  %3635 = vmatprep.mubr.bf16.mxu0 0
  %3636 = vmatmul.mubr.bf16.gmra.mrb[0].mxu0 %v295
  %v3637 = vpop.f32.mrb[0].mxu0
  %v3638 = vadd.f32 %v3565, %v3637
  %v3639 = vpop.f32.mrb[0].mxu0
  %v3640 = vadd.f32 %v3567, %v3639
  %v3641 = vpop.f32.mrb[0].mxu0
  %v3642 = vadd.f32 %v3569, %v3641
  %v3643 = vpop.f32.mrb[0].mxu0
  %v3644 = vadd.f32 %v3571, %v3643
  %3645 = vmatprep.mubr.bf16.mxu0 0
  %3646 = vmatmul.mubr.bf16.gmra.mrb[0].mxu0 %v298
  %v3647 = vpop.f32.mrb[0].mxu0
  %v3648 = vadd.f32 %v3575, %v3647
  %v3649 = vpop.f32.mrb[0].mxu0
  %v3650 = vadd.f32 %v3577, %v3649
  %v3651 = vpop.f32.mrb[0].mxu0
  %v3652 = vadd.f32 %v3579, %v3651
  %v3653 = vpop.f32.mrb[0].mxu0
  %v3654 = vadd.f32 %v3581, %v3653
  %3655 = vdwg.mxu0
  %v3656 = vld [vmem:[#allocation2] sm:$0xff]
  %v3657 = vld [vmem:[#allocation2 + $0x8] sm:$0xff]
  %v3658 = vld [vmem:[#allocation2 + $0x10] sm:$0xff]
  %v3659 = vld [vmem:[#allocation2 + $0x18] sm:$0xff]
  %v3660 = vld [vmem:[#allocation2 + $0x20] sm:$0xff]
  %v3661 = vld [vmem:[#allocation2 + $0x28] sm:$0xff]
  %v3662 = vld [vmem:[#allocation2 + $0x30] sm:$0xff]
  %v3663 = vld [vmem:[#allocation2 + $0x38] sm:$0xff]
  %v3664 = vld [vmem:[#allocation2 + $0x40] sm:$0xff]
  %v3665 = vld [vmem:[#allocation2 + $0x48] sm:$0xff]
  %v3666 = vld [vmem:[#allocation2 + $0x50] sm:$0xff]
  %v3667 = vld [vmem:[#allocation2 + $0x58] sm:$0xff]
  %v3668 = vld [vmem:[#allocation2 + $0x60] sm:$0xff]
  %v3669 = vld [vmem:[#allocation2 + $0x68] sm:$0xff]
  %v3670 = vld [vmem:[#allocation2 + $0x70] sm:$0xff]
  %v3671 = vld [vmem:[#allocation2 + $0x78] sm:$0xff]
  %v3672 = vld [vmem:[#allocation2 + $0x80] sm:$0xff]
  %v3673 = vld [vmem:[#allocation2 + $0x88] sm:$0xff]
  %v3674 = vld [vmem:[#allocation2 + $0x90] sm:$0xff]
  %v3675 = vld [vmem:[#allocation2 + $0x98] sm:$0xff]
  %v3676 = vld [vmem:[#allocation2 + $0xa0] sm:$0xff]
  %v3677 = vld [vmem:[#allocation2 + $0xa8] sm:$0xff]
  %v3678 = vld [vmem:[#allocation2 + $0xb0] sm:$0xff]
  %v3679 = vld [vmem:[#allocation2 + $0xb8] sm:$0xff]
  %v3680 = vld [vmem:[#allocation2 + $0xc0] sm:$0xff]
  %v3681 = vld [vmem:[#allocation2 + $0xc8] sm:$0xff]
  %v3682 = vld [vmem:[#allocation2 + $0xd0] sm:$0xff]
  %v3683 = vld [vmem:[#allocation2 + $0xd8] sm:$0xff]
  %v3684 = vld [vmem:[#allocation2 + $0xe0] sm:$0xff]
  %v3685 = vld [vmem:[#allocation2 + $0xe8] sm:$0xff]
  %v3686 = vld [vmem:[#allocation2 + $0xf0] sm:$0xff]
  %v3687 = vld [vmem:[#allocation2 + $0xf8] sm:$0xff]
  %v3688 = vld [vmem:[#allocation2 + $0x100] sm:$0xff]
  %v3689 = vld [vmem:[#allocation2 + $0x108] sm:$0xff]
  %v3690 = vld [vmem:[#allocation2 + $0x110] sm:$0xff]
  %v3691 = vld [vmem:[#allocation2 + $0x118] sm:$0xff]
  %v3692 = vld [vmem:[#allocation2 + $0x120] sm:$0xff]
  %v3693 = vld [vmem:[#allocation2 + $0x128] sm:$0xff]
  %v3694 = vld [vmem:[#allocation2 + $0x130] sm:$0xff]
  %v3695 = vld [vmem:[#allocation2 + $0x138] sm:$0xff]
  %v3696 = vld [vmem:[#allocation2 + $0x140] sm:$0xff]
  %v3697 = vld [vmem:[#allocation2 + $0x148] sm:$0xff]
  %v3698 = vld [vmem:[#allocation2 + $0x150] sm:$0xff]
  %v3699 = vld [vmem:[#allocation2 + $0x158] sm:$0xff]
  %v3700 = vld [vmem:[#allocation2 + $0x160] sm:$0xff]
  %v3701 = vld [vmem:[#allocation2 + $0x168] sm:$0xff]
  %v3702 = vld [vmem:[#allocation2 + $0x170] sm:$0xff]
  %v3703 = vld [vmem:[#allocation2 + $0x178] sm:$0xff]
  %v3704 = vld [vmem:[#allocation2 + $0x180] sm:$0xff]
  %v3705 = vld [vmem:[#allocation2 + $0x188] sm:$0xff]
  %v3706 = vld [vmem:[#allocation2 + $0x190] sm:$0xff]
  %v3707 = vld [vmem:[#allocation2 + $0x198] sm:$0xff]
  %v3708 = vld [vmem:[#allocation2 + $0x1a0] sm:$0xff]
  %v3709 = vld [vmem:[#allocation2 + $0x1a8] sm:$0xff]
  %v3710 = vld [vmem:[#allocation2 + $0x1b0] sm:$0xff]
  %v3711 = vld [vmem:[#allocation2 + $0x1b8] sm:$0xff]
  %v3712 = vld [vmem:[#allocation2 + $0x1c0] sm:$0x7f]
  %v3713 = vld [vmem:[#allocation2 + $0x1c8] sm:$0x7f]
  %v3714 = vld [vmem:[#allocation2 + $0x1d0] sm:$0x7f]
  %v3715 = vld [vmem:[#allocation2 + $0x1d8] sm:$0x7f]
  %v3716 = vld [vmem:[#allocation2 + $0x1e0] sm:$0x7f]
  %v3717 = vld [vmem:[#allocation2 + $0x1e8] sm:$0x7f]
  %v3718 = vld [vmem:[#allocation2 + $0x1f0] sm:$0x7f]
  %v3719 = vld [vmem:[#allocation2 + $0x1f8] sm:$0x7f]
  %vm3784 = vcmask 1046528
  %v3785 = vrot.slane %v3180, 1
  %v3786 = vrot.slane %v3184, 1
  %v3787 = vsel %vm3784, %v3785, %v3786
  %v3788 = vrot.slane %v3182, 1
  %v3789 = vrot.slane %v3186, 1
  %v3790 = vsel %vm3784, %v3788, %v3789
  %v3791 = vrot.slane %v3326, 1
  %v3792 = vrot.slane %v3330, 1
  %v3793 = vsel %vm3784, %v3791, %v3792
  %v3794 = vrot.slane %v3328, 1
  %v3795 = vrot.slane %v3332, 1
  %v3796 = vsel %vm3784, %v3794, %v3795
  %v3797 = vrot.slane %v3472, 1
  %v3798 = vrot.slane %v3476, 1
  %v3799 = vsel %vm3784, %v3797, %v3798
  %v3800 = vrot.slane %v3474, 1
  %v3801 = vrot.slane %v3478, 1
  %v3802 = vsel %vm3784, %v3800, %v3801
  %v3803 = vrot.slane %v3618, 1
  %v3804 = vrot.slane %v3622, 1
  %v3805 = vsel %vm3784, %v3803, %v3804
  %v3806 = vrot.slane %v3620, 1
  %v3807 = vrot.slane %v3624, 1
  %v3808 = vsel %vm3784, %v3806, %v3807
  %v3809 = vrot.slane %v3190, 1
  %v3810 = vsel %vm3784, %v3786, %v3809
  %v3811 = vrot.slane %v3192, 1
  %v3812 = vsel %vm3784, %v3789, %v3811
  %v3813 = vrot.slane %v3336, 1
  %v3814 = vsel %vm3784, %v3792, %v3813
  %v3815 = vrot.slane %v3338, 1
  %v3816 = vsel %vm3784, %v3795, %v3815
  %v3817 = vrot.slane %v3482, 1
  %v3818 = vsel %vm3784, %v3798, %v3817
  %v3819 = vrot.slane %v3484, 1
  %v3820 = vsel %vm3784, %v3801, %v3819
  %v3821 = vrot.slane %v3628, 1
  %v3822 = vsel %vm3784, %v3804, %v3821
  %v3823 = vrot.slane %v3630, 1
  %v3824 = vsel %vm3784, %v3807, %v3823
  %v3825 = vrot.slane %v3194, 1
  %v3826 = vsel %vm3784, %v3809, %v3825
  %v3827 = vrot.slane %v3196, 1
  %v3828 = vsel %vm3784, %v3811, %v3827
  %v3829 = vrot.slane %v3340, 1
  %v3830 = vsel %vm3784, %v3813, %v3829
  %v3831 = vrot.slane %v3342, 1
  %v3832 = vsel %vm3784, %v3815, %v3831
  %v3833 = vrot.slane %v3486, 1
  %v3834 = vsel %vm3784, %v3817, %v3833
  %v3835 = vrot.slane %v3488, 1
  %v3836 = vsel %vm3784, %v3819, %v3835
  %v3837 = vrot.slane %v3632, 1
  %v3838 = vsel %vm3784, %v3821, %v3837
  %v3839 = vrot.slane %v3634, 1
  %v3840 = vsel %vm3784, %v3823, %v3839
  %v3841 = vrot.slane %v3200, 1
  %v3842 = vsel %vm3784, %v3825, %v3841
  %v3843 = vrot.slane %v3202, 1
  %v3844 = vsel %vm3784, %v3827, %v3843
  %v3845 = vrot.slane %v3346, 1
  %v3846 = vsel %vm3784, %v3829, %v3845
  %v3847 = vrot.slane %v3348, 1
  %v3848 = vsel %vm3784, %v3831, %v3847
  %v3849 = vrot.slane %v3492, 1
  %v3850 = vsel %vm3784, %v3833, %v3849
  %v3851 = vrot.slane %v3494, 1
  %v3852 = vsel %vm3784, %v3835, %v3851
  %v3853 = vrot.slane %v3638, 1
  %v3854 = vsel %vm3784, %v3837, %v3853
  %v3855 = vrot.slane %v3640, 1
  %v3856 = vsel %vm3784, %v3839, %v3855
  %v3857 = vrot.slane %v3204, 1
  %v3858 = vsel %vm3784, %v3841, %v3857
  %v3859 = vrot.slane %v3206, 1
  %v3860 = vsel %vm3784, %v3843, %v3859
  %v3861 = vrot.slane %v3350, 1
  %v3862 = vsel %vm3784, %v3845, %v3861
  %v3863 = vrot.slane %v3352, 1
  %v3864 = vsel %vm3784, %v3847, %v3863
  %v3865 = vrot.slane %v3496, 1
  %v3866 = vsel %vm3784, %v3849, %v3865
  %v3867 = vrot.slane %v3498, 1
  %v3868 = vsel %vm3784, %v3851, %v3867
  %v3869 = vrot.slane %v3642, 1
  %v3870 = vsel %vm3784, %v3853, %v3869
  %v3871 = vrot.slane %v3644, 1
  %v3872 = vsel %vm3784, %v3855, %v3871
  %v3873 = vrot.slane %v3210, 1
  %v3874 = vsel %vm3784, %v3857, %v3873
  %v3875 = vrot.slane %v3212, 1
  %v3876 = vsel %vm3784, %v3859, %v3875
  %v3877 = vrot.slane %v3356, 1
  %v3878 = vsel %vm3784, %v3861, %v3877
  %v3879 = vrot.slane %v3358, 1
  %v3880 = vsel %vm3784, %v3863, %v3879
  %v3881 = vrot.slane %v3502, 1
  %v3882 = vsel %vm3784, %v3865, %v3881
  %v3883 = vrot.slane %v3504, 1
  %v3884 = vsel %vm3784, %v3867, %v3883
  %v3885 = vrot.slane %v3648, 1
  %v3886 = vsel %vm3784, %v3869, %v3885
  %v3887 = vrot.slane %v3650, 1
  %v3888 = vsel %vm3784, %v3871, %v3887
  %v3889 = vrot.slane %v3214, 1
  %v3890 = vsel %vm3784, %v3873, %v3889
  %v3891 = vrot.slane %v3216, 1
  %v3892 = vsel %vm3784, %v3875, %v3891
  %v3893 = vrot.slane %v3360, 1
  %v3894 = vsel %vm3784, %v3877, %v3893
  %v3895 = vrot.slane %v3362, 1
  %v3896 = vsel %vm3784, %v3879, %v3895
  %v3897 = vrot.slane %v3506, 1
  %v3898 = vsel %vm3784, %v3881, %v3897
  %v3899 = vrot.slane %v3508, 1
  %v3900 = vsel %vm3784, %v3883, %v3899
  %v3901 = vrot.slane %v3652, 1
  %v3902 = vsel %vm3784, %v3885, %v3901
  %v3903 = vrot.slane %v3654, 1
  %v3904 = vsel %vm3784, %v3887, %v3903
  %v3969 = vadd.f32 %v3656, %v3787
  %v3970 = vadd.f32 %v3657, %v3790
  %v3971 = vadd.f32 %v3658, %v3793
  %v3972 = vadd.f32 %v3659, %v3796
  %v3973 = vadd.f32 %v3660, %v3799
  %v3974 = vadd.f32 %v3661, %v3802
  %v3975 = vadd.f32 %v3662, %v3805
  %v3976 = vadd.f32 %v3663, %v3808
  %v3977 = vadd.f32 %v3664, %v3810
  %v3978 = vadd.f32 %v3665, %v3812
  %v3979 = vadd.f32 %v3666, %v3814
  %v3980 = vadd.f32 %v3667, %v3816
  %v3981 = vadd.f32 %v3668, %v3818
  %v3982 = vadd.f32 %v3669, %v3820
  %v3983 = vadd.f32 %v3670, %v3822
  %v3984 = vadd.f32 %v3671, %v3824
  %v3985 = vadd.f32 %v3672, %v3826
  %v3986 = vadd.f32 %v3673, %v3828
  %v3987 = vadd.f32 %v3674, %v3830
  %v3988 = vadd.f32 %v3675, %v3832
  %v3989 = vadd.f32 %v3676, %v3834
  %v3990 = vadd.f32 %v3677, %v3836
  %v3991 = vadd.f32 %v3678, %v3838
  %v3992 = vadd.f32 %v3679, %v3840
  %v3993 = vadd.f32 %v3680, %v3842
  %v3994 = vadd.f32 %v3681, %v3844
  %v3995 = vadd.f32 %v3682, %v3846
  %v3996 = vadd.f32 %v3683, %v3848
  %v3997 = vadd.f32 %v3684, %v3850
  %v3998 = vadd.f32 %v3685, %v3852
  %v3999 = vadd.f32 %v3686, %v3854
  %v4000 = vadd.f32 %v3687, %v3856
  %v4001 = vadd.f32 %v3688, %v3858
  %v4002 = vadd.f32 %v3689, %v3860
  %v4003 = vadd.f32 %v3690, %v3862
  %v4004 = vadd.f32 %v3691, %v3864
  %v4005 = vadd.f32 %v3692, %v3866
  %v4006 = vadd.f32 %v3693, %v3868
  %v4007 = vadd.f32 %v3694, %v3870
  %v4008 = vadd.f32 %v3695, %v3872
  %v4009 = vadd.f32 %v3696, %v3874
  %v4010 = vadd.f32 %v3697, %v3876
  %v4011 = vadd.f32 %v3698, %v3878
  %v4012 = vadd.f32 %v3699, %v3880
  %v4013 = vadd.f32 %v3700, %v3882
  %v4014 = vadd.f32 %v3701, %v3884
  %v4015 = vadd.f32 %v3702, %v3886
  %v4016 = vadd.f32 %v3703, %v3888
  %v4017 = vadd.f32 %v3704, %v3890
  %v4018 = vadd.f32 %v3705, %v3892
  %v4019 = vadd.f32 %v3706, %v3894
  %v4020 = vadd.f32 %v3707, %v3896
  %v4021 = vadd.f32 %v3708, %v3898
  %v4022 = vadd.f32 %v3709, %v3900
  %v4023 = vadd.f32 %v3710, %v3902
  %v4024 = vadd.f32 %v3711, %v3904
  %v4025 = vadd.f32 %v3712, %v3889
  %v4026 = vadd.f32 %v3713, %v3891
  %v4027 = vadd.f32 %v3714, %v3893
  %v4028 = vadd.f32 %v3715, %v3895
  %v4029 = vadd.f32 %v3716, %v3897
  %v4030 = vadd.f32 %v3717, %v3899
  %v4031 = vadd.f32 %v3718, %v3901
  %v4032 = vadd.f32 %v3719, %v3903
  %4033 = vst [vmem:[#allocation2] sm:$0xff] %v3969
  %4034 = vst [vmem:[#allocation2 + $0x8] sm:$0xff] %v3970
  %4035 = vst [vmem:[#allocation2 + $0x10] sm:$0xff] %v3971
  %4036 = vst [vmem:[#allocation2 + $0x18] sm:$0xff] %v3972
  %4037 = vst [vmem:[#allocation2 + $0x20] sm:$0xff] %v3973
  %4038 = vst [vmem:[#allocation2 + $0x28] sm:$0xff] %v3974
  %4039 = vst [vmem:[#allocation2 + $0x30] sm:$0xff] %v3975
  %4040 = vst [vmem:[#allocation2 + $0x38] sm:$0xff] %v3976
  %4041 = vst [vmem:[#allocation2 + $0x40] sm:$0xff] %v3977
  %4042 = vst [vmem:[#allocation2 + $0x48] sm:$0xff] %v3978
  %4043 = vst [vmem:[#allocation2 + $0x50] sm:$0xff] %v3979
  %4044 = vst [vmem:[#allocation2 + $0x58] sm:$0xff] %v3980
  %4045 = vst [vmem:[#allocation2 + $0x60] sm:$0xff] %v3981
  %4046 = vst [vmem:[#allocation2 + $0x68] sm:$0xff] %v3982
  %4047 = vst [vmem:[#allocation2 + $0x70] sm:$0xff] %v3983
  %4048 = vst [vmem:[#allocation2 + $0x78] sm:$0xff] %v3984
  %4049 = vst [vmem:[#allocation2 + $0x80] sm:$0xff] %v3985
  %4050 = vst [vmem:[#allocation2 + $0x88] sm:$0xff] %v3986
  %4051 = vst [vmem:[#allocation2 + $0x90] sm:$0xff] %v3987
  %4052 = vst [vmem:[#allocation2 + $0x98] sm:$0xff] %v3988
  %4053 = vst [vmem:[#allocation2 + $0xa0] sm:$0xff] %v3989
  %4054 = vst [vmem:[#allocation2 + $0xa8] sm:$0xff] %v3990
  %4055 = vst [vmem:[#allocation2 + $0xb0] sm:$0xff] %v3991
  %4056 = vst [vmem:[#allocation2 + $0xb8] sm:$0xff] %v3992
  %4057 = vst [vmem:[#allocation2 + $0xc0] sm:$0xff] %v3993
  %4058 = vst [vmem:[#allocation2 + $0xc8] sm:$0xff] %v3994
  %4059 = vst [vmem:[#allocation2 + $0xd0] sm:$0xff] %v3995
  %4060 = vst [vmem:[#allocation2 + $0xd8] sm:$0xff] %v3996
  %4061 = vst [vmem:[#allocation2 + $0xe0] sm:$0xff] %v3997
  %4062 = vst [vmem:[#allocation2 + $0xe8] sm:$0xff] %v3998
  %4063 = vst [vmem:[#allocation2 + $0xf0] sm:$0xff] %v3999
  %4064 = vst [vmem:[#allocation2 + $0xf8] sm:$0xff] %v4000
  %4065 = vst [vmem:[#allocation2 + $0x100] sm:$0xff] %v4001
  %4066 = vst [vmem:[#allocation2 + $0x108] sm:$0xff] %v4002
  %4067 = vst [vmem:[#allocation2 + $0x110] sm:$0xff] %v4003
  %4068 = vst [vmem:[#allocation2 + $0x118] sm:$0xff] %v4004
  %4069 = vst [vmem:[#allocation2 + $0x120] sm:$0xff] %v4005
  %4070 = vst [vmem:[#allocation2 + $0x128] sm:$0xff] %v4006
  %4071 = vst [vmem:[#allocation2 + $0x130] sm:$0xff] %v4007
  %4072 = vst [vmem:[#allocation2 + $0x138] sm:$0xff] %v4008
  %4073 = vst [vmem:[#allocation2 + $0x140] sm:$0xff] %v4009
  %4074 = vst [vmem:[#allocation2 + $0x148] sm:$0xff] %v4010
  %4075 = vst [vmem:[#allocation2 + $0x150] sm:$0xff] %v4011
  %4076 = vst [vmem:[#allocation2 + $0x158] sm:$0xff] %v4012
  %4077 = vst [vmem:[#allocation2 + $0x160] sm:$0xff] %v4013
  %4078 = vst [vmem:[#allocation2 + $0x168] sm:$0xff] %v4014
  %4079 = vst [vmem:[#allocation2 + $0x170] sm:$0xff] %v4015
  %4080 = vst [vmem:[#allocation2 + $0x178] sm:$0xff] %v4016
  %4081 = vst [vmem:[#allocation2 + $0x180] sm:$0xff] %v4017
  %4082 = vst [vmem:[#allocation2 + $0x188] sm:$0xff] %v4018
  %4083 = vst [vmem:[#allocation2 + $0x190] sm:$0xff] %v4019
  %4084 = vst [vmem:[#allocation2 + $0x198] sm:$0xff] %v4020
  %4085 = vst [vmem:[#allocation2 + $0x1a0] sm:$0xff] %v4021
  %4086 = vst [vmem:[#allocation2 + $0x1a8] sm:$0xff] %v4022
  %4087 = vst [vmem:[#allocation2 + $0x1b0] sm:$0xff] %v4023
  %4088 = vst [vmem:[#allocation2 + $0x1b8] sm:$0xff] %v4024
  %4089 = vst [vmem:[#allocation2 + $0x1c0] sm:$0x7f] %v4025
  %4090 = vst [vmem:[#allocation2 + $0x1c8] sm:$0x7f] %v4026
  %4091 = vst [vmem:[#allocation2 + $0x1d0] sm:$0x7f] %v4027
  %4092 = vst [vmem:[#allocation2 + $0x1d8] sm:$0x7f] %v4028
  %4093 = vst [vmem:[#allocation2 + $0x1e0] sm:$0x7f] %v4029
  %4094 = vst [vmem:[#allocation2 + $0x1e8] sm:$0x7f] %v4030
  %4095 = vst [vmem:[#allocation2 + $0x1f0] sm:$0x7f] %v4031
  %4096 = vst [vmem:[#allocation2 + $0x1f8] sm:$0x7f] %v4032
  %v4097 = vld [vmem:[#allocation2] sm:$0xff]
  %v4098 = vld [vmem:[#allocation2 + $0x8] sm:$0xff]
  %v4099 = vld [vmem:[#allocation2 + $0x10] sm:$0xff]
  %v4100 = vld [vmem:[#allocation2 + $0x18] sm:$0xff]
  %v4101 = vld [vmem:[#allocation2 + $0x20] sm:$0xff]
  %v4102 = vld [vmem:[#allocation2 + $0x28] sm:$0xff]
  %v4103 = vld [vmem:[#allocation2 + $0x30] sm:$0xff]
  %v4104 = vld [vmem:[#allocation2 + $0x38] sm:$0xff]
  %v4105 = vld [vmem:[#allocation2 + $0x40] sm:$0xff]
  %v4106 = vld [vmem:[#allocation2 + $0x48] sm:$0xff]
  %v4107 = vld [vmem:[#allocation2 + $0x50] sm:$0xff]
  %v4108 = vld [vmem:[#allocation2 + $0x58] sm:$0xff]
  %v4109 = vld [vmem:[#allocation2 + $0x60] sm:$0xff]
  %v4110 = vld [vmem:[#allocation2 + $0x68] sm:$0xff]
  %v4111 = vld [vmem:[#allocation2 + $0x70] sm:$0xff]
  %v4112 = vld [vmem:[#allocation2 + $0x78] sm:$0xff]
  %v4113 = vld [vmem:[#allocation2 + $0x80] sm:$0xff]
  %v4114 = vld [vmem:[#allocation2 + $0x88] sm:$0xff]
  %v4115 = vld [vmem:[#allocation2 + $0x90] sm:$0xff]
  %v4116 = vld [vmem:[#allocation2 + $0x98] sm:$0xff]
  %v4117 = vld [vmem:[#allocation2 + $0xa0] sm:$0xff]
  %v4118 = vld [vmem:[#allocation2 + $0xa8] sm:$0xff]
  %v4119 = vld [vmem:[#allocation2 + $0xb0] sm:$0xff]
  %v4120 = vld [vmem:[#allocation2 + $0xb8] sm:$0xff]
  %v4121 = vld [vmem:[#allocation2 + $0xc0] sm:$0xff]
  %v4122 = vld [vmem:[#allocation2 + $0xc8] sm:$0xff]
  %v4123 = vld [vmem:[#allocation2 + $0xd0] sm:$0xff]
  %v4124 = vld [vmem:[#allocation2 + $0xd8] sm:$0xff]
  %v4125 = vld [vmem:[#allocation2 + $0xe0] sm:$0xff]
  %v4126 = vld [vmem:[#allocation2 + $0xe8] sm:$0xff]
  %v4127 = vld [vmem:[#allocation2 + $0xf0] sm:$0xff]
  %v4128 = vld [vmem:[#allocation2 + $0xf8] sm:$0xff]
  %v4129 = vld [vmem:[#allocation2 + $0x100] sm:$0xff]
  %v4130 = vld [vmem:[#allocation2 + $0x108] sm:$0xff]
  %v4131 = vld [vmem:[#allocation2 + $0x110] sm:$0xff]
  %v4132 = vld [vmem:[#allocation2 + $0x118] sm:$0xff]
  %v4133 = vld [vmem:[#allocation2 + $0x120] sm:$0xff]
  %v4134 = vld [vmem:[#allocation2 + $0x128] sm:$0xff]
  %v4135 = vld [vmem:[#allocation2 + $0x130] sm:$0xff]
  %v4136 = vld [vmem:[#allocation2 + $0x138] sm:$0xff]
  %v4137 = vld [vmem:[#allocation2 + $0x140] sm:$0xff]
  %v4138 = vld [vmem:[#allocation2 + $0x148] sm:$0xff]
  %v4139 = vld [vmem:[#allocation2 + $0x150] sm:$0xff]
  %v4140 = vld [vmem:[#allocation2 + $0x158] sm:$0xff]
  %v4141 = vld [vmem:[#allocation2 + $0x160] sm:$0xff]
  %v4142 = vld [vmem:[#allocation2 + $0x168] sm:$0xff]
  %v4143 = vld [vmem:[#allocation2 + $0x170] sm:$0xff]
  %v4144 = vld [vmem:[#allocation2 + $0x178] sm:$0xff]
  %v4145 = vld [vmem:[#allocation2 + $0x180] sm:$0xff]
  %v4146 = vld [vmem:[#allocation2 + $0x188] sm:$0xff]
  %v4147 = vld [vmem:[#allocation2 + $0x190] sm:$0xff]
  %v4148 = vld [vmem:[#allocation2 + $0x198] sm:$0xff]
  %v4149 = vld [vmem:[#allocation2 + $0x1a0] sm:$0xff]
  %v4150 = vld [vmem:[#allocation2 + $0x1a8] sm:$0xff]
  %v4151 = vld [vmem:[#allocation2 + $0x1b0] sm:$0xff]
  %v4152 = vld [vmem:[#allocation2 + $0x1b8] sm:$0xff]
  %v4153 = vld [vmem:[#allocation2 + $0x1c0] sm:$0xff]
  %v4154 = vld [vmem:[#allocation2 + $0x1c8] sm:$0xff]
  %v4155 = vld [vmem:[#allocation2 + $0x1d0] sm:$0xff]
  %v4156 = vld [vmem:[#allocation2 + $0x1d8] sm:$0xff]
  %v4157 = vld [vmem:[#allocation2 + $0x1e0] sm:$0xff]
  %v4158 = vld [vmem:[#allocation2 + $0x1e8] sm:$0xff]
  %v4159 = vld [vmem:[#allocation2 + $0x1f0] sm:$0xff]
  %v4160 = vld [vmem:[#allocation2 + $0x1f8] sm:$0xff]
  %v4161 = vmax.f32 %v4097, %v4099
  %v4162 = vmax.f32 %v4105, %v4107
  %v4163 = vmax.f32 %v4113, %v4115
  %v4164 = vmax.f32 %v4121, %v4123
  %v4165 = vmax.f32 %v4129, %v4131
  %v4166 = vmax.f32 %v4137, %v4139
  %v4167 = vmax.f32 %v4145, %v4147
  %v4168 = vmax.f32 %v4153, %v4155
  %v4169 = vmax.f32 %v4101, %v4103
  %v4170 = vmax.f32 %v4109, %v4111
  %v4171 = vmax.f32 %v4117, %v4119
  %v4172 = vmax.f32 %v4125, %v4127
  %v4173 = vmax.f32 %v4133, %v4135
  %v4174 = vmax.f32 %v4141, %v4143
  %v4175 = vmax.f32 %v4149, %v4151
  %v4176 = vmax.f32 %v4157, %v4159
  %v4177 = vmax.f32 %v4161, %v4169
  %v4178 = vmax.f32 %v4162, %v4170
  %v4179 = vmax.f32 %v4163, %v4171
  %v4180 = vmax.f32 %v4164, %v4172
  %v4181 = vmax.f32 %v4165, %v4173
  %v4182 = vmax.f32 %v4166, %v4174
  %v4183 = vmax.f32 %v4167, %v4175
  %v4184 = vmax.f32 %v4168, %v4176
  %v4185 = vmax.f32 %v4098, %v4100
  %v4186 = vmax.f32 %v4106, %v4108
  %v4187 = vmax.f32 %v4114, %v4116
  %v4188 = vmax.f32 %v4122, %v4124
  %v4189 = vmax.f32 %v4130, %v4132
  %v4190 = vmax.f32 %v4138, %v4140
  %v4191 = vmax.f32 %v4146, %v4148
  %v4192 = vmax.f32 %v4154, %v4156
  %v4193 = vmax.f32 %v4102, %v4104
  %v4194 = vmax.f32 %v4110, %v4112
  %v4195 = vmax.f32 %v4118, %v4120
  %v4196 = vmax.f32 %v4126, %v4128
  %v4197 = vmax.f32 %v4134, %v4136
  %v4198 = vmax.f32 %v4142, %v4144
  %v4199 = vmax.f32 %v4150, %v4152
  %v4200 = vmax.f32 %v4158, %v4160
  %v4201 = vmax.f32 %v4185, %v4193
  %v4202 = vmax.f32 %v4186, %v4194
  %v4203 = vmax.f32 %v4187, %v4195
  %v4204 = vmax.f32 %v4188, %v4196
  %v4205 = vmax.f32 %v4189, %v4197
  %v4206 = vmax.f32 %v4190, %v4198
  %v4207 = vmax.f32 %v4191, %v4199
  %v4208 = vmax.f32 %v4192, %v4200
  %v4209 = vld [vmem:[%s2] sm:$0x3]
  %v4211 = vlaneseq
  %v4212 = vshrl.u32 %v4211, 7
  %v4213 = vsub.s32 0, %v4212
  %v4214 = vrot.slane %v4209, %v4213
  %v4215 = vlaneseq
  %v4216 = vshrl.u32 %v4215, 7
  %v4217 = vsub.s32 1, %v4216
  %v4218 = vrot.slane %v4209, %v4217
  %v4221 = vadd.f32 %v4177, %v4214
  %v4222 = vadd.f32 %v4201, %v4218
  %v4223 = vadd.f32 %v4178, %v4214
  %v4224 = vadd.f32 %v4202, %v4218
  %v4225 = vadd.f32 %v4179, %v4214
  %v4226 = vadd.f32 %v4203, %v4218
  %v4227 = vadd.f32 %v4180, %v4214
  %v4228 = vadd.f32 %v4204, %v4218
  %v4229 = vadd.f32 %v4181, %v4214
  %v4230 = vadd.f32 %v4205, %v4218
  %v4231 = vadd.f32 %v4182, %v4214
  %v4232 = vadd.f32 %v4206, %v4218
  %v4233 = vadd.f32 %v4183, %v4214
  %v4234 = vadd.f32 %v4207, %v4218
  %v4235 = vadd.f32 %v4184, %v4214
  %v4236 = vadd.f32 %v4208, %v4218
  %v4237 = vmax.f32 %v4221, 0.0
  %v4238 = vmax.f32 %v4222, 0.0
  %v4239 = vmax.f32 %v4223, 0.0
  %v4240 = vmax.f32 %v4224, 0.0
  %v4241 = vmax.f32 %v4225, 0.0
  %v4242 = vmax.f32 %v4226, 0.0
  %v4243 = vmax.f32 %v4227, 0.0
  %v4244 = vmax.f32 %v4228, 0.0
  %v4245 = vmax.f32 %v4229, 0.0
  %v4246 = vmax.f32 %v4230, 0.0
  %v4247 = vmax.f32 %v4231, 0.0
  %v4248 = vmax.f32 %v4232, 0.0
  %v4249 = vmax.f32 %v4233, 0.0
  %v4250 = vmax.f32 %v4234, 0.0
  %v4251 = vmax.f32 %v4235, 0.0
  %v4252 = vmax.f32 %v4236, 0.0
  %v4253 = vpack.c.bf16 %v4239, %v4237
  %v4254 = vpack.c.bf16 %v4240, %v4238
  %v4255 = vpack.c.bf16 %v4243, %v4241
  %v4256 = vpack.c.bf16 %v4244, %v4242
  %v4257 = vpack.c.bf16 %v4247, %v4245
  %v4258 = vpack.c.bf16 %v4248, %v4246
  %v4259 = vpack.c.bf16 %v4251, %v4249
  %v4260 = vpack.c.bf16 %v4252, %v4250
  %v4261 = vld [vmem:[%s3] sm:$0xff]
  %v4262 = vld [vmem:[%s3 + $0x8] sm:$0xff]
  %v4263 = vld [vmem:[%s3 + $0x10] sm:$0xff]
  %v4264 = vld [vmem:[%s3 + $0x18] sm:$0xff]
  %v4265 = vld [vmem:[%s3 + $0x20] sm:$0xff]
  %v4266 = vld [vmem:[%s3 + $0x28] sm:$0xff]
  %v4267 = vld [vmem:[%s3 + $0x30] sm:$0xff]
  %v4268 = vld [vmem:[%s3 + $0x38] sm:$0xff]
  %v4269 = vld [vmem:[%s3 + $0x40] sm:$0xff]
  %v4270 = vld [vmem:[%s3 + $0x48] sm:$0xff]
  %v4271 = vld [vmem:[%s3 + $0x50] sm:$0xff]
  %v4272 = vld [vmem:[%s3 + $0x58] sm:$0xff]
  %v4273 = vld [vmem:[%s3 + $0x60] sm:$0xff]
  %v4274 = vld [vmem:[%s3 + $0x68] sm:$0xff]
  %v4275 = vld [vmem:[%s3 + $0x70] sm:$0xff]
  %v4276 = vld [vmem:[%s3 + $0x78] sm:$0xff]
  %v4277 = vld [vmem:[%s3 + $0x80] sm:$0xff]
  %v4278 = vld [vmem:[%s3 + $0x88] sm:$0xff]
  %v4279 = vld [vmem:[%s3 + $0x90] sm:$0xff]
  %v4280 = vld [vmem:[%s3 + $0x98] sm:$0xff]
  %v4281 = vld [vmem:[%s3 + $0xa0] sm:$0xff]
  %v4282 = vld [vmem:[%s3 + $0xa8] sm:$0xff]
  %v4283 = vld [vmem:[%s3 + $0xb0] sm:$0xff]
  %v4284 = vld [vmem:[%s3 + $0xb8] sm:$0xff]
  %v4285 = vld [vmem:[%s3 + $0xc0] sm:$0xff]
  %v4286 = vld [vmem:[%s3 + $0xc8] sm:$0xff]
  %v4287 = vld [vmem:[%s3 + $0xd0] sm:$0xff]
  %v4288 = vld [vmem:[%s3 + $0xd8] sm:$0xff]
  %v4289 = vld [vmem:[%s3 + $0xe0] sm:$0xff]
  %v4290 = vld [vmem:[%s3 + $0xe8] sm:$0xff]
  %v4291 = vld [vmem:[%s3 + $0xf0] sm:$0xff]
  %v4292 = vld [vmem:[%s3 + $0xf8] sm:$0xff]
  %v4293 = vld [vmem:[%s3 + $0x100] sm:$0xff]
  %v4294 = vld [vmem:[%s3 + $0x108] sm:$0xff]
  %v4295 = vld [vmem:[%s3 + $0x110] sm:$0xff]
  %v4296 = vld [vmem:[%s3 + $0x118] sm:$0xff]
  %v4297 = vld [vmem:[%s3 + $0x120] sm:$0xff]
  %v4298 = vld [vmem:[%s3 + $0x128] sm:$0xff]
  %v4299 = vld [vmem:[%s3 + $0x130] sm:$0xff]
  %v4300 = vld [vmem:[%s3 + $0x138] sm:$0xff]
  %v4301 = vld [vmem:[%s3 + $0x140] sm:$0xff]
  %v4302 = vld [vmem:[%s3 + $0x148] sm:$0xff]
  %v4303 = vld [vmem:[%s3 + $0x150] sm:$0xff]
  %v4304 = vld [vmem:[%s3 + $0x158] sm:$0xff]
  %v4305 = vld [vmem:[%s3 + $0x160] sm:$0xff]
  %v4306 = vld [vmem:[%s3 + $0x168] sm:$0xff]
  %v4307 = vld [vmem:[%s3 + $0x170] sm:$0xff]
  %v4308 = vld [vmem:[%s3 + $0x178] sm:$0xff]
  %v4309 = vld [vmem:[%s3 + $0x180] sm:$0xff]
  %v4310 = vld [vmem:[%s3 + $0x188] sm:$0xff]
  %v4311 = vld [vmem:[%s3 + $0x190] sm:$0xff]
  %v4312 = vld [vmem:[%s3 + $0x198] sm:$0xff]
  %v4313 = vld [vmem:[%s3 + $0x1a0] sm:$0xff]
  %v4314 = vld [vmem:[%s3 + $0x1a8] sm:$0xff]
  %v4315 = vld [vmem:[%s3 + $0x1b0] sm:$0xff]
  %v4316 = vld [vmem:[%s3 + $0x1b8] sm:$0xff]
  %v4317 = vld [vmem:[%s3 + $0x1c0] sm:$0xff]
  %v4318 = vld [vmem:[%s3 + $0x1c8] sm:$0xff]
  %v4319 = vld [vmem:[%s3 + $0x1d0] sm:$0xff]
  %v4320 = vld [vmem:[%s3 + $0x1d8] sm:$0xff]
  %v4321 = vld [vmem:[%s3 + $0x1e0] sm:$0xff]
  %v4322 = vld [vmem:[%s3 + $0x1e8] sm:$0xff]
  %v4323 = vld [vmem:[%s3 + $0x1f0] sm:$0xff]
  %v4324 = vld [vmem:[%s3 + $0x1f8] sm:$0xff]
  %v4389 = vunpack.c.l.b16 %v4261
  %v4390 = vunpack.c.h.b16 %v4261
  %v4391 = vunpack.c.l.b16 %v4262
  %v4392 = vunpack.c.h.b16 %v4262
  %v4393 = vunpack.c.l.b16 %v4263
  %v4394 = vunpack.c.h.b16 %v4263
  %v4395 = vunpack.c.l.b16 %v4264
  %v4396 = vunpack.c.h.b16 %v4264
  %v4397 = vunpack.c.l.b16 %v4265
  %v4398 = vunpack.c.h.b16 %v4265
  %v4399 = vunpack.c.l.b16 %v4266
  %v4400 = vunpack.c.h.b16 %v4266
  %v4401 = vunpack.c.l.b16 %v4267
  %v4402 = vunpack.c.h.b16 %v4267
  %v4403 = vunpack.c.l.b16 %v4268
  %v4404 = vunpack.c.h.b16 %v4268
  %v4405 = vunpack.c.l.b16 %v4269
  %v4406 = vunpack.c.h.b16 %v4269
  %v4407 = vunpack.c.l.b16 %v4270
  %v4408 = vunpack.c.h.b16 %v4270
  %v4409 = vunpack.c.l.b16 %v4271
  %v4410 = vunpack.c.h.b16 %v4271
  %v4411 = vunpack.c.l.b16 %v4272
  %v4412 = vunpack.c.h.b16 %v4272
  %v4413 = vunpack.c.l.b16 %v4273
  %v4414 = vunpack.c.h.b16 %v4273
  %v4415 = vunpack.c.l.b16 %v4274
  %v4416 = vunpack.c.h.b16 %v4274
  %v4417 = vunpack.c.l.b16 %v4275
  %v4418 = vunpack.c.h.b16 %v4275
  %v4419 = vunpack.c.l.b16 %v4276
  %v4420 = vunpack.c.h.b16 %v4276
  %v4421 = vunpack.c.l.b16 %v4277
  %v4422 = vunpack.c.h.b16 %v4277
  %v4423 = vunpack.c.l.b16 %v4278
  %v4424 = vunpack.c.h.b16 %v4278
  %v4425 = vunpack.c.l.b16 %v4279
  %v4426 = vunpack.c.h.b16 %v4279
  %v4427 = vunpack.c.l.b16 %v4280
  %v4428 = vunpack.c.h.b16 %v4280
  %v4429 = vunpack.c.l.b16 %v4281
  %v4430 = vunpack.c.h.b16 %v4281
  %v4431 = vunpack.c.l.b16 %v4282
  %v4432 = vunpack.c.h.b16 %v4282
  %v4433 = vunpack.c.l.b16 %v4283
  %v4434 = vunpack.c.h.b16 %v4283
  %v4435 = vunpack.c.l.b16 %v4284
  %v4436 = vunpack.c.h.b16 %v4284
  %v4437 = vunpack.c.l.b16 %v4285
  %v4438 = vunpack.c.h.b16 %v4285
  %v4439 = vunpack.c.l.b16 %v4286
  %v4440 = vunpack.c.h.b16 %v4286
  %v4441 = vunpack.c.l.b16 %v4287
  %v4442 = vunpack.c.h.b16 %v4287
  %v4443 = vunpack.c.l.b16 %v4288
  %v4444 = vunpack.c.h.b16 %v4288
  %v4445 = vunpack.c.l.b16 %v4289
  %v4446 = vunpack.c.h.b16 %v4289
  %v4447 = vunpack.c.l.b16 %v4290
  %v4448 = vunpack.c.h.b16 %v4290
  %v4449 = vunpack.c.l.b16 %v4291
  %v4450 = vunpack.c.h.b16 %v4291
  %v4451 = vunpack.c.l.b16 %v4292
  %v4452 = vunpack.c.h.b16 %v4292
  %v4453 = vunpack.c.l.b16 %v4293
  %v4454 = vunpack.c.h.b16 %v4293
  %v4455 = vunpack.c.l.b16 %v4294
  %v4456 = vunpack.c.h.b16 %v4294
  %v4457 = vunpack.c.l.b16 %v4295
  %v4458 = vunpack.c.h.b16 %v4295
  %v4459 = vunpack.c.l.b16 %v4296
  %v4460 = vunpack.c.h.b16 %v4296
  %v4461 = vunpack.c.l.b16 %v4297
  %v4462 = vunpack.c.h.b16 %v4297
  %v4463 = vunpack.c.l.b16 %v4298
  %v4464 = vunpack.c.h.b16 %v4298
  %v4465 = vunpack.c.l.b16 %v4299
  %v4466 = vunpack.c.h.b16 %v4299
  %v4467 = vunpack.c.l.b16 %v4300
  %v4468 = vunpack.c.h.b16 %v4300
  %v4469 = vunpack.c.l.b16 %v4301
  %v4470 = vunpack.c.h.b16 %v4301
  %v4471 = vunpack.c.l.b16 %v4302
  %v4472 = vunpack.c.h.b16 %v4302
  %v4473 = vunpack.c.l.b16 %v4303
  %v4474 = vunpack.c.h.b16 %v4303
  %v4475 = vunpack.c.l.b16 %v4304
  %v4476 = vunpack.c.h.b16 %v4304
  %v4477 = vunpack.c.l.b16 %v4305
  %v4478 = vunpack.c.h.b16 %v4305
  %v4479 = vunpack.c.l.b16 %v4306
  %v4480 = vunpack.c.h.b16 %v4306
  %v4481 = vunpack.c.l.b16 %v4307
  %v4482 = vunpack.c.h.b16 %v4307
  %v4483 = vunpack.c.l.b16 %v4308
  %v4484 = vunpack.c.h.b16 %v4308
  %v4485 = vunpack.c.l.b16 %v4309
  %v4486 = vunpack.c.h.b16 %v4309
  %v4487 = vunpack.c.l.b16 %v4310
  %v4488 = vunpack.c.h.b16 %v4310
  %v4489 = vunpack.c.l.b16 %v4311
  %v4490 = vunpack.c.h.b16 %v4311
  %v4491 = vunpack.c.l.b16 %v4312
  %v4492 = vunpack.c.h.b16 %v4312
  %v4493 = vunpack.c.l.b16 %v4313
  %v4494 = vunpack.c.h.b16 %v4313
  %v4495 = vunpack.c.l.b16 %v4314
  %v4496 = vunpack.c.h.b16 %v4314
  %v4497 = vunpack.c.l.b16 %v4315
  %v4498 = vunpack.c.h.b16 %v4315
  %v4499 = vunpack.c.l.b16 %v4316
  %v4500 = vunpack.c.h.b16 %v4316
  %v4501 = vunpack.c.l.b16 %v4317
  %v4502 = vunpack.c.h.b16 %v4317
  %v4503 = vunpack.c.l.b16 %v4318
  %v4504 = vunpack.c.h.b16 %v4318
  %v4505 = vunpack.c.l.b16 %v4319
  %v4506 = vunpack.c.h.b16 %v4319
  %v4507 = vunpack.c.l.b16 %v4320
  %v4508 = vunpack.c.h.b16 %v4320
  %v4509 = vunpack.c.l.b16 %v4321
  %v4510 = vunpack.c.h.b16 %v4321
  %v4511 = vunpack.c.l.b16 %v4322
  %v4512 = vunpack.c.h.b16 %v4322
  %v4513 = vunpack.c.l.b16 %v4323
  %v4514 = vunpack.c.h.b16 %v4323
  %v4515 = vunpack.c.l.b16 %v4324
  %v4516 = vunpack.c.h.b16 %v4324
  %v4517 = vpack.c.b16 %v4393, %v4389
  %v4518 = vpack.c.b16 %v4394, %v4390
  %v4519 = vpack.c.b16 %v4395, %v4391
  %v4520 = vpack.c.b16 %v4396, %v4392
  %v4521 = vpack.c.b16 %v4401, %v4397
  %v4522 = vpack.c.b16 %v4402, %v4398
  %v4523 = vpack.c.b16 %v4403, %v4399
  %v4524 = vpack.c.b16 %v4404, %v4400
  %v4525 = vpack.c.b16 %v4409, %v4405
  %v4526 = vpack.c.b16 %v4410, %v4406
  %v4527 = vpack.c.b16 %v4411, %v4407
  %v4528 = vpack.c.b16 %v4412, %v4408
  %v4529 = vpack.c.b16 %v4417, %v4413
  %v4530 = vpack.c.b16 %v4418, %v4414
  %v4531 = vpack.c.b16 %v4419, %v4415
  %v4532 = vpack.c.b16 %v4420, %v4416
  %v4533 = vpack.c.b16 %v4425, %v4421
  %v4534 = vpack.c.b16 %v4426, %v4422
  %v4535 = vpack.c.b16 %v4427, %v4423
  %v4536 = vpack.c.b16 %v4428, %v4424
  %v4537 = vpack.c.b16 %v4433, %v4429
  %v4538 = vpack.c.b16 %v4434, %v4430
  %v4539 = vpack.c.b16 %v4435, %v4431
  %v4540 = vpack.c.b16 %v4436, %v4432
  %v4541 = vpack.c.b16 %v4441, %v4437
  %v4542 = vpack.c.b16 %v4442, %v4438
  %v4543 = vpack.c.b16 %v4443, %v4439
  %v4544 = vpack.c.b16 %v4444, %v4440
  %v4545 = vpack.c.b16 %v4449, %v4445
  %v4546 = vpack.c.b16 %v4450, %v4446
  %v4547 = vpack.c.b16 %v4451, %v4447
  %v4548 = vpack.c.b16 %v4452, %v4448
  %v4549 = vpack.c.b16 %v4457, %v4453
  %v4550 = vpack.c.b16 %v4458, %v4454
  %v4551 = vpack.c.b16 %v4459, %v4455
  %v4552 = vpack.c.b16 %v4460, %v4456
  %v4553 = vpack.c.b16 %v4465, %v4461
  %v4554 = vpack.c.b16 %v4466, %v4462
  %v4555 = vpack.c.b16 %v4467, %v4463
  %v4556 = vpack.c.b16 %v4468, %v4464
  %v4557 = vpack.c.b16 %v4473, %v4469
  %v4558 = vpack.c.b16 %v4474, %v4470
  %v4559 = vpack.c.b16 %v4475, %v4471
  %v4560 = vpack.c.b16 %v4476, %v4472
  %v4561 = vpack.c.b16 %v4481, %v4477
  %v4562 = vpack.c.b16 %v4482, %v4478
  %v4563 = vpack.c.b16 %v4483, %v4479
  %v4564 = vpack.c.b16 %v4484, %v4480
  %v4565 = vpack.c.b16 %v4489, %v4485
  %v4566 = vpack.c.b16 %v4490, %v4486
  %v4567 = vpack.c.b16 %v4491, %v4487
  %v4568 = vpack.c.b16 %v4492, %v4488
  %v4569 = vpack.c.b16 %v4497, %v4493
  %v4570 = vpack.c.b16 %v4498, %v4494
  %v4571 = vpack.c.b16 %v4499, %v4495
  %v4572 = vpack.c.b16 %v4500, %v4496
  %v4573 = vpack.c.b16 %v4505, %v4501
  %v4574 = vpack.c.b16 %v4506, %v4502
  %v4575 = vpack.c.b16 %v4507, %v4503
  %v4576 = vpack.c.b16 %v4508, %v4504
  %v4577 = vpack.c.b16 %v4513, %v4509
  %v4578 = vpack.c.b16 %v4514, %v4510
  %v4579 = vpack.c.b16 %v4515, %v4511
  %v4580 = vpack.c.b16 %v4516, %v4512
  %4645 = vmatprep.subr.bf16.mxu0 %v4518
  %4646 = vmatpush1.bf16.msra.mxu0 %v4517
  %4647 = vmatprep.subr.bf16.mxu0 %v4522
  %4648 = vmatpush1.bf16.msra.mxu0 %v4521
  %4649 = vmatprep.subr.bf16.mxu0 %v4526
  %4650 = vmatpush1.bf16.msra.mxu0 %v4525
  %4651 = vmatprep.subr.bf16.mxu0 %v4530
  %4652 = vmatpush1.bf16.msra.mxu0 %v4529
  %4653 = vmatprep.subr.bf16.mxu0 %v4534
  %4654 = vmatpush1.bf16.msra.mxu0 %v4533
  %4655 = vmatprep.subr.bf16.mxu0 %v4538
  %4656 = vmatpush1.bf16.msra.mxu0 %v4537
  %4657 = vmatprep.subr.bf16.mxu0 %v4542
  %4658 = vmatpush1.bf16.msra.mxu0 %v4541
  %4659 = vmatprep.subr.bf16.mxu0 %v4546
  %4660 = vmatpush1.bf16.msra.mxu0 %v4545
  %4661 = vmatprep.subr.bf16.mxu0 %v4550
  %4662 = vmatpush1.bf16.msra.mxu0 %v4549
  %4663 = vmatprep.subr.bf16.mxu0 %v4554
  %4664 = vmatpush1.bf16.msra.mxu0 %v4553
  %4665 = vmatprep.subr.bf16.mxu0 %v4558
  %4666 = vmatpush1.bf16.msra.mxu0 %v4557
  %4667 = vmatprep.subr.bf16.mxu0 %v4562
  %4668 = vmatpush1.bf16.msra.mxu0 %v4561
  %4669 = vmatprep.subr.bf16.mxu0 %v4566
  %4670 = vmatpush1.bf16.msra.mxu0 %v4565
  %4671 = vmatprep.subr.bf16.mxu0 %v4570
  %4672 = vmatpush1.bf16.msra.mxu0 %v4569
  %4673 = vmatprep.subr.bf16.mxu0 %v4574
  %4674 = vmatpush1.bf16.msra.mxu0 %v4573
  %4675 = vmatprep.subr.bf16.mxu0 %v4578
  %4676 = vmatpush1.bf16.msra.mxu0 %v4577
  %4677 = vmatprep.mubr.bf16.mxu0 %v4254
  %4678 = vmatmul.mubr.bf16.gmra.mrb[0].mxu0 %v4253
  %v4679 = vpop.f32.mrb[0].mxu0
  %v4680 = vadd.f32 0.0, %v4679
  %v4681 = vpop.f32.mrb[0].mxu0
  %v4682 = vadd.f32 0.0, %v4681
  %v4683 = vpop.f32.mrb[0].mxu0
  %v4684 = vadd.f32 0.0, %v4683
  %v4685 = vpop.f32.mrb[0].mxu0
  %v4686 = vadd.f32 0.0, %v4685
  %4687 = vmatprep.mubr.bf16.mxu0 %v4256
  %4688 = vmatmul.mubr.bf16.gmra.mrb[0].mxu0 %v4255
  %v4689 = vpop.f32.mrb[0].mxu0
  %v4690 = vadd.f32 0.0, %v4689
  %v4691 = vpop.f32.mrb[0].mxu0
  %v4692 = vadd.f32 0.0, %v4691
  %v4693 = vpop.f32.mrb[0].mxu0
  %v4694 = vadd.f32 0.0, %v4693
  %v4695 = vpop.f32.mrb[0].mxu0
  %v4696 = vadd.f32 0.0, %v4695
  %4697 = vmatprep.mubr.bf16.mxu0 %v4258
  %4698 = vmatmul.mubr.bf16.gmra.mrb[0].mxu0 %v4257
  %v4699 = vpop.f32.mrb[0].mxu0
  %v4700 = vadd.f32 0.0, %v4699
  %v4701 = vpop.f32.mrb[0].mxu0
  %v4702 = vadd.f32 0.0, %v4701
  %v4703 = vpop.f32.mrb[0].mxu0
  %v4704 = vadd.f32 0.0, %v4703
  %v4705 = vpop.f32.mrb[0].mxu0
  %v4706 = vadd.f32 0.0, %v4705
  %4707 = vmatprep.mubr.bf16.mxu0 %v4260
  %4708 = vmatmul.mubr.bf16.gmra.mrb[0].mxu0 %v4259
  %v4709 = vpop.f32.mrb[0].mxu0
  %v4710 = vadd.f32 0.0, %v4709
  %v4711 = vpop.f32.mrb[0].mxu0
  %v4712 = vadd.f32 0.0, %v4711
  %v4713 = vpop.f32.mrb[0].mxu0
  %v4714 = vadd.f32 0.0, %v4713
  %v4715 = vpop.f32.mrb[0].mxu0
  %v4716 = vadd.f32 0.0, %v4715
  %4717 = vdwg.mxu0
  %4718 = vmatprep.subr.bf16.mxu0 %v4520
  %4719 = vmatpush1.bf16.msra.mxu0 %v4519
  %4720 = vmatprep.subr.bf16.mxu0 %v4524
  %4721 = vmatpush1.bf16.msra.mxu0 %v4523
  %4722 = vmatprep.subr.bf16.mxu0 %v4528
  %4723 = vmatpush1.bf16.msra.mxu0 %v4527
  %4724 = vmatprep.subr.bf16.mxu0 %v4532
  %4725 = vmatpush1.bf16.msra.mxu0 %v4531
  %4726 = vmatprep.subr.bf16.mxu0 %v4536
  %4727 = vmatpush1.bf16.msra.mxu0 %v4535
  %4728 = vmatprep.subr.bf16.mxu0 %v4540
  %4729 = vmatpush1.bf16.msra.mxu0 %v4539
  %4730 = vmatprep.subr.bf16.mxu0 %v4544
  %4731 = vmatpush1.bf16.msra.mxu0 %v4543
  %4732 = vmatprep.subr.bf16.mxu0 %v4548
  %4733 = vmatpush1.bf16.msra.mxu0 %v4547
  %4734 = vmatprep.subr.bf16.mxu0 %v4552
  %4735 = vmatpush1.bf16.msra.mxu0 %v4551
  %4736 = vmatprep.subr.bf16.mxu0 %v4556
  %4737 = vmatpush1.bf16.msra.mxu0 %v4555
  %4738 = vmatprep.subr.bf16.mxu0 %v4560
  %4739 = vmatpush1.bf16.msra.mxu0 %v4559
  %4740 = vmatprep.subr.bf16.mxu0 %v4564
  %4741 = vmatpush1.bf16.msra.mxu0 %v4563
  %4742 = vmatprep.subr.bf16.mxu0 %v4568
  %4743 = vmatpush1.bf16.msra.mxu0 %v4567
  %4744 = vmatprep.subr.bf16.mxu0 %v4572
  %4745 = vmatpush1.bf16.msra.mxu0 %v4571
  %4746 = vmatprep.subr.bf16.mxu0 %v4576
  %4747 = vmatpush1.bf16.msra.mxu0 %v4575
  %4748 = vmatprep.subr.bf16.mxu0 %v4580
  %4749 = vmatpush1.bf16.msra.mxu0 %v4579
  %4750 = vmatprep.mubr.bf16.mxu0 %v4254
  %4751 = vmatmul.mubr.bf16.gmra.mrb[0].mxu0 %v4253
  %v4752 = vpop.f32.mrb[0].mxu0
  %v4753 = vadd.f32 0.0, %v4752
  %v4754 = vpop.f32.mrb[0].mxu0
  %v4755 = vadd.f32 0.0, %v4754
  %v4756 = vpop.f32.mrb[0].mxu0
  %v4757 = vadd.f32 0.0, %v4756
  %v4758 = vpop.f32.mrb[0].mxu0
  %v4759 = vadd.f32 0.0, %v4758
  %4760 = vmatprep.mubr.bf16.mxu0 %v4256
  %4761 = vmatmul.mubr.bf16.gmra.mrb[0].mxu0 %v4255
  %v4762 = vpop.f32.mrb[0].mxu0
  %v4763 = vadd.f32 0.0, %v4762
  %v4764 = vpop.f32.mrb[0].mxu0
  %v4765 = vadd.f32 0.0, %v4764
  %v4766 = vpop.f32.mrb[0].mxu0
  %v4767 = vadd.f32 0.0, %v4766
  %v4768 = vpop.f32.mrb[0].mxu0
  %v4769 = vadd.f32 0.0, %v4768
  %4770 = vmatprep.mubr.bf16.mxu0 %v4258
  %4771 = vmatmul.mubr.bf16.gmra.mrb[0].mxu0 %v4257
  %v4772 = vpop.f32.mrb[0].mxu0
  %v4773 = vadd.f32 0.0, %v4772
  %v4774 = vpop.f32.mrb[0].mxu0
  %v4775 = vadd.f32 0.0, %v4774
  %v4776 = vpop.f32.mrb[0].mxu0
  %v4777 = vadd.f32 0.0, %v4776
  %v4778 = vpop.f32.mrb[0].mxu0
  %v4779 = vadd.f32 0.0, %v4778
  %4780 = vmatprep.mubr.bf16.mxu0 %v4260
  %4781 = vmatmul.mubr.bf16.gmra.mrb[0].mxu0 %v4259
  %v4782 = vpop.f32.mrb[0].mxu0
  %v4783 = vadd.f32 0.0, %v4782
  %v4784 = vpop.f32.mrb[0].mxu0
  %v4785 = vadd.f32 0.0, %v4784
  %v4786 = vpop.f32.mrb[0].mxu0
  %v4787 = vadd.f32 0.0, %v4786
  %v4788 = vpop.f32.mrb[0].mxu0
  %v4789 = vadd.f32 0.0, %v4788
  %4790 = vdwg.mxu0
  %4791 = vst [vmem:[#allocation3] sm:$0xff] %v4680
  %4792 = vst [vmem:[#allocation3 + $0x8] sm:$0xff] %v4682
  %4793 = vst [vmem:[#allocation3 + $0x10] sm:$0xff] %v4753
  %4794 = vst [vmem:[#allocation3 + $0x18] sm:$0xff] %v4755
  %4795 = vst [vmem:[#allocation3 + $0x20] sm:$0xff] %v4684
  %4796 = vst [vmem:[#allocation3 + $0x28] sm:$0xff] %v4686
  %4797 = vst [vmem:[#allocation3 + $0x30] sm:$0xff] %v4757
  %4798 = vst [vmem:[#allocation3 + $0x38] sm:$0xff] %v4759
  %4799 = vst [vmem:[#allocation3 + $0x40] sm:$0xff] %v4690
  %4800 = vst [vmem:[#allocation3 + $0x48] sm:$0xff] %v4692
  %4801 = vst [vmem:[#allocation3 + $0x50] sm:$0xff] %v4763
  %4802 = vst [vmem:[#allocation3 + $0x58] sm:$0xff] %v4765
  %4803 = vst [vmem:[#allocation3 + $0x60] sm:$0xff] %v4694
  %4804 = vst [vmem:[#allocation3 + $0x68] sm:$0xff] %v4696
  %4805 = vst [vmem:[#allocation3 + $0x70] sm:$0xff] %v4767
  %4806 = vst [vmem:[#allocation3 + $0x78] sm:$0xff] %v4769
  %4807 = vst [vmem:[#allocation3 + $0x80] sm:$0xff] %v4700
  %4808 = vst [vmem:[#allocation3 + $0x88] sm:$0xff] %v4702
  %4809 = vst [vmem:[#allocation3 + $0x90] sm:$0xff] %v4773
  %4810 = vst [vmem:[#allocation3 + $0x98] sm:$0xff] %v4775
  %4811 = vst [vmem:[#allocation3 + $0xa0] sm:$0xff] %v4704
  %4812 = vst [vmem:[#allocation3 + $0xa8] sm:$0xff] %v4706
  %4813 = vst [vmem:[#allocation3 + $0xb0] sm:$0xff] %v4777
  %4814 = vst [vmem:[#allocation3 + $0xb8] sm:$0xff] %v4779
  %4815 = vst [vmem:[#allocation3 + $0xc0] sm:$0xff] %v4710
  %4816 = vst [vmem:[#allocation3 + $0xc8] sm:$0xff] %v4712
  %4817 = vst [vmem:[#allocation3 + $0xd0] sm:$0xff] %v4783
  %4818 = vst [vmem:[#allocation3 + $0xd8] sm:$0xff] %v4785
  %4819 = vst [vmem:[#allocation3 + $0xe0] sm:$0xff] %v4714
  %4820 = vst [vmem:[#allocation3 + $0xe8] sm:$0xff] %v4716
  %4821 = vst [vmem:[#allocation3 + $0xf0] sm:$0xff] %v4787
  %4822 = vst [vmem:[#allocation3 + $0xf8] sm:$0xff] %v4789
  %s4823 = scalar_lea.vmem %s3, 512
  %v4824 = vld [vmem:[%s4823] sm:$0xff]
  %v4825 = vld [vmem:[%s4823 + $0x8] sm:$0xff]
  %v4826 = vld [vmem:[%s4823 + $0x10] sm:$0xff]
  %v4827 = vld [vmem:[%s4823 + $0x18] sm:$0xff]
  %v4828 = vld [vmem:[%s4823 + $0x20] sm:$0xff]
  %v4829 = vld [vmem:[%s4823 + $0x28] sm:$0xff]
  %v4830 = vld [vmem:[%s4823 + $0x30] sm:$0xff]
  %v4831 = vld [vmem:[%s4823 + $0x38] sm:$0xff]
  %v4832 = vld [vmem:[%s4823 + $0x40] sm:$0xff]
  %v4833 = vld [vmem:[%s4823 + $0x48] sm:$0xff]
  %v4834 = vld [vmem:[%s4823 + $0x50] sm:$0xff]
  %v4835 = vld [vmem:[%s4823 + $0x58] sm:$0xff]
  %v4836 = vld [vmem:[%s4823 + $0x60] sm:$0xff]
  %v4837 = vld [vmem:[%s4823 + $0x68] sm:$0xff]
  %v4838 = vld [vmem:[%s4823 + $0x70] sm:$0xff]
  %v4839 = vld [vmem:[%s4823 + $0x78] sm:$0xff]
  %v4840 = vld [vmem:[%s4823 + $0x80] sm:$0xff]
  %v4841 = vld [vmem:[%s4823 + $0x88] sm:$0xff]
  %v4842 = vld [vmem:[%s4823 + $0x90] sm:$0xff]
  %v4843 = vld [vmem:[%s4823 + $0x98] sm:$0xff]
  %v4844 = vld [vmem:[%s4823 + $0xa0] sm:$0xff]
  %v4845 = vld [vmem:[%s4823 + $0xa8] sm:$0xff]
  %v4846 = vld [vmem:[%s4823 + $0xb0] sm:$0xff]
  %v4847 = vld [vmem:[%s4823 + $0xb8] sm:$0xff]
  %v4848 = vld [vmem:[%s4823 + $0xc0] sm:$0xff]
  %v4849 = vld [vmem:[%s4823 + $0xc8] sm:$0xff]
  %v4850 = vld [vmem:[%s4823 + $0xd0] sm:$0xff]
  %v4851 = vld [vmem:[%s4823 + $0xd8] sm:$0xff]
  %v4852 = vld [vmem:[%s4823 + $0xe0] sm:$0xff]
  %v4853 = vld [vmem:[%s4823 + $0xe8] sm:$0xff]
  %v4854 = vld [vmem:[%s4823 + $0xf0] sm:$0xff]
  %v4855 = vld [vmem:[%s4823 + $0xf8] sm:$0xff]
  %v4856 = vld [vmem:[%s4823 + $0x100] sm:$0xff]
  %v4857 = vld [vmem:[%s4823 + $0x108] sm:$0xff]
  %v4858 = vld [vmem:[%s4823 + $0x110] sm:$0xff]
  %v4859 = vld [vmem:[%s4823 + $0x118] sm:$0xff]
  %v4860 = vld [vmem:[%s4823 + $0x120] sm:$0xff]
  %v4861 = vld [vmem:[%s4823 + $0x128] sm:$0xff]
  %v4862 = vld [vmem:[%s4823 + $0x130] sm:$0xff]
  %v4863 = vld [vmem:[%s4823 + $0x138] sm:$0xff]
  %v4864 = vld [vmem:[%s4823 + $0x140] sm:$0xff]
  %v4865 = vld [vmem:[%s4823 + $0x148] sm:$0xff]
  %v4866 = vld [vmem:[%s4823 + $0x150] sm:$0xff]
  %v4867 = vld [vmem:[%s4823 + $0x158] sm:$0xff]
  %v4868 = vld [vmem:[%s4823 + $0x160] sm:$0xff]
  %v4869 = vld [vmem:[%s4823 + $0x168] sm:$0xff]
  %v4870 = vld [vmem:[%s4823 + $0x170] sm:$0xff]
  %v4871 = vld [vmem:[%s4823 + $0x178] sm:$0xff]
  %v4872 = vld [vmem:[%s4823 + $0x180] sm:$0xff]
  %v4873 = vld [vmem:[%s4823 + $0x188] sm:$0xff]
  %v4874 = vld [vmem:[%s4823 + $0x190] sm:$0xff]
  %v4875 = vld [vmem:[%s4823 + $0x198] sm:$0xff]
  %v4876 = vld [vmem:[%s4823 + $0x1a0] sm:$0xff]
  %v4877 = vld [vmem:[%s4823 + $0x1a8] sm:$0xff]
  %v4878 = vld [vmem:[%s4823 + $0x1b0] sm:$0xff]
  %v4879 = vld [vmem:[%s4823 + $0x1b8] sm:$0xff]
  %v4880 = vld [vmem:[%s4823 + $0x1c0] sm:$0xff]
  %v4881 = vld [vmem:[%s4823 + $0x1c8] sm:$0xff]
  %v4882 = vld [vmem:[%s4823 + $0x1d0] sm:$0xff]
  %v4883 = vld [vmem:[%s4823 + $0x1d8] sm:$0xff]
  %v4884 = vld [vmem:[%s4823 + $0x1e0] sm:$0xff]
  %v4885 = vld [vmem:[%s4823 + $0x1e8] sm:$0xff]
  %v4886 = vld [vmem:[%s4823 + $0x1f0] sm:$0xff]
  %v4887 = vld [vmem:[%s4823 + $0x1f8] sm:$0xff]
  %v4952 = vunpack.c.l.b16 %v4824
  %v4953 = vunpack.c.h.b16 %v4824
  %v4954 = vunpack.c.l.b16 %v4825
  %v4955 = vunpack.c.h.b16 %v4825
  %v4956 = vunpack.c.l.b16 %v4826
  %v4957 = vunpack.c.h.b16 %v4826
  %v4958 = vunpack.c.l.b16 %v4827
  %v4959 = vunpack.c.h.b16 %v4827
  %v4960 = vunpack.c.l.b16 %v4828
  %v4961 = vunpack.c.h.b16 %v4828
  %v4962 = vunpack.c.l.b16 %v4829
  %v4963 = vunpack.c.h.b16 %v4829
  %v4964 = vunpack.c.l.b16 %v4830
  %v4965 = vunpack.c.h.b16 %v4830
  %v4966 = vunpack.c.l.b16 %v4831
  %v4967 = vunpack.c.h.b16 %v4831
  %v4968 = vunpack.c.l.b16 %v4832
  %v4969 = vunpack.c.h.b16 %v4832
  %v4970 = vunpack.c.l.b16 %v4833
  %v4971 = vunpack.c.h.b16 %v4833
  %v4972 = vunpack.c.l.b16 %v4834
  %v4973 = vunpack.c.h.b16 %v4834
  %v4974 = vunpack.c.l.b16 %v4835
  %v4975 = vunpack.c.h.b16 %v4835
  %v4976 = vunpack.c.l.b16 %v4836
  %v4977 = vunpack.c.h.b16 %v4836
  %v4978 = vunpack.c.l.b16 %v4837
  %v4979 = vunpack.c.h.b16 %v4837
  %v4980 = vunpack.c.l.b16 %v4838
  %v4981 = vunpack.c.h.b16 %v4838
  %v4982 = vunpack.c.l.b16 %v4839
  %v4983 = vunpack.c.h.b16 %v4839
  %v4984 = vunpack.c.l.b16 %v4840
  %v4985 = vunpack.c.h.b16 %v4840
  %v4986 = vunpack.c.l.b16 %v4841
  %v4987 = vunpack.c.h.b16 %v4841
  %v4988 = vunpack.c.l.b16 %v4842
  %v4989 = vunpack.c.h.b16 %v4842
  %v4990 = vunpack.c.l.b16 %v4843
  %v4991 = vunpack.c.h.b16 %v4843
  %v4992 = vunpack.c.l.b16 %v4844
  %v4993 = vunpack.c.h.b16 %v4844
  %v4994 = vunpack.c.l.b16 %v4845
  %v4995 = vunpack.c.h.b16 %v4845
  %v4996 = vunpack.c.l.b16 %v4846
  %v4997 = vunpack.c.h.b16 %v4846
  %v4998 = vunpack.c.l.b16 %v4847
  %v4999 = vunpack.c.h.b16 %v4847
  %v5000 = vunpack.c.l.b16 %v4848
  %v5001 = vunpack.c.h.b16 %v4848
  %v5002 = vunpack.c.l.b16 %v4849
  %v5003 = vunpack.c.h.b16 %v4849
  %v5004 = vunpack.c.l.b16 %v4850
  %v5005 = vunpack.c.h.b16 %v4850
  %v5006 = vunpack.c.l.b16 %v4851
  %v5007 = vunpack.c.h.b16 %v4851
  %v5008 = vunpack.c.l.b16 %v4852
  %v5009 = vunpack.c.h.b16 %v4852
  %v5010 = vunpack.c.l.b16 %v4853
  %v5011 = vunpack.c.h.b16 %v4853
  %v5012 = vunpack.c.l.b16 %v4854
  %v5013 = vunpack.c.h.b16 %v4854
  %v5014 = vunpack.c.l.b16 %v4855
  %v5015 = vunpack.c.h.b16 %v4855
  %v5016 = vunpack.c.l.b16 %v4856
  %v5017 = vunpack.c.h.b16 %v4856
  %v5018 = vunpack.c.l.b16 %v4857
  %v5019 = vunpack.c.h.b16 %v4857
  %v5020 = vunpack.c.l.b16 %v4858
  %v5021 = vunpack.c.h.b16 %v4858
  %v5022 = vunpack.c.l.b16 %v4859
  %v5023 = vunpack.c.h.b16 %v4859
  %v5024 = vunpack.c.l.b16 %v4860
  %v5025 = vunpack.c.h.b16 %v4860
  %v5026 = vunpack.c.l.b16 %v4861
  %v5027 = vunpack.c.h.b16 %v4861
  %v5028 = vunpack.c.l.b16 %v4862
  %v5029 = vunpack.c.h.b16 %v4862
  %v5030 = vunpack.c.l.b16 %v4863
  %v5031 = vunpack.c.h.b16 %v4863
  %v5032 = vunpack.c.l.b16 %v4864
  %v5033 = vunpack.c.h.b16 %v4864
  %v5034 = vunpack.c.l.b16 %v4865
  %v5035 = vunpack.c.h.b16 %v4865
  %v5036 = vunpack.c.l.b16 %v4866
  %v5037 = vunpack.c.h.b16 %v4866
  %v5038 = vunpack.c.l.b16 %v4867
  %v5039 = vunpack.c.h.b16 %v4867
  %v5040 = vunpack.c.l.b16 %v4868
  %v5041 = vunpack.c.h.b16 %v4868
  %v5042 = vunpack.c.l.b16 %v4869
  %v5043 = vunpack.c.h.b16 %v4869
  %v5044 = vunpack.c.l.b16 %v4870
  %v5045 = vunpack.c.h.b16 %v4870
  %v5046 = vunpack.c.l.b16 %v4871
  %v5047 = vunpack.c.h.b16 %v4871
  %v5048 = vunpack.c.l.b16 %v4872
  %v5049 = vunpack.c.h.b16 %v4872
  %v5050 = vunpack.c.l.b16 %v4873
  %v5051 = vunpack.c.h.b16 %v4873
  %v5052 = vunpack.c.l.b16 %v4874
  %v5053 = vunpack.c.h.b16 %v4874
  %v5054 = vunpack.c.l.b16 %v4875
  %v5055 = vunpack.c.h.b16 %v4875
  %v5056 = vunpack.c.l.b16 %v4876
  %v5057 = vunpack.c.h.b16 %v4876
  %v5058 = vunpack.c.l.b16 %v4877
  %v5059 = vunpack.c.h.b16 %v4877
  %v5060 = vunpack.c.l.b16 %v4878
  %v5061 = vunpack.c.h.b16 %v4878
  %v5062 = vunpack.c.l.b16 %v4879
  %v5063 = vunpack.c.h.b16 %v4879
  %v5064 = vunpack.c.l.b16 %v4880
  %v5065 = vunpack.c.h.b16 %v4880
  %v5066 = vunpack.c.l.b16 %v4881
  %v5067 = vunpack.c.h.b16 %v4881
  %v5068 = vunpack.c.l.b16 %v4882
  %v5069 = vunpack.c.h.b16 %v4882
  %v5070 = vunpack.c.l.b16 %v4883
  %v5071 = vunpack.c.h.b16 %v4883
  %v5072 = vunpack.c.l.b16 %v4884
  %v5073 = vunpack.c.h.b16 %v4884
  %v5074 = vunpack.c.l.b16 %v4885
  %v5075 = vunpack.c.h.b16 %v4885
  %v5076 = vunpack.c.l.b16 %v4886
  %v5077 = vunpack.c.h.b16 %v4886
  %v5078 = vunpack.c.l.b16 %v4887
  %v5079 = vunpack.c.h.b16 %v4887
  %v5080 = vpack.c.b16 %v4956, %v4952
  %v5081 = vpack.c.b16 %v4957, %v4953
  %v5082 = vpack.c.b16 %v4958, %v4954
  %v5083 = vpack.c.b16 %v4959, %v4955
  %v5084 = vpack.c.b16 %v4964, %v4960
  %v5085 = vpack.c.b16 %v4965, %v4961
  %v5086 = vpack.c.b16 %v4966, %v4962
  %v5087 = vpack.c.b16 %v4967, %v4963
  %v5088 = vpack.c.b16 %v4972, %v4968
  %v5089 = vpack.c.b16 %v4973, %v4969
  %v5090 = vpack.c.b16 %v4974, %v4970
  %v5091 = vpack.c.b16 %v4975, %v4971
  %v5092 = vpack.c.b16 %v4980, %v4976
  %v5093 = vpack.c.b16 %v4981, %v4977
  %v5094 = vpack.c.b16 %v4982, %v4978
  %v5095 = vpack.c.b16 %v4983, %v4979
  %v5096 = vpack.c.b16 %v4988, %v4984
  %v5097 = vpack.c.b16 %v4989, %v4985
  %v5098 = vpack.c.b16 %v4990, %v4986
  %v5099 = vpack.c.b16 %v4991, %v4987
  %v5100 = vpack.c.b16 %v4996, %v4992
  %v5101 = vpack.c.b16 %v4997, %v4993
  %v5102 = vpack.c.b16 %v4998, %v4994
  %v5103 = vpack.c.b16 %v4999, %v4995
  %v5104 = vpack.c.b16 %v5004, %v5000
  %v5105 = vpack.c.b16 %v5005, %v5001
  %v5106 = vpack.c.b16 %v5006, %v5002
  %v5107 = vpack.c.b16 %v5007, %v5003
  %v5108 = vpack.c.b16 %v5012, %v5008
  %v5109 = vpack.c.b16 %v5013, %v5009
  %v5110 = vpack.c.b16 %v5014, %v5010
  %v5111 = vpack.c.b16 %v5015, %v5011
  %v5112 = vpack.c.b16 %v5020, %v5016
  %v5113 = vpack.c.b16 %v5021, %v5017
  %v5114 = vpack.c.b16 %v5022, %v5018
  %v5115 = vpack.c.b16 %v5023, %v5019
  %v5116 = vpack.c.b16 %v5028, %v5024
  %v5117 = vpack.c.b16 %v5029, %v5025
  %v5118 = vpack.c.b16 %v5030, %v5026
  %v5119 = vpack.c.b16 %v5031, %v5027
  %v5120 = vpack.c.b16 %v5036, %v5032
  %v5121 = vpack.c.b16 %v5037, %v5033
  %v5122 = vpack.c.b16 %v5038, %v5034
  %v5123 = vpack.c.b16 %v5039, %v5035
  %v5124 = vpack.c.b16 %v5044, %v5040
  %v5125 = vpack.c.b16 %v5045, %v5041
  %v5126 = vpack.c.b16 %v5046, %v5042
  %v5127 = vpack.c.b16 %v5047, %v5043
  %v5128 = vpack.c.b16 %v5052, %v5048
  %v5129 = vpack.c.b16 %v5053, %v5049
  %v5130 = vpack.c.b16 %v5054, %v5050
  %v5131 = vpack.c.b16 %v5055, %v5051
  %v5132 = vpack.c.b16 %v5060, %v5056
  %v5133 = vpack.c.b16 %v5061, %v5057
  %v5134 = vpack.c.b16 %v5062, %v5058
  %v5135 = vpack.c.b16 %v5063, %v5059
  %v5136 = vpack.c.b16 %v5068, %v5064
  %v5137 = vpack.c.b16 %v5069, %v5065
  %v5138 = vpack.c.b16 %v5070, %v5066
  %v5139 = vpack.c.b16 %v5071, %v5067
  %v5140 = vpack.c.b16 %v5076, %v5072
  %v5141 = vpack.c.b16 %v5077, %v5073
  %v5142 = vpack.c.b16 %v5078, %v5074
  %v5143 = vpack.c.b16 %v5079, %v5075
  %5208 = vmatprep.subr.bf16.mxu0 %v5081
  %5209 = vmatpush1.bf16.msra.mxu0 %v5080
  %5210 = vmatprep.subr.bf16.mxu0 %v5085
  %5211 = vmatpush1.bf16.msra.mxu0 %v5084
  %5212 = vmatprep.subr.bf16.mxu0 %v5089
  %5213 = vmatpush1.bf16.msra.mxu0 %v5088
  %5214 = vmatprep.subr.bf16.mxu0 %v5093
  %5215 = vmatpush1.bf16.msra.mxu0 %v5092
  %5216 = vmatprep.subr.bf16.mxu0 %v5097
  %5217 = vmatpush1.bf16.msra.mxu0 %v5096
  %5218 = vmatprep.subr.bf16.mxu0 %v5101
  %5219 = vmatpush1.bf16.msra.mxu0 %v5100
  %5220 = vmatprep.subr.bf16.mxu0 %v5105
  %5221 = vmatpush1.bf16.msra.mxu0 %v5104
  %5222 = vmatprep.subr.bf16.mxu0 %v5109
  %5223 = vmatpush1.bf16.msra.mxu0 %v5108
  %5224 = vmatprep.subr.bf16.mxu0 %v5113
  %5225 = vmatpush1.bf16.msra.mxu0 %v5112
  %5226 = vmatprep.subr.bf16.mxu0 %v5117
  %5227 = vmatpush1.bf16.msra.mxu0 %v5116
  %5228 = vmatprep.subr.bf16.mxu0 %v5121
  %5229 = vmatpush1.bf16.msra.mxu0 %v5120
  %5230 = vmatprep.subr.bf16.mxu0 %v5125
  %5231 = vmatpush1.bf16.msra.mxu0 %v5124
  %5232 = vmatprep.subr.bf16.mxu0 %v5129
  %5233 = vmatpush1.bf16.msra.mxu0 %v5128
  %5234 = vmatprep.subr.bf16.mxu0 %v5133
  %5235 = vmatpush1.bf16.msra.mxu0 %v5132
  %5236 = vmatprep.subr.bf16.mxu0 %v5137
  %5237 = vmatpush1.bf16.msra.mxu0 %v5136
  %5238 = vmatprep.subr.bf16.mxu0 %v5141
  %5239 = vmatpush1.bf16.msra.mxu0 %v5140
  %5240 = vmatprep.mubr.bf16.mxu0 %v4254
  %5241 = vmatmul.mubr.bf16.gmra.mrb[0].mxu0 %v4253
  %v5242 = vpop.f32.mrb[0].mxu0
  %v5243 = vadd.f32 0.0, %v5242
  %v5244 = vpop.f32.mrb[0].mxu0
  %v5245 = vadd.f32 0.0, %v5244
  %v5246 = vpop.f32.mrb[0].mxu0
  %v5247 = vadd.f32 0.0, %v5246
  %v5248 = vpop.f32.mrb[0].mxu0
  %v5249 = vadd.f32 0.0, %v5248
  %5250 = vmatprep.mubr.bf16.mxu0 %v4256
  %5251 = vmatmul.mubr.bf16.gmra.mrb[0].mxu0 %v4255
  %v5252 = vpop.f32.mrb[0].mxu0
  %v5253 = vadd.f32 0.0, %v5252
  %v5254 = vpop.f32.mrb[0].mxu0
  %v5255 = vadd.f32 0.0, %v5254
  %v5256 = vpop.f32.mrb[0].mxu0
  %v5257 = vadd.f32 0.0, %v5256
  %v5258 = vpop.f32.mrb[0].mxu0
  %v5259 = vadd.f32 0.0, %v5258
  %5260 = vmatprep.mubr.bf16.mxu0 %v4258
  %5261 = vmatmul.mubr.bf16.gmra.mrb[0].mxu0 %v4257
  %v5262 = vpop.f32.mrb[0].mxu0
  %v5263 = vadd.f32 0.0, %v5262
  %v5264 = vpop.f32.mrb[0].mxu0
  %v5265 = vadd.f32 0.0, %v5264
  %v5266 = vpop.f32.mrb[0].mxu0
  %v5267 = vadd.f32 0.0, %v5266
  %v5268 = vpop.f32.mrb[0].mxu0
  %v5269 = vadd.f32 0.0, %v5268
  %5270 = vmatprep.mubr.bf16.mxu0 %v4260
  %5271 = vmatmul.mubr.bf16.gmra.mrb[0].mxu0 %v4259
  %v5272 = vpop.f32.mrb[0].mxu0
  %v5273 = vadd.f32 0.0, %v5272
  %v5274 = vpop.f32.mrb[0].mxu0
  %v5275 = vadd.f32 0.0, %v5274
  %v5276 = vpop.f32.mrb[0].mxu0
  %v5277 = vadd.f32 0.0, %v5276
  %v5278 = vpop.f32.mrb[0].mxu0
  %v5279 = vadd.f32 0.0, %v5278
  %5280 = vdwg.mxu0
  %5281 = vmatprep.subr.bf16.mxu0 %v5083
  %5282 = vmatpush1.bf16.msra.mxu0 %v5082
  %5283 = vmatprep.subr.bf16.mxu0 %v5087
  %5284 = vmatpush1.bf16.msra.mxu0 %v5086
  %5285 = vmatprep.subr.bf16.mxu0 %v5091
  %5286 = vmatpush1.bf16.msra.mxu0 %v5090
  %5287 = vmatprep.subr.bf16.mxu0 %v5095
  %5288 = vmatpush1.bf16.msra.mxu0 %v5094
  %5289 = vmatprep.subr.bf16.mxu0 %v5099
  %5290 = vmatpush1.bf16.msra.mxu0 %v5098
  %5291 = vmatprep.subr.bf16.mxu0 %v5103
  %5292 = vmatpush1.bf16.msra.mxu0 %v5102
  %5293 = vmatprep.subr.bf16.mxu0 %v5107
  %5294 = vmatpush1.bf16.msra.mxu0 %v5106
  %5295 = vmatprep.subr.bf16.mxu0 %v5111
  %5296 = vmatpush1.bf16.msra.mxu0 %v5110
  %5297 = vmatprep.subr.bf16.mxu0 %v5115
  %5298 = vmatpush1.bf16.msra.mxu0 %v5114
  %5299 = vmatprep.subr.bf16.mxu0 %v5119
  %5300 = vmatpush1.bf16.msra.mxu0 %v5118
  %5301 = vmatprep.subr.bf16.mxu0 %v5123
  %5302 = vmatpush1.bf16.msra.mxu0 %v5122
  %5303 = vmatprep.subr.bf16.mxu0 %v5127
  %5304 = vmatpush1.bf16.msra.mxu0 %v5126
  %5305 = vmatprep.subr.bf16.mxu0 %v5131
  %5306 = vmatpush1.bf16.msra.mxu0 %v5130
  %5307 = vmatprep.subr.bf16.mxu0 %v5135
  %5308 = vmatpush1.bf16.msra.mxu0 %v5134
  %5309 = vmatprep.subr.bf16.mxu0 %v5139
  %5310 = vmatpush1.bf16.msra.mxu0 %v5138
  %5311 = vmatprep.subr.bf16.mxu0 %v5143
  %5312 = vmatpush1.bf16.msra.mxu0 %v5142
  %5313 = vmatprep.mubr.bf16.mxu0 %v4254
  %5314 = vmatmul.mubr.bf16.gmra.mrb[0].mxu0 %v4253
  %v5315 = vpop.f32.mrb[0].mxu0
  %v5316 = vadd.f32 0.0, %v5315
  %v5317 = vpop.f32.mrb[0].mxu0
  %v5318 = vadd.f32 0.0, %v5317
  %v5319 = vpop.f32.mrb[0].mxu0
  %v5320 = vadd.f32 0.0, %v5319
  %v5321 = vpop.f32.mrb[0].mxu0
  %v5322 = vadd.f32 0.0, %v5321
  %5323 = vmatprep.mubr.bf16.mxu0 %v4256
  %5324 = vmatmul.mubr.bf16.gmra.mrb[0].mxu0 %v4255
  %v5325 = vpop.f32.mrb[0].mxu0
  %v5326 = vadd.f32 0.0, %v5325
  %v5327 = vpop.f32.mrb[0].mxu0
  %v5328 = vadd.f32 0.0, %v5327
  %v5329 = vpop.f32.mrb[0].mxu0
  %v5330 = vadd.f32 0.0, %v5329
  %v5331 = vpop.f32.mrb[0].mxu0
  %v5332 = vadd.f32 0.0, %v5331
  %5333 = vmatprep.mubr.bf16.mxu0 %v4258
  %5334 = vmatmul.mubr.bf16.gmra.mrb[0].mxu0 %v4257
  %v5335 = vpop.f32.mrb[0].mxu0
  %v5336 = vadd.f32 0.0, %v5335
  %v5337 = vpop.f32.mrb[0].mxu0
  %v5338 = vadd.f32 0.0, %v5337
  %v5339 = vpop.f32.mrb[0].mxu0
  %v5340 = vadd.f32 0.0, %v5339
  %v5341 = vpop.f32.mrb[0].mxu0
  %v5342 = vadd.f32 0.0, %v5341
  %5343 = vmatprep.mubr.bf16.mxu0 %v4260
  %5344 = vmatmul.mubr.bf16.gmra.mrb[0].mxu0 %v4259
  %v5345 = vpop.f32.mrb[0].mxu0
  %v5346 = vadd.f32 0.0, %v5345
  %v5347 = vpop.f32.mrb[0].mxu0
  %v5348 = vadd.f32 0.0, %v5347
  %v5349 = vpop.f32.mrb[0].mxu0
  %v5350 = vadd.f32 0.0, %v5349
  %v5351 = vpop.f32.mrb[0].mxu0
  %v5352 = vadd.f32 0.0, %v5351
  %5353 = vdwg.mxu0
  %v5354 = vld [vmem:[#allocation3] sm:$0xff]
  %v5355 = vld [vmem:[#allocation3 + $0x8] sm:$0xff]
  %v5356 = vld [vmem:[#allocation3 + $0x10] sm:$0xff]
  %v5357 = vld [vmem:[#allocation3 + $0x18] sm:$0xff]
  %v5358 = vld [vmem:[#allocation3 + $0x20] sm:$0xff]
  %v5359 = vld [vmem:[#allocation3 + $0x28] sm:$0xff]
  %v5360 = vld [vmem:[#allocation3 + $0x30] sm:$0xff]
  %v5361 = vld [vmem:[#allocation3 + $0x38] sm:$0xff]
  %v5362 = vld [vmem:[#allocation3 + $0x40] sm:$0xff]
  %v5363 = vld [vmem:[#allocation3 + $0x48] sm:$0xff]
  %v5364 = vld [vmem:[#allocation3 + $0x50] sm:$0xff]
  %v5365 = vld [vmem:[#allocation3 + $0x58] sm:$0xff]
  %v5366 = vld [vmem:[#allocation3 + $0x60] sm:$0xff]
  %v5367 = vld [vmem:[#allocation3 + $0x68] sm:$0xff]
  %v5368 = vld [vmem:[#allocation3 + $0x70] sm:$0xff]
  %v5369 = vld [vmem:[#allocation3 + $0x78] sm:$0xff]
  %v5370 = vld [vmem:[#allocation3 + $0x80] sm:$0xff]
  %v5371 = vld [vmem:[#allocation3 + $0x88] sm:$0xff]
  %v5372 = vld [vmem:[#allocation3 + $0x90] sm:$0xff]
  %v5373 = vld [vmem:[#allocation3 + $0x98] sm:$0xff]
  %v5374 = vld [vmem:[#allocation3 + $0xa0] sm:$0xff]
  %v5375 = vld [vmem:[#allocation3 + $0xa8] sm:$0xff]
  %v5376 = vld [vmem:[#allocation3 + $0xb0] sm:$0xff]
  %v5377 = vld [vmem:[#allocation3 + $0xb8] sm:$0xff]
  %v5378 = vld [vmem:[#allocation3 + $0xc0] sm:$0xff]
  %v5379 = vld [vmem:[#allocation3 + $0xc8] sm:$0xff]
  %v5380 = vld [vmem:[#allocation3 + $0xd0] sm:$0xff]
  %v5381 = vld [vmem:[#allocation3 + $0xd8] sm:$0xff]
  %v5382 = vld [vmem:[#allocation3 + $0xe0] sm:$0x7f]
  %v5383 = vld [vmem:[#allocation3 + $0xe8] sm:$0x7f]
  %v5384 = vld [vmem:[#allocation3 + $0xf0] sm:$0x7f]
  %v5385 = vld [vmem:[#allocation3 + $0xf8] sm:$0x7f]
  %v5418 = vrot.slane %v5243, 1
  %v5419 = vrot.slane %v5247, 1
  %v5420 = vsel %vm3784, %v5418, %v5419
  %v5421 = vrot.slane %v5245, 1
  %v5422 = vrot.slane %v5249, 1
  %v5423 = vsel %vm3784, %v5421, %v5422
  %v5424 = vrot.slane %v5316, 1
  %v5425 = vrot.slane %v5320, 1
  %v5426 = vsel %vm3784, %v5424, %v5425
  %v5427 = vrot.slane %v5318, 1
  %v5428 = vrot.slane %v5322, 1
  %v5429 = vsel %vm3784, %v5427, %v5428
  %v5430 = vrot.slane %v5253, 1
  %v5431 = vsel %vm3784, %v5419, %v5430
  %v5432 = vrot.slane %v5255, 1
  %v5433 = vsel %vm3784, %v5422, %v5432
  %v5434 = vrot.slane %v5326, 1
  %v5435 = vsel %vm3784, %v5425, %v5434
  %v5436 = vrot.slane %v5328, 1
  %v5437 = vsel %vm3784, %v5428, %v5436
  %v5438 = vrot.slane %v5257, 1
  %v5439 = vsel %vm3784, %v5430, %v5438
  %v5440 = vrot.slane %v5259, 1
  %v5441 = vsel %vm3784, %v5432, %v5440
  %v5442 = vrot.slane %v5330, 1
  %v5443 = vsel %vm3784, %v5434, %v5442
  %v5444 = vrot.slane %v5332, 1
  %v5445 = vsel %vm3784, %v5436, %v5444
  %v5446 = vrot.slane %v5263, 1
  %v5447 = vsel %vm3784, %v5438, %v5446
  %v5448 = vrot.slane %v5265, 1
  %v5449 = vsel %vm3784, %v5440, %v5448
  %v5450 = vrot.slane %v5336, 1
  %v5451 = vsel %vm3784, %v5442, %v5450
  %v5452 = vrot.slane %v5338, 1
  %v5453 = vsel %vm3784, %v5444, %v5452
  %v5454 = vrot.slane %v5267, 1
  %v5455 = vsel %vm3784, %v5446, %v5454
  %v5456 = vrot.slane %v5269, 1
  %v5457 = vsel %vm3784, %v5448, %v5456
  %v5458 = vrot.slane %v5340, 1
  %v5459 = vsel %vm3784, %v5450, %v5458
  %v5460 = vrot.slane %v5342, 1
  %v5461 = vsel %vm3784, %v5452, %v5460
  %v5462 = vrot.slane %v5273, 1
  %v5463 = vsel %vm3784, %v5454, %v5462
  %v5464 = vrot.slane %v5275, 1
  %v5465 = vsel %vm3784, %v5456, %v5464
  %v5466 = vrot.slane %v5346, 1
  %v5467 = vsel %vm3784, %v5458, %v5466
  %v5468 = vrot.slane %v5348, 1
  %v5469 = vsel %vm3784, %v5460, %v5468
  %v5470 = vrot.slane %v5277, 1
  %v5471 = vsel %vm3784, %v5462, %v5470
  %v5472 = vrot.slane %v5279, 1
  %v5473 = vsel %vm3784, %v5464, %v5472
  %v5474 = vrot.slane %v5350, 1
  %v5475 = vsel %vm3784, %v5466, %v5474
  %v5476 = vrot.slane %v5352, 1
  %v5477 = vsel %vm3784, %v5468, %v5476
  %v5510 = vadd.f32 %v5354, %v5420
  %v5511 = vadd.f32 %v5355, %v5423
  %v5512 = vadd.f32 %v5356, %v5426
  %v5513 = vadd.f32 %v5357, %v5429
  %v5514 = vadd.f32 %v5358, %v5431
  %v5515 = vadd.f32 %v5359, %v5433
  %v5516 = vadd.f32 %v5360, %v5435
  %v5517 = vadd.f32 %v5361, %v5437
  %v5518 = vadd.f32 %v5362, %v5439
  %v5519 = vadd.f32 %v5363, %v5441
  %v5520 = vadd.f32 %v5364, %v5443
  %v5521 = vadd.f32 %v5365, %v5445
  %v5522 = vadd.f32 %v5366, %v5447
  %v5523 = vadd.f32 %v5367, %v5449
  %v5524 = vadd.f32 %v5368, %v5451
  %v5525 = vadd.f32 %v5369, %v5453
  %v5526 = vadd.f32 %v5370, %v5455
  %v5527 = vadd.f32 %v5371, %v5457
  %v5528 = vadd.f32 %v5372, %v5459
  %v5529 = vadd.f32 %v5373, %v5461
  %v5530 = vadd.f32 %v5374, %v5463
  %v5531 = vadd.f32 %v5375, %v5465
  %v5532 = vadd.f32 %v5376, %v5467
  %v5533 = vadd.f32 %v5377, %v5469
  %v5534 = vadd.f32 %v5378, %v5471
  %v5535 = vadd.f32 %v5379, %v5473
  %v5536 = vadd.f32 %v5380, %v5475
  %v5537 = vadd.f32 %v5381, %v5477
  %v5538 = vadd.f32 %v5382, %v5470
  %v5539 = vadd.f32 %v5383, %v5472
  %v5540 = vadd.f32 %v5384, %v5474
  %v5541 = vadd.f32 %v5385, %v5476
  %5542 = vst [vmem:[#allocation3] sm:$0xff] %v5510
  %5543 = vst [vmem:[#allocation3 + $0x8] sm:$0xff] %v5511
  %5544 = vst [vmem:[#allocation3 + $0x10] sm:$0xff] %v5512
  %5545 = vst [vmem:[#allocation3 + $0x18] sm:$0xff] %v5513
  %5546 = vst [vmem:[#allocation3 + $0x20] sm:$0xff] %v5514
  %5547 = vst [vmem:[#allocation3 + $0x28] sm:$0xff] %v5515
  %5548 = vst [vmem:[#allocation3 + $0x30] sm:$0xff] %v5516
  %5549 = vst [vmem:[#allocation3 + $0x38] sm:$0xff] %v5517
  %5550 = vst [vmem:[#allocation3 + $0x40] sm:$0xff] %v5518
  %5551 = vst [vmem:[#allocation3 + $0x48] sm:$0xff] %v5519
  %5552 = vst [vmem:[#allocation3 + $0x50] sm:$0xff] %v5520
  %5553 = vst [vmem:[#allocation3 + $0x58] sm:$0xff] %v5521
  %5554 = vst [vmem:[#allocation3 + $0x60] sm:$0xff] %v5522
  %5555 = vst [vmem:[#allocation3 + $0x68] sm:$0xff] %v5523
  %5556 = vst [vmem:[#allocation3 + $0x70] sm:$0xff] %v5524
  %5557 = vst [vmem:[#allocation3 + $0x78] sm:$0xff] %v5525
  %5558 = vst [vmem:[#allocation3 + $0x80] sm:$0xff] %v5526
  %5559 = vst [vmem:[#allocation3 + $0x88] sm:$0xff] %v5527
  %5560 = vst [vmem:[#allocation3 + $0x90] sm:$0xff] %v5528
  %5561 = vst [vmem:[#allocation3 + $0x98] sm:$0xff] %v5529
  %5562 = vst [vmem:[#allocation3 + $0xa0] sm:$0xff] %v5530
  %5563 = vst [vmem:[#allocation3 + $0xa8] sm:$0xff] %v5531
  %5564 = vst [vmem:[#allocation3 + $0xb0] sm:$0xff] %v5532
  %5565 = vst [vmem:[#allocation3 + $0xb8] sm:$0xff] %v5533
  %5566 = vst [vmem:[#allocation3 + $0xc0] sm:$0xff] %v5534
  %5567 = vst [vmem:[#allocation3 + $0xc8] sm:$0xff] %v5535
  %5568 = vst [vmem:[#allocation3 + $0xd0] sm:$0xff] %v5536
  %5569 = vst [vmem:[#allocation3 + $0xd8] sm:$0xff] %v5537
  %5570 = vst [vmem:[#allocation3 + $0xe0] sm:$0x7f] %v5538
  %5571 = vst [vmem:[#allocation3 + $0xe8] sm:$0x7f] %v5539
  %5572 = vst [vmem:[#allocation3 + $0xf0] sm:$0x7f] %v5540
  %5573 = vst [vmem:[#allocation3 + $0xf8] sm:$0x7f] %v5541
  %s5574 = scalar_lea.vmem %s3, 1024
  %v5575 = vld [vmem:[%s5574] sm:$0xff]
  %v5576 = vld [vmem:[%s5574 + $0x8] sm:$0xff]
  %v5577 = vld [vmem:[%s5574 + $0x10] sm:$0xff]
  %v5578 = vld [vmem:[%s5574 + $0x18] sm:$0xff]
  %v5579 = vld [vmem:[%s5574 + $0x20] sm:$0xff]
  %v5580 = vld [vmem:[%s5574 + $0x28] sm:$0xff]
  %v5581 = vld [vmem:[%s5574 + $0x30] sm:$0xff]
  %v5582 = vld [vmem:[%s5574 + $0x38] sm:$0xff]
  %v5583 = vld [vmem:[%s5574 + $0x40] sm:$0xff]
  %v5584 = vld [vmem:[%s5574 + $0x48] sm:$0xff]
  %v5585 = vld [vmem:[%s5574 + $0x50] sm:$0xff]
  %v5586 = vld [vmem:[%s5574 + $0x58] sm:$0xff]
  %v5587 = vld [vmem:[%s5574 + $0x60] sm:$0xff]
  %v5588 = vld [vmem:[%s5574 + $0x68] sm:$0xff]
  %v5589 = vld [vmem:[%s5574 + $0x70] sm:$0xff]
  %v5590 = vld [vmem:[%s5574 + $0x78] sm:$0xff]
  %v5591 = vld [vmem:[%s5574 + $0x80] sm:$0xff]
  %v5592 = vld [vmem:[%s5574 + $0x88] sm:$0xff]
  %v5593 = vld [vmem:[%s5574 + $0x90] sm:$0xff]
  %v5594 = vld [vmem:[%s5574 + $0x98] sm:$0xff]
  %v5595 = vld [vmem:[%s5574 + $0xa0] sm:$0xff]
  %v5596 = vld [vmem:[%s5574 + $0xa8] sm:$0xff]
  %v5597 = vld [vmem:[%s5574 + $0xb0] sm:$0xff]
  %v5598 = vld [vmem:[%s5574 + $0xb8] sm:$0xff]
  %v5599 = vld [vmem:[%s5574 + $0xc0] sm:$0xff]
  %v5600 = vld [vmem:[%s5574 + $0xc8] sm:$0xff]
  %v5601 = vld [vmem:[%s5574 + $0xd0] sm:$0xff]
  %v5602 = vld [vmem:[%s5574 + $0xd8] sm:$0xff]
  %v5603 = vld [vmem:[%s5574 + $0xe0] sm:$0xff]
  %v5604 = vld [vmem:[%s5574 + $0xe8] sm:$0xff]
  %v5605 = vld [vmem:[%s5574 + $0xf0] sm:$0xff]
  %v5606 = vld [vmem:[%s5574 + $0xf8] sm:$0xff]
  %v5607 = vld [vmem:[%s5574 + $0x100] sm:$0xff]
  %v5608 = vld [vmem:[%s5574 + $0x108] sm:$0xff]
  %v5609 = vld [vmem:[%s5574 + $0x110] sm:$0xff]
  %v5610 = vld [vmem:[%s5574 + $0x118] sm:$0xff]
  %v5611 = vld [vmem:[%s5574 + $0x120] sm:$0xff]
  %v5612 = vld [vmem:[%s5574 + $0x128] sm:$0xff]
  %v5613 = vld [vmem:[%s5574 + $0x130] sm:$0xff]
  %v5614 = vld [vmem:[%s5574 + $0x138] sm:$0xff]
  %v5615 = vld [vmem:[%s5574 + $0x140] sm:$0xff]
  %v5616 = vld [vmem:[%s5574 + $0x148] sm:$0xff]
  %v5617 = vld [vmem:[%s5574 + $0x150] sm:$0xff]
  %v5618 = vld [vmem:[%s5574 + $0x158] sm:$0xff]
  %v5619 = vld [vmem:[%s5574 + $0x160] sm:$0xff]
  %v5620 = vld [vmem:[%s5574 + $0x168] sm:$0xff]
  %v5621 = vld [vmem:[%s5574 + $0x170] sm:$0xff]
  %v5622 = vld [vmem:[%s5574 + $0x178] sm:$0xff]
  %v5623 = vld [vmem:[%s5574 + $0x180] sm:$0xff]
  %v5624 = vld [vmem:[%s5574 + $0x188] sm:$0xff]
  %v5625 = vld [vmem:[%s5574 + $0x190] sm:$0xff]
  %v5626 = vld [vmem:[%s5574 + $0x198] sm:$0xff]
  %v5627 = vld [vmem:[%s5574 + $0x1a0] sm:$0xff]
  %v5628 = vld [vmem:[%s5574 + $0x1a8] sm:$0xff]
  %v5629 = vld [vmem:[%s5574 + $0x1b0] sm:$0xff]
  %v5630 = vld [vmem:[%s5574 + $0x1b8] sm:$0xff]
  %v5631 = vld [vmem:[%s5574 + $0x1c0] sm:$0xff]
  %v5632 = vld [vmem:[%s5574 + $0x1c8] sm:$0xff]
  %v5633 = vld [vmem:[%s5574 + $0x1d0] sm:$0xff]
  %v5634 = vld [vmem:[%s5574 + $0x1d8] sm:$0xff]
  %v5635 = vld [vmem:[%s5574 + $0x1e0] sm:$0xff]
  %v5636 = vld [vmem:[%s5574 + $0x1e8] sm:$0xff]
  %v5637 = vld [vmem:[%s5574 + $0x1f0] sm:$0xff]
  %v5638 = vld [vmem:[%s5574 + $0x1f8] sm:$0xff]
  %v5703 = vunpack.c.l.b16 %v5575
  %v5704 = vunpack.c.h.b16 %v5575
  %v5705 = vunpack.c.l.b16 %v5576
  %v5706 = vunpack.c.h.b16 %v5576
  %v5707 = vunpack.c.l.b16 %v5577
  %v5708 = vunpack.c.h.b16 %v5577
  %v5709 = vunpack.c.l.b16 %v5578
  %v5710 = vunpack.c.h.b16 %v5578
  %v5711 = vunpack.c.l.b16 %v5579
  %v5712 = vunpack.c.h.b16 %v5579
  %v5713 = vunpack.c.l.b16 %v5580
  %v5714 = vunpack.c.h.b16 %v5580
  %v5715 = vunpack.c.l.b16 %v5581
  %v5716 = vunpack.c.h.b16 %v5581
  %v5717 = vunpack.c.l.b16 %v5582
  %v5718 = vunpack.c.h.b16 %v5582
  %v5719 = vunpack.c.l.b16 %v5583
  %v5720 = vunpack.c.h.b16 %v5583
  %v5721 = vunpack.c.l.b16 %v5584
  %v5722 = vunpack.c.h.b16 %v5584
  %v5723 = vunpack.c.l.b16 %v5585
  %v5724 = vunpack.c.h.b16 %v5585
  %v5725 = vunpack.c.l.b16 %v5586
  %v5726 = vunpack.c.h.b16 %v5586
  %v5727 = vunpack.c.l.b16 %v5587
  %v5728 = vunpack.c.h.b16 %v5587
  %v5729 = vunpack.c.l.b16 %v5588
  %v5730 = vunpack.c.h.b16 %v5588
  %v5731 = vunpack.c.l.b16 %v5589
  %v5732 = vunpack.c.h.b16 %v5589
  %v5733 = vunpack.c.l.b16 %v5590
  %v5734 = vunpack.c.h.b16 %v5590
  %v5735 = vunpack.c.l.b16 %v5591
  %v5736 = vunpack.c.h.b16 %v5591
  %v5737 = vunpack.c.l.b16 %v5592
  %v5738 = vunpack.c.h.b16 %v5592
  %v5739 = vunpack.c.l.b16 %v5593
  %v5740 = vunpack.c.h.b16 %v5593
  %v5741 = vunpack.c.l.b16 %v5594
  %v5742 = vunpack.c.h.b16 %v5594
  %v5743 = vunpack.c.l.b16 %v5595
  %v5744 = vunpack.c.h.b16 %v5595
  %v5745 = vunpack.c.l.b16 %v5596
  %v5746 = vunpack.c.h.b16 %v5596
  %v5747 = vunpack.c.l.b16 %v5597
  %v5748 = vunpack.c.h.b16 %v5597
  %v5749 = vunpack.c.l.b16 %v5598
  %v5750 = vunpack.c.h.b16 %v5598
  %v5751 = vunpack.c.l.b16 %v5599
  %v5752 = vunpack.c.h.b16 %v5599
  %v5753 = vunpack.c.l.b16 %v5600
  %v5754 = vunpack.c.h.b16 %v5600
  %v5755 = vunpack.c.l.b16 %v5601
  %v5756 = vunpack.c.h.b16 %v5601
  %v5757 = vunpack.c.l.b16 %v5602
  %v5758 = vunpack.c.h.b16 %v5602
  %v5759 = vunpack.c.l.b16 %v5603
  %v5760 = vunpack.c.h.b16 %v5603
  %v5761 = vunpack.c.l.b16 %v5604
  %v5762 = vunpack.c.h.b16 %v5604
  %v5763 = vunpack.c.l.b16 %v5605
  %v5764 = vunpack.c.h.b16 %v5605
  %v5765 = vunpack.c.l.b16 %v5606
  %v5766 = vunpack.c.h.b16 %v5606
  %v5767 = vunpack.c.l.b16 %v5607
  %v5768 = vunpack.c.h.b16 %v5607
  %v5769 = vunpack.c.l.b16 %v5608
  %v5770 = vunpack.c.h.b16 %v5608
  %v5771 = vunpack.c.l.b16 %v5609
  %v5772 = vunpack.c.h.b16 %v5609
  %v5773 = vunpack.c.l.b16 %v5610
  %v5774 = vunpack.c.h.b16 %v5610
  %v5775 = vunpack.c.l.b16 %v5611
  %v5776 = vunpack.c.h.b16 %v5611
  %v5777 = vunpack.c.l.b16 %v5612
  %v5778 = vunpack.c.h.b16 %v5612
  %v5779 = vunpack.c.l.b16 %v5613
  %v5780 = vunpack.c.h.b16 %v5613
  %v5781 = vunpack.c.l.b16 %v5614
  %v5782 = vunpack.c.h.b16 %v5614
  %v5783 = vunpack.c.l.b16 %v5615
  %v5784 = vunpack.c.h.b16 %v5615
  %v5785 = vunpack.c.l.b16 %v5616
  %v5786 = vunpack.c.h.b16 %v5616
  %v5787 = vunpack.c.l.b16 %v5617
  %v5788 = vunpack.c.h.b16 %v5617
  %v5789 = vunpack.c.l.b16 %v5618
  %v5790 = vunpack.c.h.b16 %v5618
  %v5791 = vunpack.c.l.b16 %v5619
  %v5792 = vunpack.c.h.b16 %v5619
  %v5793 = vunpack.c.l.b16 %v5620
  %v5794 = vunpack.c.h.b16 %v5620
  %v5795 = vunpack.c.l.b16 %v5621
  %v5796 = vunpack.c.h.b16 %v5621
  %v5797 = vunpack.c.l.b16 %v5622
  %v5798 = vunpack.c.h.b16 %v5622
  %v5799 = vunpack.c.l.b16 %v5623
  %v5800 = vunpack.c.h.b16 %v5623
  %v5801 = vunpack.c.l.b16 %v5624
  %v5802 = vunpack.c.h.b16 %v5624
  %v5803 = vunpack.c.l.b16 %v5625
  %v5804 = vunpack.c.h.b16 %v5625
  %v5805 = vunpack.c.l.b16 %v5626
  %v5806 = vunpack.c.h.b16 %v5626
  %v5807 = vunpack.c.l.b16 %v5627
  %v5808 = vunpack.c.h.b16 %v5627
  %v5809 = vunpack.c.l.b16 %v5628
  %v5810 = vunpack.c.h.b16 %v5628
  %v5811 = vunpack.c.l.b16 %v5629
  %v5812 = vunpack.c.h.b16 %v5629
  %v5813 = vunpack.c.l.b16 %v5630
  %v5814 = vunpack.c.h.b16 %v5630
  %v5815 = vunpack.c.l.b16 %v5631
  %v5816 = vunpack.c.h.b16 %v5631
  %v5817 = vunpack.c.l.b16 %v5632
  %v5818 = vunpack.c.h.b16 %v5632
  %v5819 = vunpack.c.l.b16 %v5633
  %v5820 = vunpack.c.h.b16 %v5633
  %v5821 = vunpack.c.l.b16 %v5634
  %v5822 = vunpack.c.h.b16 %v5634
  %v5823 = vunpack.c.l.b16 %v5635
  %v5824 = vunpack.c.h.b16 %v5635
  %v5825 = vunpack.c.l.b16 %v5636
  %v5826 = vunpack.c.h.b16 %v5636
  %v5827 = vunpack.c.l.b16 %v5637
  %v5828 = vunpack.c.h.b16 %v5637
  %v5829 = vunpack.c.l.b16 %v5638
  %v5830 = vunpack.c.h.b16 %v5638
  %v5831 = vpack.c.b16 %v5707, %v5703
  %v5832 = vpack.c.b16 %v5708, %v5704
  %v5833 = vpack.c.b16 %v5709, %v5705
  %v5834 = vpack.c.b16 %v5710, %v5706
  %v5835 = vpack.c.b16 %v5715, %v5711
  %v5836 = vpack.c.b16 %v5716, %v5712
  %v5837 = vpack.c.b16 %v5717, %v5713
  %v5838 = vpack.c.b16 %v5718, %v5714
  %v5839 = vpack.c.b16 %v5723, %v5719
  %v5840 = vpack.c.b16 %v5724, %v5720
  %v5841 = vpack.c.b16 %v5725, %v5721
  %v5842 = vpack.c.b16 %v5726, %v5722
  %v5843 = vpack.c.b16 %v5731, %v5727
  %v5844 = vpack.c.b16 %v5732, %v5728
  %v5845 = vpack.c.b16 %v5733, %v5729
  %v5846 = vpack.c.b16 %v5734, %v5730
  %v5847 = vpack.c.b16 %v5739, %v5735
  %v5848 = vpack.c.b16 %v5740, %v5736
  %v5849 = vpack.c.b16 %v5741, %v5737
  %v5850 = vpack.c.b16 %v5742, %v5738
  %v5851 = vpack.c.b16 %v5747, %v5743
  %v5852 = vpack.c.b16 %v5748, %v5744
  %v5853 = vpack.c.b16 %v5749, %v5745
  %v5854 = vpack.c.b16 %v5750, %v5746
  %v5855 = vpack.c.b16 %v5755, %v5751
  %v5856 = vpack.c.b16 %v5756, %v5752
  %v5857 = vpack.c.b16 %v5757, %v5753
  %v5858 = vpack.c.b16 %v5758, %v5754
  %v5859 = vpack.c.b16 %v5763, %v5759
  %v5860 = vpack.c.b16 %v5764, %v5760
  %v5861 = vpack.c.b16 %v5765, %v5761
  %v5862 = vpack.c.b16 %v5766, %v5762
  %v5863 = vpack.c.b16 %v5771, %v5767
  %v5864 = vpack.c.b16 %v5772, %v5768
  %v5865 = vpack.c.b16 %v5773, %v5769
  %v5866 = vpack.c.b16 %v5774, %v5770
  %v5867 = vpack.c.b16 %v5779, %v5775
  %v5868 = vpack.c.b16 %v5780, %v5776
  %v5869 = vpack.c.b16 %v5781, %v5777
  %v5870 = vpack.c.b16 %v5782, %v5778
  %v5871 = vpack.c.b16 %v5787, %v5783
  %v5872 = vpack.c.b16 %v5788, %v5784
  %v5873 = vpack.c.b16 %v5789, %v5785
  %v5874 = vpack.c.b16 %v5790, %v5786
  %v5875 = vpack.c.b16 %v5795, %v5791
  %v5876 = vpack.c.b16 %v5796, %v5792
  %v5877 = vpack.c.b16 %v5797, %v5793
  %v5878 = vpack.c.b16 %v5798, %v5794
  %v5879 = vpack.c.b16 %v5803, %v5799
  %v5880 = vpack.c.b16 %v5804, %v5800
  %v5881 = vpack.c.b16 %v5805, %v5801
  %v5882 = vpack.c.b16 %v5806, %v5802
  %v5883 = vpack.c.b16 %v5811, %v5807
  %v5884 = vpack.c.b16 %v5812, %v5808
  %v5885 = vpack.c.b16 %v5813, %v5809
  %v5886 = vpack.c.b16 %v5814, %v5810
  %v5887 = vpack.c.b16 %v5819, %v5815
  %v5888 = vpack.c.b16 %v5820, %v5816
  %v5889 = vpack.c.b16 %v5821, %v5817
  %v5890 = vpack.c.b16 %v5822, %v5818
  %v5891 = vpack.c.b16 %v5827, %v5823
  %v5892 = vpack.c.b16 %v5828, %v5824
  %v5893 = vpack.c.b16 %v5829, %v5825
  %v5894 = vpack.c.b16 %v5830, %v5826
  %5959 = vmatprep.subr.bf16.mxu0 %v5832
  %5960 = vmatpush1.bf16.msra.mxu0 %v5831
  %5961 = vmatprep.subr.bf16.mxu0 %v5836
  %5962 = vmatpush1.bf16.msra.mxu0 %v5835
  %5963 = vmatprep.subr.bf16.mxu0 %v5840
  %5964 = vmatpush1.bf16.msra.mxu0 %v5839
  %5965 = vmatprep.subr.bf16.mxu0 %v5844
  %5966 = vmatpush1.bf16.msra.mxu0 %v5843
  %5967 = vmatprep.subr.bf16.mxu0 %v5848
  %5968 = vmatpush1.bf16.msra.mxu0 %v5847
  %5969 = vmatprep.subr.bf16.mxu0 %v5852
  %5970 = vmatpush1.bf16.msra.mxu0 %v5851
  %5971 = vmatprep.subr.bf16.mxu0 %v5856
  %5972 = vmatpush1.bf16.msra.mxu0 %v5855
  %5973 = vmatprep.subr.bf16.mxu0 %v5860
  %5974 = vmatpush1.bf16.msra.mxu0 %v5859
  %5975 = vmatprep.subr.bf16.mxu0 %v5864
  %5976 = vmatpush1.bf16.msra.mxu0 %v5863
  %5977 = vmatprep.subr.bf16.mxu0 %v5868
  %5978 = vmatpush1.bf16.msra.mxu0 %v5867
  %5979 = vmatprep.subr.bf16.mxu0 %v5872
  %5980 = vmatpush1.bf16.msra.mxu0 %v5871
  %5981 = vmatprep.subr.bf16.mxu0 %v5876
  %5982 = vmatpush1.bf16.msra.mxu0 %v5875
  %5983 = vmatprep.subr.bf16.mxu0 %v5880
  %5984 = vmatpush1.bf16.msra.mxu0 %v5879
  %5985 = vmatprep.subr.bf16.mxu0 %v5884
  %5986 = vmatpush1.bf16.msra.mxu0 %v5883
  %5987 = vmatprep.subr.bf16.mxu0 %v5888
  %5988 = vmatpush1.bf16.msra.mxu0 %v5887
  %5989 = vmatprep.subr.bf16.mxu0 %v5892
  %5990 = vmatpush1.bf16.msra.mxu0 %v5891
  %5991 = vmatprep.mubr.bf16.mxu0 %v4254
  %5992 = vmatmul.mubr.bf16.gmra.mrb[0].mxu0 %v4253
  %v5993 = vpop.f32.mrb[0].mxu0
  %v5994 = vadd.f32 0.0, %v5993
  %v5995 = vpop.f32.mrb[0].mxu0
  %v5996 = vadd.f32 0.0, %v5995
  %v5997 = vpop.f32.mrb[0].mxu0
  %v5998 = vadd.f32 0.0, %v5997
  %v5999 = vpop.f32.mrb[0].mxu0
  %v6000 = vadd.f32 0.0, %v5999
  %6001 = vmatprep.mubr.bf16.mxu0 %v4256
  %6002 = vmatmul.mubr.bf16.gmra.mrb[0].mxu0 %v4255
  %v6003 = vpop.f32.mrb[0].mxu0
  %v6004 = vadd.f32 0.0, %v6003
  %v6005 = vpop.f32.mrb[0].mxu0
  %v6006 = vadd.f32 0.0, %v6005
  %v6007 = vpop.f32.mrb[0].mxu0
  %v6008 = vadd.f32 0.0, %v6007
  %v6009 = vpop.f32.mrb[0].mxu0
  %v6010 = vadd.f32 0.0, %v6009
  %6011 = vmatprep.mubr.bf16.mxu0 %v4258
  %6012 = vmatmul.mubr.bf16.gmra.mrb[0].mxu0 %v4257
  %v6013 = vpop.f32.mrb[0].mxu0
  %v6014 = vadd.f32 0.0, %v6013
  %v6015 = vpop.f32.mrb[0].mxu0
  %v6016 = vadd.f32 0.0, %v6015
  %v6017 = vpop.f32.mrb[0].mxu0
  %v6018 = vadd.f32 0.0, %v6017
  %v6019 = vpop.f32.mrb[0].mxu0
  %v6020 = vadd.f32 0.0, %v6019
  %6021 = vmatprep.mubr.bf16.mxu0 %v4260
  %6022 = vmatmul.mubr.bf16.gmra.mrb[0].mxu0 %v4259
  %v6023 = vpop.f32.mrb[0].mxu0
  %v6024 = vadd.f32 0.0, %v6023
  %v6025 = vpop.f32.mrb[0].mxu0
  %v6026 = vadd.f32 0.0, %v6025
  %v6027 = vpop.f32.mrb[0].mxu0
  %v6028 = vadd.f32 0.0, %v6027
  %v6029 = vpop.f32.mrb[0].mxu0
  %v6030 = vadd.f32 0.0, %v6029
  %6031 = vdwg.mxu0
  %6032 = vmatprep.subr.bf16.mxu0 %v5834
  %6033 = vmatpush1.bf16.msra.mxu0 %v5833
  %6034 = vmatprep.subr.bf16.mxu0 %v5838
  %6035 = vmatpush1.bf16.msra.mxu0 %v5837
  %6036 = vmatprep.subr.bf16.mxu0 %v5842
  %6037 = vmatpush1.bf16.msra.mxu0 %v5841
  %6038 = vmatprep.subr.bf16.mxu0 %v5846
  %6039 = vmatpush1.bf16.msra.mxu0 %v5845
  %6040 = vmatprep.subr.bf16.mxu0 %v5850
  %6041 = vmatpush1.bf16.msra.mxu0 %v5849
  %6042 = vmatprep.subr.bf16.mxu0 %v5854
  %6043 = vmatpush1.bf16.msra.mxu0 %v5853
  %6044 = vmatprep.subr.bf16.mxu0 %v5858
  %6045 = vmatpush1.bf16.msra.mxu0 %v5857
  %6046 = vmatprep.subr.bf16.mxu0 %v5862
  %6047 = vmatpush1.bf16.msra.mxu0 %v5861
  %6048 = vmatprep.subr.bf16.mxu0 %v5866
  %6049 = vmatpush1.bf16.msra.mxu0 %v5865
  %6050 = vmatprep.subr.bf16.mxu0 %v5870
  %6051 = vmatpush1.bf16.msra.mxu0 %v5869
  %6052 = vmatprep.subr.bf16.mxu0 %v5874
  %6053 = vmatpush1.bf16.msra.mxu0 %v5873
  %6054 = vmatprep.subr.bf16.mxu0 %v5878
  %6055 = vmatpush1.bf16.msra.mxu0 %v5877
  %6056 = vmatprep.subr.bf16.mxu0 %v5882
  %6057 = vmatpush1.bf16.msra.mxu0 %v5881
  %6058 = vmatprep.subr.bf16.mxu0 %v5886
  %6059 = vmatpush1.bf16.msra.mxu0 %v5885
  %6060 = vmatprep.subr.bf16.mxu0 %v5890
  %6061 = vmatpush1.bf16.msra.mxu0 %v5889
  %6062 = vmatprep.subr.bf16.mxu0 %v5894
  %6063 = vmatpush1.bf16.msra.mxu0 %v5893
  %6064 = vmatprep.mubr.bf16.mxu0 %v4254
  %6065 = vmatmul.mubr.bf16.gmra.mrb[0].mxu0 %v4253
  %v6066 = vpop.f32.mrb[0].mxu0
  %v6067 = vadd.f32 0.0, %v6066
  %v6068 = vpop.f32.mrb[0].mxu0
  %v6069 = vadd.f32 0.0, %v6068
  %v6070 = vpop.f32.mrb[0].mxu0
  %v6071 = vadd.f32 0.0, %v6070
  %v6072 = vpop.f32.mrb[0].mxu0
  %v6073 = vadd.f32 0.0, %v6072
  %6074 = vmatprep.mubr.bf16.mxu0 %v4256
  %6075 = vmatmul.mubr.bf16.gmra.mrb[0].mxu0 %v4255
  %v6076 = vpop.f32.mrb[0].mxu0
  %v6077 = vadd.f32 0.0, %v6076
  %v6078 = vpop.f32.mrb[0].mxu0
  %v6079 = vadd.f32 0.0, %v6078
  %v6080 = vpop.f32.mrb[0].mxu0
  %v6081 = vadd.f32 0.0, %v6080
  %v6082 = vpop.f32.mrb[0].mxu0
  %v6083 = vadd.f32 0.0, %v6082
  %6084 = vmatprep.mubr.bf16.mxu0 %v4258
  %6085 = vmatmul.mubr.bf16.gmra.mrb[0].mxu0 %v4257
  %v6086 = vpop.f32.mrb[0].mxu0
  %v6087 = vadd.f32 0.0, %v6086
  %v6088 = vpop.f32.mrb[0].mxu0
  %v6089 = vadd.f32 0.0, %v6088
  %v6090 = vpop.f32.mrb[0].mxu0
  %v6091 = vadd.f32 0.0, %v6090
  %v6092 = vpop.f32.mrb[0].mxu0
  %v6093 = vadd.f32 0.0, %v6092
  %6094 = vmatprep.mubr.bf16.mxu0 %v4260
  %6095 = vmatmul.mubr.bf16.gmra.mrb[0].mxu0 %v4259
  %v6096 = vpop.f32.mrb[0].mxu0
  %v6097 = vadd.f32 0.0, %v6096
  %v6098 = vpop.f32.mrb[0].mxu0
  %v6099 = vadd.f32 0.0, %v6098
  %v6100 = vpop.f32.mrb[0].mxu0
  %v6101 = vadd.f32 0.0, %v6100
  %v6102 = vpop.f32.mrb[0].mxu0
  %v6103 = vadd.f32 0.0, %v6102
  %6104 = vdwg.mxu0
  %v6105 = vld [vmem:[#allocation3] sm:$0xff]
  %v6106 = vld [vmem:[#allocation3 + $0x8] sm:$0xff]
  %v6107 = vld [vmem:[#allocation3 + $0x10] sm:$0xff]
  %v6108 = vld [vmem:[#allocation3 + $0x18] sm:$0xff]
  %v6109 = vld [vmem:[#allocation3 + $0x20] sm:$0xff]
  %v6110 = vld [vmem:[#allocation3 + $0x28] sm:$0xff]
  %v6111 = vld [vmem:[#allocation3 + $0x30] sm:$0xff]
  %v6112 = vld [vmem:[#allocation3 + $0x38] sm:$0xff]
  %v6113 = vld [vmem:[#allocation3 + $0x40] sm:$0xff]
  %v6114 = vld [vmem:[#allocation3 + $0x48] sm:$0xff]
  %v6115 = vld [vmem:[#allocation3 + $0x50] sm:$0xff]
  %v6116 = vld [vmem:[#allocation3 + $0x58] sm:$0xff]
  %v6117 = vld [vmem:[#allocation3 + $0x60] sm:$0xff]
  %v6118 = vld [vmem:[#allocation3 + $0x68] sm:$0xff]
  %v6119 = vld [vmem:[#allocation3 + $0x70] sm:$0xff]
  %v6120 = vld [vmem:[#allocation3 + $0x78] sm:$0xff]
  %v6121 = vld [vmem:[#allocation3 + $0x80] sm:$0xff]
  %v6122 = vld [vmem:[#allocation3 + $0x88] sm:$0xff]
  %v6123 = vld [vmem:[#allocation3 + $0x90] sm:$0xff]
  %v6124 = vld [vmem:[#allocation3 + $0x98] sm:$0xff]
  %v6125 = vld [vmem:[#allocation3 + $0xa0] sm:$0xff]
  %v6126 = vld [vmem:[#allocation3 + $0xa8] sm:$0xff]
  %v6127 = vld [vmem:[#allocation3 + $0xb0] sm:$0xff]
  %v6128 = vld [vmem:[#allocation3 + $0xb8] sm:$0xff]
  %v6129 = vld [vmem:[#allocation3 + $0xc0] sm:$0xff]
  %v6130 = vld [vmem:[#allocation3 + $0xc8] sm:$0xff]
  %v6131 = vld [vmem:[#allocation3 + $0xd0] sm:$0xff]
  %v6132 = vld [vmem:[#allocation3 + $0xd8] sm:$0xff]
  %v6133 = vld [vmem:[#allocation3 + $0xe0] sm:$0x3f]
  %v6134 = vld [vmem:[#allocation3 + $0xe8] sm:$0x3f]
  %v6135 = vld [vmem:[#allocation3 + $0xf0] sm:$0x3f]
  %v6136 = vld [vmem:[#allocation3 + $0xf8] sm:$0x3f]
  %vm6169 = vcmask 1045504
  %v6170 = vrot.slane %v5994, 2
  %v6171 = vrot.slane %v5998, 2
  %v6172 = vsel %vm6169, %v6170, %v6171
  %v6173 = vrot.slane %v5996, 2
  %v6174 = vrot.slane %v6000, 2
  %v6175 = vsel %vm6169, %v6173, %v6174
  %v6176 = vrot.slane %v6067, 2
  %v6177 = vrot.slane %v6071, 2
  %v6178 = vsel %vm6169, %v6176, %v6177
  %v6179 = vrot.slane %v6069, 2
  %v6180 = vrot.slane %v6073, 2
  %v6181 = vsel %vm6169, %v6179, %v6180
  %v6182 = vrot.slane %v6004, 2
  %v6183 = vsel %vm6169, %v6171, %v6182
  %v6184 = vrot.slane %v6006, 2
  %v6185 = vsel %vm6169, %v6174, %v6184
  %v6186 = vrot.slane %v6077, 2
  %v6187 = vsel %vm6169, %v6177, %v6186
  %v6188 = vrot.slane %v6079, 2
  %v6189 = vsel %vm6169, %v6180, %v6188
  %v6190 = vrot.slane %v6008, 2
  %v6191 = vsel %vm6169, %v6182, %v6190
  %v6192 = vrot.slane %v6010, 2
  %v6193 = vsel %vm6169, %v6184, %v6192
  %v6194 = vrot.slane %v6081, 2
  %v6195 = vsel %vm6169, %v6186, %v6194
  %v6196 = vrot.slane %v6083, 2
  %v6197 = vsel %vm6169, %v6188, %v6196
  %v6198 = vrot.slane %v6014, 2
  %v6199 = vsel %vm6169, %v6190, %v6198
  %v6200 = vrot.slane %v6016, 2
  %v6201 = vsel %vm6169, %v6192, %v6200
  %v6202 = vrot.slane %v6087, 2
  %v6203 = vsel %vm6169, %v6194, %v6202
  %v6204 = vrot.slane %v6089, 2
  %v6205 = vsel %vm6169, %v6196, %v6204
  %v6206 = vrot.slane %v6018, 2
  %v6207 = vsel %vm6169, %v6198, %v6206
  %v6208 = vrot.slane %v6020, 2
  %v6209 = vsel %vm6169, %v6200, %v6208
  %v6210 = vrot.slane %v6091, 2
  %v6211 = vsel %vm6169, %v6202, %v6210
  %v6212 = vrot.slane %v6093, 2
  %v6213 = vsel %vm6169, %v6204, %v6212
  %v6214 = vrot.slane %v6024, 2
  %v6215 = vsel %vm6169, %v6206, %v6214
  %v6216 = vrot.slane %v6026, 2
  %v6217 = vsel %vm6169, %v6208, %v6216
  %v6218 = vrot.slane %v6097, 2
  %v6219 = vsel %vm6169, %v6210, %v6218
  %v6220 = vrot.slane %v6099, 2
  %v6221 = vsel %vm6169, %v6212, %v6220
  %v6222 = vrot.slane %v6028, 2
  %v6223 = vsel %vm6169, %v6214, %v6222
  %v6224 = vrot.slane %v6030, 2
  %v6225 = vsel %vm6169, %v6216, %v6224
  %v6226 = vrot.slane %v6101, 2
  %v6227 = vsel %vm6169, %v6218, %v6226
  %v6228 = vrot.slane %v6103, 2
  %v6229 = vsel %vm6169, %v6220, %v6228
  %v6262 = vadd.f32 %v6105, %v6172
  %v6263 = vadd.f32 %v6106, %v6175
  %v6264 = vadd.f32 %v6107, %v6178
  %v6265 = vadd.f32 %v6108, %v6181
  %v6266 = vadd.f32 %v6109, %v6183
  %v6267 = vadd.f32 %v6110, %v6185
  %v6268 = vadd.f32 %v6111, %v6187
  %v6269 = vadd.f32 %v6112, %v6189
  %v6270 = vadd.f32 %v6113, %v6191
  %v6271 = vadd.f32 %v6114, %v6193
  %v6272 = vadd.f32 %v6115, %v6195
  %v6273 = vadd.f32 %v6116, %v6197
  %v6274 = vadd.f32 %v6117, %v6199
  %v6275 = vadd.f32 %v6118, %v6201
  %v6276 = vadd.f32 %v6119, %v6203
  %v6277 = vadd.f32 %v6120, %v6205
  %v6278 = vadd.f32 %v6121, %v6207
  %v6279 = vadd.f32 %v6122, %v6209
  %v6280 = vadd.f32 %v6123, %v6211
  %v6281 = vadd.f32 %v6124, %v6213
  %v6282 = vadd.f32 %v6125, %v6215
  %v6283 = vadd.f32 %v6126, %v6217
  %v6284 = vadd.f32 %v6127, %v6219
  %v6285 = vadd.f32 %v6128, %v6221
  %v6286 = vadd.f32 %v6129, %v6223
  %v6287 = vadd.f32 %v6130, %v6225
  %v6288 = vadd.f32 %v6131, %v6227
  %v6289 = vadd.f32 %v6132, %v6229
  %v6290 = vadd.f32 %v6133, %v6222
  %v6291 = vadd.f32 %v6134, %v6224
  %v6292 = vadd.f32 %v6135, %v6226
  %v6293 = vadd.f32 %v6136, %v6228
  %6294 = vst [vmem:[#allocation3] sm:$0xff] %v6262
  %6295 = vst [vmem:[#allocation3 + $0x8] sm:$0xff] %v6263
  %6296 = vst [vmem:[#allocation3 + $0x10] sm:$0xff] %v6264
  %6297 = vst [vmem:[#allocation3 + $0x18] sm:$0xff] %v6265
  %6298 = vst [vmem:[#allocation3 + $0x20] sm:$0xff] %v6266
  %6299 = vst [vmem:[#allocation3 + $0x28] sm:$0xff] %v6267
  %6300 = vst [vmem:[#allocation3 + $0x30] sm:$0xff] %v6268
  %6301 = vst [vmem:[#allocation3 + $0x38] sm:$0xff] %v6269
  %6302 = vst [vmem:[#allocation3 + $0x40] sm:$0xff] %v6270
  %6303 = vst [vmem:[#allocation3 + $0x48] sm:$0xff] %v6271
  %6304 = vst [vmem:[#allocation3 + $0x50] sm:$0xff] %v6272
  %6305 = vst [vmem:[#allocation3 + $0x58] sm:$0xff] %v6273
  %6306 = vst [vmem:[#allocation3 + $0x60] sm:$0xff] %v6274
  %6307 = vst [vmem:[#allocation3 + $0x68] sm:$0xff] %v6275
  %6308 = vst [vmem:[#allocation3 + $0x70] sm:$0xff] %v6276
  %6309 = vst [vmem:[#allocation3 + $0x78] sm:$0xff] %v6277
  %6310 = vst [vmem:[#allocation3 + $0x80] sm:$0xff] %v6278
  %6311 = vst [vmem:[#allocation3 + $0x88] sm:$0xff] %v6279
  %6312 = vst [vmem:[#allocation3 + $0x90] sm:$0xff] %v6280
  %6313 = vst [vmem:[#allocation3 + $0x98] sm:$0xff] %v6281
  %6314 = vst [vmem:[#allocation3 + $0xa0] sm:$0xff] %v6282
  %6315 = vst [vmem:[#allocation3 + $0xa8] sm:$0xff] %v6283
  %6316 = vst [vmem:[#allocation3 + $0xb0] sm:$0xff] %v6284
  %6317 = vst [vmem:[#allocation3 + $0xb8] sm:$0xff] %v6285
  %6318 = vst [vmem:[#allocation3 + $0xc0] sm:$0xff] %v6286
  %6319 = vst [vmem:[#allocation3 + $0xc8] sm:$0xff] %v6287
  %6320 = vst [vmem:[#allocation3 + $0xd0] sm:$0xff] %v6288
  %6321 = vst [vmem:[#allocation3 + $0xd8] sm:$0xff] %v6289
  %6322 = vst [vmem:[#allocation3 + $0xe0] sm:$0x3f] %v6290
  %6323 = vst [vmem:[#allocation3 + $0xe8] sm:$0x3f] %v6291
  %6324 = vst [vmem:[#allocation3 + $0xf0] sm:$0x3f] %v6292
  %6325 = vst [vmem:[#allocation3 + $0xf8] sm:$0x3f] %v6293
  %v6326 = vld [vmem:[#allocation3] sm:$0xff]
  %v6327 = vld [vmem:[#allocation3 + $0x8] sm:$0xff]
  %v6328 = vld [vmem:[#allocation3 + $0x10] sm:$0xff]
  %v6329 = vld [vmem:[#allocation3 + $0x18] sm:$0xff]
  %v6330 = vld [vmem:[#allocation3 + $0x20] sm:$0xff]
  %v6331 = vld [vmem:[#allocation3 + $0x28] sm:$0xff]
  %v6332 = vld [vmem:[#allocation3 + $0x30] sm:$0xff]
  %v6333 = vld [vmem:[#allocation3 + $0x38] sm:$0xff]
  %v6334 = vld [vmem:[#allocation3 + $0x40] sm:$0xff]
  %v6335 = vld [vmem:[#allocation3 + $0x48] sm:$0xff]
  %v6336 = vld [vmem:[#allocation3 + $0x50] sm:$0xff]
  %v6337 = vld [vmem:[#allocation3 + $0x58] sm:$0xff]
  %v6338 = vld [vmem:[#allocation3 + $0x60] sm:$0xff]
  %v6339 = vld [vmem:[#allocation3 + $0x68] sm:$0xff]
  %v6340 = vld [vmem:[#allocation3 + $0x70] sm:$0xff]
  %v6341 = vld [vmem:[#allocation3 + $0x78] sm:$0xff]
  %v6342 = vld [vmem:[#allocation3 + $0x80] sm:$0xff]
  %v6343 = vld [vmem:[#allocation3 + $0x88] sm:$0xff]
  %v6344 = vld [vmem:[#allocation3 + $0x90] sm:$0xff]
  %v6345 = vld [vmem:[#allocation3 + $0x98] sm:$0xff]
  %v6346 = vld [vmem:[#allocation3 + $0xa0] sm:$0xff]
  %v6347 = vld [vmem:[#allocation3 + $0xa8] sm:$0xff]
  %v6348 = vld [vmem:[#allocation3 + $0xb0] sm:$0xff]
  %v6349 = vld [vmem:[#allocation3 + $0xb8] sm:$0xff]
  %v6350 = vld [vmem:[#allocation3 + $0xc0] sm:$0xff]
  %v6351 = vld [vmem:[#allocation3 + $0xc8] sm:$0xff]
  %v6352 = vld [vmem:[#allocation3 + $0xd0] sm:$0xff]
  %v6353 = vld [vmem:[#allocation3 + $0xd8] sm:$0xff]
  %v6354 = vld [vmem:[#allocation3 + $0xe0] sm:$0xff]
  %v6355 = vld [vmem:[#allocation3 + $0xe8] sm:$0xff]
  %v6356 = vld [vmem:[#allocation3 + $0xf0] sm:$0xff]
  %v6357 = vld [vmem:[#allocation3 + $0xf8] sm:$0xff]
  %v6358 = vmax.f32 %v6326, %v6327
  %v6359 = vmax.f32 %v6330, %v6331
  %v6360 = vmax.f32 %v6334, %v6335
  %v6361 = vmax.f32 %v6338, %v6339
  %v6362 = vmax.f32 %v6342, %v6343
  %v6363 = vmax.f32 %v6346, %v6347
  %v6364 = vmax.f32 %v6350, %v6351
  %v6365 = vmax.f32 %v6354, %v6355
  %v6366 = vmax.f32 %v6328, %v6329
  %v6367 = vmax.f32 %v6332, %v6333
  %v6368 = vmax.f32 %v6336, %v6337
  %v6369 = vmax.f32 %v6340, %v6341
  %v6370 = vmax.f32 %v6344, %v6345
  %v6371 = vmax.f32 %v6348, %v6349
  %v6372 = vmax.f32 %v6352, %v6353
  %v6373 = vmax.f32 %v6356, %v6357
  %v6374 = vmax.f32 %v6358, %v6366
  %v6375 = vmax.f32 %v6359, %v6367
  %v6376 = vmax.f32 %v6360, %v6368
  %v6377 = vmax.f32 %v6361, %v6369
  %v6378 = vmax.f32 %v6362, %v6370
  %v6379 = vmax.f32 %v6363, %v6371
  %v6380 = vmax.f32 %v6364, %v6372
  %v6381 = vmax.f32 %v6365, %v6373
  %v6382 = vld [vmem:[%s4] sm:$0x1]
  %v6384 = vlaneseq
  %v6385 = vshrl.u32 %v6384, 7
  %v6386 = vsub.s32 0, %v6385
  %v6387 = vrot.slane %v6382, %v6386
  %v6389 = vadd.f32 %v6374, %v6387
  %v6390 = vadd.f32 %v6375, %v6387
  %v6391 = vadd.f32 %v6376, %v6387
  %v6392 = vadd.f32 %v6377, %v6387
  %v6393 = vadd.f32 %v6378, %v6387
  %v6394 = vadd.f32 %v6379, %v6387
  %v6395 = vadd.f32 %v6380, %v6387
  %v6396 = vadd.f32 %v6381, %v6387
  %v6397 = vmax.f32 %v6389, 0.0
  %v6398 = vmax.f32 %v6390, 0.0
  %v6399 = vmax.f32 %v6391, 0.0
  %v6400 = vmax.f32 %v6392, 0.0
  %v6401 = vmax.f32 %v6393, 0.0
  %v6402 = vmax.f32 %v6394, 0.0
  %v6403 = vmax.f32 %v6395, 0.0
  %v6404 = vmax.f32 %v6396, 0.0
  %v6405 = vpack.c.bf16 %v6398, %v6397
  %v6406 = vpack.c.bf16 %v6400, %v6399
  %v6407 = vpack.c.bf16 %v6402, %v6401
  %v6408 = vpack.c.bf16 %v6404, %v6403
  %v6409 = vld [vmem:[%s5] sm:$0xf]
  %v6410 = vld [vmem:[%s5 + $0x4] sm:$0xf]
  %v6411 = vld [vmem:[%s5 + $0x8] sm:$0xf]
  %v6412 = vld [vmem:[%s5 + $0xc] sm:$0xf]
  %v6413 = vld [vmem:[%s5 + $0x10] sm:$0xf]
  %v6414 = vld [vmem:[%s5 + $0x14] sm:$0xf]
  %v6415 = vld [vmem:[%s5 + $0x18] sm:$0xf]
  %v6416 = vld [vmem:[%s5 + $0x1c] sm:$0xf]
  %v6417 = vld [vmem:[%s5 + $0x20] sm:$0xf]
  %v6418 = vld [vmem:[%s5 + $0x24] sm:$0xf]
  %v6419 = vld [vmem:[%s5 + $0x28] sm:$0xf]
  %v6420 = vld [vmem:[%s5 + $0x2c] sm:$0xf]
  %v6421 = vld [vmem:[%s5 + $0x30] sm:$0xf]
  %v6422 = vld [vmem:[%s5 + $0x34] sm:$0xf]
  %v6423 = vld [vmem:[%s5 + $0x38] sm:$0xf]
  %v6424 = vld [vmem:[%s5 + $0x3c] sm:$0xf]
  %v6441 = vunpack.c.l.b16 %v6409
  %v6442 = vunpack.c.l.b16 %v6410
  %v6443 = vunpack.c.l.b16 %v6411
  %v6444 = vunpack.c.l.b16 %v6412
  %v6445 = vunpack.c.l.b16 %v6413
  %v6446 = vunpack.c.l.b16 %v6414
  %v6447 = vunpack.c.l.b16 %v6415
  %v6448 = vunpack.c.l.b16 %v6416
  %v6449 = vunpack.c.l.b16 %v6417
  %v6450 = vunpack.c.l.b16 %v6418
  %v6451 = vunpack.c.l.b16 %v6419
  %v6452 = vunpack.c.l.b16 %v6420
  %v6453 = vunpack.c.l.b16 %v6421
  %v6454 = vunpack.c.l.b16 %v6422
  %v6455 = vunpack.c.l.b16 %v6423
  %v6456 = vunpack.c.l.b16 %v6424
  %v6457 = vpack.c.b16 %v6442, %v6441
  %v6458 = vpack.c.b16 %v6444, %v6443
  %v6459 = vpack.c.b16 %v6446, %v6445
  %v6460 = vpack.c.b16 %v6448, %v6447
  %v6461 = vpack.c.b16 %v6450, %v6449
  %v6462 = vpack.c.b16 %v6452, %v6451
  %v6463 = vpack.c.b16 %v6454, %v6453
  %v6464 = vpack.c.b16 %v6456, %v6455
  %6473 = vmatprep.subr.bf16.mxu0 0
  %6474 = vmatpush1.bf16.msra.mxu0 %v6457
  %6475 = vmatprep.subr.bf16.mxu0 0
  %6476 = vmatpush1.bf16.msra.mxu0 %v6458
  %6477 = vmatprep.subr.bf16.mxu0 0
  %6478 = vmatpush1.bf16.msra.mxu0 %v6459
  %6479 = vmatprep.subr.bf16.mxu0 0
  %6480 = vmatpush1.bf16.msra.mxu0 %v6460
  %6481 = vmatprep.subr.bf16.mxu0 0
  %6482 = vmatpush1.bf16.msra.mxu0 %v6461
  %6483 = vmatprep.subr.bf16.mxu0 0
  %6484 = vmatpush1.bf16.msra.mxu0 %v6462
  %6485 = vmatprep.subr.bf16.mxu0 0
  %6486 = vmatpush1.bf16.msra.mxu0 %v6463
  %6487 = vmatprep.subr.bf16.mxu0 0
  %6488 = vmatpush1.bf16.msra.mxu0 %v6464
  %6489 = vmatprep.subr.bf16.mxu0 0
  %6490 = vmatpush1.bf16.msra.mxu0 0
  %6491 = vmatprep.subr.bf16.mxu0 0
  %6492 = vmatpush1.bf16.msra.mxu0 0
  %6493 = vmatprep.subr.bf16.mxu0 0
  %6494 = vmatpush1.bf16.msra.mxu0 0
  %6495 = vmatprep.subr.bf16.mxu0 0
  %6496 = vmatpush1.bf16.msra.mxu0 0
  %6497 = vmatprep.subr.bf16.mxu0 0
  %6498 = vmatpush1.bf16.msra.mxu0 0
  %6499 = vmatprep.subr.bf16.mxu0 0
  %6500 = vmatpush1.bf16.msra.mxu0 0
  %6501 = vmatprep.subr.bf16.mxu0 0
  %6502 = vmatpush1.bf16.msra.mxu0 0
  %6503 = vmatprep.subr.bf16.mxu0 0
  %6504 = vmatpush1.bf16.msra.mxu0 0
  %6505 = vmatprep.mubr.bf16.mxu0 0
  %6506 = vmatmul.mubr.bf16.gmra.mrb[0].mxu0 %v6405
  %v6507 = vpop.f32.mrb[0].mxu0
  %v6508 = vadd.f32 0.0, %v6507
  %v6509 = vpop.f32.mrb[0].mxu0
  %v6510 = vpop.f32.mrb[0].mxu0
  %v6511 = vadd.f32 0.0, %v6510
  %v6512 = vpop.f32.mrb[0].mxu0
  %6513 = vmatprep.mubr.bf16.mxu0 0
  %6514 = vmatmul.mubr.bf16.gmra.mrb[0].mxu0 %v6406
  %v6515 = vpop.f32.mrb[0].mxu0
  %v6516 = vadd.f32 0.0, %v6515
  %v6517 = vpop.f32.mrb[0].mxu0
  %v6518 = vpop.f32.mrb[0].mxu0
  %v6519 = vadd.f32 0.0, %v6518
  %v6520 = vpop.f32.mrb[0].mxu0
  %6521 = vmatprep.mubr.bf16.mxu0 0
  %6522 = vmatmul.mubr.bf16.gmra.mrb[0].mxu0 %v6407
  %v6523 = vpop.f32.mrb[0].mxu0
  %v6524 = vadd.f32 0.0, %v6523
  %v6525 = vpop.f32.mrb[0].mxu0
  %v6526 = vpop.f32.mrb[0].mxu0
  %v6527 = vadd.f32 0.0, %v6526
  %v6528 = vpop.f32.mrb[0].mxu0
  %6529 = vmatprep.mubr.bf16.mxu0 0
  %6530 = vmatmul.mubr.bf16.gmra.mrb[0].mxu0 %v6408
  %v6531 = vpop.f32.mrb[0].mxu0
  %v6532 = vadd.f32 0.0, %v6531
  %v6533 = vpop.f32.mrb[0].mxu0
  %v6534 = vpop.f32.mrb[0].mxu0
  %v6535 = vadd.f32 0.0, %v6534
  %v6536 = vpop.f32.mrb[0].mxu0
  %6537 = vdwg.mxu0
  %6538 = vst [vmem:[#allocation4] sm:$0xff] %v6508
  %6539 = vst [vmem:[#allocation4 + $0x8] sm:$0xff] %v6511
  %6540 = vst [vmem:[#allocation4 + $0x10] sm:$0xff] %v6516
  %6541 = vst [vmem:[#allocation4 + $0x18] sm:$0xff] %v6519
  %6542 = vst [vmem:[#allocation4 + $0x20] sm:$0xff] %v6524
  %6543 = vst [vmem:[#allocation4 + $0x28] sm:$0xff] %v6527
  %6544 = vst [vmem:[#allocation4 + $0x30] sm:$0xff] %v6532
  %6545 = vst [vmem:[#allocation4 + $0x38] sm:$0xff] %v6535
  %s6546 = scalar_lea.vmem %s5, 64
  %v6547 = vld [vmem:[%s6546] sm:$0xf]
  %v6548 = vld [vmem:[%s6546 + $0x4] sm:$0xf]
  %v6549 = vld [vmem:[%s6546 + $0x8] sm:$0xf]
  %v6550 = vld [vmem:[%s6546 + $0xc] sm:$0xf]
  %v6551 = vld [vmem:[%s6546 + $0x10] sm:$0xf]
  %v6552 = vld [vmem:[%s6546 + $0x14] sm:$0xf]
  %v6553 = vld [vmem:[%s6546 + $0x18] sm:$0xf]
  %v6554 = vld [vmem:[%s6546 + $0x1c] sm:$0xf]
  %v6555 = vld [vmem:[%s6546 + $0x20] sm:$0xf]
  %v6556 = vld [vmem:[%s6546 + $0x24] sm:$0xf]
  %v6557 = vld [vmem:[%s6546 + $0x28] sm:$0xf]
  %v6558 = vld [vmem:[%s6546 + $0x2c] sm:$0xf]
  %v6559 = vld [vmem:[%s6546 + $0x30] sm:$0xf]
  %v6560 = vld [vmem:[%s6546 + $0x34] sm:$0xf]
  %v6561 = vld [vmem:[%s6546 + $0x38] sm:$0xf]
  %v6562 = vld [vmem:[%s6546 + $0x3c] sm:$0xf]
  %v6579 = vunpack.c.l.b16 %v6547
  %v6580 = vunpack.c.l.b16 %v6548
  %v6581 = vunpack.c.l.b16 %v6549
  %v6582 = vunpack.c.l.b16 %v6550
  %v6583 = vunpack.c.l.b16 %v6551
  %v6584 = vunpack.c.l.b16 %v6552
  %v6585 = vunpack.c.l.b16 %v6553
  %v6586 = vunpack.c.l.b16 %v6554
  %v6587 = vunpack.c.l.b16 %v6555
  %v6588 = vunpack.c.l.b16 %v6556
  %v6589 = vunpack.c.l.b16 %v6557
  %v6590 = vunpack.c.l.b16 %v6558
  %v6591 = vunpack.c.l.b16 %v6559
  %v6592 = vunpack.c.l.b16 %v6560
  %v6593 = vunpack.c.l.b16 %v6561
  %v6594 = vunpack.c.l.b16 %v6562
  %v6595 = vpack.c.b16 %v6580, %v6579
  %v6596 = vpack.c.b16 %v6582, %v6581
  %v6597 = vpack.c.b16 %v6584, %v6583
  %v6598 = vpack.c.b16 %v6586, %v6585
  %v6599 = vpack.c.b16 %v6588, %v6587
  %v6600 = vpack.c.b16 %v6590, %v6589
  %v6601 = vpack.c.b16 %v6592, %v6591
  %v6602 = vpack.c.b16 %v6594, %v6593
  %6611 = vmatprep.subr.bf16.mxu0 0
  %6612 = vmatpush1.bf16.msra.mxu0 %v6595
  %6613 = vmatprep.subr.bf16.mxu0 0
  %6614 = vmatpush1.bf16.msra.mxu0 %v6596
  %6615 = vmatprep.subr.bf16.mxu0 0
  %6616 = vmatpush1.bf16.msra.mxu0 %v6597
  %6617 = vmatprep.subr.bf16.mxu0 0
  %6618 = vmatpush1.bf16.msra.mxu0 %v6598
  %6619 = vmatprep.subr.bf16.mxu0 0
  %6620 = vmatpush1.bf16.msra.mxu0 %v6599
  %6621 = vmatprep.subr.bf16.mxu0 0
  %6622 = vmatpush1.bf16.msra.mxu0 %v6600
  %6623 = vmatprep.subr.bf16.mxu0 0
  %6624 = vmatpush1.bf16.msra.mxu0 %v6601
  %6625 = vmatprep.subr.bf16.mxu0 0
  %6626 = vmatpush1.bf16.msra.mxu0 %v6602
  %6627 = vmatprep.subr.bf16.mxu0 0
  %6628 = vmatpush1.bf16.msra.mxu0 0
  %6629 = vmatprep.subr.bf16.mxu0 0
  %6630 = vmatpush1.bf16.msra.mxu0 0
  %6631 = vmatprep.subr.bf16.mxu0 0
  %6632 = vmatpush1.bf16.msra.mxu0 0
  %6633 = vmatprep.subr.bf16.mxu0 0
  %6634 = vmatpush1.bf16.msra.mxu0 0
  %6635 = vmatprep.subr.bf16.mxu0 0
  %6636 = vmatpush1.bf16.msra.mxu0 0
  %6637 = vmatprep.subr.bf16.mxu0 0
  %6638 = vmatpush1.bf16.msra.mxu0 0
  %6639 = vmatprep.subr.bf16.mxu0 0
  %6640 = vmatpush1.bf16.msra.mxu0 0
  %6641 = vmatprep.subr.bf16.mxu0 0
  %6642 = vmatpush1.bf16.msra.mxu0 0
  %6643 = vmatprep.mubr.bf16.mxu0 0
  %6644 = vmatmul.mubr.bf16.gmra.mrb[0].mxu0 %v6405
  %v6645 = vpop.f32.mrb[0].mxu0
  %v6646 = vadd.f32 0.0, %v6645
  %v6647 = vpop.f32.mrb[0].mxu0
  %v6648 = vpop.f32.mrb[0].mxu0
  %v6649 = vadd.f32 0.0, %v6648
  %v6650 = vpop.f32.mrb[0].mxu0
  %6651 = vmatprep.mubr.bf16.mxu0 0
  %6652 = vmatmul.mubr.bf16.gmra.mrb[0].mxu0 %v6406
  %v6653 = vpop.f32.mrb[0].mxu0
  %v6654 = vadd.f32 0.0, %v6653
  %v6655 = vpop.f32.mrb[0].mxu0
  %v6656 = vpop.f32.mrb[0].mxu0
  %v6657 = vadd.f32 0.0, %v6656
  %v6658 = vpop.f32.mrb[0].mxu0
  %6659 = vmatprep.mubr.bf16.mxu0 0
  %6660 = vmatmul.mubr.bf16.gmra.mrb[0].mxu0 %v6407
  %v6661 = vpop.f32.mrb[0].mxu0
  %v6662 = vadd.f32 0.0, %v6661
  %v6663 = vpop.f32.mrb[0].mxu0
  %v6664 = vpop.f32.mrb[0].mxu0
  %v6665 = vadd.f32 0.0, %v6664
  %v6666 = vpop.f32.mrb[0].mxu0
  %6667 = vmatprep.mubr.bf16.mxu0 0
  %6668 = vmatmul.mubr.bf16.gmra.mrb[0].mxu0 %v6408
  %v6669 = vpop.f32.mrb[0].mxu0
  %v6670 = vadd.f32 0.0, %v6669
  %v6671 = vpop.f32.mrb[0].mxu0
  %v6672 = vpop.f32.mrb[0].mxu0
  %v6673 = vadd.f32 0.0, %v6672
  %v6674 = vpop.f32.mrb[0].mxu0
  %6675 = vdwg.mxu0
  %v6676 = vld [vmem:[#allocation4] sm:$0xff]
  %v6677 = vld [vmem:[#allocation4 + $0x8] sm:$0xff]
  %v6678 = vld [vmem:[#allocation4 + $0x10] sm:$0xff]
  %v6679 = vld [vmem:[#allocation4 + $0x18] sm:$0xff]
  %v6680 = vld [vmem:[#allocation4 + $0x20] sm:$0xff]
  %v6681 = vld [vmem:[#allocation4 + $0x28] sm:$0xff]
  %v6682 = vld [vmem:[#allocation4 + $0x30] sm:$0xff]
  %v6683 = vld [vmem:[#allocation4 + $0x38] sm:$0x7f]
  %v6692 = vrot.slane %v6646, 1
  %v6693 = vrot.slane %v6649, 1
  %v6694 = vsel %vm3784, %v6692, %v6693
  %v6695 = vrot.slane %v6654, 1
  %v6696 = vsel %vm3784, %v6693, %v6695
  %v6697 = vrot.slane %v6657, 1
  %v6698 = vsel %vm3784, %v6695, %v6697
  %v6699 = vrot.slane %v6662, 1
  %v6700 = vsel %vm3784, %v6697, %v6699
  %v6701 = vrot.slane %v6665, 1
  %v6702 = vsel %vm3784, %v6699, %v6701
  %v6703 = vrot.slane %v6670, 1
  %v6704 = vsel %vm3784, %v6701, %v6703
  %v6705 = vrot.slane %v6673, 1
  %v6706 = vsel %vm3784, %v6703, %v6705
  %v6715 = vadd.f32 %v6676, %v6694
  %v6716 = vadd.f32 %v6677, %v6696
  %v6717 = vadd.f32 %v6678, %v6698
  %v6718 = vadd.f32 %v6679, %v6700
  %v6719 = vadd.f32 %v6680, %v6702
  %v6720 = vadd.f32 %v6681, %v6704
  %v6721 = vadd.f32 %v6682, %v6706
  %v6722 = vadd.f32 %v6683, %v6705
  %6723 = vst [vmem:[#allocation4] sm:$0xff] %v6715
  %6724 = vst [vmem:[#allocation4 + $0x8] sm:$0xff] %v6716
  %6725 = vst [vmem:[#allocation4 + $0x10] sm:$0xff] %v6717
  %6726 = vst [vmem:[#allocation4 + $0x18] sm:$0xff] %v6718
  %6727 = vst [vmem:[#allocation4 + $0x20] sm:$0xff] %v6719
  %6728 = vst [vmem:[#allocation4 + $0x28] sm:$0xff] %v6720
  %6729 = vst [vmem:[#allocation4 + $0x30] sm:$0xff] %v6721
  %6730 = vst [vmem:[#allocation4 + $0x38] sm:$0x7f] %v6722
  %s6731 = scalar_lea.vmem %s5, 128
  %v6732 = vld [vmem:[%s6731] sm:$0xf]
  %v6733 = vld [vmem:[%s6731 + $0x4] sm:$0xf]
  %v6734 = vld [vmem:[%s6731 + $0x8] sm:$0xf]
  %v6735 = vld [vmem:[%s6731 + $0xc] sm:$0xf]
  %v6736 = vld [vmem:[%s6731 + $0x10] sm:$0xf]
  %v6737 = vld [vmem:[%s6731 + $0x14] sm:$0xf]
  %v6738 = vld [vmem:[%s6731 + $0x18] sm:$0xf]
  %v6739 = vld [vmem:[%s6731 + $0x1c] sm:$0xf]
  %v6740 = vld [vmem:[%s6731 + $0x20] sm:$0xf]
  %v6741 = vld [vmem:[%s6731 + $0x24] sm:$0xf]
  %v6742 = vld [vmem:[%s6731 + $0x28] sm:$0xf]
  %v6743 = vld [vmem:[%s6731 + $0x2c] sm:$0xf]
  %v6744 = vld [vmem:[%s6731 + $0x30] sm:$0xf]
  %v6745 = vld [vmem:[%s6731 + $0x34] sm:$0xf]
  %v6746 = vld [vmem:[%s6731 + $0x38] sm:$0xf]
  %v6747 = vld [vmem:[%s6731 + $0x3c] sm:$0xf]
  %v6764 = vunpack.c.l.b16 %v6732
  %v6765 = vunpack.c.l.b16 %v6733
  %v6766 = vunpack.c.l.b16 %v6734
  %v6767 = vunpack.c.l.b16 %v6735
  %v6768 = vunpack.c.l.b16 %v6736
  %v6769 = vunpack.c.l.b16 %v6737
  %v6770 = vunpack.c.l.b16 %v6738
  %v6771 = vunpack.c.l.b16 %v6739
  %v6772 = vunpack.c.l.b16 %v6740
  %v6773 = vunpack.c.l.b16 %v6741
  %v6774 = vunpack.c.l.b16 %v6742
  %v6775 = vunpack.c.l.b16 %v6743
  %v6776 = vunpack.c.l.b16 %v6744
  %v6777 = vunpack.c.l.b16 %v6745
  %v6778 = vunpack.c.l.b16 %v6746
  %v6779 = vunpack.c.l.b16 %v6747
  %v6780 = vpack.c.b16 %v6765, %v6764
  %v6781 = vpack.c.b16 %v6767, %v6766
  %v6782 = vpack.c.b16 %v6769, %v6768
  %v6783 = vpack.c.b16 %v6771, %v6770
  %v6784 = vpack.c.b16 %v6773, %v6772
  %v6785 = vpack.c.b16 %v6775, %v6774
  %v6786 = vpack.c.b16 %v6777, %v6776
  %v6787 = vpack.c.b16 %v6779, %v6778
  %6796 = vmatprep.subr.bf16.mxu0 0
  %6797 = vmatpush1.bf16.msra.mxu0 %v6780
  %6798 = vmatprep.subr.bf16.mxu0 0
  %6799 = vmatpush1.bf16.msra.mxu0 %v6781
  %6800 = vmatprep.subr.bf16.mxu0 0
  %6801 = vmatpush1.bf16.msra.mxu0 %v6782
  %6802 = vmatprep.subr.bf16.mxu0 0
  %6803 = vmatpush1.bf16.msra.mxu0 %v6783
  %6804 = vmatprep.subr.bf16.mxu0 0
  %6805 = vmatpush1.bf16.msra.mxu0 %v6784
  %6806 = vmatprep.subr.bf16.mxu0 0
  %6807 = vmatpush1.bf16.msra.mxu0 %v6785
  %6808 = vmatprep.subr.bf16.mxu0 0
  %6809 = vmatpush1.bf16.msra.mxu0 %v6786
  %6810 = vmatprep.subr.bf16.mxu0 0
  %6811 = vmatpush1.bf16.msra.mxu0 %v6787
  %6812 = vmatprep.subr.bf16.mxu0 0
  %6813 = vmatpush1.bf16.msra.mxu0 0
  %6814 = vmatprep.subr.bf16.mxu0 0
  %6815 = vmatpush1.bf16.msra.mxu0 0
  %6816 = vmatprep.subr.bf16.mxu0 0
  %6817 = vmatpush1.bf16.msra.mxu0 0
  %6818 = vmatprep.subr.bf16.mxu0 0
  %6819 = vmatpush1.bf16.msra.mxu0 0
  %6820 = vmatprep.subr.bf16.mxu0 0
  %6821 = vmatpush1.bf16.msra.mxu0 0
  %6822 = vmatprep.subr.bf16.mxu0 0
  %6823 = vmatpush1.bf16.msra.mxu0 0
  %6824 = vmatprep.subr.bf16.mxu0 0
  %6825 = vmatpush1.bf16.msra.mxu0 0
  %6826 = vmatprep.subr.bf16.mxu0 0
  %6827 = vmatpush1.bf16.msra.mxu0 0
  %6828 = vmatprep.mubr.bf16.mxu0 0
  %6829 = vmatmul.mubr.bf16.gmra.mrb[0].mxu0 %v6405
  %v6830 = vpop.f32.mrb[0].mxu0
  %v6831 = vadd.f32 0.0, %v6830
  %v6832 = vpop.f32.mrb[0].mxu0
  %v6833 = vpop.f32.mrb[0].mxu0
  %v6834 = vadd.f32 0.0, %v6833
  %v6835 = vpop.f32.mrb[0].mxu0
  %6836 = vmatprep.mubr.bf16.mxu0 0
  %6837 = vmatmul.mubr.bf16.gmra.mrb[0].mxu0 %v6406
  %v6838 = vpop.f32.mrb[0].mxu0
  %v6839 = vadd.f32 0.0, %v6838
  %v6840 = vpop.f32.mrb[0].mxu0
  %v6841 = vpop.f32.mrb[0].mxu0
  %v6842 = vadd.f32 0.0, %v6841
  %v6843 = vpop.f32.mrb[0].mxu0
  %6844 = vmatprep.mubr.bf16.mxu0 0
  %6845 = vmatmul.mubr.bf16.gmra.mrb[0].mxu0 %v6407
  %v6846 = vpop.f32.mrb[0].mxu0
  %v6847 = vadd.f32 0.0, %v6846
  %v6848 = vpop.f32.mrb[0].mxu0
  %v6849 = vpop.f32.mrb[0].mxu0
  %v6850 = vadd.f32 0.0, %v6849
  %v6851 = vpop.f32.mrb[0].mxu0
  %6852 = vmatprep.mubr.bf16.mxu0 0
  %6853 = vmatmul.mubr.bf16.gmra.mrb[0].mxu0 %v6408
  %v6854 = vpop.f32.mrb[0].mxu0
  %v6855 = vadd.f32 0.0, %v6854
  %v6856 = vpop.f32.mrb[0].mxu0
  %v6857 = vpop.f32.mrb[0].mxu0
  %v6858 = vadd.f32 0.0, %v6857
  %v6859 = vpop.f32.mrb[0].mxu0
  %6860 = vdwg.mxu0
  %v6861 = vld [vmem:[#allocation4] sm:$0xff]
  %v6862 = vld [vmem:[#allocation4 + $0x8] sm:$0xff]
  %v6863 = vld [vmem:[#allocation4 + $0x10] sm:$0xff]
  %v6864 = vld [vmem:[#allocation4 + $0x18] sm:$0xff]
  %v6865 = vld [vmem:[#allocation4 + $0x20] sm:$0xff]
  %v6866 = vld [vmem:[#allocation4 + $0x28] sm:$0xff]
  %v6867 = vld [vmem:[#allocation4 + $0x30] sm:$0xff]
  %v6868 = vld [vmem:[#allocation4 + $0x38] sm:$0x3f]
  %v6877 = vrot.slane %v6831, 2
  %v6878 = vrot.slane %v6834, 2
  %v6879 = vsel %vm6169, %v6877, %v6878
  %v6880 = vrot.slane %v6839, 2
  %v6881 = vsel %vm6169, %v6878, %v6880
  %v6882 = vrot.slane %v6842, 2
  %v6883 = vsel %vm6169, %v6880, %v6882
  %v6884 = vrot.slane %v6847, 2
  %v6885 = vsel %vm6169, %v6882, %v6884
  %v6886 = vrot.slane %v6850, 2
  %v6887 = vsel %vm6169, %v6884, %v6886
  %v6888 = vrot.slane %v6855, 2
  %v6889 = vsel %vm6169, %v6886, %v6888
  %v6890 = vrot.slane %v6858, 2
  %v6891 = vsel %vm6169, %v6888, %v6890
  %v6900 = vadd.f32 %v6861, %v6879
  %v6901 = vadd.f32 %v6862, %v6881
  %v6902 = vadd.f32 %v6863, %v6883
  %v6903 = vadd.f32 %v6864, %v6885
  %v6904 = vadd.f32 %v6865, %v6887
  %v6905 = vadd.f32 %v6866, %v6889
  %v6906 = vadd.f32 %v6867, %v6891
  %v6907 = vadd.f32 %v6868, %v6890
  %6908 = vst [vmem:[#allocation4] sm:$0xff] %v6900
  %6909 = vst [vmem:[#allocation4 + $0x8] sm:$0xff] %v6901
  %6910 = vst [vmem:[#allocation4 + $0x10] sm:$0xff] %v6902
  %6911 = vst [vmem:[#allocation4 + $0x18] sm:$0xff] %v6903
  %6912 = vst [vmem:[#allocation4 + $0x20] sm:$0xff] %v6904
  %6913 = vst [vmem:[#allocation4 + $0x28] sm:$0xff] %v6905
  %6914 = vst [vmem:[#allocation4 + $0x30] sm:$0xff] %v6906
  %6915 = vst [vmem:[#allocation4 + $0x38] sm:$0x3f] %v6907
  %s6916 = scalar_lea.vmem %s5, 192
  %v6917 = vld [vmem:[%s6916] sm:$0xf]
  %v6918 = vld [vmem:[%s6916 + $0x4] sm:$0xf]
  %v6919 = vld [vmem:[%s6916 + $0x8] sm:$0xf]
  %v6920 = vld [vmem:[%s6916 + $0xc] sm:$0xf]
  %v6921 = vld [vmem:[%s6916 + $0x10] sm:$0xf]
  %v6922 = vld [vmem:[%s6916 + $0x14] sm:$0xf]
  %v6923 = vld [vmem:[%s6916 + $0x18] sm:$0xf]
  %v6924 = vld [vmem:[%s6916 + $0x1c] sm:$0xf]
  %v6925 = vld [vmem:[%s6916 + $0x20] sm:$0xf]
  %v6926 = vld [vmem:[%s6916 + $0x24] sm:$0xf]
  %v6927 = vld [vmem:[%s6916 + $0x28] sm:$0xf]
  %v6928 = vld [vmem:[%s6916 + $0x2c] sm:$0xf]
  %v6929 = vld [vmem:[%s6916 + $0x30] sm:$0xf]
  %v6930 = vld [vmem:[%s6916 + $0x34] sm:$0xf]
  %v6931 = vld [vmem:[%s6916 + $0x38] sm:$0xf]
  %v6932 = vld [vmem:[%s6916 + $0x3c] sm:$0xf]
  %v6949 = vunpack.c.l.b16 %v6917
  %v6950 = vunpack.c.l.b16 %v6918
  %v6951 = vunpack.c.l.b16 %v6919
  %v6952 = vunpack.c.l.b16 %v6920
  %v6953 = vunpack.c.l.b16 %v6921
  %v6954 = vunpack.c.l.b16 %v6922
  %v6955 = vunpack.c.l.b16 %v6923
  %v6956 = vunpack.c.l.b16 %v6924
  %v6957 = vunpack.c.l.b16 %v6925
  %v6958 = vunpack.c.l.b16 %v6926
  %v6959 = vunpack.c.l.b16 %v6927
  %v6960 = vunpack.c.l.b16 %v6928
  %v6961 = vunpack.c.l.b16 %v6929
  %v6962 = vunpack.c.l.b16 %v6930
  %v6963 = vunpack.c.l.b16 %v6931
  %v6964 = vunpack.c.l.b16 %v6932
  %v6965 = vpack.c.b16 %v6950, %v6949
  %v6966 = vpack.c.b16 %v6952, %v6951
  %v6967 = vpack.c.b16 %v6954, %v6953
  %v6968 = vpack.c.b16 %v6956, %v6955
  %v6969 = vpack.c.b16 %v6958, %v6957
  %v6970 = vpack.c.b16 %v6960, %v6959
  %v6971 = vpack.c.b16 %v6962, %v6961
  %v6972 = vpack.c.b16 %v6964, %v6963
  %6981 = vmatprep.subr.bf16.mxu0 0
  %6982 = vmatpush1.bf16.msra.mxu0 %v6965
  %6983 = vmatprep.subr.bf16.mxu0 0
  %6984 = vmatpush1.bf16.msra.mxu0 %v6966
  %6985 = vmatprep.subr.bf16.mxu0 0
  %6986 = vmatpush1.bf16.msra.mxu0 %v6967
  %6987 = vmatprep.subr.bf16.mxu0 0
  %6988 = vmatpush1.bf16.msra.mxu0 %v6968
  %6989 = vmatprep.subr.bf16.mxu0 0
  %6990 = vmatpush1.bf16.msra.mxu0 %v6969
  %6991 = vmatprep.subr.bf16.mxu0 0
  %6992 = vmatpush1.bf16.msra.mxu0 %v6970
  %6993 = vmatprep.subr.bf16.mxu0 0
  %6994 = vmatpush1.bf16.msra.mxu0 %v6971
  %6995 = vmatprep.subr.bf16.mxu0 0
  %6996 = vmatpush1.bf16.msra.mxu0 %v6972
  %6997 = vmatprep.subr.bf16.mxu0 0
  %6998 = vmatpush1.bf16.msra.mxu0 0
  %6999 = vmatprep.subr.bf16.mxu0 0
  %7000 = vmatpush1.bf16.msra.mxu0 0
  %7001 = vmatprep.subr.bf16.mxu0 0
  %7002 = vmatpush1.bf16.msra.mxu0 0
  %7003 = vmatprep.subr.bf16.mxu0 0
  %7004 = vmatpush1.bf16.msra.mxu0 0
  %7005 = vmatprep.subr.bf16.mxu0 0
  %7006 = vmatpush1.bf16.msra.mxu0 0
  %7007 = vmatprep.subr.bf16.mxu0 0
  %7008 = vmatpush1.bf16.msra.mxu0 0
  %7009 = vmatprep.subr.bf16.mxu0 0
  %7010 = vmatpush1.bf16.msra.mxu0 0
  %7011 = vmatprep.subr.bf16.mxu0 0
  %7012 = vmatpush1.bf16.msra.mxu0 0
  %7013 = vmatprep.mubr.bf16.mxu0 0
  %7014 = vmatmul.mubr.bf16.gmra.mrb[0].mxu0 %v6405
  %v7015 = vpop.f32.mrb[0].mxu0
  %v7016 = vadd.f32 0.0, %v7015
  %v7017 = vpop.f32.mrb[0].mxu0
  %v7018 = vpop.f32.mrb[0].mxu0
  %v7019 = vadd.f32 0.0, %v7018
  %v7020 = vpop.f32.mrb[0].mxu0
  %7021 = vmatprep.mubr.bf16.mxu0 0
  %7022 = vmatmul.mubr.bf16.gmra.mrb[0].mxu0 %v6406
  %v7023 = vpop.f32.mrb[0].mxu0
  %v7024 = vadd.f32 0.0, %v7023
  %v7025 = vpop.f32.mrb[0].mxu0
  %v7026 = vpop.f32.mrb[0].mxu0
  %v7027 = vadd.f32 0.0, %v7026
  %v7028 = vpop.f32.mrb[0].mxu0
  %7029 = vmatprep.mubr.bf16.mxu0 0
  %7030 = vmatmul.mubr.bf16.gmra.mrb[0].mxu0 %v6407
  %v7031 = vpop.f32.mrb[0].mxu0
  %v7032 = vadd.f32 0.0, %v7031
  %v7033 = vpop.f32.mrb[0].mxu0
  %v7034 = vpop.f32.mrb[0].mxu0
  %v7035 = vadd.f32 0.0, %v7034
  %v7036 = vpop.f32.mrb[0].mxu0
  %7037 = vmatprep.mubr.bf16.mxu0 0
  %7038 = vmatmul.mubr.bf16.gmra.mrb[0].mxu0 %v6408
  %v7039 = vpop.f32.mrb[0].mxu0
  %v7040 = vadd.f32 0.0, %v7039
  %v7041 = vpop.f32.mrb[0].mxu0
  %v7042 = vpop.f32.mrb[0].mxu0
  %v7043 = vadd.f32 0.0, %v7042
  %v7044 = vpop.f32.mrb[0].mxu0
  %7045 = vdwg.mxu0
  %v7046 = vld [vmem:[#allocation4] sm:$0xff]
  %v7047 = vld [vmem:[#allocation4 + $0x8] sm:$0xff]
  %v7048 = vld [vmem:[#allocation4 + $0x10] sm:$0xff]
  %v7049 = vld [vmem:[#allocation4 + $0x18] sm:$0xff]
  %v7050 = vld [vmem:[#allocation4 + $0x20] sm:$0xff]
  %v7051 = vld [vmem:[#allocation4 + $0x28] sm:$0xff]
  %v7052 = vld [vmem:[#allocation4 + $0x30] sm:$0xff]
  %v7053 = vld [vmem:[#allocation4 + $0x38] sm:$0x1f]
  %vm7062 = vcmask 1044480
  %v7063 = vrot.slane %v7016, 3
  %v7064 = vrot.slane %v7019, 3
  %v7065 = vsel %vm7062, %v7063, %v7064
  %v7066 = vrot.slane %v7024, 3
  %v7067 = vsel %vm7062, %v7064, %v7066
  %v7068 = vrot.slane %v7027, 3
  %v7069 = vsel %vm7062, %v7066, %v7068
  %v7070 = vrot.slane %v7032, 3
  %v7071 = vsel %vm7062, %v7068, %v7070
  %v7072 = vrot.slane %v7035, 3
  %v7073 = vsel %vm7062, %v7070, %v7072
  %v7074 = vrot.slane %v7040, 3
  %v7075 = vsel %vm7062, %v7072, %v7074
  %v7076 = vrot.slane %v7043, 3
  %v7077 = vsel %vm7062, %v7074, %v7076
  %v7086 = vadd.f32 %v7046, %v7065
  %v7087 = vadd.f32 %v7047, %v7067
  %v7088 = vadd.f32 %v7048, %v7069
  %v7089 = vadd.f32 %v7049, %v7071
  %v7090 = vadd.f32 %v7050, %v7073
  %v7091 = vadd.f32 %v7051, %v7075
  %v7092 = vadd.f32 %v7052, %v7077
  %v7093 = vadd.f32 %v7053, %v7076
  %7094 = vst [vmem:[#allocation4] sm:$0xff] %v7086
  %7095 = vst [vmem:[#allocation4 + $0x8] sm:$0xff] %v7087
  %7096 = vst [vmem:[#allocation4 + $0x10] sm:$0xff] %v7088
  %7097 = vst [vmem:[#allocation4 + $0x18] sm:$0xff] %v7089
  %7098 = vst [vmem:[#allocation4 + $0x20] sm:$0xff] %v7090
  %7099 = vst [vmem:[#allocation4 + $0x28] sm:$0xff] %v7091
  %7100 = vst [vmem:[#allocation4 + $0x30] sm:$0xff] %v7092
  %7101 = vst [vmem:[#allocation4 + $0x38] sm:$0x1f] %v7093
  %s7102 = scalar_lea.vmem %s5, 256
  %v7103 = vld [vmem:[%s7102] sm:$0xf]
  %v7104 = vld [vmem:[%s7102 + $0x4] sm:$0xf]
  %v7105 = vld [vmem:[%s7102 + $0x8] sm:$0xf]
  %v7106 = vld [vmem:[%s7102 + $0xc] sm:$0xf]
  %v7107 = vld [vmem:[%s7102 + $0x10] sm:$0xf]
  %v7108 = vld [vmem:[%s7102 + $0x14] sm:$0xf]
  %v7109 = vld [vmem:[%s7102 + $0x18] sm:$0xf]
  %v7110 = vld [vmem:[%s7102 + $0x1c] sm:$0xf]
  %v7111 = vld [vmem:[%s7102 + $0x20] sm:$0xf]
  %v7112 = vld [vmem:[%s7102 + $0x24] sm:$0xf]
  %v7113 = vld [vmem:[%s7102 + $0x28] sm:$0xf]
  %v7114 = vld [vmem:[%s7102 + $0x2c] sm:$0xf]
  %v7115 = vld [vmem:[%s7102 + $0x30] sm:$0xf]
  %v7116 = vld [vmem:[%s7102 + $0x34] sm:$0xf]
  %v7117 = vld [vmem:[%s7102 + $0x38] sm:$0xf]
  %v7118 = vld [vmem:[%s7102 + $0x3c] sm:$0xf]
  %v7135 = vunpack.c.l.b16 %v7103
  %v7136 = vunpack.c.l.b16 %v7104
  %v7137 = vunpack.c.l.b16 %v7105
  %v7138 = vunpack.c.l.b16 %v7106
  %v7139 = vunpack.c.l.b16 %v7107
  %v7140 = vunpack.c.l.b16 %v7108
  %v7141 = vunpack.c.l.b16 %v7109
  %v7142 = vunpack.c.l.b16 %v7110
  %v7143 = vunpack.c.l.b16 %v7111
  %v7144 = vunpack.c.l.b16 %v7112
  %v7145 = vunpack.c.l.b16 %v7113
  %v7146 = vunpack.c.l.b16 %v7114
  %v7147 = vunpack.c.l.b16 %v7115
  %v7148 = vunpack.c.l.b16 %v7116
  %v7149 = vunpack.c.l.b16 %v7117
  %v7150 = vunpack.c.l.b16 %v7118
  %v7151 = vpack.c.b16 %v7136, %v7135
  %v7152 = vpack.c.b16 %v7138, %v7137
  %v7153 = vpack.c.b16 %v7140, %v7139
  %v7154 = vpack.c.b16 %v7142, %v7141
  %v7155 = vpack.c.b16 %v7144, %v7143
  %v7156 = vpack.c.b16 %v7146, %v7145
  %v7157 = vpack.c.b16 %v7148, %v7147
  %v7158 = vpack.c.b16 %v7150, %v7149
  %7167 = vmatprep.subr.bf16.mxu0 0
  %7168 = vmatpush1.bf16.msra.mxu0 %v7151
  %7169 = vmatprep.subr.bf16.mxu0 0
  %7170 = vmatpush1.bf16.msra.mxu0 %v7152
  %7171 = vmatprep.subr.bf16.mxu0 0
  %7172 = vmatpush1.bf16.msra.mxu0 %v7153
  %7173 = vmatprep.subr.bf16.mxu0 0
  %7174 = vmatpush1.bf16.msra.mxu0 %v7154
  %7175 = vmatprep.subr.bf16.mxu0 0
  %7176 = vmatpush1.bf16.msra.mxu0 %v7155
  %7177 = vmatprep.subr.bf16.mxu0 0
  %7178 = vmatpush1.bf16.msra.mxu0 %v7156
  %7179 = vmatprep.subr.bf16.mxu0 0
  %7180 = vmatpush1.bf16.msra.mxu0 %v7157
  %7181 = vmatprep.subr.bf16.mxu0 0
  %7182 = vmatpush1.bf16.msra.mxu0 %v7158
  %7183 = vmatprep.subr.bf16.mxu0 0
  %7184 = vmatpush1.bf16.msra.mxu0 0
  %7185 = vmatprep.subr.bf16.mxu0 0
  %7186 = vmatpush1.bf16.msra.mxu0 0
  %7187 = vmatprep.subr.bf16.mxu0 0
  %7188 = vmatpush1.bf16.msra.mxu0 0
  %7189 = vmatprep.subr.bf16.mxu0 0
  %7190 = vmatpush1.bf16.msra.mxu0 0
  %7191 = vmatprep.subr.bf16.mxu0 0
  %7192 = vmatpush1.bf16.msra.mxu0 0
  %7193 = vmatprep.subr.bf16.mxu0 0
  %7194 = vmatpush1.bf16.msra.mxu0 0
  %7195 = vmatprep.subr.bf16.mxu0 0
  %7196 = vmatpush1.bf16.msra.mxu0 0
  %7197 = vmatprep.subr.bf16.mxu0 0
  %7198 = vmatpush1.bf16.msra.mxu0 0
  %7199 = vmatprep.mubr.bf16.mxu0 0
  %7200 = vmatmul.mubr.bf16.gmra.mrb[0].mxu0 %v6405
  %v7201 = vpop.f32.mrb[0].mxu0
  %v7202 = vadd.f32 0.0, %v7201
  %v7203 = vpop.f32.mrb[0].mxu0
  %v7204 = vpop.f32.mrb[0].mxu0
  %v7205 = vadd.f32 0.0, %v7204
  %v7206 = vpop.f32.mrb[0].mxu0
  %7207 = vmatprep.mubr.bf16.mxu0 0
  %7208 = vmatmul.mubr.bf16.gmra.mrb[0].mxu0 %v6406
  %v7209 = vpop.f32.mrb[0].mxu0
  %v7210 = vadd.f32 0.0, %v7209
  %v7211 = vpop.f32.mrb[0].mxu0
  %v7212 = vpop.f32.mrb[0].mxu0
  %v7213 = vadd.f32 0.0, %v7212
  %v7214 = vpop.f32.mrb[0].mxu0
  %7215 = vmatprep.mubr.bf16.mxu0 0
  %7216 = vmatmul.mubr.bf16.gmra.mrb[0].mxu0 %v6407
  %v7217 = vpop.f32.mrb[0].mxu0
  %v7218 = vadd.f32 0.0, %v7217
  %v7219 = vpop.f32.mrb[0].mxu0
  %v7220 = vpop.f32.mrb[0].mxu0
  %v7221 = vadd.f32 0.0, %v7220
  %v7222 = vpop.f32.mrb[0].mxu0
  %7223 = vmatprep.mubr.bf16.mxu0 0
  %7224 = vmatmul.mubr.bf16.gmra.mrb[0].mxu0 %v6408
  %v7225 = vpop.f32.mrb[0].mxu0
  %v7226 = vadd.f32 0.0, %v7225
  %v7227 = vpop.f32.mrb[0].mxu0
  %v7228 = vpop.f32.mrb[0].mxu0
  %v7229 = vadd.f32 0.0, %v7228
  %v7230 = vpop.f32.mrb[0].mxu0
  %7231 = vdwg.mxu0
  %v7232 = vld [vmem:[#allocation4] sm:$0xff]
  %v7233 = vld [vmem:[#allocation4 + $0x8] sm:$0xff]
  %v7234 = vld [vmem:[#allocation4 + $0x10] sm:$0xff]
  %v7235 = vld [vmem:[#allocation4 + $0x18] sm:$0xff]
  %v7236 = vld [vmem:[#allocation4 + $0x20] sm:$0xff]
  %v7237 = vld [vmem:[#allocation4 + $0x28] sm:$0xff]
  %v7238 = vld [vmem:[#allocation4 + $0x30] sm:$0xff]
  %v7239 = vld [vmem:[#allocation4 + $0x38] sm:$0xf]
  %vm7248 = vcmask 1043456
  %v7249 = vrot.slane %v7202, 4
  %v7250 = vrot.slane %v7205, 4
  %v7251 = vsel %vm7248, %v7249, %v7250
  %v7252 = vrot.slane %v7210, 4
  %v7253 = vsel %vm7248, %v7250, %v7252
  %v7254 = vrot.slane %v7213, 4
  %v7255 = vsel %vm7248, %v7252, %v7254
  %v7256 = vrot.slane %v7218, 4
  %v7257 = vsel %vm7248, %v7254, %v7256
  %v7258 = vrot.slane %v7221, 4
  %v7259 = vsel %vm7248, %v7256, %v7258
  %v7260 = vrot.slane %v7226, 4
  %v7261 = vsel %vm7248, %v7258, %v7260
  %v7262 = vrot.slane %v7229, 4
  %v7263 = vsel %vm7248, %v7260, %v7262
  %v7272 = vadd.f32 %v7232, %v7251
  %v7273 = vadd.f32 %v7233, %v7253
  %v7274 = vadd.f32 %v7234, %v7255
  %v7275 = vadd.f32 %v7235, %v7257
  %v7276 = vadd.f32 %v7236, %v7259
  %v7277 = vadd.f32 %v7237, %v7261
  %v7278 = vadd.f32 %v7238, %v7263
  %v7279 = vadd.f32 %v7239, %v7262
  %7280 = vst [vmem:[#allocation4] sm:$0xff] %v7272
  %7281 = vst [vmem:[#allocation4 + $0x8] sm:$0xff] %v7273
  %7282 = vst [vmem:[#allocation4 + $0x10] sm:$0xff] %v7274
  %7283 = vst [vmem:[#allocation4 + $0x18] sm:$0xff] %v7275
  %7284 = vst [vmem:[#allocation4 + $0x20] sm:$0xff] %v7276
  %7285 = vst [vmem:[#allocation4 + $0x28] sm:$0xff] %v7277
  %7286 = vst [vmem:[#allocation4 + $0x30] sm:$0xff] %v7278
  %7287 = vst [vmem:[#allocation4 + $0x38] sm:$0xf] %v7279
  %v7288 = vld [vmem:[#allocation4] sm:$0xff]
  %v7289 = vld [vmem:[#allocation4 + $0x8] sm:$0xff]
  %v7290 = vld [vmem:[#allocation4 + $0x10] sm:$0xff]
  %v7291 = vld [vmem:[#allocation4 + $0x18] sm:$0xff]
  %v7292 = vld [vmem:[#allocation4 + $0x20] sm:$0xff]
  %v7293 = vld [vmem:[#allocation4 + $0x28] sm:$0xff]
  %v7294 = vld [vmem:[#allocation4 + $0x30] sm:$0xff]
  %v7295 = vld [vmem:[#allocation4 + $0x38] sm:$0xff]
  %v7296 = vld [vmem:[%s6] sm:$0x1]
  %v7298 = vlaneseq
  %v7299 = vshrl.u32 %v7298, 7
  %v7300 = vsub.s32 0, %v7299
  %v7301 = vrot.slane %v7296, %v7300
  %v7303 = vadd.f32 %v7288, %v7301
  %v7304 = vadd.f32 %v7289, %v7301
  %v7305 = vadd.f32 %v7290, %v7301
  %v7306 = vadd.f32 %v7291, %v7301
  %v7307 = vadd.f32 %v7292, %v7301
  %v7308 = vadd.f32 %v7293, %v7301
  %v7309 = vadd.f32 %v7294, %v7301
  %v7310 = vadd.f32 %v7295, %v7301
  %v7311 = vmax.f32 %v7303, 0.0
  %v7312 = vmax.f32 %v7304, 0.0
  %v7313 = vmax.f32 %v7305, 0.0
  %v7314 = vmax.f32 %v7306, 0.0
  %v7315 = vmax.f32 %v7307, 0.0
  %v7316 = vmax.f32 %v7308, 0.0
  %v7317 = vmax.f32 %v7309, 0.0
  %v7318 = vmax.f32 %v7310, 0.0
  %v7319 = vpack.c.bf16 %v7312, %v7311
  %v7320 = vpack.c.bf16 %v7314, %v7313
  %v7321 = vpack.c.bf16 %v7316, %v7315
  %v7322 = vpack.c.bf16 %v7318, %v7317
  %v7323 = vld [vmem:[%s7] sm:$0xf]
  %v7324 = vld [vmem:[%s7 + $0x4] sm:$0xf]
  %v7325 = vld [vmem:[%s7 + $0x8] sm:$0xf]
  %v7326 = vld [vmem:[%s7 + $0xc] sm:$0xf]
  %v7327 = vld [vmem:[%s7 + $0x10] sm:$0xf]
  %v7328 = vld [vmem:[%s7 + $0x14] sm:$0xf]
  %v7329 = vld [vmem:[%s7 + $0x18] sm:$0xf]
  %v7330 = vld [vmem:[%s7 + $0x1c] sm:$0xf]
  %v7331 = vld [vmem:[%s7 + $0x20] sm:$0xf]
  %v7332 = vld [vmem:[%s7 + $0x24] sm:$0xf]
  %v7333 = vld [vmem:[%s7 + $0x28] sm:$0xf]
  %v7334 = vld [vmem:[%s7 + $0x2c] sm:$0xf]
  %v7335 = vld [vmem:[%s7 + $0x30] sm:$0xf]
  %v7336 = vld [vmem:[%s7 + $0x34] sm:$0xf]
  %v7337 = vld [vmem:[%s7 + $0x38] sm:$0xf]
  %v7338 = vld [vmem:[%s7 + $0x3c] sm:$0xf]
  %v7339 = vld [vmem:[%s8] sm:$0x1]
  %v7341 = vlaneseq
  %v7342 = vshrl.u32 %v7341, 7
  %v7343 = vsub.s32 0, %v7342
  %v7344 = vrot.slane %v7339, %v7343
  %v7362 = vunpack.c.l.b16 %v7323
  %v7363 = vunpack.c.l.b16 %v7324
  %v7364 = vunpack.c.l.b16 %v7325
  %v7365 = vunpack.c.l.b16 %v7326
  %v7366 = vunpack.c.l.b16 %v7327
  %v7367 = vunpack.c.l.b16 %v7328
  %v7368 = vunpack.c.l.b16 %v7329
  %v7369 = vunpack.c.l.b16 %v7330
  %v7370 = vunpack.c.l.b16 %v7331
  %v7371 = vunpack.c.l.b16 %v7332
  %v7372 = vunpack.c.l.b16 %v7333
  %v7373 = vunpack.c.l.b16 %v7334
  %v7374 = vunpack.c.l.b16 %v7335
  %v7375 = vunpack.c.l.b16 %v7336
  %v7376 = vunpack.c.l.b16 %v7337
  %v7377 = vunpack.c.l.b16 %v7338
  %v7378 = vpack.c.b16 %v7363, %v7362
  %v7379 = vpack.c.b16 %v7365, %v7364
  %v7380 = vpack.c.b16 %v7367, %v7366
  %v7381 = vpack.c.b16 %v7369, %v7368
  %v7382 = vpack.c.b16 %v7371, %v7370
  %v7383 = vpack.c.b16 %v7373, %v7372
  %v7384 = vpack.c.b16 %v7375, %v7374
  %v7385 = vpack.c.b16 %v7377, %v7376
  %7394 = vmatprep.subr.bf16.mxu0 0
  %7395 = vmatpush1.bf16.msra.mxu0 %v7378
  %7396 = vmatprep.subr.bf16.mxu0 0
  %7397 = vmatpush1.bf16.msra.mxu0 %v7379
  %7398 = vmatprep.subr.bf16.mxu0 0
  %7399 = vmatpush1.bf16.msra.mxu0 %v7380
  %7400 = vmatprep.subr.bf16.mxu0 0
  %7401 = vmatpush1.bf16.msra.mxu0 %v7381
  %7402 = vmatprep.subr.bf16.mxu0 0
  %7403 = vmatpush1.bf16.msra.mxu0 %v7382
  %7404 = vmatprep.subr.bf16.mxu0 0
  %7405 = vmatpush1.bf16.msra.mxu0 %v7383
  %7406 = vmatprep.subr.bf16.mxu0 0
  %7407 = vmatpush1.bf16.msra.mxu0 %v7384
  %7408 = vmatprep.subr.bf16.mxu0 0
  %7409 = vmatpush1.bf16.msra.mxu0 %v7385
  %7410 = vmatprep.subr.bf16.mxu0 0
  %7411 = vmatpush1.bf16.msra.mxu0 0
  %7412 = vmatprep.subr.bf16.mxu0 0
  %7413 = vmatpush1.bf16.msra.mxu0 0
  %7414 = vmatprep.subr.bf16.mxu0 0
  %7415 = vmatpush1.bf16.msra.mxu0 0
  %7416 = vmatprep.subr.bf16.mxu0 0
  %7417 = vmatpush1.bf16.msra.mxu0 0
  %7418 = vmatprep.subr.bf16.mxu0 0
  %7419 = vmatpush1.bf16.msra.mxu0 0
  %7420 = vmatprep.subr.bf16.mxu0 0
  %7421 = vmatpush1.bf16.msra.mxu0 0
  %7422 = vmatprep.subr.bf16.mxu0 0
  %7423 = vmatpush1.bf16.msra.mxu0 0
  %7424 = vmatprep.subr.bf16.mxu0 0
  %7425 = vmatpush1.bf16.msra.mxu0 0
  %7426 = vmatprep.mubr.bf16.mxu0 0
  %7427 = vmatmul.mubr.bf16.gmra.mrb[0].mxu0 %v7319
  %v7428 = vpop.f32.mrb[0].mxu0
  %v7429 = vadd.f32 %v7344, %v7428
  %v7430 = vpop.f32.mrb[0].mxu0
  %v7431 = vpop.f32.mrb[0].mxu0
  %v7432 = vadd.f32 %v7344, %v7431
  %v7433 = vpop.f32.mrb[0].mxu0
  %7434 = vmatprep.mubr.bf16.mxu0 0
  %7435 = vmatmul.mubr.bf16.gmra.mrb[0].mxu0 %v7320
  %v7436 = vpop.f32.mrb[0].mxu0
  %v7437 = vadd.f32 %v7344, %v7436
  %v7438 = vpop.f32.mrb[0].mxu0
  %v7439 = vpop.f32.mrb[0].mxu0
  %v7440 = vadd.f32 %v7344, %v7439
  %v7441 = vpop.f32.mrb[0].mxu0
  %7442 = vmatprep.mubr.bf16.mxu0 0
  %7443 = vmatmul.mubr.bf16.gmra.mrb[0].mxu0 %v7321
  %v7444 = vpop.f32.mrb[0].mxu0
  %v7445 = vadd.f32 %v7344, %v7444
  %v7446 = vpop.f32.mrb[0].mxu0
  %v7447 = vpop.f32.mrb[0].mxu0
  %v7448 = vadd.f32 %v7344, %v7447
  %v7449 = vpop.f32.mrb[0].mxu0
  %7450 = vmatprep.mubr.bf16.mxu0 0
  %7451 = vmatmul.mubr.bf16.gmra.mrb[0].mxu0 %v7322
  %v7452 = vpop.f32.mrb[0].mxu0
  %v7453 = vadd.f32 %v7344, %v7452
  %v7454 = vpop.f32.mrb[0].mxu0
  %v7455 = vpop.f32.mrb[0].mxu0
  %v7456 = vadd.f32 %v7344, %v7455
  %v7457 = vpop.f32.mrb[0].mxu0
  %7458 = vdwg.mxu0
  %v7459 = vmax.f32 %v7429, 0.0
  %v7460 = vmax.f32 %v7432, 0.0
  %v7461 = vmax.f32 %v7437, 0.0
  %v7462 = vmax.f32 %v7440, 0.0
  %v7463 = vmax.f32 %v7445, 0.0
  %v7464 = vmax.f32 %v7448, 0.0
  %v7465 = vmax.f32 %v7453, 0.0
  %v7466 = vmax.f32 %v7456, 0.0
  %v7467 = vpack.c.bf16 %v7460, %v7459
  %v7468 = vpack.c.bf16 %v7462, %v7461
  %v7469 = vpack.c.bf16 %v7464, %v7463
  %v7470 = vpack.c.bf16 %v7466, %v7465
  %v7471 = vld [vmem:[%s9] sm:$0xf]
  %v7472 = vld [vmem:[%s9 + $0x4] sm:$0xf]
  %v7473 = vld [vmem:[%s9 + $0x8] sm:$0xf]
  %v7474 = vld [vmem:[%s9 + $0xc] sm:$0xf]
  %v7475 = vld [vmem:[%s9 + $0x10] sm:$0xf]
  %v7476 = vld [vmem:[%s9 + $0x14] sm:$0xf]
  %v7477 = vld [vmem:[%s9 + $0x18] sm:$0xf]
  %v7478 = vld [vmem:[%s9 + $0x1c] sm:$0xf]
  %v7479 = vld [vmem:[%s9 + $0x20] sm:$0xf]
  %v7480 = vld [vmem:[%s9 + $0x24] sm:$0xf]
  %v7481 = vld [vmem:[%s9 + $0x28] sm:$0xf]
  %v7482 = vld [vmem:[%s9 + $0x2c] sm:$0xf]
  %v7483 = vld [vmem:[%s9 + $0x30] sm:$0xf]
  %v7484 = vld [vmem:[%s9 + $0x34] sm:$0xf]
  %v7485 = vld [vmem:[%s9 + $0x38] sm:$0xf]
  %v7486 = vld [vmem:[%s9 + $0x3c] sm:$0xf]
  %v7487 = vld [vmem:[%s10] sm:$0x1]
  %v7489 = vlaneseq
  %v7490 = vshrl.u32 %v7489, 7
  %v7491 = vsub.s32 0, %v7490
  %v7492 = vrot.slane %v7487, %v7491
  %v7510 = vunpack.c.l.b16 %v7471
  %v7511 = vunpack.c.l.b16 %v7472
  %v7512 = vunpack.c.l.b16 %v7473
  %v7513 = vunpack.c.l.b16 %v7474
  %v7514 = vunpack.c.l.b16 %v7475
  %v7515 = vunpack.c.l.b16 %v7476
  %v7516 = vunpack.c.l.b16 %v7477
  %v7517 = vunpack.c.l.b16 %v7478
  %v7518 = vunpack.c.l.b16 %v7479
  %v7519 = vunpack.c.l.b16 %v7480
  %v7520 = vunpack.c.l.b16 %v7481
  %v7521 = vunpack.c.l.b16 %v7482
  %v7522 = vunpack.c.l.b16 %v7483
  %v7523 = vunpack.c.l.b16 %v7484
  %v7524 = vunpack.c.l.b16 %v7485
  %v7525 = vunpack.c.l.b16 %v7486
  %v7526 = vpack.c.b16 %v7511, %v7510
  %v7527 = vpack.c.b16 %v7513, %v7512
  %v7528 = vpack.c.b16 %v7515, %v7514
  %v7529 = vpack.c.b16 %v7517, %v7516
  %v7530 = vpack.c.b16 %v7519, %v7518
  %v7531 = vpack.c.b16 %v7521, %v7520
  %v7532 = vpack.c.b16 %v7523, %v7522
  %v7533 = vpack.c.b16 %v7525, %v7524
  %7542 = vmatprep.subr.bf16.mxu0 0
  %7543 = vmatpush1.bf16.msra.mxu0 %v7526
  %7544 = vmatprep.subr.bf16.mxu0 0
  %7545 = vmatpush1.bf16.msra.mxu0 %v7527
  %7546 = vmatprep.subr.bf16.mxu0 0
  %7547 = vmatpush1.bf16.msra.mxu0 %v7528
  %7548 = vmatprep.subr.bf16.mxu0 0
  %7549 = vmatpush1.bf16.msra.mxu0 %v7529
  %7550 = vmatprep.subr.bf16.mxu0 0
  %7551 = vmatpush1.bf16.msra.mxu0 %v7530
  %7552 = vmatprep.subr.bf16.mxu0 0
  %7553 = vmatpush1.bf16.msra.mxu0 %v7531
  %7554 = vmatprep.subr.bf16.mxu0 0
  %7555 = vmatpush1.bf16.msra.mxu0 %v7532
  %7556 = vmatprep.subr.bf16.mxu0 0
  %7557 = vmatpush1.bf16.msra.mxu0 %v7533
  %7558 = vmatprep.subr.bf16.mxu0 0
  %7559 = vmatpush1.bf16.msra.mxu0 0
  %7560 = vmatprep.subr.bf16.mxu0 0
  %7561 = vmatpush1.bf16.msra.mxu0 0
  %7562 = vmatprep.subr.bf16.mxu0 0
  %7563 = vmatpush1.bf16.msra.mxu0 0
  %7564 = vmatprep.subr.bf16.mxu0 0
  %7565 = vmatpush1.bf16.msra.mxu0 0
  %7566 = vmatprep.subr.bf16.mxu0 0
  %7567 = vmatpush1.bf16.msra.mxu0 0
  %7568 = vmatprep.subr.bf16.mxu0 0
  %7569 = vmatpush1.bf16.msra.mxu0 0
  %7570 = vmatprep.subr.bf16.mxu0 0
  %7571 = vmatpush1.bf16.msra.mxu0 0
  %7572 = vmatprep.subr.bf16.mxu0 0
  %7573 = vmatpush1.bf16.msra.mxu0 0
  %7574 = vmatprep.mubr.bf16.mxu0 0
  %7575 = vmatmul.mubr.bf16.gmra.mrb[0].mxu0 %v7467
  %v7576 = vpop.f32.mrb[0].mxu0
  %v7577 = vadd.f32 %v7492, %v7576
  %v7578 = vpop.f32.mrb[0].mxu0
  %v7579 = vpop.f32.mrb[0].mxu0
  %v7580 = vadd.f32 %v7492, %v7579
  %v7581 = vpop.f32.mrb[0].mxu0
  %7582 = vmatprep.mubr.bf16.mxu0 0
  %7583 = vmatmul.mubr.bf16.gmra.mrb[0].mxu0 %v7468
  %v7584 = vpop.f32.mrb[0].mxu0
  %v7585 = vadd.f32 %v7492, %v7584
  %v7586 = vpop.f32.mrb[0].mxu0
  %v7587 = vpop.f32.mrb[0].mxu0
  %v7588 = vadd.f32 %v7492, %v7587
  %v7589 = vpop.f32.mrb[0].mxu0
  %7590 = vmatprep.mubr.bf16.mxu0 0
  %7591 = vmatmul.mubr.bf16.gmra.mrb[0].mxu0 %v7469
  %v7592 = vpop.f32.mrb[0].mxu0
  %v7593 = vadd.f32 %v7492, %v7592
  %v7594 = vpop.f32.mrb[0].mxu0
  %v7595 = vpop.f32.mrb[0].mxu0
  %v7596 = vadd.f32 %v7492, %v7595
  %v7597 = vpop.f32.mrb[0].mxu0
  %7598 = vmatprep.mubr.bf16.mxu0 0
  %7599 = vmatmul.mubr.bf16.gmra.mrb[0].mxu0 %v7470
  %v7600 = vpop.f32.mrb[0].mxu0
  %v7601 = vadd.f32 %v7492, %v7600
  %v7602 = vpop.f32.mrb[0].mxu0
  %v7603 = vpop.f32.mrb[0].mxu0
  %v7604 = vadd.f32 %v7492, %v7603
  %v7605 = vpop.f32.mrb[0].mxu0
  %7606 = vdwg.mxu0
  %7607 = vst [vmem:[%s11] sm:$0xff] %v7577
  %7608 = vst [vmem:[%s11 + $0x8] sm:$0xff] %v7580
  %7609 = vst [vmem:[%s11 + $0x10] sm:$0xff] %v7585
  %7610 = vst [vmem:[%s11 + $0x18] sm:$0xff] %v7588
  %7611 = vst [vmem:[%s11 + $0x20] sm:$0xff] %v7593
  %7612 = vst [vmem:[%s11 + $0x28] sm:$0xff] %v7596
  %7613 = vst [vmem:[%s11 + $0x30] sm:$0xff] %v7601
  %7614 = vst [vmem:[%s11 + $0x38] sm:$0xff] %v7604
  // Predicated region
  $region46: #{mlp_forward.1} parent=0 // pred_check
    _
  $region47: #{mlp_forward.1} parent=0 // pred_check_branch
    %7616 = sbr.rel (0) target = $region49
  $region48: #{mlp_forward.1} parent=0 // pred_region
    _
  $region49: #{mlp_forward.1} parent=0 // pred_fallthru
    _
  // Predicated region
  $region50: #{mlp_forward.1} parent=0 // pred_check
    _
  $region51: #{mlp_forward.1} parent=0 // pred_check_branch
    %7618 = sbr.rel (0) target = $region53
  $region52: #{mlp_forward.1} parent=0 // pred_region
    _
  $region53: #{mlp_forward.1} parent=0 // pred_fallthru
    _

</llo_original>
